<compile_context>
chip_gen: v5e
topology: v5e:2x2
jax: 0.10.0
libtpu: 0.0.40
codegen_flags: <defaults>
</compile_context>

<pallas_src>
import functools

import jax
import jax.numpy as jnp
import numpy as np
from jax.experimental import pallas as pl
from jax.experimental.pallas import tpu as pltpu

PRIMITIVES = (
    "none",
    "max_pool_3x3",
    "avg_pool_3x3",
    "skip_connect",
    "sep_conv_3x3",
    "sep_conv_5x5",
    "dil_conv_3x3",
    "dil_conv_5x5",
)

BN_EPS = 1e-5
PB = 4          # canonical border width = max padding over primitives (dil_conv_5x5)
NEG = -1e30     # finite "-inf" stand-in (must stay finite under multiply-masking)


def _round_up(v, m):
    return ((v + m - 1) // m) * m


def _layout_constants(N, C, H, W):
    """Single-row (1, NPIXP) constants; broadcast across sublanes in-kernel."""
    HB, WB = H + 2 * PB, W + 2 * PB
    NPIX = HB * WB
    NPIXP = _round_up(NPIX, 128)
    valid = np.zeros((HB, WB), np.float32)
    valid[PB:PB + H, PB:PB + W] = 1.0
    # 3x3 / stride 1 / pad 1 in-bounds tap count (count_include_pad=False).
    ones_p = np.pad(np.ones((H, W), np.float32), 1)
    cnt = np.zeros((H, W), np.float32)
    for ki in range(3):
        for kj in range(3):
            cnt += ones_p[ki:ki + H, kj:kj + W]
    inv_cnt = np.zeros((HB, WB), np.float32)
    inv_cnt[PB:PB + H, PB:PB + W] = 1.0 / cnt
    mask_row = np.zeros((1, NPIXP), np.float32)
    invc_row = np.zeros((1, NPIXP), np.float32)
    mask_row[0, :NPIX] = valid.reshape(-1)
    invc_row[0, :NPIX] = inv_cnt.reshape(-1)
    return mask_row, invc_row


def mixed_op_forward(x_nchw, weights, params):
    """MixedOp forward.  x: (N,C,H,W) NCHW, weights: (8,) softmaxed alphas."""
    N, C, H, W = x_nchw.shape
    NC = N * C
    HB, WB = H + 2 * PB, W + 2 * PB
    NPIX = HB * WB                                   # real lanes per (n, c) plane
    NPIXP = _round_up(NPIX, 128)                     # lane-padded row width
    SL = _round_up(PB * WB + PB, 128)                # slack >= max |tap offset|
    BUFW = SL + NPIXP + SL
    M = N * H * W                                    # valid elements per channel (BN)
    INV_M = 1.0 / M

    mask_np, invc_np = _layout_constants(N, C, H, W)

    # NCHW -> canonical packed (N*C, NPIXP): batch*channels on sublanes,
    # zero-padded flattened spatial (plus lane padding) on lanes.
    xc = jnp.pad(x_nchw.astype(jnp.float32).reshape(NC, H, W),
                 ((0, 0), (PB, PB), (PB, PB)))
    xc = jnp.pad(xc.reshape(NC, NPIX), ((0, 0), (0, NPIXP - NPIX)))

    # Parameter re-tilings for the packed layout (tiny, host/XLA side).
    eye_n = jnp.eye(N, dtype=jnp.float32)
    tile_dw = lambda dw: jnp.tile(dw, (N, 1))                       # (NC, k*k)
    blk_pw = lambda pw: jnp.kron(eye_n, pw)                         # block-diag (NC, NC)
    cmat = jnp.kron(jnp.ones((N, N), jnp.float32),
                    jnp.eye(C, dtype=jnp.float32))                  # batch-combine (NC, NC)

    def kernel(w_ref, x_ref, mask_ref, invc_ref, cmat_ref,
               s3d1_ref, s3p1_ref, s3d2_ref, s3p2_ref,
               s5d1_ref, s5p1_ref, s5d2_ref, s5p2_ref,
               d3d_ref, d3p_ref, d5d_ref, d5p_ref,
               out_ref, buf_ref, maskb_ref):
        # Zero only the slack stripes (interior is rewritten by every stage);
        # keeps every value finite under the multiply-based masking.
        buf_ref[:, 0:SL] = jnp.zeros((NC, SL), jnp.float32)
        buf_ref[:, SL + NPIXP:SL + NPIXP + SL] = jnp.zeros((NC, SL), jnp.float32)
        # One-time sublane broadcast of the (1, NPIXP) valid mask; later uses
        # re-load it from VMEM instead of pinning vregs across the kernel.
        maskb_ref[...] = jnp.broadcast_to(mask_ref[...], (NC, NPIXP))

        x = x_ref[...]                       # zero border / zero pad lanes
        xr = jnp.maximum(x, 0.0)             # ReLU(x): shared by all conv branches

        def mask0(v):                        # restore the zero-border invariant
            return v * maskb_ref[...]

        def dwconv(v, taps_ref, k, d, pad):
            """Depthwise KxK conv, stride 1, groups=C.  v must have zero border."""
            # TODO(synk): pltpu.roll-based within-row taps (k loads per stencil)
            # after HW validation of wrap/shift direction; static slices are
            # the known-good path.
            buf_ref[:, SL:SL + NPIXP] = v
            taps = taps_ref[...]             # (NC, k*k)
            acc = None
            for ki in range(k):
                for kj in range(k):
                    off = (ki * d - pad) * WB + (kj * d - pad)
                    wt = taps[:, ki * k + kj:ki * k + kj + 1]        # (NC, 1)
                    t = wt * buf_ref[:, SL + off:SL + off + NPIXP]
                    acc = t if acc is None else acc + t
            return mask0(acc)

        def pwconv(v, wref):
            """1x1 conv across channels: block-diagonal matmul on the MXU."""
            return jnp.dot(wref[...], v, preferred_element_type=jnp.float32)

        def bnorm(v, w_scale):
            """BatchNorm2d(affine=False), training mode (batch stats, biased var).
            Cross-batch (sublane) combine via the (NC, NC) 0/1 matrix on the
            otherwise-idle MXU; optional arch weight folded into the scale."""
            cm = cmat_ref[...]
            mean = jnp.sum(jnp.dot(cm, v, preferred_element_type=jnp.float32),
                           axis=1, keepdims=True) * INV_M            # (NC, 1)
            ex2 = jnp.sum(jnp.dot(cm, v * v, preferred_element_type=jnp.float32),
                          axis=1, keepdims=True) * INV_M
            var = jnp.maximum(ex2 - mean * mean, 0.0)
            scale = jax.lax.rsqrt(var + BN_EPS)
            if w_scale is not None:
                scale = scale * w_scale                               # fold arch weight
            return (v - mean) * scale

        def sep(k, pad, dwa, pwa, dwb, pwb, w_scale):     # ReLU-dw-pw-BN twice
            y = bnorm(pwconv(dwconv(xr, dwa, k, 1, pad), pwa), None)
            y = mask0(jnp.maximum(y, 0.0))                # zero border before restaging
            return bnorm(pwconv(dwconv(y, dwb, k, 1, pad), pwb), w_scale)

        def dil(k, pad, dwa, pwa, w_scale):               # ReLU-dw(dilated)-pw-BN
            return bnorm(pwconv(dwconv(xr, dwa, k, 2, pad), pwa), w_scale)

        def pool3(is_max, w_scale):
            """3x3 stride-1 pad-1 pool + BatchNorm (MixedOp pool wrapper)."""
            if is_max:
                buf_ref[:, SL:SL + NPIXP] = jnp.where(maskb_ref[...] != 0.0, x, NEG)
            else:
                buf_ref[:, SL:SL + NPIXP] = x             # x already has zero border
            acc = None
            for ki in range(3):
                for kj in range(3):
                    off = (ki - 1) * WB + (kj - 1)
                    t = buf_ref[:, SL + off:SL + off + NPIXP]
                    if acc is None:
                        acc = t
                    else:
                        acc = jnp.maximum(acc, t) if is_max else acc + t
            if is_max:
                acc = mask0(acc)
            else:
                acc = acc * jnp.broadcast_to(invc_ref[...], (NC, NPIXP))
            return bnorm(acc, w_scale)

        # PRIMITIVES: none, max_pool_3x3, avg_pool_3x3, skip_connect,
        #             sep_conv_3x3, sep_conv_5x5, dil_conv_3x3, dil_conv_5x5.
        # 'none' is exactly zero; skip_connect seeds the accumulator; all other
        # branches arrive pre-scaled (w folded into their final BN scale).
        acc = w_ref[3] * x
        acc = acc + pool3(True, w_ref[1])
        acc = acc + pool3(False, w_ref[2])
        acc = acc + sep(3, 1, s3d1_ref, s3p1_ref, s3d2_ref, s3p2_ref, w_ref[4])
        acc = acc + sep(5, 2, s5d1_ref, s5p1_ref, s5d2_ref, s5p2_ref, w_ref[5])
        acc = acc + dil(3, 2, d3d_ref, d3p_ref, w_ref[6])
        acc = acc + dil(5, 4, d5d_ref, d5p_ref, w_ref[7])
        out_ref[...] = acc                   # (NC, NPIXP): unmasked lane-dense stores

    vmem = pl.BlockSpec(memory_space=pltpu.MemorySpace.VMEM)
    smem = pl.BlockSpec(memory_space=pltpu.MemorySpace.SMEM)

    out = pl.pallas_call(
        kernel,
        out_shape=jax.ShapeDtypeStruct((NC, NPIXP), jnp.float32),
        in_specs=[smem] + [vmem] * 16,
        out_specs=vmem,
        scratch_shapes=[pltpu.VMEM((NC, BUFW), jnp.float32),
                        pltpu.VMEM((NC, NPIXP), jnp.float32)],
    )(weights.astype(jnp.float32), xc,
      jnp.asarray(mask_np), jnp.asarray(invc_np), cmat,
      tile_dw(params["sep3"]["dw1"]), blk_pw(params["sep3"]["pw1"]),
      tile_dw(params["sep3"]["dw2"]), blk_pw(params["sep3"]["pw2"]),
      tile_dw(params["sep5"]["dw1"]), blk_pw(params["sep5"]["pw1"]),
      tile_dw(params["sep5"]["dw2"]), blk_pw(params["sep5"]["pw2"]),
      tile_dw(params["dil3"]["dw"]), blk_pw(params["dil3"]["pw"]),
      tile_dw(params["dil5"]["dw"]), blk_pw(params["dil5"]["pw"]))

    y = out[:, :NPIX].reshape(N, C, HB, WB)[:, :, PB:PB + H, PB:PB + W]
    return y                                              # back to NCHW


def init_mixedop_params(key, C):
    """Deterministic init.  Layouts: depthwise (C, k*k) [c, ki*k+kj];
    pointwise (C_out, C_in)."""
    def dw(k_, ksz):
        return jax.random.normal(k_, (C, ksz * ksz), jnp.float32) * (2.0 / (ksz * ksz)) ** 0.5

    def pw(k_):
        return jax.random.normal(k_, (C, C), jnp.float32) * (2.0 / C) ** 0.5

    ks = jax.random.split(key, 12)
    return {
        "sep3": {"dw1": dw(ks[0], 3), "pw1": pw(ks[1]),
                 "dw2": dw(ks[2], 3), "pw2": pw(ks[3])},
        "sep5": {"dw1": dw(ks[4], 5), "pw1": pw(ks[5]),
                 "dw2": dw(ks[6], 5), "pw2": pw(ks[7])},
        "dil3": {"dw": dw(ks[8], 3), "pw": pw(ks[9])},
        "dil5": {"dw": dw(ks[10], 5), "pw": pw(ks[11])},
    }


def _maxpool_bn_ref(x):
    """Pure-JAX reference: max_pool2d(3, stride=1, pad=1) + BN(affine=False, train)."""
    mp = jax.lax.reduce_window(x, -jnp.inf, jax.lax.max,
                               (1, 1, 3, 3), (1, 1, 1, 1),
                               ((0, 0), (0, 0), (1, 1), (1, 1)))
    mean = jnp.mean(mp, axis=(0, 2, 3), keepdims=True)
    ex2 = jnp.mean(mp * mp, axis=(0, 2, 3), keepdims=True)
    var = jnp.maximum(ex2 - mean * mean, 0.0)
    return (mp - mean) * jax.lax.rsqrt(var + BN_EPS)


if __name__ == "__main__":
    N, C, H, W = 2, 4, 16, 16
    kx, kp, ka = jax.random.split(jax.random.PRNGKey(0), 3)

    x = jax.random.normal(kx, (N, C, H, W), jnp.float32)          # NCHW input
    params = init_mixedop_params(kp, C)
    alphas = jax.random.normal(ka, (len(PRIMITIVES),), jnp.float32)
    weights = jax.nn.softmax(alphas)                              # architecture weights

    fwd = jax.jit(functools.partial(mixed_op_forward, params=params))

    # Plumbing checks: one-hot 'skip_connect' must reproduce x and one-hot
    # 'none' must be exactly zero (validates packed layout / masking / weight
    # folding round trip).
    onehot = jnp.eye(len(PRIMITIVES), dtype=jnp.float32)
    out_skip = jax.block_until_ready(fwd(x, onehot[3]))
    out_none = jax.block_until_ready(fwd(x, onehot[0]))
    assert jnp.allclose(out_skip, x, atol=1e-5), "skip_connect path mismatch"
    assert jnp.allclose(out_none, 0.0, atol=1e-6), "none path mismatch"

    # One-hot max_pool_3x3 against a pure-JAX reference: validates the packed
    # stencil staging and the MXU-based cross-batch BatchNorm stat combine.
    out_mp = jax.block_until_ready(fwd(x, onehot[1]))
    ref_mp = jax.block_until_ready(_maxpool_bn_ref(x))
    assert jnp.allclose(out_mp, ref_mp, rtol=5e-3, atol=5e-3), "max_pool path mismatch"

    out = jax.block_until_ready(fwd(x, weights))
    assert out.shape == (N, C, H, W)
    assert bool(jnp.all(jnp.isfinite(out)))
    print("KERNEL_OK")
</pallas_src>

<mosaic_0001>
module attributes {stable_mosaic.version = 11 : i64} {
  func.func @kernel(%arg0: memref<8xf32, #tpu.memory_space<smem>>, %arg1: memref<8x640xf32, #tpu.memory_space<vmem>>, %arg2: memref<1x640xf32, #tpu.memory_space<vmem>>, %arg3: memref<1x640xf32, #tpu.memory_space<vmem>>, %arg4: memref<8x8xf32, #tpu.memory_space<vmem>>, %arg5: memref<8x9xf32, #tpu.memory_space<vmem>>, %arg6: memref<8x8xf32, #tpu.memory_space<vmem>>, %arg7: memref<8x9xf32, #tpu.memory_space<vmem>>, %arg8: memref<8x8xf32, #tpu.memory_space<vmem>>, %arg9: memref<8x25xf32, #tpu.memory_space<vmem>>, %arg10: memref<8x8xf32, #tpu.memory_space<vmem>>, %arg11: memref<8x25xf32, #tpu.memory_space<vmem>>, %arg12: memref<8x8xf32, #tpu.memory_space<vmem>>, %arg13: memref<8x9xf32, #tpu.memory_space<vmem>>, %arg14: memref<8x8xf32, #tpu.memory_space<vmem>>, %arg15: memref<8x25xf32, #tpu.memory_space<vmem>>, %arg16: memref<8x8xf32, #tpu.memory_space<vmem>>, %arg17: memref<8x640xf32, #tpu.memory_space<vmem>>, %arg18: memref<8x896xf32, #tpu.memory_space<vmem>>, %arg19: memref<8x640xf32, #tpu.memory_space<vmem>>) attributes {dimension_semantics = [], scalar_prefetch = 0 : i64, scratch_operands = 2 : i64, tpu.core_type = #tpu.core_type<tc>} {
    %cst = arith.constant 0.000000e+00 : f32
    %0 = vector.broadcast %cst : f32 to vector<8x128xf32>
    %c0 = arith.constant 0 : index
    %c0_0 = arith.constant 0 : index
    %1 = vector.load %arg18[%c0, %c0_0] : memref<8x896xf32, #tpu.memory_space<vmem>>, vector<8x128xf32>
    tpu.vector_store %arg18[%c0, %c0_0], %0 {strides = array<i32>} : memref<8x896xf32, #tpu.memory_space<vmem>>, vector<8x128xf32>,
    %cst_1 = arith.constant 0.000000e+00 : f32
    %2 = vector.broadcast %cst_1 : f32 to vector<8x128xf32>
    %c0_2 = arith.constant 0 : index
    %c768 = arith.constant 768 : index
    %3 = vector.load %arg18[%c0_2, %c768] : memref<8x896xf32, #tpu.memory_space<vmem>>, vector<8x128xf32>
    tpu.vector_store %arg18[%c0_2, %c768], %2 {strides = array<i32>} : memref<8x896xf32, #tpu.memory_space<vmem>>, vector<8x128xf32>,
    %c0_3 = arith.constant 0 : index
    %c0_4 = arith.constant 0 : index
    %4 = vector.load %arg2[%c0_3, %c0_4] : memref<1x640xf32, #tpu.memory_space<vmem>>, vector<1x640xf32>
    %5 = vector.shape_cast %4 : vector<1x640xf32> to vector<1x640xf32>
    %6 = vector.broadcast %5 : vector<1x640xf32> to vector<8x640xf32>
    %c0_5 = arith.constant 0 : index
    %c0_6 = arith.constant 0 : index
    %7 = vector.load %arg19[%c0_5, %c0_6] : memref<8x640xf32, #tpu.memory_space<vmem>>, vector<8x640xf32>
    tpu.vector_store %arg19[%c0_5, %c0_6], %6 {strides = array<i32>} : memref<8x640xf32, #tpu.memory_space<vmem>>, vector<8x640xf32>,
    %c0_7 = arith.constant 0 : index
    %c0_8 = arith.constant 0 : index
    %8 = vector.load %arg1[%c0_7, %c0_8] : memref<8x640xf32, #tpu.memory_space<vmem>>, vector<8x640xf32>
    %cst_9 = arith.constant 0.000000e+00 : f32
    %9 = vector.broadcast %cst_9 : f32 to vector<8x640xf32>
    %10 = arith.maximumf %8, %9 : vector<8x640xf32>
    %c3 = arith.constant 3 : index
    %11 = memref.load %arg0[%c3] : memref<8xf32, #tpu.memory_space<smem>>
    %12 = vector.broadcast %11 : f32 to vector<8x640xf32>
    %13 = arith.mulf %12, %8 : vector<8x640xf32>
    %c1 = arith.constant 1 : index
    %14 = memref.load %arg0[%c1] : memref<8xf32, #tpu.memory_space<smem>>
    %c0_10 = arith.constant 0 : index
    %c0_11 = arith.constant 0 : index
    %15 = vector.load %arg19[%c0_10, %c0_11] : memref<8x640xf32, #tpu.memory_space<vmem>>, vector<8x640xf32>
    %cst_12 = arith.constant 0.000000e+00 : f32
    %16 = vector.broadcast %cst_12 : f32 to vector<8x640xf32>
    %17 = arith.cmpf one, %15, %16 : vector<8x640xf32>
    %cst_13 = arith.constant -1.000000e+30 : f32
    %18 = vector.broadcast %cst_13 : f32 to vector<8x640xf32>
    %19 = arith.select %17, %8, %18 : vector<8x640xi1>, vector<8x640xf32>
    %c0_14 = arith.constant 0 : index
    %c128 = arith.constant 128 : index
    %20 = vector.load %arg18[%c0_14, %c128] : memref<8x896xf32, #tpu.memory_space<vmem>>, vector<8x640xf32>
    tpu.vector_store %arg18[%c0_14, %c128], %19 {strides = array<i32>} : memref<8x896xf32, #tpu.memory_space<vmem>>, vector<8x640xf32>,
    %c0_15 = arith.constant 0 : index
    %c103 = arith.constant 103 : index
    %21 = vector.load %arg18[%c0_15, %c103] : memref<8x896xf32, #tpu.memory_space<vmem>>, vector<8x640xf32>
    %c0_16 = arith.constant 0 : index
    %c104 = arith.constant 104 : index
    %22 = vector.load %arg18[%c0_16, %c104] : memref<8x896xf32, #tpu.memory_space<vmem>>, vector<8x640xf32>
    %23 = arith.maximumf %21, %22 : vector<8x640xf32>
    %c0_17 = arith.constant 0 : index
    %c105 = arith.constant 105 : index
    %24 = vector.load %arg18[%c0_17, %c105] : memref<8x896xf32, #tpu.memory_space<vmem>>, vector<8x640xf32>
    %25 = arith.maximumf %23, %24 : vector<8x640xf32>
    %c0_18 = arith.constant 0 : index
    %c127 = arith.constant 127 : index
    %26 = vector.load %arg18[%c0_18, %c127] : memref<8x896xf32, #tpu.memory_space<vmem>>, vector<8x640xf32>
    %27 = arith.maximumf %25, %26 : vector<8x640xf32>
    %c0_19 = arith.constant 0 : index
    %c128_20 = arith.constant 128 : index
    %28 = vector.load %arg18[%c0_19, %c128_20] : memref<8x896xf32, #tpu.memory_space<vmem>>, vector<8x640xf32>
    %29 = arith.maximumf %27, %28 : vector<8x640xf32>
    %c0_21 = arith.constant 0 : index
    %c129 = arith.constant 129 : index
    %30 = vector.load %arg18[%c0_21, %c129] : memref<8x896xf32, #tpu.memory_space<vmem>>, vector<8x640xf32>
    %31 = arith.maximumf %29, %30 : vector<8x640xf32>
    %c0_22 = arith.constant 0 : index
    %c151 = arith.constant 151 : index
    %32 = vector.load %arg18[%c0_22, %c151] : memref<8x896xf32, #tpu.memory_space<vmem>>, vector<8x640xf32>
    %33 = arith.maximumf %31, %32 : vector<8x640xf32>
    %c0_23 = arith.constant 0 : index
    %c152 = arith.constant 152 : index
    %34 = vector.load %arg18[%c0_23, %c152] : memref<8x896xf32, #tpu.memory_space<vmem>>, vector<8x640xf32>
    %35 = arith.maximumf %33, %34 : vector<8x640xf32>
    %c0_24 = arith.constant 0 : index
    %c153 = arith.constant 153 : index
    %36 = vector.load %arg18[%c0_24, %c153] : memref<8x896xf32, #tpu.memory_space<vmem>>, vector<8x640xf32>
    %37 = arith.maximumf %35, %36 : vector<8x640xf32>
    %c0_25 = arith.constant 0 : index
    %c0_26 = arith.constant 0 : index
    %38 = vector.load %arg19[%c0_25, %c0_26] : memref<8x640xf32, #tpu.memory_space<vmem>>, vector<8x640xf32>
    %39 = arith.mulf %37, %38 : vector<8x640xf32>
    %c0_27 = arith.constant 0 : index
    %c0_28 = arith.constant 0 : index
    %40 = vector.load %arg4[%c0_27, %c0_28] : memref<8x8xf32, #tpu.memory_space<vmem>>, vector<8x8xf32>
    %cst_29 = arith.constant dense<0.000000e+00> : vector<8x640xf32>
    %41 = tpu.matmul %40, %39, %cst_29 {dimension_numbers = #tpu.dot_dimension_numbers<[1], [0], [0], [1], [0, 0, 1, 1], [], []>} : vector<8x8xf32>, vector<8x640xf32>, vector<8x640xf32> -> vector<8x640xf32>
    %cst_30 = arith.constant dense<0.000000e+00> : vector<8xf32>
    %42 = vector.multi_reduction <add>, %41, %cst_30 [1] : vector<8x640xf32> to vector<8xf32>
    %43 = vector.shape_cast %42 : vector<8xf32> to vector<8x1xf32>
    %cst_31 = arith.constant 0.001953125 : f32
    %44 = vector.broadcast %cst_31 : f32 to vector<8x1xf32>
    %45 = arith.mulf %43, %44 : vector<8x1xf32>
    %46 = arith.mulf %39, %39 : vector<8x640xf32>
    %cst_32 = arith.constant dense<0.000000e+00> : vector<8x640xf32>
    %47 = tpu.matmul %40, %46, %cst_32 {dimension_numbers = #tpu.dot_dimension_numbers<[1], [0], [0], [1], [0, 0, 1, 1], [], []>} : vector<8x8xf32>, vector<8x640xf32>, vector<8x640xf32> -> vector<8x640xf32>
    %cst_33 = arith.constant dense<0.000000e+00> : vector<8xf32>
    %48 = vector.multi_reduction <add>, %47, %cst_33 [1] : vector<8x640xf32> to vector<8xf32>
    %49 = vector.shape_cast %48 : vector<8xf32> to vector<8x1xf32>
    %cst_34 = arith.constant 0.001953125 : f32
    %50 = vector.broadcast %cst_34 : f32 to vector<8x1xf32>
    %51 = arith.mulf %49, %50 : vector<8x1xf32>
    %52 = arith.mulf %45, %45 : vector<8x1xf32>
    %53 = arith.subf %51, %52 : vector<8x1xf32>
    %cst_35 = arith.constant 0.000000e+00 : f32
    %54 = vector.broadcast %cst_35 : f32 to vector<8x1xf32>
    %55 = arith.maximumf %53, %54 : vector<8x1xf32>
    %cst_36 = arith.constant 9.99999974E-6 : f32
    %56 = vector.broadcast %cst_36 : f32 to vector<8x1xf32>
    %57 = arith.addf %55, %56 : vector<8x1xf32>
    %58 = math.rsqrt %57 : vector<8x1xf32>
    %59 = vector.broadcast %14 : f32 to vector<8x1xf32>
    %60 = arith.mulf %58, %59 : vector<8x1xf32>
    %61 = vector.broadcast %45 : vector<8x1xf32> to vector<8x640xf32>
    %62 = arith.subf %39, %61 : vector<8x640xf32>
    %63 = vector.broadcast %60 : vector<8x1xf32> to vector<8x640xf32>
    %64 = arith.mulf %62, %63 : vector<8x640xf32>
    %65 = arith.addf %13, %64 : vector<8x640xf32>
    %c2 = arith.constant 2 : index
    %66 = memref.load %arg0[%c2] : memref<8xf32, #tpu.memory_space<smem>>
    %c0_37 = arith.constant 0 : index
    %c128_38 = arith.constant 128 : index
    %67 = vector.load %arg18[%c0_37, %c128_38] : memref<8x896xf32, #tpu.memory_space<vmem>>, vector<8x640xf32>
    tpu.vector_store %arg18[%c0_37, %c128_38], %8 {strides = array<i32>} : memref<8x896xf32, #tpu.memory_space<vmem>>, vector<8x640xf32>,
    %c0_39 = arith.constant 0 : index
    %c103_40 = arith.constant 103 : index
    %68 = vector.load %arg18[%c0_39, %c103_40] : memref<8x896xf32, #tpu.memory_space<vmem>>, vector<8x640xf32>
    %c0_41 = arith.constant 0 : index
    %c104_42 = arith.constant 104 : index
    %69 = vector.load %arg18[%c0_41, %c104_42] : memref<8x896xf32, #tpu.memory_space<vmem>>, vector<8x640xf32>
    %70 = arith.addf %68, %69 : vector<8x640xf32>
    %c0_43 = arith.constant 0 : index
    %c105_44 = arith.constant 105 : index
    %71 = vector.load %arg18[%c0_43, %c105_44] : memref<8x896xf32, #tpu.memory_space<vmem>>, vector<8x640xf32>
    %72 = arith.addf %70, %71 : vector<8x640xf32>
    %c0_45 = arith.constant 0 : index
    %c127_46 = arith.constant 127 : index
    %73 = vector.load %arg18[%c0_45, %c127_46] : memref<8x896xf32, #tpu.memory_space<vmem>>, vector<8x640xf32>
    %74 = arith.addf %72, %73 : vector<8x640xf32>
    %c0_47 = arith.constant 0 : index
    %c128_48 = arith.constant 128 : index
    %75 = vector.load %arg18[%c0_47, %c128_48] : memref<8x896xf32, #tpu.memory_space<vmem>>, vector<8x640xf32>
    %76 = arith.addf %74, %75 : vector<8x640xf32>
    %c0_49 = arith.constant 0 : index
    %c129_50 = arith.constant 129 : index
    %77 = vector.load %arg18[%c0_49, %c129_50] : memref<8x896xf32, #tpu.memory_space<vmem>>, vector<8x640xf32>
    %78 = arith.addf %76, %77 : vector<8x640xf32>
    %c0_51 = arith.constant 0 : index
    %c151_52 = arith.constant 151 : index
    %79 = vector.load %arg18[%c0_51, %c151_52] : memref<8x896xf32, #tpu.memory_space<vmem>>, vector<8x640xf32>
    %80 = arith.addf %78, %79 : vector<8x640xf32>
    %c0_53 = arith.constant 0 : index
    %c152_54 = arith.constant 152 : index
    %81 = vector.load %arg18[%c0_53, %c152_54] : memref<8x896xf32, #tpu.memory_space<vmem>>, vector<8x640xf32>
    %82 = arith.addf %80, %81 : vector<8x640xf32>
    %c0_55 = arith.constant 0 : index
    %c153_56 = arith.constant 153 : index
    %83 = vector.load %arg18[%c0_55, %c153_56] : memref<8x896xf32, #tpu.memory_space<vmem>>, vector<8x640xf32>
    %84 = arith.addf %82, %83 : vector<8x640xf32>
    %c0_57 = arith.constant 0 : index
    %c0_58 = arith.constant 0 : index
    %85 = vector.load %arg3[%c0_57, %c0_58] : memref<1x640xf32, #tpu.memory_space<vmem>>, vector<1x640xf32>
    %86 = vector.shape_cast %85 : vector<1x640xf32> to vector<1x640xf32>
    %87 = vector.broadcast %86 : vector<1x640xf32> to vector<8x640xf32>
    %88 = arith.mulf %84, %87 : vector<8x640xf32>
    %c0_59 = arith.constant 0 : index
    %c0_60 = arith.constant 0 : index
    %89 = vector.load %arg4[%c0_59, %c0_60] : memref<8x8xf32, #tpu.memory_space<vmem>>, vector<8x8xf32>
    %cst_61 = arith.constant dense<0.000000e+00> : vector<8x640xf32>
    %90 = tpu.matmul %89, %88, %cst_61 {dimension_numbers = #tpu.dot_dimension_numbers<[1], [0], [0], [1], [0, 0, 1, 1], [], []>} : vector<8x8xf32>, vector<8x640xf32>, vector<8x640xf32> -> vector<8x640xf32>
    %cst_62 = arith.constant dense<0.000000e+00> : vector<8xf32>
    %91 = vector.multi_reduction <add>, %90, %cst_62 [1] : vector<8x640xf32> to vector<8xf32>
    %92 = vector.shape_cast %91 : vector<8xf32> to vector<8x1xf32>
    %cst_63 = arith.constant 0.001953125 : f32
    %93 = vector.broadcast %cst_63 : f32 to vector<8x1xf32>
    %94 = arith.mulf %92, %93 : vector<8x1xf32>
    %95 = arith.mulf %88, %88 : vector<8x640xf32>
    %cst_64 = arith.constant dense<0.000000e+00> : vector<8x640xf32>
    %96 = tpu.matmul %89, %95, %cst_64 {dimension_numbers = #tpu.dot_dimension_numbers<[1], [0], [0], [1], [0, 0, 1, 1], [], []>} : vector<8x8xf32>, vector<8x640xf32>, vector<8x640xf32> -> vector<8x640xf32>
    %cst_65 = arith.constant dense<0.000000e+00> : vector<8xf32>
    %97 = vector.multi_reduction <add>, %96, %cst_65 [1] : vector<8x640xf32> to vector<8xf32>
    %98 = vector.shape_cast %97 : vector<8xf32> to vector<8x1xf32>
    %cst_66 = arith.constant 0.001953125 : f32
    %99 = vector.broadcast %cst_66 : f32 to vector<8x1xf32>
    %100 = arith.mulf %98, %99 : vector<8x1xf32>
    %101 = arith.mulf %94, %94 : vector<8x1xf32>
    %102 = arith.subf %100, %101 : vector<8x1xf32>
    %cst_67 = arith.constant 0.000000e+00 : f32
    %103 = vector.broadcast %cst_67 : f32 to vector<8x1xf32>
    %104 = arith.maximumf %102, %103 : vector<8x1xf32>
    %cst_68 = arith.constant 9.99999974E-6 : f32
    %105 = vector.broadcast %cst_68 : f32 to vector<8x1xf32>
    %106 = arith.addf %104, %105 : vector<8x1xf32>
    %107 = math.rsqrt %106 : vector<8x1xf32>
    %108 = vector.broadcast %66 : f32 to vector<8x1xf32>
    %109 = arith.mulf %107, %108 : vector<8x1xf32>
    %110 = vector.broadcast %94 : vector<8x1xf32> to vector<8x640xf32>
    %111 = arith.subf %88, %110 : vector<8x640xf32>
    %112 = vector.broadcast %109 : vector<8x1xf32> to vector<8x640xf32>
    %113 = arith.mulf %111, %112 : vector<8x640xf32>
    %114 = arith.addf %65, %113 : vector<8x640xf32>
    %c4 = arith.constant 4 : index
    %115 = memref.load %arg0[%c4] : memref<8xf32, #tpu.memory_space<smem>>
    %c0_69 = arith.constant 0 : index
    %c128_70 = arith.constant 128 : index
    %116 = vector.load %arg18[%c0_69, %c128_70] : memref<8x896xf32, #tpu.memory_space<vmem>>, vector<8x640xf32>
    tpu.vector_store %arg18[%c0_69, %c128_70], %10 {strides = array<i32>} : memref<8x896xf32, #tpu.memory_space<vmem>>, vector<8x640xf32>,
    %c0_71 = arith.constant 0 : index
    %c0_72 = arith.constant 0 : index
    %117 = vector.load %arg5[%c0_71, %c0_72] : memref<8x9xf32, #tpu.memory_space<vmem>>, vector<8x9xf32>
    %118 = vector.extract_strided_slice %117 {offsets = [0, 0], sizes = [8, 1], strides = [1, 1]} : vector<8x9xf32> to vector<8x1xf32>
    %c0_73 = arith.constant 0 : index
    %c103_74 = arith.constant 103 : index
    %119 = vector.load %arg18[%c0_73, %c103_74] : memref<8x896xf32, #tpu.memory_space<vmem>>, vector<8x640xf32>
    %120 = vector.broadcast %118 : vector<8x1xf32> to vector<8x640xf32>
    %121 = arith.mulf %120, %119 : vector<8x640xf32>
    %122 = vector.extract_strided_slice %117 {offsets = [0, 1], sizes = [8, 1], strides = [1, 1]} : vector<8x9xf32> to vector<8x1xf32>
    %c0_75 = arith.constant 0 : index
    %c104_76 = arith.constant 104 : index
    %123 = vector.load %arg18[%c0_75, %c104_76] : memref<8x896xf32, #tpu.memory_space<vmem>>, vector<8x640xf32>
    %124 = vector.broadcast %122 : vector<8x1xf32> to vector<8x640xf32>
    %125 = arith.mulf %124, %123 : vector<8x640xf32>
    %126 = arith.addf %121, %125 : vector<8x640xf32>
    %127 = vector.extract_strided_slice %117 {offsets = [0, 2], sizes = [8, 1], strides = [1, 1]} : vector<8x9xf32> to vector<8x1xf32>
    %c0_77 = arith.constant 0 : index
    %c105_78 = arith.constant 105 : index
    %128 = vector.load %arg18[%c0_77, %c105_78] : memref<8x896xf32, #tpu.memory_space<vmem>>, vector<8x640xf32>
    %129 = vector.broadcast %127 : vector<8x1xf32> to vector<8x640xf32>
    %130 = arith.mulf %129, %128 : vector<8x640xf32>
    %131 = arith.addf %126, %130 : vector<8x640xf32>
    %132 = vector.extract_strided_slice %117 {offsets = [0, 3], sizes = [8, 1], strides = [1, 1]} : vector<8x9xf32> to vector<8x1xf32>
    %c0_79 = arith.constant 0 : index
    %c127_80 = arith.constant 127 : index
    %133 = vector.load %arg18[%c0_79, %c127_80] : memref<8x896xf32, #tpu.memory_space<vmem>>, vector<8x640xf32>
    %134 = vector.broadcast %132 : vector<8x1xf32> to vector<8x640xf32>
    %135 = arith.mulf %134, %133 : vector<8x640xf32>
    %136 = arith.addf %131, %135 : vector<8x640xf32>
    %137 = vector.extract_strided_slice %117 {offsets = [0, 4], sizes = [8, 1], strides = [1, 1]} : vector<8x9xf32> to vector<8x1xf32>
    %c0_81 = arith.constant 0 : index
    %c128_82 = arith.constant 128 : index
    %138 = vector.load %arg18[%c0_81, %c128_82] : memref<8x896xf32, #tpu.memory_space<vmem>>, vector<8x640xf32>
    %139 = vector.broadcast %137 : vector<8x1xf32> to vector<8x640xf32>
    %140 = arith.mulf %139, %138 : vector<8x640xf32>
    %141 = arith.addf %136, %140 : vector<8x640xf32>
    %142 = vector.extract_strided_slice %117 {offsets = [0, 5], sizes = [8, 1], strides = [1, 1]} : vector<8x9xf32> to vector<8x1xf32>
    %c0_83 = arith.constant 0 : index
    %c129_84 = arith.constant 129 : index
    %143 = vector.load %arg18[%c0_83, %c129_84] : memref<8x896xf32, #tpu.memory_space<vmem>>, vector<8x640xf32>
    %144 = vector.broadcast %142 : vector<8x1xf32> to vector<8x640xf32>
    %145 = arith.mulf %144, %143 : vector<8x640xf32>
    %146 = arith.addf %141, %145 : vector<8x640xf32>
    %147 = vector.extract_strided_slice %117 {offsets = [0, 6], sizes = [8, 1], strides = [1, 1]} : vector<8x9xf32> to vector<8x1xf32>
    %c0_85 = arith.constant 0 : index
    %c151_86 = arith.constant 151 : index
    %148 = vector.load %arg18[%c0_85, %c151_86] : memref<8x896xf32, #tpu.memory_space<vmem>>, vector<8x640xf32>
    %149 = vector.broadcast %147 : vector<8x1xf32> to vector<8x640xf32>
    %150 = arith.mulf %149, %148 : vector<8x640xf32>
    %151 = arith.addf %146, %150 : vector<8x640xf32>
    %152 = vector.extract_strided_slice %117 {offsets = [0, 7], sizes = [8, 1], strides = [1, 1]} : vector<8x9xf32> to vector<8x1xf32>
    %c0_87 = arith.constant 0 : index
    %c152_88 = arith.constant 152 : index
    %153 = vector.load %arg18[%c0_87, %c152_88] : memref<8x896xf32, #tpu.memory_space<vmem>>, vector<8x640xf32>
    %154 = vector.broadcast %152 : vector<8x1xf32> to vector<8x640xf32>
    %155 = arith.mulf %154, %153 : vector<8x640xf32>
    %156 = arith.addf %151, %155 : vector<8x640xf32>
    %157 = vector.extract_strided_slice %117 {offsets = [0, 8], sizes = [8, 1], strides = [1, 1]} : vector<8x9xf32> to vector<8x1xf32>
    %c0_89 = arith.constant 0 : index
    %c153_90 = arith.constant 153 : index
    %158 = vector.load %arg18[%c0_89, %c153_90] : memref<8x896xf32, #tpu.memory_space<vmem>>, vector<8x640xf32>
    %159 = vector.broadcast %157 : vector<8x1xf32> to vector<8x640xf32>
    %160 = arith.mulf %159, %158 : vector<8x640xf32>
    %161 = arith.addf %156, %160 : vector<8x640xf32>
    %c0_91 = arith.constant 0 : index
    %c0_92 = arith.constant 0 : index
    %162 = vector.load %arg19[%c0_91, %c0_92] : memref<8x640xf32, #tpu.memory_space<vmem>>, vector<8x640xf32>
    %163 = arith.mulf %161, %162 : vector<8x640xf32>
    %c0_93 = arith.constant 0 : index
    %c0_94 = arith.constant 0 : index
    %164 = vector.load %arg6[%c0_93, %c0_94] : memref<8x8xf32, #tpu.memory_space<vmem>>, vector<8x8xf32>
    %cst_95 = arith.constant dense<0.000000e+00> : vector<8x640xf32>
    %165 = tpu.matmul %164, %163, %cst_95 {dimension_numbers = #tpu.dot_dimension_numbers<[1], [0], [0], [1], [0, 0, 1, 1], [], []>} : vector<8x8xf32>, vector<8x640xf32>, vector<8x640xf32> -> vector<8x640xf32>
    %c0_96 = arith.constant 0 : index
    %c0_97 = arith.constant 0 : index
    %166 = vector.load %arg4[%c0_96, %c0_97] : memref<8x8xf32, #tpu.memory_space<vmem>>, vector<8x8xf32>
    %cst_98 = arith.constant dense<0.000000e+00> : vector<8x640xf32>
    %167 = tpu.matmul %166, %165, %cst_98 {dimension_numbers = #tpu.dot_dimension_numbers<[1], [0], [0], [1], [0, 0, 1, 1], [], []>} : vector<8x8xf32>, vector<8x640xf32>, vector<8x640xf32> -> vector<8x640xf32>
    %cst_99 = arith.constant dense<0.000000e+00> : vector<8xf32>
    %168 = vector.multi_reduction <add>, %167, %cst_99 [1] : vector<8x640xf32> to vector<8xf32>
    %169 = vector.shape_cast %168 : vector<8xf32> to vector<8x1xf32>
    %cst_100 = arith.constant 0.001953125 : f32
    %170 = vector.broadcast %cst_100 : f32 to vector<8x1xf32>
    %171 = arith.mulf %169, %170 : vector<8x1xf32>
    %172 = arith.mulf %165, %165 : vector<8x640xf32>
    %cst_101 = arith.constant dense<0.000000e+00> : vector<8x640xf32>
    %173 = tpu.matmul %166, %172, %cst_101 {dimension_numbers = #tpu.dot_dimension_numbers<[1], [0], [0], [1], [0, 0, 1, 1], [], []>} : vector<8x8xf32>, vector<8x640xf32>, vector<8x640xf32> -> vector<8x640xf32>
    %cst_102 = arith.constant dense<0.000000e+00> : vector<8xf32>
    %174 = vector.multi_reduction <add>, %173, %cst_102 [1] : vector<8x640xf32> to vector<8xf32>
    %175 = vector.shape_cast %174 : vector<8xf32> to vector<8x1xf32>
    %cst_103 = arith.constant 0.001953125 : f32
    %176 = vector.broadcast %cst_103 : f32 to vector<8x1xf32>
    %177 = arith.mulf %175, %176 : vector<8x1xf32>
    %178 = arith.mulf %171, %171 : vector<8x1xf32>
    %179 = arith.subf %177, %178 : vector<8x1xf32>
    %cst_104 = arith.constant 0.000000e+00 : f32
    %180 = vector.broadcast %cst_104 : f32 to vector<8x1xf32>
    %181 = arith.maximumf %179, %180 : vector<8x1xf32>
    %cst_105 = arith.constant 9.99999974E-6 : f32
    %182 = vector.broadcast %cst_105 : f32 to vector<8x1xf32>
    %183 = arith.addf %181, %182 : vector<8x1xf32>
    %184 = math.rsqrt %183 : vector<8x1xf32>
    %185 = vector.broadcast %171 : vector<8x1xf32> to vector<8x640xf32>
    %186 = arith.subf %165, %185 : vector<8x640xf32>
    %187 = vector.broadcast %184 : vector<8x1xf32> to vector<8x640xf32>
    %188 = arith.mulf %186, %187 : vector<8x640xf32>
    %cst_106 = arith.constant 0.000000e+00 : f32
    %189 = vector.broadcast %cst_106 : f32 to vector<8x640xf32>
    %190 = arith.maximumf %188, %189 : vector<8x640xf32>
    %c0_107 = arith.constant 0 : index
    %c0_108 = arith.constant 0 : index
    %191 = vector.load %arg19[%c0_107, %c0_108] : memref<8x640xf32, #tpu.memory_space<vmem>>, vector<8x640xf32>
    %192 = arith.mulf %190, %191 : vector<8x640xf32>
    %c0_109 = arith.constant 0 : index
    %c128_110 = arith.constant 128 : index
    %193 = vector.load %arg18[%c0_109, %c128_110] : memref<8x896xf32, #tpu.memory_space<vmem>>, vector<8x640xf32>
    tpu.vector_store %arg18[%c0_109, %c128_110], %192 {strides = array<i32>} : memref<8x896xf32, #tpu.memory_space<vmem>>, vector<8x640xf32>,
    %c0_111 = arith.constant 0 : index
    %c0_112 = arith.constant 0 : index
    %194 = vector.load %arg7[%c0_111, %c0_112] : memref<8x9xf32, #tpu.memory_space<vmem>>, vector<8x9xf32>
    %195 = vector.extract_strided_slice %194 {offsets = [0, 0], sizes = [8, 1], strides = [1, 1]} : vector<8x9xf32> to vector<8x1xf32>
    %c0_113 = arith.constant 0 : index
    %c103_114 = arith.constant 103 : index
    %196 = vector.load %arg18[%c0_113, %c103_114] : memref<8x896xf32, #tpu.memory_space<vmem>>, vector<8x640xf32>
    %197 = vector.broadcast %195 : vector<8x1xf32> to vector<8x640xf32>
    %198 = arith.mulf %197, %196 : vector<8x640xf32>
    %199 = vector.extract_strided_slice %194 {offsets = [0, 1], sizes = [8, 1], strides = [1, 1]} : vector<8x9xf32> to vector<8x1xf32>
    %c0_115 = arith.constant 0 : index
    %c104_116 = arith.constant 104 : index
    %200 = vector.load %arg18[%c0_115, %c104_116] : memref<8x896xf32, #tpu.memory_space<vmem>>, vector<8x640xf32>
    %201 = vector.broadcast %199 : vector<8x1xf32> to vector<8x640xf32>
    %202 = arith.mulf %201, %200 : vector<8x640xf32>
    %203 = arith.addf %198, %202 : vector<8x640xf32>
    %204 = vector.extract_strided_slice %194 {offsets = [0, 2], sizes = [8, 1], strides = [1, 1]} : vector<8x9xf32> to vector<8x1xf32>
    %c0_117 = arith.constant 0 : index
    %c105_118 = arith.constant 105 : index
    %205 = vector.load %arg18[%c0_117, %c105_118] : memref<8x896xf32, #tpu.memory_space<vmem>>, vector<8x640xf32>
    %206 = vector.broadcast %204 : vector<8x1xf32> to vector<8x640xf32>
    %207 = arith.mulf %206, %205 : vector<8x640xf32>
    %208 = arith.addf %203, %207 : vector<8x640xf32>
    %209 = vector.extract_strided_slice %194 {offsets = [0, 3], sizes = [8, 1], strides = [1, 1]} : vector<8x9xf32> to vector<8x1xf32>
    %c0_119 = arith.constant 0 : index
    %c127_120 = arith.constant 127 : index
    %210 = vector.load %arg18[%c0_119, %c127_120] : memref<8x896xf32, #tpu.memory_space<vmem>>, vector<8x640xf32>
    %211 = vector.broadcast %209 : vector<8x1xf32> to vector<8x640xf32>
    %212 = arith.mulf %211, %210 : vector<8x640xf32>
    %213 = arith.addf %208, %212 : vector<8x640xf32>
    %214 = vector.extract_strided_slice %194 {offsets = [0, 4], sizes = [8, 1], strides = [1, 1]} : vector<8x9xf32> to vector<8x1xf32>
    %c0_121 = arith.constant 0 : index
    %c128_122 = arith.constant 128 : index
    %215 = vector.load %arg18[%c0_121, %c128_122] : memref<8x896xf32, #tpu.memory_space<vmem>>, vector<8x640xf32>
    %216 = vector.broadcast %214 : vector<8x1xf32> to vector<8x640xf32>
    %217 = arith.mulf %216, %215 : vector<8x640xf32>
    %218 = arith.addf %213, %217 : vector<8x640xf32>
    %219 = vector.extract_strided_slice %194 {offsets = [0, 5], sizes = [8, 1], strides = [1, 1]} : vector<8x9xf32> to vector<8x1xf32>
    %c0_123 = arith.constant 0 : index
    %c129_124 = arith.constant 129 : index
    %220 = vector.load %arg18[%c0_123, %c129_124] : memref<8x896xf32, #tpu.memory_space<vmem>>, vector<8x640xf32>
    %221 = vector.broadcast %219 : vector<8x1xf32> to vector<8x640xf32>
    %222 = arith.mulf %221, %220 : vector<8x640xf32>
    %223 = arith.addf %218, %222 : vector<8x640xf32>
    %224 = vector.extract_strided_slice %194 {offsets = [0, 6], sizes = [8, 1], strides = [1, 1]} : vector<8x9xf32> to vector<8x1xf32>
    %c0_125 = arith.constant 0 : index
    %c151_126 = arith.constant 151 : index
    %225 = vector.load %arg18[%c0_125, %c151_126] : memref<8x896xf32, #tpu.memory_space<vmem>>, vector<8x640xf32>
    %226 = vector.broadcast %224 : vector<8x1xf32> to vector<8x640xf32>
    %227 = arith.mulf %226, %225 : vector<8x640xf32>
    %228 = arith.addf %223, %227 : vector<8x640xf32>
    %229 = vector.extract_strided_slice %194 {offsets = [0, 7], sizes = [8, 1], strides = [1, 1]} : vector<8x9xf32> to vector<8x1xf32>
    %c0_127 = arith.constant 0 : index
    %c152_128 = arith.constant 152 : index
    %230 = vector.load %arg18[%c0_127, %c152_128] : memref<8x896xf32, #tpu.memory_space<vmem>>, vector<8x640xf32>
    %231 = vector.broadcast %229 : vector<8x1xf32> to vector<8x640xf32>
    %232 = arith.mulf %231, %230 : vector<8x640xf32>
    %233 = arith.addf %228, %232 : vector<8x640xf32>
    %234 = vector.extract_strided_slice %194 {offsets = [0, 8], sizes = [8, 1], strides = [1, 1]} : vector<8x9xf32> to vector<8x1xf32>
    %c0_129 = arith.constant 0 : index
    %c153_130 = arith.constant 153 : index
    %235 = vector.load %arg18[%c0_129, %c153_130] : memref<8x896xf32, #tpu.memory_space<vmem>>, vector<8x640xf32>
    %236 = vector.broadcast %234 : vector<8x1xf32> to vector<8x640xf32>
    %237 = arith.mulf %236, %235 : vector<8x640xf32>
    %238 = arith.addf %233, %237 : vector<8x640xf32>
    %c0_131 = arith.constant 0 : index
    %c0_132 = arith.constant 0 : index
    %239 = vector.load %arg19[%c0_131, %c0_132] : memref<8x640xf32, #tpu.memory_space<vmem>>, vector<8x640xf32>
    %240 = arith.mulf %238, %239 : vector<8x640xf32>
    %c0_133 = arith.constant 0 : index
    %c0_134 = arith.constant 0 : index
    %241 = vector.load %arg8[%c0_133, %c0_134] : memref<8x8xf32, #tpu.memory_space<vmem>>, vector<8x8xf32>
    %cst_135 = arith.constant dense<0.000000e+00> : vector<8x640xf32>
    %242 = tpu.matmul %241, %240, %cst_135 {dimension_numbers = #tpu.dot_dimension_numbers<[1], [0], [0], [1], [0, 0, 1, 1], [], []>} : vector<8x8xf32>, vector<8x640xf32>, vector<8x640xf32> -> vector<8x640xf32>
    %c0_136 = arith.constant 0 : index
    %c0_137 = arith.constant 0 : index
    %243 = vector.load %arg4[%c0_136, %c0_137] : memref<8x8xf32, #tpu.memory_space<vmem>>, vector<8x8xf32>
    %cst_138 = arith.constant dense<0.000000e+00> : vector<8x640xf32>
    %244 = tpu.matmul %243, %242, %cst_138 {dimension_numbers = #tpu.dot_dimension_numbers<[1], [0], [0], [1], [0, 0, 1, 1], [], []>} : vector<8x8xf32>, vector<8x640xf32>, vector<8x640xf32> -> vector<8x640xf32>
    %cst_139 = arith.constant dense<0.000000e+00> : vector<8xf32>
    %245 = vector.multi_reduction <add>, %244, %cst_139 [1] : vector<8x640xf32> to vector<8xf32>
    %246 = vector.shape_cast %245 : vector<8xf32> to vector<8x1xf32>
    %cst_140 = arith.constant 0.001953125 : f32
    %247 = vector.broadcast %cst_140 : f32 to vector<8x1xf32>
    %248 = arith.mulf %246, %247 : vector<8x1xf32>
    %249 = arith.mulf %242, %242 : vector<8x640xf32>
    %cst_141 = arith.constant dense<0.000000e+00> : vector<8x640xf32>
    %250 = tpu.matmul %243, %249, %cst_141 {dimension_numbers = #tpu.dot_dimension_numbers<[1], [0], [0], [1], [0, 0, 1, 1], [], []>} : vector<8x8xf32>, vector<8x640xf32>, vector<8x640xf32> -> vector<8x640xf32>
    %cst_142 = arith.constant dense<0.000000e+00> : vector<8xf32>
    %251 = vector.multi_reduction <add>, %250, %cst_142 [1] : vector<8x640xf32> to vector<8xf32>
    %252 = vector.shape_cast %251 : vector<8xf32> to vector<8x1xf32>
    %cst_143 = arith.constant 0.001953125 : f32
    %253 = vector.broadcast %cst_143 : f32 to vector<8x1xf32>
    %254 = arith.mulf %252, %253 : vector<8x1xf32>
    %255 = arith.mulf %248, %248 : vector<8x1xf32>
    %256 = arith.subf %254, %255 : vector<8x1xf32>
    %cst_144 = arith.constant 0.000000e+00 : f32
    %257 = vector.broadcast %cst_144 : f32 to vector<8x1xf32>
    %258 = arith.maximumf %256, %257 : vector<8x1xf32>
    %cst_145 = arith.constant 9.99999974E-6 : f32
    %259 = vector.broadcast %cst_145 : f32 to vector<8x1xf32>
    %260 = arith.addf %258, %259 : vector<8x1xf32>
    %261 = math.rsqrt %260 : vector<8x1xf32>
    %262 = vector.broadcast %115 : f32 to vector<8x1xf32>
    %263 = arith.mulf %261, %262 : vector<8x1xf32>
    %264 = vector.broadcast %248 : vector<8x1xf32> to vector<8x640xf32>
    %265 = arith.subf %242, %264 : vector<8x640xf32>
    %266 = vector.broadcast %263 : vector<8x1xf32> to vector<8x640xf32>
    %267 = arith.mulf %265, %266 : vector<8x640xf32>
    %268 = arith.addf %114, %267 : vector<8x640xf32>
    %c5 = arith.constant 5 : index
    %269 = memref.load %arg0[%c5] : memref<8xf32, #tpu.memory_space<smem>>
    %c0_146 = arith.constant 0 : index
    %c128_147 = arith.constant 128 : index
    %270 = vector.load %arg18[%c0_146, %c128_147] : memref<8x896xf32, #tpu.memory_space<vmem>>, vector<8x640xf32>
    tpu.vector_store %arg18[%c0_146, %c128_147], %10 {strides = array<i32>} : memref<8x896xf32, #tpu.memory_space<vmem>>, vector<8x640xf32>,
    %c0_148 = arith.constant 0 : index
    %c0_149 = arith.constant 0 : index
    %271 = vector.load %arg9[%c0_148, %c0_149] : memref<8x25xf32, #tpu.memory_space<vmem>>, vector<8x25xf32>
    %272 = vector.extract_strided_slice %271 {offsets = [0, 0], sizes = [8, 1], strides = [1, 1]} : vector<8x25xf32> to vector<8x1xf32>
    %c0_150 = arith.constant 0 : index
    %c78 = arith.constant 78 : index
    %273 = vector.load %arg18[%c0_150, %c78] : memref<8x896xf32, #tpu.memory_space<vmem>>, vector<8x640xf32>
    %274 = vector.broadcast %272 : vector<8x1xf32> to vector<8x640xf32>
    %275 = arith.mulf %274, %273 : vector<8x640xf32>
    %276 = vector.extract_strided_slice %271 {offsets = [0, 1], sizes = [8, 1], strides = [1, 1]} : vector<8x25xf32> to vector<8x1xf32>
    %c0_151 = arith.constant 0 : index
    %c79 = arith.constant 79 : index
    %277 = vector.load %arg18[%c0_151, %c79] : memref<8x896xf32, #tpu.memory_space<vmem>>, vector<8x640xf32>
    %278 = vector.broadcast %276 : vector<8x1xf32> to vector<8x640xf32>
    %279 = arith.mulf %278, %277 : vector<8x640xf32>
    %280 = arith.addf %275, %279 : vector<8x640xf32>
    %281 = vector.extract_strided_slice %271 {offsets = [0, 2], sizes = [8, 1], strides = [1, 1]} : vector<8x25xf32> to vector<8x1xf32>
    %c0_152 = arith.constant 0 : index
    %c80 = arith.constant 80 : index
    %282 = vector.load %arg18[%c0_152, %c80] : memref<8x896xf32, #tpu.memory_space<vmem>>, vector<8x640xf32>
    %283 = vector.broadcast %281 : vector<8x1xf32> to vector<8x640xf32>
    %284 = arith.mulf %283, %282 : vector<8x640xf32>
    %285 = arith.addf %280, %284 : vector<8x640xf32>
    %286 = vector.extract_strided_slice %271 {offsets = [0, 3], sizes = [8, 1], strides = [1, 1]} : vector<8x25xf32> to vector<8x1xf32>
    %c0_153 = arith.constant 0 : index
    %c81 = arith.constant 81 : index
    %287 = vector.load %arg18[%c0_153, %c81] : memref<8x896xf32, #tpu.memory_space<vmem>>, vector<8x640xf32>
    %288 = vector.broadcast %286 : vector<8x1xf32> to vector<8x640xf32>
    %289 = arith.mulf %288, %287 : vector<8x640xf32>
    %290 = arith.addf %285, %289 : vector<8x640xf32>
    %291 = vector.extract_strided_slice %271 {offsets = [0, 4], sizes = [8, 1], strides = [1, 1]} : vector<8x25xf32> to vector<8x1xf32>
    %c0_154 = arith.constant 0 : index
    %c82 = arith.constant 82 : index
    %292 = vector.load %arg18[%c0_154, %c82] : memref<8x896xf32, #tpu.memory_space<vmem>>, vector<8x640xf32>
    %293 = vector.broadcast %291 : vector<8x1xf32> to vector<8x640xf32>
    %294 = arith.mulf %293, %292 : vector<8x640xf32>
    %295 = arith.addf %290, %294 : vector<8x640xf32>
    %296 = vector.extract_strided_slice %271 {offsets = [0, 5], sizes = [8, 1], strides = [1, 1]} : vector<8x25xf32> to vector<8x1xf32>
    %c0_155 = arith.constant 0 : index
    %c102 = arith.constant 102 : index
    %297 = vector.load %arg18[%c0_155, %c102] : memref<8x896xf32, #tpu.memory_space<vmem>>, vector<8x640xf32>
    %298 = vector.broadcast %296 : vector<8x1xf32> to vector<8x640xf32>
    %299 = arith.mulf %298, %297 : vector<8x640xf32>
    %300 = arith.addf %295, %299 : vector<8x640xf32>
    %301 = vector.extract_strided_slice %271 {offsets = [0, 6], sizes = [8, 1], strides = [1, 1]} : vector<8x25xf32> to vector<8x1xf32>
    %c0_156 = arith.constant 0 : index
    %c103_157 = arith.constant 103 : index
    %302 = vector.load %arg18[%c0_156, %c103_157] : memref<8x896xf32, #tpu.memory_space<vmem>>, vector<8x640xf32>
    %303 = vector.broadcast %301 : vector<8x1xf32> to vector<8x640xf32>
    %304 = arith.mulf %303, %302 : vector<8x640xf32>
    %305 = arith.addf %300, %304 : vector<8x640xf32>
    %306 = vector.extract_strided_slice %271 {offsets = [0, 7], sizes = [8, 1], strides = [1, 1]} : vector<8x25xf32> to vector<8x1xf32>
    %c0_158 = arith.constant 0 : index
    %c104_159 = arith.constant 104 : index
    %307 = vector.load %arg18[%c0_158, %c104_159] : memref<8x896xf32, #tpu.memory_space<vmem>>, vector<8x640xf32>
    %308 = vector.broadcast %306 : vector<8x1xf32> to vector<8x640xf32>
    %309 = arith.mulf %308, %307 : vector<8x640xf32>
    %310 = arith.addf %305, %309 : vector<8x640xf32>
    %311 = vector.extract_strided_slice %271 {offsets = [0, 8], sizes = [8, 1], strides = [1, 1]} : vector<8x25xf32> to vector<8x1xf32>
    %c0_160 = arith.constant 0 : index
    %c105_161 = arith.constant 105 : index
    %312 = vector.load %arg18[%c0_160, %c105_161] : memref<8x896xf32, #tpu.memory_space<vmem>>, vector<8x640xf32>
    %313 = vector.broadcast %311 : vector<8x1xf32> to vector<8x640xf32>
    %314 = arith.mulf %313, %312 : vector<8x640xf32>
    %315 = arith.addf %310, %314 : vector<8x640xf32>
    %316 = vector.extract_strided_slice %271 {offsets = [0, 9], sizes = [8, 1], strides = [1, 1]} : vector<8x25xf32> to vector<8x1xf32>
    %c0_162 = arith.constant 0 : index
    %c106 = arith.constant 106 : index
    %317 = vector.load %arg18[%c0_162, %c106] : memref<8x896xf32, #tpu.memory_space<vmem>>, vector<8x640xf32>
    %318 = vector.broadcast %316 : vector<8x1xf32> to vector<8x640xf32>
    %319 = arith.mulf %318, %317 : vector<8x640xf32>
    %320 = arith.addf %315, %319 : vector<8x640xf32>
    %321 = vector.extract_strided_slice %271 {offsets = [0, 10], sizes = [8, 1], strides = [1, 1]} : vector<8x25xf32> to vector<8x1xf32>
    %c0_163 = arith.constant 0 : index
    %c126 = arith.constant 126 : index
    %322 = vector.load %arg18[%c0_163, %c126] : memref<8x896xf32, #tpu.memory_space<vmem>>, vector<8x640xf32>
    %323 = vector.broadcast %321 : vector<8x1xf32> to vector<8x640xf32>
    %324 = arith.mulf %323, %322 : vector<8x640xf32>
    %325 = arith.addf %320, %324 : vector<8x640xf32>
    %326 = vector.extract_strided_slice %271 {offsets = [0, 11], sizes = [8, 1], strides = [1, 1]} : vector<8x25xf32> to vector<8x1xf32>
    %c0_164 = arith.constant 0 : index
    %c127_165 = arith.constant 127 : index
    %327 = vector.load %arg18[%c0_164, %c127_165] : memref<8x896xf32, #tpu.memory_space<vmem>>, vector<8x640xf32>
    %328 = vector.broadcast %326 : vector<8x1xf32> to vector<8x640xf32>
    %329 = arith.mulf %328, %327 : vector<8x640xf32>
    %330 = arith.addf %325, %329 : vector<8x640xf32>
    %331 = vector.extract_strided_slice %271 {offsets = [0, 12], sizes = [8, 1], strides = [1, 1]} : vector<8x25xf32> to vector<8x1xf32>
    %c0_166 = arith.constant 0 : index
    %c128_167 = arith.constant 128 : index
    %332 = vector.load %arg18[%c0_166, %c128_167] : memref<8x896xf32, #tpu.memory_space<vmem>>, vector<8x640xf32>
    %333 = vector.broadcast %331 : vector<8x1xf32> to vector<8x640xf32>
    %334 = arith.mulf %333, %332 : vector<8x640xf32>
    %335 = arith.addf %330, %334 : vector<8x640xf32>
    %336 = vector.extract_strided_slice %271 {offsets = [0, 13], sizes = [8, 1], strides = [1, 1]} : vector<8x25xf32> to vector<8x1xf32>
    %c0_168 = arith.constant 0 : index
    %c129_169 = arith.constant 129 : index
    %337 = vector.load %arg18[%c0_168, %c129_169] : memref<8x896xf32, #tpu.memory_space<vmem>>, vector<8x640xf32>
    %338 = vector.broadcast %336 : vector<8x1xf32> to vector<8x640xf32>
    %339 = arith.mulf %338, %337 : vector<8x640xf32>
    %340 = arith.addf %335, %339 : vector<8x640xf32>
    %341 = vector.extract_strided_slice %271 {offsets = [0, 14], sizes = [8, 1], strides = [1, 1]} : vector<8x25xf32> to vector<8x1xf32>
    %c0_170 = arith.constant 0 : index
    %c130 = arith.constant 130 : index
    %342 = vector.load %arg18[%c0_170, %c130] : memref<8x896xf32, #tpu.memory_space<vmem>>, vector<8x640xf32>
    %343 = vector.broadcast %341 : vector<8x1xf32> to vector<8x640xf32>
    %344 = arith.mulf %343, %342 : vector<8x640xf32>
    %345 = arith.addf %340, %344 : vector<8x640xf32>
    %346 = vector.extract_strided_slice %271 {offsets = [0, 15], sizes = [8, 1], strides = [1, 1]} : vector<8x25xf32> to vector<8x1xf32>
    %c0_171 = arith.constant 0 : index
    %c150 = arith.constant 150 : index
    %347 = vector.load %arg18[%c0_171, %c150] : memref<8x896xf32, #tpu.memory_space<vmem>>, vector<8x640xf32>
    %348 = vector.broadcast %346 : vector<8x1xf32> to vector<8x640xf32>
    %349 = arith.mulf %348, %347 : vector<8x640xf32>
    %350 = arith.addf %345, %349 : vector<8x640xf32>
    %351 = vector.extract_strided_slice %271 {offsets = [0, 16], sizes = [8, 1], strides = [1, 1]} : vector<8x25xf32> to vector<8x1xf32>
    %c0_172 = arith.constant 0 : index
    %c151_173 = arith.constant 151 : index
    %352 = vector.load %arg18[%c0_172, %c151_173] : memref<8x896xf32, #tpu.memory_space<vmem>>, vector<8x640xf32>
    %353 = vector.broadcast %351 : vector<8x1xf32> to vector<8x640xf32>
    %354 = arith.mulf %353, %352 : vector<8x640xf32>
    %355 = arith.addf %350, %354 : vector<8x640xf32>
    %356 = vector.extract_strided_slice %271 {offsets = [0, 17], sizes = [8, 1], strides = [1, 1]} : vector<8x25xf32> to vector<8x1xf32>
    %c0_174 = arith.constant 0 : index
    %c152_175 = arith.constant 152 : index
    %357 = vector.load %arg18[%c0_174, %c152_175] : memref<8x896xf32, #tpu.memory_space<vmem>>, vector<8x640xf32>
    %358 = vector.broadcast %356 : vector<8x1xf32> to vector<8x640xf32>
    %359 = arith.mulf %358, %357 : vector<8x640xf32>
    %360 = arith.addf %355, %359 : vector<8x640xf32>
    %361 = vector.extract_strided_slice %271 {offsets = [0, 18], sizes = [8, 1], strides = [1, 1]} : vector<8x25xf32> to vector<8x1xf32>
    %c0_176 = arith.constant 0 : index
    %c153_177 = arith.constant 153 : index
    %362 = vector.load %arg18[%c0_176, %c153_177] : memref<8x896xf32, #tpu.memory_space<vmem>>, vector<8x640xf32>
    %363 = vector.broadcast %361 : vector<8x1xf32> to vector<8x640xf32>
    %364 = arith.mulf %363, %362 : vector<8x640xf32>
    %365 = arith.addf %360, %364 : vector<8x640xf32>
    %366 = vector.extract_strided_slice %271 {offsets = [0, 19], sizes = [8, 1], strides = [1, 1]} : vector<8x25xf32> to vector<8x1xf32>
    %c0_178 = arith.constant 0 : index
    %c154 = arith.constant 154 : index
    %367 = vector.load %arg18[%c0_178, %c154] : memref<8x896xf32, #tpu.memory_space<vmem>>, vector<8x640xf32>
    %368 = vector.broadcast %366 : vector<8x1xf32> to vector<8x640xf32>
    %369 = arith.mulf %368, %367 : vector<8x640xf32>
    %370 = arith.addf %365, %369 : vector<8x640xf32>
    %371 = vector.extract_strided_slice %271 {offsets = [0, 20], sizes = [8, 1], strides = [1, 1]} : vector<8x25xf32> to vector<8x1xf32>
    %c0_179 = arith.constant 0 : index
    %c174 = arith.constant 174 : index
    %372 = vector.load %arg18[%c0_179, %c174] : memref<8x896xf32, #tpu.memory_space<vmem>>, vector<8x640xf32>
    %373 = vector.broadcast %371 : vector<8x1xf32> to vector<8x640xf32>
    %374 = arith.mulf %373, %372 : vector<8x640xf32>
    %375 = arith.addf %370, %374 : vector<8x640xf32>
    %376 = vector.extract_strided_slice %271 {offsets = [0, 21], sizes = [8, 1], strides = [1, 1]} : vector<8x25xf32> to vector<8x1xf32>
    %c0_180 = arith.constant 0 : index
    %c175 = arith.constant 175 : index
    %377 = vector.load %arg18[%c0_180, %c175] : memref<8x896xf32, #tpu.memory_space<vmem>>, vector<8x640xf32>
    %378 = vector.broadcast %376 : vector<8x1xf32> to vector<8x640xf32>
    %379 = arith.mulf %378, %377 : vector<8x640xf32>
    %380 = arith.addf %375, %379 : vector<8x640xf32>
    %381 = vector.extract_strided_slice %271 {offsets = [0, 22], sizes = [8, 1], strides = [1, 1]} : vector<8x25xf32> to vector<8x1xf32>
    %c0_181 = arith.constant 0 : index
    %c176 = arith.constant 176 : index
    %382 = vector.load %arg18[%c0_181, %c176] : memref<8x896xf32, #tpu.memory_space<vmem>>, vector<8x640xf32>
    %383 = vector.broadcast %381 : vector<8x1xf32> to vector<8x640xf32>
    %384 = arith.mulf %383, %382 : vector<8x640xf32>
    %385 = arith.addf %380, %384 : vector<8x640xf32>
    %386 = vector.extract_strided_slice %271 {offsets = [0, 23], sizes = [8, 1], strides = [1, 1]} : vector<8x25xf32> to vector<8x1xf32>
    %c0_182 = arith.constant 0 : index
    %c177 = arith.constant 177 : index
    %387 = vector.load %arg18[%c0_182, %c177] : memref<8x896xf32, #tpu.memory_space<vmem>>, vector<8x640xf32>
    %388 = vector.broadcast %386 : vector<8x1xf32> to vector<8x640xf32>
    %389 = arith.mulf %388, %387 : vector<8x640xf32>
    %390 = arith.addf %385, %389 : vector<8x640xf32>
    %391 = vector.extract_strided_slice %271 {offsets = [0, 24], sizes = [8, 1], strides = [1, 1]} : vector<8x25xf32> to vector<8x1xf32>
    %c0_183 = arith.constant 0 : index
    %c178 = arith.constant 178 : index
    %392 = vector.load %arg18[%c0_183, %c178] : memref<8x896xf32, #tpu.memory_space<vmem>>, vector<8x640xf32>
    %393 = vector.broadcast %391 : vector<8x1xf32> to vector<8x640xf32>
    %394 = arith.mulf %393, %392 : vector<8x640xf32>
    %395 = arith.addf %390, %394 : vector<8x640xf32>
    %c0_184 = arith.constant 0 : index
    %c0_185 = arith.constant 0 : index
    %396 = vector.load %arg19[%c0_184, %c0_185] : memref<8x640xf32, #tpu.memory_space<vmem>>, vector<8x640xf32>
    %397 = arith.mulf %395, %396 : vector<8x640xf32>
    %c0_186 = arith.constant 0 : index
    %c0_187 = arith.constant 0 : index
    %398 = vector.load %arg10[%c0_186, %c0_187] : memref<8x8xf32, #tpu.memory_space<vmem>>, vector<8x8xf32>
    %cst_188 = arith.constant dense<0.000000e+00> : vector<8x640xf32>
    %399 = tpu.matmul %398, %397, %cst_188 {dimension_numbers = #tpu.dot_dimension_numbers<[1], [0], [0], [1], [0, 0, 1, 1], [], []>} : vector<8x8xf32>, vector<8x640xf32>, vector<8x640xf32> -> vector<8x640xf32>
    %c0_189 = arith.constant 0 : index
    %c0_190 = arith.constant 0 : index
    %400 = vector.load %arg4[%c0_189, %c0_190] : memref<8x8xf32, #tpu.memory_space<vmem>>, vector<8x8xf32>
    %cst_191 = arith.constant dense<0.000000e+00> : vector<8x640xf32>
    %401 = tpu.matmul %400, %399, %cst_191 {dimension_numbers = #tpu.dot_dimension_numbers<[1], [0], [0], [1], [0, 0, 1, 1], [], []>} : vector<8x8xf32>, vector<8x640xf32>, vector<8x640xf32> -> vector<8x640xf32>
    %cst_192 = arith.constant dense<0.000000e+00> : vector<8xf32>
    %402 = vector.multi_reduction <add>, %401, %cst_192 [1] : vector<8x640xf32> to vector<8xf32>
    %403 = vector.shape_cast %402 : vector<8xf32> to vector<8x1xf32>
    %cst_193 = arith.constant 0.001953125 : f32
    %404 = vector.broadcast %cst_193 : f32 to vector<8x1xf32>
    %405 = arith.mulf %403, %404 : vector<8x1xf32>
    %406 = arith.mulf %399, %399 : vector<8x640xf32>
    %cst_194 = arith.constant dense<0.000000e+00> : vector<8x640xf32>
    %407 = tpu.matmul %400, %406, %cst_194 {dimension_numbers = #tpu.dot_dimension_numbers<[1], [0], [0], [1], [0, 0, 1, 1], [], []>} : vector<8x8xf32>, vector<8x640xf32>, vector<8x640xf32> -> vector<8x640xf32>
    %cst_195 = arith.constant dense<0.000000e+00> : vector<8xf32>
    %408 = vector.multi_reduction <add>, %407, %cst_195 [1] : vector<8x640xf32> to vector<8xf32>
    %409 = vector.shape_cast %408 : vector<8xf32> to vector<8x1xf32>
    %cst_196 = arith.constant 0.001953125 : f32
    %410 = vector.broadcast %cst_196 : f32 to vector<8x1xf32>
    %411 = arith.mulf %409, %410 : vector<8x1xf32>
    %412 = arith.mulf %405, %405 : vector<8x1xf32>
    %413 = arith.subf %411, %412 : vector<8x1xf32>
    %cst_197 = arith.constant 0.000000e+00 : f32
    %414 = vector.broadcast %cst_197 : f32 to vector<8x1xf32>
    %415 = arith.maximumf %413, %414 : vector<8x1xf32>
    %cst_198 = arith.constant 9.99999974E-6 : f32
    %416 = vector.broadcast %cst_198 : f32 to vector<8x1xf32>
    %417 = arith.addf %415, %416 : vector<8x1xf32>
    %418 = math.rsqrt %417 : vector<8x1xf32>
    %419 = vector.broadcast %405 : vector<8x1xf32> to vector<8x640xf32>
    %420 = arith.subf %399, %419 : vector<8x640xf32>
    %421 = vector.broadcast %418 : vector<8x1xf32> to vector<8x640xf32>
    %422 = arith.mulf %420, %421 : vector<8x640xf32>
    %cst_199 = arith.constant 0.000000e+00 : f32
    %423 = vector.broadcast %cst_199 : f32 to vector<8x640xf32>
    %424 = arith.maximumf %422, %423 : vector<8x640xf32>
    %c0_200 = arith.constant 0 : index
    %c0_201 = arith.constant 0 : index
    %425 = vector.load %arg19[%c0_200, %c0_201] : memref<8x640xf32, #tpu.memory_space<vmem>>, vector<8x640xf32>
    %426 = arith.mulf %424, %425 : vector<8x640xf32>
    %c0_202 = arith.constant 0 : index
    %c128_203 = arith.constant 128 : index
    %427 = vector.load %arg18[%c0_202, %c128_203] : memref<8x896xf32, #tpu.memory_space<vmem>>, vector<8x640xf32>
    tpu.vector_store %arg18[%c0_202, %c128_203], %426 {strides = array<i32>} : memref<8x896xf32, #tpu.memory_space<vmem>>, vector<8x640xf32>,
    %c0_204 = arith.constant 0 : index
    %c0_205 = arith.constant 0 : index
    %428 = vector.load %arg11[%c0_204, %c0_205] : memref<8x25xf32, #tpu.memory_space<vmem>>, vector<8x25xf32>
    %429 = vector.extract_strided_slice %428 {offsets = [0, 0], sizes = [8, 1], strides = [1, 1]} : vector<8x25xf32> to vector<8x1xf32>
    %c0_206 = arith.constant 0 : index
    %c78_207 = arith.constant 78 : index
    %430 = vector.load %arg18[%c0_206, %c78_207] : memref<8x896xf32, #tpu.memory_space<vmem>>, vector<8x640xf32>
    %431 = vector.broadcast %429 : vector<8x1xf32> to vector<8x640xf32>
    %432 = arith.mulf %431, %430 : vector<8x640xf32>
    %433 = vector.extract_strided_slice %428 {offsets = [0, 1], sizes = [8, 1], strides = [1, 1]} : vector<8x25xf32> to vector<8x1xf32>
    %c0_208 = arith.constant 0 : index
    %c79_209 = arith.constant 79 : index
    %434 = vector.load %arg18[%c0_208, %c79_209] : memref<8x896xf32, #tpu.memory_space<vmem>>, vector<8x640xf32>
    %435 = vector.broadcast %433 : vector<8x1xf32> to vector<8x640xf32>
    %436 = arith.mulf %435, %434 : vector<8x640xf32>
    %437 = arith.addf %432, %436 : vector<8x640xf32>
    %438 = vector.extract_strided_slice %428 {offsets = [0, 2], sizes = [8, 1], strides = [1, 1]} : vector<8x25xf32> to vector<8x1xf32>
    %c0_210 = arith.constant 0 : index
    %c80_211 = arith.constant 80 : index
    %439 = vector.load %arg18[%c0_210, %c80_211] : memref<8x896xf32, #tpu.memory_space<vmem>>, vector<8x640xf32>
    %440 = vector.broadcast %438 : vector<8x1xf32> to vector<8x640xf32>
    %441 = arith.mulf %440, %439 : vector<8x640xf32>
    %442 = arith.addf %437, %441 : vector<8x640xf32>
    %443 = vector.extract_strided_slice %428 {offsets = [0, 3], sizes = [8, 1], strides = [1, 1]} : vector<8x25xf32> to vector<8x1xf32>
    %c0_212 = arith.constant 0 : index
    %c81_213 = arith.constant 81 : index
    %444 = vector.load %arg18[%c0_212, %c81_213] : memref<8x896xf32, #tpu.memory_space<vmem>>, vector<8x640xf32>
    %445 = vector.broadcast %443 : vector<8x1xf32> to vector<8x640xf32>
    %446 = arith.mulf %445, %444 : vector<8x640xf32>
    %447 = arith.addf %442, %446 : vector<8x640xf32>
    %448 = vector.extract_strided_slice %428 {offsets = [0, 4], sizes = [8, 1], strides = [1, 1]} : vector<8x25xf32> to vector<8x1xf32>
    %c0_214 = arith.constant 0 : index
    %c82_215 = arith.constant 82 : index
    %449 = vector.load %arg18[%c0_214, %c82_215] : memref<8x896xf32, #tpu.memory_space<vmem>>, vector<8x640xf32>
    %450 = vector.broadcast %448 : vector<8x1xf32> to vector<8x640xf32>
    %451 = arith.mulf %450, %449 : vector<8x640xf32>
    %452 = arith.addf %447, %451 : vector<8x640xf32>
    %453 = vector.extract_strided_slice %428 {offsets = [0, 5], sizes = [8, 1], strides = [1, 1]} : vector<8x25xf32> to vector<8x1xf32>
    %c0_216 = arith.constant 0 : index
    %c102_217 = arith.constant 102 : index
    %454 = vector.load %arg18[%c0_216, %c102_217] : memref<8x896xf32, #tpu.memory_space<vmem>>, vector<8x640xf32>
    %455 = vector.broadcast %453 : vector<8x1xf32> to vector<8x640xf32>
    %456 = arith.mulf %455, %454 : vector<8x640xf32>
    %457 = arith.addf %452, %456 : vector<8x640xf32>
    %458 = vector.extract_strided_slice %428 {offsets = [0, 6], sizes = [8, 1], strides = [1, 1]} : vector<8x25xf32> to vector<8x1xf32>
    %c0_218 = arith.constant 0 : index
    %c103_219 = arith.constant 103 : index
    %459 = vector.load %arg18[%c0_218, %c103_219] : memref<8x896xf32, #tpu.memory_space<vmem>>, vector<8x640xf32>
    %460 = vector.broadcast %458 : vector<8x1xf32> to vector<8x640xf32>
    %461 = arith.mulf %460, %459 : vector<8x640xf32>
    %462 = arith.addf %457, %461 : vector<8x640xf32>
    %463 = vector.extract_strided_slice %428 {offsets = [0, 7], sizes = [8, 1], strides = [1, 1]} : vector<8x25xf32> to vector<8x1xf32>
    %c0_220 = arith.constant 0 : index
    %c104_221 = arith.constant 104 : index
    %464 = vector.load %arg18[%c0_220, %c104_221] : memref<8x896xf32, #tpu.memory_space<vmem>>, vector<8x640xf32>
    %465 = vector.broadcast %463 : vector<8x1xf32> to vector<8x640xf32>
    %466 = arith.mulf %465, %464 : vector<8x640xf32>
    %467 = arith.addf %462, %466 : vector<8x640xf32>
    %468 = vector.extract_strided_slice %428 {offsets = [0, 8], sizes = [8, 1], strides = [1, 1]} : vector<8x25xf32> to vector<8x1xf32>
    %c0_222 = arith.constant 0 : index
    %c105_223 = arith.constant 105 : index
    %469 = vector.load %arg18[%c0_222, %c105_223] : memref<8x896xf32, #tpu.memory_space<vmem>>, vector<8x640xf32>
    %470 = vector.broadcast %468 : vector<8x1xf32> to vector<8x640xf32>
    %471 = arith.mulf %470, %469 : vector<8x640xf32>
    %472 = arith.addf %467, %471 : vector<8x640xf32>
    %473 = vector.extract_strided_slice %428 {offsets = [0, 9], sizes = [8, 1], strides = [1, 1]} : vector<8x25xf32> to vector<8x1xf32>
    %c0_224 = arith.constant 0 : index
    %c106_225 = arith.constant 106 : index
    %474 = vector.load %arg18[%c0_224, %c106_225] : memref<8x896xf32, #tpu.memory_space<vmem>>, vector<8x640xf32>
    %475 = vector.broadcast %473 : vector<8x1xf32> to vector<8x640xf32>
    %476 = arith.mulf %475, %474 : vector<8x640xf32>
    %477 = arith.addf %472, %476 : vector<8x640xf32>
    %478 = vector.extract_strided_slice %428 {offsets = [0, 10], sizes = [8, 1], strides = [1, 1]} : vector<8x25xf32> to vector<8x1xf32>
    %c0_226 = arith.constant 0 : index
    %c126_227 = arith.constant 126 : index
    %479 = vector.load %arg18[%c0_226, %c126_227] : memref<8x896xf32, #tpu.memory_space<vmem>>, vector<8x640xf32>
    %480 = vector.broadcast %478 : vector<8x1xf32> to vector<8x640xf32>
    %481 = arith.mulf %480, %479 : vector<8x640xf32>
    %482 = arith.addf %477, %481 : vector<8x640xf32>
    %483 = vector.extract_strided_slice %428 {offsets = [0, 11], sizes = [8, 1], strides = [1, 1]} : vector<8x25xf32> to vector<8x1xf32>
    %c0_228 = arith.constant 0 : index
    %c127_229 = arith.constant 127 : index
    %484 = vector.load %arg18[%c0_228, %c127_229] : memref<8x896xf32, #tpu.memory_space<vmem>>, vector<8x640xf32>
    %485 = vector.broadcast %483 : vector<8x1xf32> to vector<8x640xf32>
    %486 = arith.mulf %485, %484 : vector<8x640xf32>
    %487 = arith.addf %482, %486 : vector<8x640xf32>
    %488 = vector.extract_strided_slice %428 {offsets = [0, 12], sizes = [8, 1], strides = [1, 1]} : vector<8x25xf32> to vector<8x1xf32>
    %c0_230 = arith.constant 0 : index
    %c128_231 = arith.constant 128 : index
    %489 = vector.load %arg18[%c0_230, %c128_231] : memref<8x896xf32, #tpu.memory_space<vmem>>, vector<8x640xf32>
    %490 = vector.broadcast %488 : vector<8x1xf32> to vector<8x640xf32>
    %491 = arith.mulf %490, %489 : vector<8x640xf32>
    %492 = arith.addf %487, %491 : vector<8x640xf32>
    %493 = vector.extract_strided_slice %428 {offsets = [0, 13], sizes = [8, 1], strides = [1, 1]} : vector<8x25xf32> to vector<8x1xf32>
    %c0_232 = arith.constant 0 : index
    %c129_233 = arith.constant 129 : index
    %494 = vector.load %arg18[%c0_232, %c129_233] : memref<8x896xf32, #tpu.memory_space<vmem>>, vector<8x640xf32>
    %495 = vector.broadcast %493 : vector<8x1xf32> to vector<8x640xf32>
    %496 = arith.mulf %495, %494 : vector<8x640xf32>
    %497 = arith.addf %492, %496 : vector<8x640xf32>
    %498 = vector.extract_strided_slice %428 {offsets = [0, 14], sizes = [8, 1], strides = [1, 1]} : vector<8x25xf32> to vector<8x1xf32>
    %c0_234 = arith.constant 0 : index
    %c130_235 = arith.constant 130 : index
    %499 = vector.load %arg18[%c0_234, %c130_235] : memref<8x896xf32, #tpu.memory_space<vmem>>, vector<8x640xf32>
    %500 = vector.broadcast %498 : vector<8x1xf32> to vector<8x640xf32>
    %501 = arith.mulf %500, %499 : vector<8x640xf32>
    %502 = arith.addf %497, %501 : vector<8x640xf32>
    %503 = vector.extract_strided_slice %428 {offsets = [0, 15], sizes = [8, 1], strides = [1, 1]} : vector<8x25xf32> to vector<8x1xf32>
    %c0_236 = arith.constant 0 : index
    %c150_237 = arith.constant 150 : index
    %504 = vector.load %arg18[%c0_236, %c150_237] : memref<8x896xf32, #tpu.memory_space<vmem>>, vector<8x640xf32>
    %505 = vector.broadcast %503 : vector<8x1xf32> to vector<8x640xf32>
    %506 = arith.mulf %505, %504 : vector<8x640xf32>
    %507 = arith.addf %502, %506 : vector<8x640xf32>
    %508 = vector.extract_strided_slice %428 {offsets = [0, 16], sizes = [8, 1], strides = [1, 1]} : vector<8x25xf32> to vector<8x1xf32>
    %c0_238 = arith.constant 0 : index
    %c151_239 = arith.constant 151 : index
    %509 = vector.load %arg18[%c0_238, %c151_239] : memref<8x896xf32, #tpu.memory_space<vmem>>, vector<8x640xf32>
    %510 = vector.broadcast %508 : vector<8x1xf32> to vector<8x640xf32>
    %511 = arith.mulf %510, %509 : vector<8x640xf32>
    %512 = arith.addf %507, %511 : vector<8x640xf32>
    %513 = vector.extract_strided_slice %428 {offsets = [0, 17], sizes = [8, 1], strides = [1, 1]} : vector<8x25xf32> to vector<8x1xf32>
    %c0_240 = arith.constant 0 : index
    %c152_241 = arith.constant 152 : index
    %514 = vector.load %arg18[%c0_240, %c152_241] : memref<8x896xf32, #tpu.memory_space<vmem>>, vector<8x640xf32>
    %515 = vector.broadcast %513 : vector<8x1xf32> to vector<8x640xf32>
    %516 = arith.mulf %515, %514 : vector<8x640xf32>
    %517 = arith.addf %512, %516 : vector<8x640xf32>
    %518 = vector.extract_strided_slice %428 {offsets = [0, 18], sizes = [8, 1], strides = [1, 1]} : vector<8x25xf32> to vector<8x1xf32>
    %c0_242 = arith.constant 0 : index
    %c153_243 = arith.constant 153 : index
    %519 = vector.load %arg18[%c0_242, %c153_243] : memref<8x896xf32, #tpu.memory_space<vmem>>, vector<8x640xf32>
    %520 = vector.broadcast %518 : vector<8x1xf32> to vector<8x640xf32>
    %521 = arith.mulf %520, %519 : vector<8x640xf32>
    %522 = arith.addf %517, %521 : vector<8x640xf32>
    %523 = vector.extract_strided_slice %428 {offsets = [0, 19], sizes = [8, 1], strides = [1, 1]} : vector<8x25xf32> to vector<8x1xf32>
    %c0_244 = arith.constant 0 : index
    %c154_245 = arith.constant 154 : index
    %524 = vector.load %arg18[%c0_244, %c154_245] : memref<8x896xf32, #tpu.memory_space<vmem>>, vector<8x640xf32>
    %525 = vector.broadcast %523 : vector<8x1xf32> to vector<8x640xf32>
    %526 = arith.mulf %525, %524 : vector<8x640xf32>
    %527 = arith.addf %522, %526 : vector<8x640xf32>
    %528 = vector.extract_strided_slice %428 {offsets = [0, 20], sizes = [8, 1], strides = [1, 1]} : vector<8x25xf32> to vector<8x1xf32>
    %c0_246 = arith.constant 0 : index
    %c174_247 = arith.constant 174 : index
    %529 = vector.load %arg18[%c0_246, %c174_247] : memref<8x896xf32, #tpu.memory_space<vmem>>, vector<8x640xf32>
    %530 = vector.broadcast %528 : vector<8x1xf32> to vector<8x640xf32>
    %531 = arith.mulf %530, %529 : vector<8x640xf32>
    %532 = arith.addf %527, %531 : vector<8x640xf32>
    %533 = vector.extract_strided_slice %428 {offsets = [0, 21], sizes = [8, 1], strides = [1, 1]} : vector<8x25xf32> to vector<8x1xf32>
    %c0_248 = arith.constant 0 : index
    %c175_249 = arith.constant 175 : index
    %534 = vector.load %arg18[%c0_248, %c175_249] : memref<8x896xf32, #tpu.memory_space<vmem>>, vector<8x640xf32>
    %535 = vector.broadcast %533 : vector<8x1xf32> to vector<8x640xf32>
    %536 = arith.mulf %535, %534 : vector<8x640xf32>
    %537 = arith.addf %532, %536 : vector<8x640xf32>
    %538 = vector.extract_strided_slice %428 {offsets = [0, 22], sizes = [8, 1], strides = [1, 1]} : vector<8x25xf32> to vector<8x1xf32>
    %c0_250 = arith.constant 0 : index
    %c176_251 = arith.constant 176 : index
    %539 = vector.load %arg18[%c0_250, %c176_251] : memref<8x896xf32, #tpu.memory_space<vmem>>, vector<8x640xf32>
    %540 = vector.broadcast %538 : vector<8x1xf32> to vector<8x640xf32>
    %541 = arith.mulf %540, %539 : vector<8x640xf32>
    %542 = arith.addf %537, %541 : vector<8x640xf32>
    %543 = vector.extract_strided_slice %428 {offsets = [0, 23], sizes = [8, 1], strides = [1, 1]} : vector<8x25xf32> to vector<8x1xf32>
    %c0_252 = arith.constant 0 : index
    %c177_253 = arith.constant 177 : index
    %544 = vector.load %arg18[%c0_252, %c177_253] : memref<8x896xf32, #tpu.memory_space<vmem>>, vector<8x640xf32>
    %545 = vector.broadcast %543 : vector<8x1xf32> to vector<8x640xf32>
    %546 = arith.mulf %545, %544 : vector<8x640xf32>
    %547 = arith.addf %542, %546 : vector<8x640xf32>
    %548 = vector.extract_strided_slice %428 {offsets = [0, 24], sizes = [8, 1], strides = [1, 1]} : vector<8x25xf32> to vector<8x1xf32>
    %c0_254 = arith.constant 0 : index
    %c178_255 = arith.constant 178 : index
    %549 = vector.load %arg18[%c0_254, %c178_255] : memref<8x896xf32, #tpu.memory_space<vmem>>, vector<8x640xf32>
    %550 = vector.broadcast %548 : vector<8x1xf32> to vector<8x640xf32>
    %551 = arith.mulf %550, %549 : vector<8x640xf32>
    %552 = arith.addf %547, %551 : vector<8x640xf32>
    %c0_256 = arith.constant 0 : index
    %c0_257 = arith.constant 0 : index
    %553 = vector.load %arg19[%c0_256, %c0_257] : memref<8x640xf32, #tpu.memory_space<vmem>>, vector<8x640xf32>
    %554 = arith.mulf %552, %553 : vector<8x640xf32>
    %c0_258 = arith.constant 0 : index
    %c0_259 = arith.constant 0 : index
    %555 = vector.load %arg12[%c0_258, %c0_259] : memref<8x8xf32, #tpu.memory_space<vmem>>, vector<8x8xf32>
    %cst_260 = arith.constant dense<0.000000e+00> : vector<8x640xf32>
    %556 = tpu.matmul %555, %554, %cst_260 {dimension_numbers = #tpu.dot_dimension_numbers<[1], [0], [0], [1], [0, 0, 1, 1], [], []>} : vector<8x8xf32>, vector<8x640xf32>, vector<8x640xf32> -> vector<8x640xf32>
    %c0_261 = arith.constant 0 : index
    %c0_262 = arith.constant 0 : index
    %557 = vector.load %arg4[%c0_261, %c0_262] : memref<8x8xf32, #tpu.memory_space<vmem>>, vector<8x8xf32>
    %cst_263 = arith.constant dense<0.000000e+00> : vector<8x640xf32>
    %558 = tpu.matmul %557, %556, %cst_263 {dimension_numbers = #tpu.dot_dimension_numbers<[1], [0], [0], [1], [0, 0, 1, 1], [], []>} : vector<8x8xf32>, vector<8x640xf32>, vector<8x640xf32> -> vector<8x640xf32>
    %cst_264 = arith.constant dense<0.000000e+00> : vector<8xf32>
    %559 = vector.multi_reduction <add>, %558, %cst_264 [1] : vector<8x640xf32> to vector<8xf32>
    %560 = vector.shape_cast %559 : vector<8xf32> to vector<8x1xf32>
    %cst_265 = arith.constant 0.001953125 : f32
    %561 = vector.broadcast %cst_265 : f32 to vector<8x1xf32>
    %562 = arith.mulf %560, %561 : vector<8x1xf32>
    %563 = arith.mulf %556, %556 : vector<8x640xf32>
    %cst_266 = arith.constant dense<0.000000e+00> : vector<8x640xf32>
    %564 = tpu.matmul %557, %563, %cst_266 {dimension_numbers = #tpu.dot_dimension_numbers<[1], [0], [0], [1], [0, 0, 1, 1], [], []>} : vector<8x8xf32>, vector<8x640xf32>, vector<8x640xf32> -> vector<8x640xf32>
    %cst_267 = arith.constant dense<0.000000e+00> : vector<8xf32>
    %565 = vector.multi_reduction <add>, %564, %cst_267 [1] : vector<8x640xf32> to vector<8xf32>
    %566 = vector.shape_cast %565 : vector<8xf32> to vector<8x1xf32>
    %cst_268 = arith.constant 0.001953125 : f32
    %567 = vector.broadcast %cst_268 : f32 to vector<8x1xf32>
    %568 = arith.mulf %566, %567 : vector<8x1xf32>
    %569 = arith.mulf %562, %562 : vector<8x1xf32>
    %570 = arith.subf %568, %569 : vector<8x1xf32>
    %cst_269 = arith.constant 0.000000e+00 : f32
    %571 = vector.broadcast %cst_269 : f32 to vector<8x1xf32>
    %572 = arith.maximumf %570, %571 : vector<8x1xf32>
    %cst_270 = arith.constant 9.99999974E-6 : f32
    %573 = vector.broadcast %cst_270 : f32 to vector<8x1xf32>
    %574 = arith.addf %572, %573 : vector<8x1xf32>
    %575 = math.rsqrt %574 : vector<8x1xf32>
    %576 = vector.broadcast %269 : f32 to vector<8x1xf32>
    %577 = arith.mulf %575, %576 : vector<8x1xf32>
    %578 = vector.broadcast %562 : vector<8x1xf32> to vector<8x640xf32>
    %579 = arith.subf %556, %578 : vector<8x640xf32>
    %580 = vector.broadcast %577 : vector<8x1xf32> to vector<8x640xf32>
    %581 = arith.mulf %579, %580 : vector<8x640xf32>
    %582 = arith.addf %268, %581 : vector<8x640xf32>
    %c6 = arith.constant 6 : index
    %583 = memref.load %arg0[%c6] : memref<8xf32, #tpu.memory_space<smem>>
    %c0_271 = arith.constant 0 : index
    %c128_272 = arith.constant 128 : index
    %584 = vector.load %arg18[%c0_271, %c128_272] : memref<8x896xf32, #tpu.memory_space<vmem>>, vector<8x640xf32>
    tpu.vector_store %arg18[%c0_271, %c128_272], %10 {strides = array<i32>} : memref<8x896xf32, #tpu.memory_space<vmem>>, vector<8x640xf32>,
    %c0_273 = arith.constant 0 : index
    %c0_274 = arith.constant 0 : index
    %585 = vector.load %arg13[%c0_273, %c0_274] : memref<8x9xf32, #tpu.memory_space<vmem>>, vector<8x9xf32>
    %586 = vector.extract_strided_slice %585 {offsets = [0, 0], sizes = [8, 1], strides = [1, 1]} : vector<8x9xf32> to vector<8x1xf32>
    %c0_275 = arith.constant 0 : index
    %c78_276 = arith.constant 78 : index
    %587 = vector.load %arg18[%c0_275, %c78_276] : memref<8x896xf32, #tpu.memory_space<vmem>>, vector<8x640xf32>
    %588 = vector.broadcast %586 : vector<8x1xf32> to vector<8x640xf32>
    %589 = arith.mulf %588, %587 : vector<8x640xf32>
    %590 = vector.extract_strided_slice %585 {offsets = [0, 1], sizes = [8, 1], strides = [1, 1]} : vector<8x9xf32> to vector<8x1xf32>
    %c0_277 = arith.constant 0 : index
    %c80_278 = arith.constant 80 : index
    %591 = vector.load %arg18[%c0_277, %c80_278] : memref<8x896xf32, #tpu.memory_space<vmem>>, vector<8x640xf32>
    %592 = vector.broadcast %590 : vector<8x1xf32> to vector<8x640xf32>
    %593 = arith.mulf %592, %591 : vector<8x640xf32>
    %594 = arith.addf %589, %593 : vector<8x640xf32>
    %595 = vector.extract_strided_slice %585 {offsets = [0, 2], sizes = [8, 1], strides = [1, 1]} : vector<8x9xf32> to vector<8x1xf32>
    %c0_279 = arith.constant 0 : index
    %c82_280 = arith.constant 82 : index
    %596 = vector.load %arg18[%c0_279, %c82_280] : memref<8x896xf32, #tpu.memory_space<vmem>>, vector<8x640xf32>
    %597 = vector.broadcast %595 : vector<8x1xf32> to vector<8x640xf32>
    %598 = arith.mulf %597, %596 : vector<8x640xf32>
    %599 = arith.addf %594, %598 : vector<8x640xf32>
    %600 = vector.extract_strided_slice %585 {offsets = [0, 3], sizes = [8, 1], strides = [1, 1]} : vector<8x9xf32> to vector<8x1xf32>
    %c0_281 = arith.constant 0 : index
    %c126_282 = arith.constant 126 : index
    %601 = vector.load %arg18[%c0_281, %c126_282] : memref<8x896xf32, #tpu.memory_space<vmem>>, vector<8x640xf32>
    %602 = vector.broadcast %600 : vector<8x1xf32> to vector<8x640xf32>
    %603 = arith.mulf %602, %601 : vector<8x640xf32>
    %604 = arith.addf %599, %603 : vector<8x640xf32>
    %605 = vector.extract_strided_slice %585 {offsets = [0, 4], sizes = [8, 1], strides = [1, 1]} : vector<8x9xf32> to vector<8x1xf32>
    %c0_283 = arith.constant 0 : index
    %c128_284 = arith.constant 128 : index
    %606 = vector.load %arg18[%c0_283, %c128_284] : memref<8x896xf32, #tpu.memory_space<vmem>>, vector<8x640xf32>
    %607 = vector.broadcast %605 : vector<8x1xf32> to vector<8x640xf32>
    %608 = arith.mulf %607, %606 : vector<8x640xf32>
    %609 = arith.addf %604, %608 : vector<8x640xf32>
    %610 = vector.extract_strided_slice %585 {offsets = [0, 5], sizes = [8, 1], strides = [1, 1]} : vector<8x9xf32> to vector<8x1xf32>
    %c0_285 = arith.constant 0 : index
    %c130_286 = arith.constant 130 : index
    %611 = vector.load %arg18[%c0_285, %c130_286] : memref<8x896xf32, #tpu.memory_space<vmem>>, vector<8x640xf32>
    %612 = vector.broadcast %610 : vector<8x1xf32> to vector<8x640xf32>
    %613 = arith.mulf %612, %611 : vector<8x640xf32>
    %614 = arith.addf %609, %613 : vector<8x640xf32>
    %615 = vector.extract_strided_slice %585 {offsets = [0, 6], sizes = [8, 1], strides = [1, 1]} : vector<8x9xf32> to vector<8x1xf32>
    %c0_287 = arith.constant 0 : index
    %c174_288 = arith.constant 174 : index
    %616 = vector.load %arg18[%c0_287, %c174_288] : memref<8x896xf32, #tpu.memory_space<vmem>>, vector<8x640xf32>
    %617 = vector.broadcast %615 : vector<8x1xf32> to vector<8x640xf32>
    %618 = arith.mulf %617, %616 : vector<8x640xf32>
    %619 = arith.addf %614, %618 : vector<8x640xf32>
    %620 = vector.extract_strided_slice %585 {offsets = [0, 7], sizes = [8, 1], strides = [1, 1]} : vector<8x9xf32> to vector<8x1xf32>
    %c0_289 = arith.constant 0 : index
    %c176_290 = arith.constant 176 : index
    %621 = vector.load %arg18[%c0_289, %c176_290] : memref<8x896xf32, #tpu.memory_space<vmem>>, vector<8x640xf32>
    %622 = vector.broadcast %620 : vector<8x1xf32> to vector<8x640xf32>
    %623 = arith.mulf %622, %621 : vector<8x640xf32>
    %624 = arith.addf %619, %623 : vector<8x640xf32>
    %625 = vector.extract_strided_slice %585 {offsets = [0, 8], sizes = [8, 1], strides = [1, 1]} : vector<8x9xf32> to vector<8x1xf32>
    %c0_291 = arith.constant 0 : index
    %c178_292 = arith.constant 178 : index
    %626 = vector.load %arg18[%c0_291, %c178_292] : memref<8x896xf32, #tpu.memory_space<vmem>>, vector<8x640xf32>
    %627 = vector.broadcast %625 : vector<8x1xf32> to vector<8x640xf32>
    %628 = arith.mulf %627, %626 : vector<8x640xf32>
    %629 = arith.addf %624, %628 : vector<8x640xf32>
    %c0_293 = arith.constant 0 : index
    %c0_294 = arith.constant 0 : index
    %630 = vector.load %arg19[%c0_293, %c0_294] : memref<8x640xf32, #tpu.memory_space<vmem>>, vector<8x640xf32>
    %631 = arith.mulf %629, %630 : vector<8x640xf32>
    %c0_295 = arith.constant 0 : index
    %c0_296 = arith.constant 0 : index
    %632 = vector.load %arg14[%c0_295, %c0_296] : memref<8x8xf32, #tpu.memory_space<vmem>>, vector<8x8xf32>
    %cst_297 = arith.constant dense<0.000000e+00> : vector<8x640xf32>
    %633 = tpu.matmul %632, %631, %cst_297 {dimension_numbers = #tpu.dot_dimension_numbers<[1], [0], [0], [1], [0, 0, 1, 1], [], []>} : vector<8x8xf32>, vector<8x640xf32>, vector<8x640xf32> -> vector<8x640xf32>
    %c0_298 = arith.constant 0 : index
    %c0_299 = arith.constant 0 : index
    %634 = vector.load %arg4[%c0_298, %c0_299] : memref<8x8xf32, #tpu.memory_space<vmem>>, vector<8x8xf32>
    %cst_300 = arith.constant dense<0.000000e+00> : vector<8x640xf32>
    %635 = tpu.matmul %634, %633, %cst_300 {dimension_numbers = #tpu.dot_dimension_numbers<[1], [0], [0], [1], [0, 0, 1, 1], [], []>} : vector<8x8xf32>, vector<8x640xf32>, vector<8x640xf32> -> vector<8x640xf32>
    %cst_301 = arith.constant dense<0.000000e+00> : vector<8xf32>
    %636 = vector.multi_reduction <add>, %635, %cst_301 [1] : vector<8x640xf32> to vector<8xf32>
    %637 = vector.shape_cast %636 : vector<8xf32> to vector<8x1xf32>
    %cst_302 = arith.constant 0.001953125 : f32
    %638 = vector.broadcast %cst_302 : f32 to vector<8x1xf32>
    %639 = arith.mulf %637, %638 : vector<8x1xf32>
    %640 = arith.mulf %633, %633 : vector<8x640xf32>
    %cst_303 = arith.constant dense<0.000000e+00> : vector<8x640xf32>
    %641 = tpu.matmul %634, %640, %cst_303 {dimension_numbers = #tpu.dot_dimension_numbers<[1], [0], [0], [1], [0, 0, 1, 1], [], []>} : vector<8x8xf32>, vector<8x640xf32>, vector<8x640xf32> -> vector<8x640xf32>
    %cst_304 = arith.constant dense<0.000000e+00> : vector<8xf32>
    %642 = vector.multi_reduction <add>, %641, %cst_304 [1] : vector<8x640xf32> to vector<8xf32>
    %643 = vector.shape_cast %642 : vector<8xf32> to vector<8x1xf32>
    %cst_305 = arith.constant 0.001953125 : f32
    %644 = vector.broadcast %cst_305 : f32 to vector<8x1xf32>
    %645 = arith.mulf %643, %644 : vector<8x1xf32>
    %646 = arith.mulf %639, %639 : vector<8x1xf32>
    %647 = arith.subf %645, %646 : vector<8x1xf32>
    %cst_306 = arith.constant 0.000000e+00 : f32
    %648 = vector.broadcast %cst_306 : f32 to vector<8x1xf32>
    %649 = arith.maximumf %647, %648 : vector<8x1xf32>
    %cst_307 = arith.constant 9.99999974E-6 : f32
    %650 = vector.broadcast %cst_307 : f32 to vector<8x1xf32>
    %651 = arith.addf %649, %650 : vector<8x1xf32>
    %652 = math.rsqrt %651 : vector<8x1xf32>
    %653 = vector.broadcast %583 : f32 to vector<8x1xf32>
    %654 = arith.mulf %652, %653 : vector<8x1xf32>
    %655 = vector.broadcast %639 : vector<8x1xf32> to vector<8x640xf32>
    %656 = arith.subf %633, %655 : vector<8x640xf32>
    %657 = vector.broadcast %654 : vector<8x1xf32> to vector<8x640xf32>
    %658 = arith.mulf %656, %657 : vector<8x640xf32>
    %659 = arith.addf %582, %658 : vector<8x640xf32>
    %c7 = arith.constant 7 : index
    %660 = memref.load %arg0[%c7] : memref<8xf32, #tpu.memory_space<smem>>
    %c0_308 = arith.constant 0 : index
    %c128_309 = arith.constant 128 : index
    %661 = vector.load %arg18[%c0_308, %c128_309] : memref<8x896xf32, #tpu.memory_space<vmem>>, vector<8x640xf32>
    tpu.vector_store %arg18[%c0_308, %c128_309], %10 {strides = array<i32>} : memref<8x896xf32, #tpu.memory_space<vmem>>, vector<8x640xf32>,
    %c0_310 = arith.constant 0 : index
    %c0_311 = arith.constant 0 : index
    %662 = vector.load %arg15[%c0_310, %c0_311] : memref<8x25xf32, #tpu.memory_space<vmem>>, vector<8x25xf32>
    %663 = vector.extract_strided_slice %662 {offsets = [0, 0], sizes = [8, 1], strides = [1, 1]} : vector<8x25xf32> to vector<8x1xf32>
    %c0_312 = arith.constant 0 : index
    %c28 = arith.constant 28 : index
    %664 = vector.load %arg18[%c0_312, %c28] : memref<8x896xf32, #tpu.memory_space<vmem>>, vector<8x640xf32>
    %665 = vector.broadcast %663 : vector<8x1xf32> to vector<8x640xf32>
    %666 = arith.mulf %665, %664 : vector<8x640xf32>
    %667 = vector.extract_strided_slice %662 {offsets = [0, 1], sizes = [8, 1], strides = [1, 1]} : vector<8x25xf32> to vector<8x1xf32>
    %c0_313 = arith.constant 0 : index
    %c30 = arith.constant 30 : index
    %668 = vector.load %arg18[%c0_313, %c30] : memref<8x896xf32, #tpu.memory_space<vmem>>, vector<8x640xf32>
    %669 = vector.broadcast %667 : vector<8x1xf32> to vector<8x640xf32>
    %670 = arith.mulf %669, %668 : vector<8x640xf32>
    %671 = arith.addf %666, %670 : vector<8x640xf32>
    %672 = vector.extract_strided_slice %662 {offsets = [0, 2], sizes = [8, 1], strides = [1, 1]} : vector<8x25xf32> to vector<8x1xf32>
    %c0_314 = arith.constant 0 : index
    %c32 = arith.constant 32 : index
    %673 = vector.load %arg18[%c0_314, %c32] : memref<8x896xf32, #tpu.memory_space<vmem>>, vector<8x640xf32>
    %674 = vector.broadcast %672 : vector<8x1xf32> to vector<8x640xf32>
    %675 = arith.mulf %674, %673 : vector<8x640xf32>
    %676 = arith.addf %671, %675 : vector<8x640xf32>
    %677 = vector.extract_strided_slice %662 {offsets = [0, 3], sizes = [8, 1], strides = [1, 1]} : vector<8x25xf32> to vector<8x1xf32>
    %c0_315 = arith.constant 0 : index
    %c34 = arith.constant 34 : index
    %678 = vector.load %arg18[%c0_315, %c34] : memref<8x896xf32, #tpu.memory_space<vmem>>, vector<8x640xf32>
    %679 = vector.broadcast %677 : vector<8x1xf32> to vector<8x640xf32>
    %680 = arith.mulf %679, %678 : vector<8x640xf32>
    %681 = arith.addf %676, %680 : vector<8x640xf32>
    %682 = vector.extract_strided_slice %662 {offsets = [0, 4], sizes = [8, 1], strides = [1, 1]} : vector<8x25xf32> to vector<8x1xf32>
    %c0_316 = arith.constant 0 : index
    %c36 = arith.constant 36 : index
    %683 = vector.load %arg18[%c0_316, %c36] : memref<8x896xf32, #tpu.memory_space<vmem>>, vector<8x640xf32>
    %684 = vector.broadcast %682 : vector<8x1xf32> to vector<8x640xf32>
    %685 = arith.mulf %684, %683 : vector<8x640xf32>
    %686 = arith.addf %681, %685 : vector<8x640xf32>
    %687 = vector.extract_strided_slice %662 {offsets = [0, 5], sizes = [8, 1], strides = [1, 1]} : vector<8x25xf32> to vector<8x1xf32>
    %c0_317 = arith.constant 0 : index
    %c76 = arith.constant 76 : index
    %688 = vector.load %arg18[%c0_317, %c76] : memref<8x896xf32, #tpu.memory_space<vmem>>, vector<8x640xf32>
    %689 = vector.broadcast %687 : vector<8x1xf32> to vector<8x640xf32>
    %690 = arith.mulf %689, %688 : vector<8x640xf32>
    %691 = arith.addf %686, %690 : vector<8x640xf32>
    %692 = vector.extract_strided_slice %662 {offsets = [0, 6], sizes = [8, 1], strides = [1, 1]} : vector<8x25xf32> to vector<8x1xf32>
    %c0_318 = arith.constant 0 : index
    %c78_319 = arith.constant 78 : index
    %693 = vector.load %arg18[%c0_318, %c78_319] : memref<8x896xf32, #tpu.memory_space<vmem>>, vector<8x640xf32>
    %694 = vector.broadcast %692 : vector<8x1xf32> to vector<8x640xf32>
    %695 = arith.mulf %694, %693 : vector<8x640xf32>
    %696 = arith.addf %691, %695 : vector<8x640xf32>
    %697 = vector.extract_strided_slice %662 {offsets = [0, 7], sizes = [8, 1], strides = [1, 1]} : vector<8x25xf32> to vector<8x1xf32>
    %c0_320 = arith.constant 0 : index
    %c80_321 = arith.constant 80 : index
    %698 = vector.load %arg18[%c0_320, %c80_321] : memref<8x896xf32, #tpu.memory_space<vmem>>, vector<8x640xf32>
    %699 = vector.broadcast %697 : vector<8x1xf32> to vector<8x640xf32>
    %700 = arith.mulf %699, %698 : vector<8x640xf32>
    %701 = arith.addf %696, %700 : vector<8x640xf32>
    %702 = vector.extract_strided_slice %662 {offsets = [0, 8], sizes = [8, 1], strides = [1, 1]} : vector<8x25xf32> to vector<8x1xf32>
    %c0_322 = arith.constant 0 : index
    %c82_323 = arith.constant 82 : index
    %703 = vector.load %arg18[%c0_322, %c82_323] : memref<8x896xf32, #tpu.memory_space<vmem>>, vector<8x640xf32>
    %704 = vector.broadcast %702 : vector<8x1xf32> to vector<8x640xf32>
    %705 = arith.mulf %704, %703 : vector<8x640xf32>
    %706 = arith.addf %701, %705 : vector<8x640xf32>
    %707 = vector.extract_strided_slice %662 {offsets = [0, 9], sizes = [8, 1], strides = [1, 1]} : vector<8x25xf32> to vector<8x1xf32>
    %c0_324 = arith.constant 0 : index
    %c84 = arith.constant 84 : index
    %708 = vector.load %arg18[%c0_324, %c84] : memref<8x896xf32, #tpu.memory_space<vmem>>, vector<8x640xf32>
    %709 = vector.broadcast %707 : vector<8x1xf32> to vector<8x640xf32>
    %710 = arith.mulf %709, %708 : vector<8x640xf32>
    %711 = arith.addf %706, %710 : vector<8x640xf32>
    %712 = vector.extract_strided_slice %662 {offsets = [0, 10], sizes = [8, 1], strides = [1, 1]} : vector<8x25xf32> to vector<8x1xf32>
    %c0_325 = arith.constant 0 : index
    %c124 = arith.constant 124 : index
    %713 = vector.load %arg18[%c0_325, %c124] : memref<8x896xf32, #tpu.memory_space<vmem>>, vector<8x640xf32>
    %714 = vector.broadcast %712 : vector<8x1xf32> to vector<8x640xf32>
    %715 = arith.mulf %714, %713 : vector<8x640xf32>
    %716 = arith.addf %711, %715 : vector<8x640xf32>
    %717 = vector.extract_strided_slice %662 {offsets = [0, 11], sizes = [8, 1], strides = [1, 1]} : vector<8x25xf32> to vector<8x1xf32>
    %c0_326 = arith.constant 0 : index
    %c126_327 = arith.constant 126 : index
    %718 = vector.load %arg18[%c0_326, %c126_327] : memref<8x896xf32, #tpu.memory_space<vmem>>, vector<8x640xf32>
    %719 = vector.broadcast %717 : vector<8x1xf32> to vector<8x640xf32>
    %720 = arith.mulf %719, %718 : vector<8x640xf32>
    %721 = arith.addf %716, %720 : vector<8x640xf32>
    %722 = vector.extract_strided_slice %662 {offsets = [0, 12], sizes = [8, 1], strides = [1, 1]} : vector<8x25xf32> to vector<8x1xf32>
    %c0_328 = arith.constant 0 : index
    %c128_329 = arith.constant 128 : index
    %723 = vector.load %arg18[%c0_328, %c128_329] : memref<8x896xf32, #tpu.memory_space<vmem>>, vector<8x640xf32>
    %724 = vector.broadcast %722 : vector<8x1xf32> to vector<8x640xf32>
    %725 = arith.mulf %724, %723 : vector<8x640xf32>
    %726 = arith.addf %721, %725 : vector<8x640xf32>
    %727 = vector.extract_strided_slice %662 {offsets = [0, 13], sizes = [8, 1], strides = [1, 1]} : vector<8x25xf32> to vector<8x1xf32>
    %c0_330 = arith.constant 0 : index
    %c130_331 = arith.constant 130 : index
    %728 = vector.load %arg18[%c0_330, %c130_331] : memref<8x896xf32, #tpu.memory_space<vmem>>, vector<8x640xf32>
    %729 = vector.broadcast %727 : vector<8x1xf32> to vector<8x640xf32>
    %730 = arith.mulf %729, %728 : vector<8x640xf32>
    %731 = arith.addf %726, %730 : vector<8x640xf32>
    %732 = vector.extract_strided_slice %662 {offsets = [0, 14], sizes = [8, 1], strides = [1, 1]} : vector<8x25xf32> to vector<8x1xf32>
    %c0_332 = arith.constant 0 : index
    %c132 = arith.constant 132 : index
    %733 = vector.load %arg18[%c0_332, %c132] : memref<8x896xf32, #tpu.memory_space<vmem>>, vector<8x640xf32>
    %734 = vector.broadcast %732 : vector<8x1xf32> to vector<8x640xf32>
    %735 = arith.mulf %734, %733 : vector<8x640xf32>
    %736 = arith.addf %731, %735 : vector<8x640xf32>
    %737 = vector.extract_strided_slice %662 {offsets = [0, 15], sizes = [8, 1], strides = [1, 1]} : vector<8x25xf32> to vector<8x1xf32>
    %c0_333 = arith.constant 0 : index
    %c172 = arith.constant 172 : index
    %738 = vector.load %arg18[%c0_333, %c172] : memref<8x896xf32, #tpu.memory_space<vmem>>, vector<8x640xf32>
    %739 = vector.broadcast %737 : vector<8x1xf32> to vector<8x640xf32>
    %740 = arith.mulf %739, %738 : vector<8x640xf32>
    %741 = arith.addf %736, %740 : vector<8x640xf32>
    %742 = vector.extract_strided_slice %662 {offsets = [0, 16], sizes = [8, 1], strides = [1, 1]} : vector<8x25xf32> to vector<8x1xf32>
    %c0_334 = arith.constant 0 : index
    %c174_335 = arith.constant 174 : index
    %743 = vector.load %arg18[%c0_334, %c174_335] : memref<8x896xf32, #tpu.memory_space<vmem>>, vector<8x640xf32>
    %744 = vector.broadcast %742 : vector<8x1xf32> to vector<8x640xf32>
    %745 = arith.mulf %744, %743 : vector<8x640xf32>
    %746 = arith.addf %741, %745 : vector<8x640xf32>
    %747 = vector.extract_strided_slice %662 {offsets = [0, 17], sizes = [8, 1], strides = [1, 1]} : vector<8x25xf32> to vector<8x1xf32>
    %c0_336 = arith.constant 0 : index
    %c176_337 = arith.constant 176 : index
    %748 = vector.load %arg18[%c0_336, %c176_337] : memref<8x896xf32, #tpu.memory_space<vmem>>, vector<8x640xf32>
    %749 = vector.broadcast %747 : vector<8x1xf32> to vector<8x640xf32>
    %750 = arith.mulf %749, %748 : vector<8x640xf32>
    %751 = arith.addf %746, %750 : vector<8x640xf32>
    %752 = vector.extract_strided_slice %662 {offsets = [0, 18], sizes = [8, 1], strides = [1, 1]} : vector<8x25xf32> to vector<8x1xf32>
    %c0_338 = arith.constant 0 : index
    %c178_339 = arith.constant 178 : index
    %753 = vector.load %arg18[%c0_338, %c178_339] : memref<8x896xf32, #tpu.memory_space<vmem>>, vector<8x640xf32>
    %754 = vector.broadcast %752 : vector<8x1xf32> to vector<8x640xf32>
    %755 = arith.mulf %754, %753 : vector<8x640xf32>
    %756 = arith.addf %751, %755 : vector<8x640xf32>
    %757 = vector.extract_strided_slice %662 {offsets = [0, 19], sizes = [8, 1], strides = [1, 1]} : vector<8x25xf32> to vector<8x1xf32>
    %c0_340 = arith.constant 0 : index
    %c180 = arith.constant 180 : index
    %758 = vector.load %arg18[%c0_340, %c180] : memref<8x896xf32, #tpu.memory_space<vmem>>, vector<8x640xf32>
    %759 = vector.broadcast %757 : vector<8x1xf32> to vector<8x640xf32>
    %760 = arith.mulf %759, %758 : vector<8x640xf32>
    %761 = arith.addf %756, %760 : vector<8x640xf32>
    %762 = vector.extract_strided_slice %662 {offsets = [0, 20], sizes = [8, 1], strides = [1, 1]} : vector<8x25xf32> to vector<8x1xf32>
    %c0_341 = arith.constant 0 : index
    %c220 = arith.constant 220 : index
    %763 = vector.load %arg18[%c0_341, %c220] : memref<8x896xf32, #tpu.memory_space<vmem>>, vector<8x640xf32>
    %764 = vector.broadcast %762 : vector<8x1xf32> to vector<8x640xf32>
    %765 = arith.mulf %764, %763 : vector<8x640xf32>
    %766 = arith.addf %761, %765 : vector<8x640xf32>
    %767 = vector.extract_strided_slice %662 {offsets = [0, 21], sizes = [8, 1], strides = [1, 1]} : vector<8x25xf32> to vector<8x1xf32>
    %c0_342 = arith.constant 0 : index
    %c222 = arith.constant 222 : index
    %768 = vector.load %arg18[%c0_342, %c222] : memref<8x896xf32, #tpu.memory_space<vmem>>, vector<8x640xf32>
    %769 = vector.broadcast %767 : vector<8x1xf32> to vector<8x640xf32>
    %770 = arith.mulf %769, %768 : vector<8x640xf32>
    %771 = arith.addf %766, %770 : vector<8x640xf32>
    %772 = vector.extract_strided_slice %662 {offsets = [0, 22], sizes = [8, 1], strides = [1, 1]} : vector<8x25xf32> to vector<8x1xf32>
    %c0_343 = arith.constant 0 : index
    %c224 = arith.constant 224 : index
    %773 = vector.load %arg18[%c0_343, %c224] : memref<8x896xf32, #tpu.memory_space<vmem>>, vector<8x640xf32>
    %774 = vector.broadcast %772 : vector<8x1xf32> to vector<8x640xf32>
    %775 = arith.mulf %774, %773 : vector<8x640xf32>
    %776 = arith.addf %771, %775 : vector<8x640xf32>
    %777 = vector.extract_strided_slice %662 {offsets = [0, 23], sizes = [8, 1], strides = [1, 1]} : vector<8x25xf32> to vector<8x1xf32>
    %c0_344 = arith.constant 0 : index
    %c226 = arith.constant 226 : index
    %778 = vector.load %arg18[%c0_344, %c226] : memref<8x896xf32, #tpu.memory_space<vmem>>, vector<8x640xf32>
    %779 = vector.broadcast %777 : vector<8x1xf32> to vector<8x640xf32>
    %780 = arith.mulf %779, %778 : vector<8x640xf32>
    %781 = arith.addf %776, %780 : vector<8x640xf32>
    %782 = vector.extract_strided_slice %662 {offsets = [0, 24], sizes = [8, 1], strides = [1, 1]} : vector<8x25xf32> to vector<8x1xf32>
    %c0_345 = arith.constant 0 : index
    %c228 = arith.constant 228 : index
    %783 = vector.load %arg18[%c0_345, %c228] : memref<8x896xf32, #tpu.memory_space<vmem>>, vector<8x640xf32>
    %784 = vector.broadcast %782 : vector<8x1xf32> to vector<8x640xf32>
    %785 = arith.mulf %784, %783 : vector<8x640xf32>
    %786 = arith.addf %781, %785 : vector<8x640xf32>
    %c0_346 = arith.constant 0 : index
    %c0_347 = arith.constant 0 : index
    %787 = vector.load %arg19[%c0_346, %c0_347] : memref<8x640xf32, #tpu.memory_space<vmem>>, vector<8x640xf32>
    %788 = arith.mulf %786, %787 : vector<8x640xf32>
    %c0_348 = arith.constant 0 : index
    %c0_349 = arith.constant 0 : index
    %789 = vector.load %arg16[%c0_348, %c0_349] : memref<8x8xf32, #tpu.memory_space<vmem>>, vector<8x8xf32>
    %cst_350 = arith.constant dense<0.000000e+00> : vector<8x640xf32>
    %790 = tpu.matmul %789, %788, %cst_350 {dimension_numbers = #tpu.dot_dimension_numbers<[1], [0], [0], [1], [0, 0, 1, 1], [], []>} : vector<8x8xf32>, vector<8x640xf32>, vector<8x640xf32> -> vector<8x640xf32>
    %c0_351 = arith.constant 0 : index
    %c0_352 = arith.constant 0 : index
    %791 = vector.load %arg4[%c0_351, %c0_352] : memref<8x8xf32, #tpu.memory_space<vmem>>, vector<8x8xf32>
    %cst_353 = arith.constant dense<0.000000e+00> : vector<8x640xf32>
    %792 = tpu.matmul %791, %790, %cst_353 {dimension_numbers = #tpu.dot_dimension_numbers<[1], [0], [0], [1], [0, 0, 1, 1], [], []>} : vector<8x8xf32>, vector<8x640xf32>, vector<8x640xf32> -> vector<8x640xf32>
    %cst_354 = arith.constant dense<0.000000e+00> : vector<8xf32>
    %793 = vector.multi_reduction <add>, %792, %cst_354 [1] : vector<8x640xf32> to vector<8xf32>
    %794 = vector.shape_cast %793 : vector<8xf32> to vector<8x1xf32>
    %cst_355 = arith.constant 0.001953125 : f32
    %795 = vector.broadcast %cst_355 : f32 to vector<8x1xf32>
    %796 = arith.mulf %794, %795 : vector<8x1xf32>
    %797 = arith.mulf %790, %790 : vector<8x640xf32>
    %cst_356 = arith.constant dense<0.000000e+00> : vector<8x640xf32>
    %798 = tpu.matmul %791, %797, %cst_356 {dimension_numbers = #tpu.dot_dimension_numbers<[1], [0], [0], [1], [0, 0, 1, 1], [], []>} : vector<8x8xf32>, vector<8x640xf32>, vector<8x640xf32> -> vector<8x640xf32>
    %cst_357 = arith.constant dense<0.000000e+00> : vector<8xf32>
    %799 = vector.multi_reduction <add>, %798, %cst_357 [1] : vector<8x640xf32> to vector<8xf32>
    %800 = vector.shape_cast %799 : vector<8xf32> to vector<8x1xf32>
    %cst_358 = arith.constant 0.001953125 : f32
    %801 = vector.broadcast %cst_358 : f32 to vector<8x1xf32>
    %802 = arith.mulf %800, %801 : vector<8x1xf32>
    %803 = arith.mulf %796, %796 : vector<8x1xf32>
    %804 = arith.subf %802, %803 : vector<8x1xf32>
    %cst_359 = arith.constant 0.000000e+00 : f32
    %805 = vector.broadcast %cst_359 : f32 to vector<8x1xf32>
    %806 = arith.maximumf %804, %805 : vector<8x1xf32>
    %cst_360 = arith.constant 9.99999974E-6 : f32
    %807 = vector.broadcast %cst_360 : f32 to vector<8x1xf32>
    %808 = arith.addf %806, %807 : vector<8x1xf32>
    %809 = math.rsqrt %808 : vector<8x1xf32>
    %810 = vector.broadcast %660 : f32 to vector<8x1xf32>
    %811 = arith.mulf %809, %810 : vector<8x1xf32>
    %812 = vector.broadcast %796 : vector<8x1xf32> to vector<8x640xf32>
    %813 = arith.subf %790, %812 : vector<8x640xf32>
    %814 = vector.broadcast %811 : vector<8x1xf32> to vector<8x640xf32>
    %815 = arith.mulf %813, %814 : vector<8x640xf32>
    %816 = arith.addf %659, %815 : vector<8x640xf32>
    %c0_361 = arith.constant 0 : index
    %c0_362 = arith.constant 0 : index
    %817 = vector.load %arg17[%c0_361, %c0_362] : memref<8x640xf32, #tpu.memory_space<vmem>>, vector<8x640xf32>
    tpu.vector_store %arg17[%c0_361, %c0_362], %816 {strides = array<i32>} : memref<8x640xf32, #tpu.memory_space<vmem>>, vector<8x640xf32>,
    return
  }
}

</mosaic_0001>

<llo_original>
// kernel: mixed_op_forward.1
$region0: #{mixed_op_forward.1}
  #allocation0 [shape = 'u32[]', space=smem, size = 0x4, offset = 0x4, fixed_abs, tag = 'smem constant byte address 0x4 - core index']
  #allocation1 [shape = 'u32[72,128]{1,0:T(1,128)}', space=vmem, size = 0x9000, scoped, tag = 'internal scratch']
  #allocation2 [shape = 'f32[8,896]{1,0:T(8,128)}', space=vmem, size = 0x7000, scoped, tag = 'scratch operand']
  #allocation3 [shape = 'f32[8,640]{1,0:T(8,128)}', space=vmem, size = 0x5000, scoped, tag = 'scratch operand']
  %s0 = inlined_call_operand.vmem [shape: f32[8], index: 0, kind: input, shape index: {}]
  %s1 = inlined_call_operand.vmem [shape: f32[8,640], index: 1, kind: input, shape index: {}]
  %s2 = inlined_call_operand.vmem [shape: f32[1,640], index: 2, kind: input, shape index: {}]
  %s3 = inlined_call_operand.vmem [shape: f32[1,640], index: 3, kind: input, shape index: {}]
  %s4 = inlined_call_operand.vmem [shape: f32[8,8], index: 4, kind: input, shape index: {}]
  %s5 = inlined_call_operand.vmem [shape: f32[8,9], index: 5, kind: input, shape index: {}]
  %s6 = inlined_call_operand.vmem [shape: f32[8,8], index: 6, kind: input, shape index: {}]
  %s7 = inlined_call_operand.vmem [shape: f32[8,9], index: 7, kind: input, shape index: {}]
  %s8 = inlined_call_operand.vmem [shape: f32[8,8], index: 8, kind: input, shape index: {}]
  %s9 = inlined_call_operand.vmem [shape: f32[8,25], index: 9, kind: input, shape index: {}]
  %s10 = inlined_call_operand.vmem [shape: f32[8,8], index: 10, kind: input, shape index: {}]
  %s11 = inlined_call_operand.vmem [shape: f32[8,25], index: 11, kind: input, shape index: {}]
  %s12 = inlined_call_operand.vmem [shape: f32[8,8], index: 12, kind: input, shape index: {}]
  %s13 = inlined_call_operand.vmem [shape: f32[8,9], index: 13, kind: input, shape index: {}]
  %s14 = inlined_call_operand.vmem [shape: f32[8,8], index: 14, kind: input, shape index: {}]
  %s15 = inlined_call_operand.vmem [shape: f32[8,25], index: 15, kind: input, shape index: {}]
  %s16 = inlined_call_operand.vmem [shape: f32[8,8], index: 16, kind: input, shape index: {}]
  %s17 = inlined_call_operand.vmem [shape: f32[8,640], index: 17, kind: output, shape index: {}]
  %s18 = sld [smem:[#allocation0]]
  $region82: #{mixed_op_forward.1} parent=0
    _
  %s20 = ssub.s32 1, %s18
  %s21 = scalar_select 0, %s20, %s18
  $region1: #{mixed_op_forward.1} parent=0
    #allocation4 [shape = 'u8[512]{0}', space=smem, size = 0x200, scoped, tag = 'input window, operand 0, single buffered']
    #allocation5 [shape = 's32[1]{0}', space=sflag, size = 0x4, scoped, tag = 'scoped memory for mixed_op_forward.1']
    %22 = vsyncpa [#allocation5], 0
    // Predicated region
    $region2: #{mixed_op_forward.1} parent=1 // pred_check
      _
    $region3: #{mixed_op_forward.1} parent=1 // pred_check_branch
      %24 = sbr.rel (0) target = $region5
    $region4: #{mixed_op_forward.1} parent=1 // pred_region
      %26 = vsyncadd [#allocation5], 0
      %s28 = sshll.u32 %s0, 4
      %s29 = int_to_ptr.vmem [resolvable:$true] %s28
      %31 = dma.vmem_to_smem %s29, 16, [#allocation4], [#allocation5]
    $region5: #{mixed_op_forward.1} parent=1 // pred_fallthru
      _
    // Predicated region
    $region6: #{mixed_op_forward.1} parent=1 // pred_check
      _
    $region7: #{mixed_op_forward.1} parent=1 // pred_check_branch
      %33 = sbr.rel (0) target = $region9
    $region8: #{mixed_op_forward.1} parent=1 // pred_region
      _
    $region9: #{mixed_op_forward.1} parent=1 // pred_fallthru
      _
    // Predicated region
    $region10: #{mixed_op_forward.1} parent=1 // pred_check
      _
    $region11: #{mixed_op_forward.1} parent=1 // pred_check_branch
      %35 = sbr.rel (0) target = $region13
    $region12: #{mixed_op_forward.1} parent=1 // pred_region
      _
    $region13: #{mixed_op_forward.1} parent=1 // pred_fallthru
      _
    // Predicated region
    $region14: #{mixed_op_forward.1} parent=1 // pred_check
      _
    $region15: #{mixed_op_forward.1} parent=1 // pred_check_branch
      %37 = sbr.rel (0) target = $region17
    $region16: #{mixed_op_forward.1} parent=1 // pred_region
      _
    $region17: #{mixed_op_forward.1} parent=1 // pred_fallthru
      _
    // Predicated region
    $region18: #{mixed_op_forward.1} parent=1 // pred_check
      _
    $region19: #{mixed_op_forward.1} parent=1 // pred_check_branch
      %39 = sbr.rel (0) target = $region21
    $region20: #{mixed_op_forward.1} parent=1 // pred_region
      _
    $region21: #{mixed_op_forward.1} parent=1 // pred_fallthru
      _
    // Predicated region
    $region22: #{mixed_op_forward.1} parent=1 // pred_check
      _
    $region23: #{mixed_op_forward.1} parent=1 // pred_check_branch
      %41 = sbr.rel (0) target = $region25
    $region24: #{mixed_op_forward.1} parent=1 // pred_region
      _
    $region25: #{mixed_op_forward.1} parent=1 // pred_fallthru
      _
    // Predicated region
    $region26: #{mixed_op_forward.1} parent=1 // pred_check
      _
    $region27: #{mixed_op_forward.1} parent=1 // pred_check_branch
      %43 = sbr.rel (0) target = $region29
    $region28: #{mixed_op_forward.1} parent=1 // pred_region
      _
    $region29: #{mixed_op_forward.1} parent=1 // pred_fallthru
      _
    // Predicated region
    $region30: #{mixed_op_forward.1} parent=1 // pred_check
      _
    $region31: #{mixed_op_forward.1} parent=1 // pred_check_branch
      %45 = sbr.rel (0) target = $region33
    $region32: #{mixed_op_forward.1} parent=1 // pred_region
      _
    $region33: #{mixed_op_forward.1} parent=1 // pred_fallthru
      _
    // Predicated region
    $region34: #{mixed_op_forward.1} parent=1 // pred_check
      _
    $region35: #{mixed_op_forward.1} parent=1 // pred_check_branch
      %47 = sbr.rel (0) target = $region37
    $region36: #{mixed_op_forward.1} parent=1 // pred_region
      _
    $region37: #{mixed_op_forward.1} parent=1 // pred_fallthru
      _
    // Predicated region
    $region38: #{mixed_op_forward.1} parent=1 // pred_check
      _
    $region39: #{mixed_op_forward.1} parent=1 // pred_check_branch
      %49 = sbr.rel (0) target = $region41
    $region40: #{mixed_op_forward.1} parent=1 // pred_region
      _
    $region41: #{mixed_op_forward.1} parent=1 // pred_fallthru
      _
    // Predicated region
    $region42: #{mixed_op_forward.1} parent=1 // pred_check
      _
    $region43: #{mixed_op_forward.1} parent=1 // pred_check_branch
      %51 = sbr.rel (0) target = $region45
    $region44: #{mixed_op_forward.1} parent=1 // pred_region
      _
    $region45: #{mixed_op_forward.1} parent=1 // pred_fallthru
      _
    // Predicated region
    $region46: #{mixed_op_forward.1} parent=1 // pred_check
      _
    $region47: #{mixed_op_forward.1} parent=1 // pred_check_branch
      %53 = sbr.rel (0) target = $region49
    $region48: #{mixed_op_forward.1} parent=1 // pred_region
      _
    $region49: #{mixed_op_forward.1} parent=1 // pred_fallthru
      _
    // Predicated region
    $region50: #{mixed_op_forward.1} parent=1 // pred_check
      _
    $region51: #{mixed_op_forward.1} parent=1 // pred_check_branch
      %55 = sbr.rel (0) target = $region53
    $region52: #{mixed_op_forward.1} parent=1 // pred_region
      _
    $region53: #{mixed_op_forward.1} parent=1 // pred_fallthru
      _
    // Predicated region
    $region54: #{mixed_op_forward.1} parent=1 // pred_check
      _
    $region55: #{mixed_op_forward.1} parent=1 // pred_check_branch
      %57 = sbr.rel (0) target = $region57
    $region56: #{mixed_op_forward.1} parent=1 // pred_region
      _
    $region57: #{mixed_op_forward.1} parent=1 // pred_fallthru
      _
    // Predicated region
    $region58: #{mixed_op_forward.1} parent=1 // pred_check
      _
    $region59: #{mixed_op_forward.1} parent=1 // pred_check_branch
      %59 = sbr.rel (0) target = $region61
    $region60: #{mixed_op_forward.1} parent=1 // pred_region
      _
    $region61: #{mixed_op_forward.1} parent=1 // pred_fallthru
      _
    // Predicated region
    $region62: #{mixed_op_forward.1} parent=1 // pred_check
      _
    $region63: #{mixed_op_forward.1} parent=1 // pred_check_branch
      %61 = sbr.rel (0) target = $region65
    $region64: #{mixed_op_forward.1} parent=1 // pred_region
      _
    $region65: #{mixed_op_forward.1} parent=1 // pred_fallthru
      _
    // Predicated region
    $region66: #{mixed_op_forward.1} parent=1 // pred_check
      _
    $region67: #{mixed_op_forward.1} parent=1 // pred_check_branch
      %63 = sbr.rel (0) target = $region69
    $region68: #{mixed_op_forward.1} parent=1 // pred_region
      _
    $region69: #{mixed_op_forward.1} parent=1 // pred_fallthru
      _
    // Predicated region
    $region70: #{mixed_op_forward.1} parent=1 // pred_check
      _
    $region71: #{mixed_op_forward.1} parent=1 // pred_check_branch
      %65 = sbr.rel (0) target = $region73
    $region72: #{mixed_op_forward.1} parent=1 // pred_region
      %67 = dma.done [#allocation5], 16
    $region73: #{mixed_op_forward.1} parent=1 // pred_fallthru
      _
    %68 = sfence
    %69 = vst [vmem:[#allocation2] sm:$0xff] 0.0
    %70 = vst [vmem:[#allocation2 + $0x30] sm:$0xff] 0.0
    %v71 = vld [vmem:[%s2] sm:$0x1f]
    %v73 = vperm.slane %v71, 0
    %v74 = vperm.slane %v71, 1
    %v75 = vperm.slane %v71, 2
    %v76 = vperm.slane %v71, 3
    %v77 = vperm.slane %v71, 4
    %83 = vst [vmem:[#allocation3] sm:$0xff] %v73
    %84 = vst [vmem:[#allocation3 + $0x8] sm:$0xff] %v74
    %85 = vst [vmem:[#allocation3 + $0x10] sm:$0xff] %v75
    %86 = vst [vmem:[#allocation3 + $0x18] sm:$0xff] %v76
    %87 = vst [vmem:[#allocation3 + $0x20] sm:$0xff] %v77
    %v88 = vld [vmem:[%s1] sm:$0xff]
    %v89 = vld [vmem:[%s1 + $0x8] sm:$0xff]
    %v90 = vld [vmem:[%s1 + $0x10] sm:$0xff]
    %v91 = vld [vmem:[%s1 + $0x18] sm:$0xff]
    %v92 = vld [vmem:[%s1 + $0x20] sm:$0xff]
    %v93 = vmax.f32 %v88, 0.0
    %v94 = vmax.f32 %v89, 0.0
    %v95 = vmax.f32 %v90, 0.0
    %v96 = vmax.f32 %v91, 0.0
    %v97 = vmax.f32 %v92, 0.0
    %s98 = sld [smem:[#allocation4 + $0x3]]
    %v99 = vstv %s98
    %v100 = vmul.f32 %v99, %v88
    %v101 = vmul.f32 %v99, %v89
    %v102 = vmul.f32 %v99, %v90
    %v103 = vmul.f32 %v99, %v91
    %v104 = vmul.f32 %v99, %v92
    %s105 = sld [smem:[#allocation4 + $0x1]]
    %v106 = vld [vmem:[#allocation3] sm:$0xff]
    %v107 = vld [vmem:[#allocation3 + $0x8] sm:$0xff]
    %v108 = vld [vmem:[#allocation3 + $0x10] sm:$0xff]
    %v109 = vld [vmem:[#allocation3 + $0x18] sm:$0xff]
    %v110 = vld [vmem:[#allocation3 + $0x20] sm:$0xff]
    %vm111 = vcmp.ne.f32.partialorder %v106, 0.0
    %vm112 = vcmp.ne.f32.partialorder %v107, 0.0
    %vm113 = vcmp.ne.f32.partialorder %v108, 0.0
    %vm114 = vcmp.ne.f32.partialorder %v109, 0.0
    %vm115 = vcmp.ne.f32.partialorder %v110, 0.0
    %v116 = vsel %vm111, %v88, -1e+30
    %v117 = vsel %vm112, %v89, -1e+30
    %v118 = vsel %vm113, %v90, -1e+30
    %v119 = vsel %vm114, %v91, -1e+30
    %v120 = vsel %vm115, %v92, -1e+30
    %121 = vst [vmem:[#allocation2 + $0x8] sm:$0xff] %v116
    %122 = vst [vmem:[#allocation2 + $0x10] sm:$0xff] %v117
    %123 = vst [vmem:[#allocation2 + $0x18] sm:$0xff] %v118
    %124 = vst [vmem:[#allocation2 + $0x20] sm:$0xff] %v119
    %125 = vst [vmem:[#allocation2 + $0x28] sm:$0xff] %v120
    %v126 = vld [vmem:[#allocation2] sm:$0xff]
    %v127 = vld [vmem:[#allocation2 + $0x8] sm:$0xff]
    %v128 = vld [vmem:[#allocation2 + $0x10] sm:$0xff]
    %v129 = vld [vmem:[#allocation2 + $0x18] sm:$0xff]
    %v130 = vld [vmem:[#allocation2 + $0x20] sm:$0xff]
    %v131 = vld [vmem:[#allocation2 + $0x28] sm:$0xff]
    %138 = vrot.lane.b32.xlu0 %v126, 127
    %v139 = vpop.permute.xlu0 %138
    %140 = vrot.lane.b32.xlu0 %v127, 127
    %v141 = vpop.permute.xlu0 %140
    %142 = vrot.lane.b32.xlu0 %v128, 127
    %v143 = vpop.permute.xlu0 %142
    %144 = vrot.lane.b32.xlu0 %v129, 127
    %v145 = vpop.permute.xlu0 %144
    %146 = vrot.lane.b32.xlu0 %v130, 127
    %v147 = vpop.permute.xlu0 %146
    %148 = vrot.lane.b32.xlu0 %v131, 127
    %v149 = vpop.permute.xlu0 %148
    %vm150 = vcmask 1039360
    %v151 = vsel %vm150, %v139, %v141
    %v152 = vsel %vm150, %v141, %v143
    %v153 = vsel %vm150, %v143, %v145
    %v154 = vsel %vm150, %v145, %v147
    %v155 = vsel %vm150, %v147, %v149
    %v162 = vmax.f32 %v126, %v151
    %v163 = vmax.f32 %v127, %v152
    %v164 = vmax.f32 %v128, %v153
    %v165 = vmax.f32 %v129, %v154
    %v166 = vmax.f32 %v130, %v155
    %v167 = vmax.f32 %v131, %v149
    %168 = vrot.lane.b32.xlu0 %v126, 126
    %v169 = vpop.permute.xlu0 %168
    %170 = vrot.lane.b32.xlu0 %v127, 126
    %v171 = vpop.permute.xlu0 %170
    %172 = vrot.lane.b32.xlu0 %v128, 126
    %v173 = vpop.permute.xlu0 %172
    %174 = vrot.lane.b32.xlu0 %v129, 126
    %v175 = vpop.permute.xlu0 %174
    %176 = vrot.lane.b32.xlu0 %v130, 126
    %v177 = vpop.permute.xlu0 %176
    %178 = vrot.lane.b32.xlu0 %v131, 126
    %v179 = vpop.permute.xlu0 %178
    %vm180 = vcmask 1031168
    %v181 = vsel %vm180, %v169, %v171
    %v182 = vsel %vm180, %v171, %v173
    %v183 = vsel %vm180, %v173, %v175
    %v184 = vsel %vm180, %v175, %v177
    %v185 = vsel %vm180, %v177, %v179
    %v192 = vmax.f32 %v162, %v181
    %v193 = vmax.f32 %v163, %v182
    %v194 = vmax.f32 %v164, %v183
    %v195 = vmax.f32 %v165, %v184
    %v196 = vmax.f32 %v166, %v185
    %v197 = vmax.f32 %v167, %v179
    %198 = vrot.lane.b32.xlu0 %v126, 104
    %v199 = vpop.permute.xlu0 %198
    %200 = vrot.lane.b32.xlu0 %v127, 104
    %v201 = vpop.permute.xlu0 %200
    %202 = vrot.lane.b32.xlu0 %v128, 104
    %v203 = vpop.permute.xlu0 %202
    %204 = vrot.lane.b32.xlu0 %v129, 104
    %v205 = vpop.permute.xlu0 %204
    %206 = vrot.lane.b32.xlu0 %v130, 104
    %v207 = vpop.permute.xlu0 %206
    %208 = vrot.lane.b32.xlu0 %v131, 104
    %v209 = vpop.permute.xlu0 %208
    %vm210 = vcmask 850944
    %v211 = vsel %vm210, %v199, %v201
    %v212 = vsel %vm210, %v201, %v203
    %v213 = vsel %vm210, %v203, %v205
    %v214 = vsel %vm210, %v205, %v207
    %v215 = vsel %vm210, %v207, %v209
    %v222 = vmax.f32 %v192, %v211
    %v223 = vmax.f32 %v193, %v212
    %v224 = vmax.f32 %v194, %v213
    %v225 = vmax.f32 %v195, %v214
    %v226 = vmax.f32 %v196, %v215
    %v227 = vmax.f32 %v197, %v209
    %228 = vrot.lane.b32.xlu0 %v127, 103
    %v229 = vpop.permute.xlu0 %228
    %230 = vrot.lane.b32.xlu0 %v128, 103
    %v231 = vpop.permute.xlu0 %230
    %232 = vrot.lane.b32.xlu0 %v129, 103
    %v233 = vpop.permute.xlu0 %232
    %234 = vrot.lane.b32.xlu0 %v130, 103
    %v235 = vpop.permute.xlu0 %234
    %236 = vrot.lane.b32.xlu0 %v131, 103
    %v237 = vpop.permute.xlu0 %236
    %vm238 = vcmask 842752
    %v239 = vsel %vm238, %v229, %v231
    %v240 = vsel %vm238, %v231, %v233
    %v241 = vsel %vm238, %v233, %v235
    %v242 = vsel %vm238, %v235, %v237
    %v249 = vmax.f32 %v222, %v229
    %v250 = vmax.f32 %v223, %v239
    %v251 = vmax.f32 %v224, %v240
    %v252 = vmax.f32 %v225, %v241
    %v253 = vmax.f32 %v226, %v242
    %v254 = vmax.f32 %v227, %v237
    %v255 = vld [vmem:[#allocation2 + $0x8] sm:$0xff]
    %v256 = vld [vmem:[#allocation2 + $0x10] sm:$0xff]
    %v257 = vld [vmem:[#allocation2 + $0x18] sm:$0xff]
    %v258 = vld [vmem:[#allocation2 + $0x20] sm:$0xff]
    %v259 = vld [vmem:[#allocation2 + $0x28] sm:$0xff]
    %v260 = vld [vmem:[#allocation2 + $0x30] sm:$0xff]
    %267 = vrot.lane.b32.xlu0 %v255, 102
    %v268 = vpop.permute.xlu0 %267
    %269 = vrot.lane.b32.xlu0 %v256, 102
    %v270 = vpop.permute.xlu0 %269
    %271 = vrot.lane.b32.xlu0 %v257, 102
    %v272 = vpop.permute.xlu0 %271
    %273 = vrot.lane.b32.xlu0 %v258, 102
    %v274 = vpop.permute.xlu0 %273
    %275 = vrot.lane.b32.xlu0 %v259, 102
    %v276 = vpop.permute.xlu0 %275
    %277 = vrot.lane.b32.xlu0 %v260, 102
    %v278 = vpop.permute.xlu0 %277
    %vm279 = vcmask 834560
    %v280 = vsel %vm279, %v268, %v270
    %v281 = vsel %vm279, %v270, %v272
    %v282 = vsel %vm279, %v272, %v274
    %v283 = vsel %vm279, %v274, %v276
    %v284 = vsel %vm279, %v276, %v278
    %v291 = vmax.f32 %v249, %v268
    %v292 = vmax.f32 %v250, %v280
    %v293 = vmax.f32 %v251, %v281
    %v294 = vmax.f32 %v252, %v282
    %v295 = vmax.f32 %v253, %v283
    %v296 = vmax.f32 %v254, %v284
    %297 = vrot.lane.b32.xlu0 %v255, 80
    %v298 = vpop.permute.xlu0 %297
    %299 = vrot.lane.b32.xlu0 %v256, 80
    %v300 = vpop.permute.xlu0 %299
    %301 = vrot.lane.b32.xlu0 %v257, 80
    %v302 = vpop.permute.xlu0 %301
    %303 = vrot.lane.b32.xlu0 %v258, 80
    %v304 = vpop.permute.xlu0 %303
    %305 = vrot.lane.b32.xlu0 %v259, 80
    %v306 = vpop.permute.xlu0 %305
    %307 = vrot.lane.b32.xlu0 %v260, 80
    %v308 = vpop.permute.xlu0 %307
    %vm309 = vcmask 654336
    %v310 = vsel %vm309, %v298, %v300
    %v311 = vsel %vm309, %v300, %v302
    %v312 = vsel %vm309, %v302, %v304
    %v313 = vsel %vm309, %v304, %v306
    %v314 = vsel %vm309, %v306, %v308
    %v321 = vmax.f32 %v291, %v298
    %v322 = vmax.f32 %v292, %v310
    %v323 = vmax.f32 %v293, %v311
    %v324 = vmax.f32 %v294, %v312
    %v325 = vmax.f32 %v295, %v313
    %v326 = vmax.f32 %v296, %v314
    %327 = vrot.lane.b32.xlu0 %v255, 79
    %v328 = vpop.permute.xlu0 %327
    %329 = vrot.lane.b32.xlu0 %v256, 79
    %v330 = vpop.permute.xlu0 %329
    %331 = vrot.lane.b32.xlu0 %v257, 79
    %v332 = vpop.permute.xlu0 %331
    %333 = vrot.lane.b32.xlu0 %v258, 79
    %v334 = vpop.permute.xlu0 %333
    %335 = vrot.lane.b32.xlu0 %v259, 79
    %v336 = vpop.permute.xlu0 %335
    %337 = vrot.lane.b32.xlu0 %v260, 79
    %v338 = vpop.permute.xlu0 %337
    %vm339 = vcmask 646144
    %v340 = vsel %vm339, %v328, %v330
    %v341 = vsel %vm339, %v330, %v332
    %v342 = vsel %vm339, %v332, %v334
    %v343 = vsel %vm339, %v334, %v336
    %v344 = vsel %vm339, %v336, %v338
    %v351 = vmax.f32 %v321, %v328
    %v352 = vmax.f32 %v322, %v340
    %v353 = vmax.f32 %v323, %v341
    %v354 = vmax.f32 %v324, %v342
    %v355 = vmax.f32 %v325, %v343
    %v356 = vmax.f32 %v326, %v344
    %357 = vrot.lane.b32.xlu0 %v255, 78
    %v358 = vpop.permute.xlu0 %357
    %359 = vrot.lane.b32.xlu0 %v256, 78
    %v360 = vpop.permute.xlu0 %359
    %361 = vrot.lane.b32.xlu0 %v257, 78
    %v362 = vpop.permute.xlu0 %361
    %363 = vrot.lane.b32.xlu0 %v258, 78
    %v364 = vpop.permute.xlu0 %363
    %365 = vrot.lane.b32.xlu0 %v259, 78
    %v366 = vpop.permute.xlu0 %365
    %367 = vrot.lane.b32.xlu0 %v260, 78
    %v368 = vpop.permute.xlu0 %367
    %vm369 = vcmask 637952
    %v370 = vsel %vm369, %v358, %v360
    %v371 = vsel %vm369, %v360, %v362
    %v372 = vsel %vm369, %v362, %v364
    %v373 = vsel %vm369, %v364, %v366
    %v374 = vsel %vm369, %v366, %v368
    %v381 = vmax.f32 %v351, %v358
    %v382 = vmax.f32 %v352, %v370
    %v383 = vmax.f32 %v353, %v371
    %v384 = vmax.f32 %v354, %v372
    %v385 = vmax.f32 %v355, %v373
    %v386 = vmax.f32 %v356, %v374
    %v387 = vld [vmem:[#allocation3] sm:$0xff]
    %v388 = vld [vmem:[#allocation3 + $0x8] sm:$0xff]
    %v389 = vld [vmem:[#allocation3 + $0x10] sm:$0xff]
    %v390 = vld [vmem:[#allocation3 + $0x18] sm:$0xff]
    %v391 = vld [vmem:[#allocation3 + $0x20] sm:$0xff]
    %397 = vrot.lane.b32.xlu0 %v387, 103
    %v398 = vpop.permute.xlu0 %397
    %399 = vrot.lane.b32.xlu0 %v388, 103
    %v400 = vpop.permute.xlu0 %399
    %401 = vrot.lane.b32.xlu0 %v389, 103
    %v402 = vpop.permute.xlu0 %401
    %403 = vrot.lane.b32.xlu0 %v390, 103
    %v404 = vpop.permute.xlu0 %403
    %405 = vrot.lane.b32.xlu0 %v391, 103
    %v406 = vpop.permute.xlu0 %405
    %v407 = vsel %vm238, %v398, %v400
    %v408 = vsel %vm238, %v400, %v402
    %v409 = vsel %vm238, %v402, %v404
    %v410 = vsel %vm238, %v404, %v406
    %v417 = vmul.f32 %v381, %v398
    %v418 = vmul.f32 %v382, %v407
    %v419 = vmul.f32 %v383, %v408
    %v420 = vmul.f32 %v384, %v409
    %v421 = vmul.f32 %v385, %v410
    %v422 = vmul.f32 %v386, %v406
    %v423 = vld [vmem:[%s4] sm:$0xff]
    %430 = vrot.lane.b32.xlu0 %v417, 25
    %v431 = vpop.permute.xlu0 %430
    %432 = vrot.lane.b32.xlu0 %v418, 25
    %v433 = vpop.permute.xlu0 %432
    %434 = vrot.lane.b32.xlu0 %v419, 25
    %v435 = vpop.permute.xlu0 %434
    %436 = vrot.lane.b32.xlu0 %v420, 25
    %v437 = vpop.permute.xlu0 %436
    %438 = vrot.lane.b32.xlu0 %v421, 25
    %v439 = vpop.permute.xlu0 %438
    %440 = vrot.lane.b32.xlu0 %v422, 25
    %v441 = vpop.permute.xlu0 %440
    %vm442 = vcmask 203776
    %v443 = vsel %vm442, %v431, %v433
    %v444 = vsel %vm442, %v433, %v435
    %v445 = vsel %vm442, %v435, %v437
    %v446 = vsel %vm442, %v437, %v439
    %v447 = vsel %vm442, %v439, %v441
    %vm453 = vcmask 64512
    %v455 = vsel %vm453, %v423, 0
    %457 = vmatpush.msra.mxu0 0.0
    %458 = vmatpush.msra.mxu0 0.0
    %459 = vmatpush.msra.mxu0 0.0
    %460 = vmatpush.msra.mxu0 0.0
    %461 = vmatpush.msra.mxu0 0.0
    %462 = vmatpush.msra.mxu0 0.0
    %463 = vmatpush.msra.mxu0 0.0
    %464 = vmatpush.msra.mxu0 0.0
    %465 = vmatpush.msra.mxu0 0.0
    %466 = vmatpush.msra.mxu0 0.0
    %467 = vmatpush.msra.mxu0 0.0
    %468 = vmatpush.msra.mxu0 0.0
    %469 = vmatpush.msra.mxu0 0.0
    %470 = vmatpush.msra.mxu0 0.0
    %471 = vmatpush.msra.mxu0 0.0
    %472 = vmatpush.msra.mxu0 %v443
    %473 = vmatmul.f32.gmra.mxu0 %v455
    %v474 = vpop.f32.mrf.mxu0
    %v475 = vadd.f32 0.0, %v474
    %476 = vdwg.mxu0
    %477 = vmatpush.msra.mxu0 0.0
    %478 = vmatpush.msra.mxu0 0.0
    %479 = vmatpush.msra.mxu0 0.0
    %480 = vmatpush.msra.mxu0 0.0
    %481 = vmatpush.msra.mxu0 0.0
    %482 = vmatpush.msra.mxu0 0.0
    %483 = vmatpush.msra.mxu0 0.0
    %484 = vmatpush.msra.mxu0 0.0
    %485 = vmatpush.msra.mxu0 0.0
    %486 = vmatpush.msra.mxu0 0.0
    %487 = vmatpush.msra.mxu0 0.0
    %488 = vmatpush.msra.mxu0 0.0
    %489 = vmatpush.msra.mxu0 0.0
    %490 = vmatpush.msra.mxu0 0.0
    %491 = vmatpush.msra.mxu0 0.0
    %492 = vmatpush.msra.mxu0 %v444
    %493 = vmatmul.f32.gmra.mxu0 %v455
    %v494 = vpop.f32.mrf.mxu0
    %v495 = vadd.f32 0.0, %v494
    %496 = vdwg.mxu0
    %497 = vmatpush.msra.mxu0 0.0
    %498 = vmatpush.msra.mxu0 0.0
    %499 = vmatpush.msra.mxu0 0.0
    %500 = vmatpush.msra.mxu0 0.0
    %501 = vmatpush.msra.mxu0 0.0
    %502 = vmatpush.msra.mxu0 0.0
    %503 = vmatpush.msra.mxu0 0.0
    %504 = vmatpush.msra.mxu0 0.0
    %505 = vmatpush.msra.mxu0 0.0
    %506 = vmatpush.msra.mxu0 0.0
    %507 = vmatpush.msra.mxu0 0.0
    %508 = vmatpush.msra.mxu0 0.0
    %509 = vmatpush.msra.mxu0 0.0
    %510 = vmatpush.msra.mxu0 0.0
    %511 = vmatpush.msra.mxu0 0.0
    %512 = vmatpush.msra.mxu0 %v445
    %513 = vmatmul.f32.gmra.mxu0 %v455
    %v514 = vpop.f32.mrf.mxu0
    %v515 = vadd.f32 0.0, %v514
    %516 = vdwg.mxu0
    %517 = vmatpush.msra.mxu0 0.0
    %518 = vmatpush.msra.mxu0 0.0
    %519 = vmatpush.msra.mxu0 0.0
    %520 = vmatpush.msra.mxu0 0.0
    %521 = vmatpush.msra.mxu0 0.0
    %522 = vmatpush.msra.mxu0 0.0
    %523 = vmatpush.msra.mxu0 0.0
    %524 = vmatpush.msra.mxu0 0.0
    %525 = vmatpush.msra.mxu0 0.0
    %526 = vmatpush.msra.mxu0 0.0
    %527 = vmatpush.msra.mxu0 0.0
    %528 = vmatpush.msra.mxu0 0.0
    %529 = vmatpush.msra.mxu0 0.0
    %530 = vmatpush.msra.mxu0 0.0
    %531 = vmatpush.msra.mxu0 0.0
    %532 = vmatpush.msra.mxu0 %v446
    %533 = vmatmul.f32.gmra.mxu0 %v455
    %v534 = vpop.f32.mrf.mxu0
    %v535 = vadd.f32 0.0, %v534
    %536 = vdwg.mxu0
    %537 = vmatpush.msra.mxu0 0.0
    %538 = vmatpush.msra.mxu0 0.0
    %539 = vmatpush.msra.mxu0 0.0
    %540 = vmatpush.msra.mxu0 0.0
    %541 = vmatpush.msra.mxu0 0.0
    %542 = vmatpush.msra.mxu0 0.0
    %543 = vmatpush.msra.mxu0 0.0
    %544 = vmatpush.msra.mxu0 0.0
    %545 = vmatpush.msra.mxu0 0.0
    %546 = vmatpush.msra.mxu0 0.0
    %547 = vmatpush.msra.mxu0 0.0
    %548 = vmatpush.msra.mxu0 0.0
    %549 = vmatpush.msra.mxu0 0.0
    %550 = vmatpush.msra.mxu0 0.0
    %551 = vmatpush.msra.mxu0 0.0
    %552 = vmatpush.msra.mxu0 %v447
    %553 = vmatmul.f32.gmra.mxu0 %v455
    %v554 = vpop.f32.mrf.mxu0
    %v555 = vadd.f32 0.0, %v554
    %556 = vdwg.mxu0
    %v557 = vadd.f32 %v475, %v495
    %v558 = vadd.f32 %v557, %v515
    %v559 = vadd.f32 %v558, %v535
    %v560 = vadd.f32 %v559, %v555
    %561 = vadd.xlane.f32.xlu0 %v560
    %v562 = vpop.xlane.xlu0 %561
    %v563 = vmul.f32 %v562, 0.001953125
    %v564 = vmul.f32 %v417, %v417
    %v565 = vmul.f32 %v418, %v418
    %v566 = vmul.f32 %v419, %v419
    %v567 = vmul.f32 %v420, %v420
    %v568 = vmul.f32 %v421, %v421
    %v569 = vmul.f32 %v422, %v422
    %576 = vrot.lane.b32.xlu0 %v564, 25
    %v577 = vpop.permute.xlu0 %576
    %578 = vrot.lane.b32.xlu0 %v565, 25
    %v579 = vpop.permute.xlu0 %578
    %580 = vrot.lane.b32.xlu0 %v566, 25
    %v581 = vpop.permute.xlu0 %580
    %582 = vrot.lane.b32.xlu0 %v567, 25
    %v583 = vpop.permute.xlu0 %582
    %584 = vrot.lane.b32.xlu0 %v568, 25
    %v585 = vpop.permute.xlu0 %584
    %586 = vrot.lane.b32.xlu0 %v569, 25
    %v587 = vpop.permute.xlu0 %586
    %v588 = vsel %vm442, %v577, %v579
    %v589 = vsel %vm442, %v579, %v581
    %v590 = vsel %vm442, %v581, %v583
    %v591 = vsel %vm442, %v583, %v585
    %v592 = vsel %vm442, %v585, %v587
    %598 = vmatpush.msra.mxu0 0.0
    %599 = vmatpush.msra.mxu0 0.0
    %600 = vmatpush.msra.mxu0 0.0
    %601 = vmatpush.msra.mxu0 0.0
    %602 = vmatpush.msra.mxu0 0.0
    %603 = vmatpush.msra.mxu0 0.0
    %604 = vmatpush.msra.mxu0 0.0
    %605 = vmatpush.msra.mxu0 0.0
    %606 = vmatpush.msra.mxu0 0.0
    %607 = vmatpush.msra.mxu0 0.0
    %608 = vmatpush.msra.mxu0 0.0
    %609 = vmatpush.msra.mxu0 0.0
    %610 = vmatpush.msra.mxu0 0.0
    %611 = vmatpush.msra.mxu0 0.0
    %612 = vmatpush.msra.mxu0 0.0
    %613 = vmatpush.msra.mxu0 %v588
    %614 = vmatmul.f32.gmra.mxu0 %v455
    %v615 = vpop.f32.mrf.mxu0
    %v616 = vadd.f32 0.0, %v615
    %617 = vdwg.mxu0
    %618 = vmatpush.msra.mxu0 0.0
    %619 = vmatpush.msra.mxu0 0.0
    %620 = vmatpush.msra.mxu0 0.0
    %621 = vmatpush.msra.mxu0 0.0
    %622 = vmatpush.msra.mxu0 0.0
    %623 = vmatpush.msra.mxu0 0.0
    %624 = vmatpush.msra.mxu0 0.0
    %625 = vmatpush.msra.mxu0 0.0
    %626 = vmatpush.msra.mxu0 0.0
    %627 = vmatpush.msra.mxu0 0.0
    %628 = vmatpush.msra.mxu0 0.0
    %629 = vmatpush.msra.mxu0 0.0
    %630 = vmatpush.msra.mxu0 0.0
    %631 = vmatpush.msra.mxu0 0.0
    %632 = vmatpush.msra.mxu0 0.0
    %633 = vmatpush.msra.mxu0 %v589
    %634 = vmatmul.f32.gmra.mxu0 %v455
    %v635 = vpop.f32.mrf.mxu0
    %v636 = vadd.f32 0.0, %v635
    %637 = vdwg.mxu0
    %638 = vmatpush.msra.mxu0 0.0
    %639 = vmatpush.msra.mxu0 0.0
    %640 = vmatpush.msra.mxu0 0.0
    %641 = vmatpush.msra.mxu0 0.0
    %642 = vmatpush.msra.mxu0 0.0
    %643 = vmatpush.msra.mxu0 0.0
    %644 = vmatpush.msra.mxu0 0.0
    %645 = vmatpush.msra.mxu0 0.0
    %646 = vmatpush.msra.mxu0 0.0
    %647 = vmatpush.msra.mxu0 0.0
    %648 = vmatpush.msra.mxu0 0.0
    %649 = vmatpush.msra.mxu0 0.0
    %650 = vmatpush.msra.mxu0 0.0
    %651 = vmatpush.msra.mxu0 0.0
    %652 = vmatpush.msra.mxu0 0.0
    %653 = vmatpush.msra.mxu0 %v590
    %654 = vmatmul.f32.gmra.mxu0 %v455
    %v655 = vpop.f32.mrf.mxu0
    %v656 = vadd.f32 0.0, %v655
    %657 = vdwg.mxu0
    %658 = vmatpush.msra.mxu0 0.0
    %659 = vmatpush.msra.mxu0 0.0
    %660 = vmatpush.msra.mxu0 0.0
    %661 = vmatpush.msra.mxu0 0.0
    %662 = vmatpush.msra.mxu0 0.0
    %663 = vmatpush.msra.mxu0 0.0
    %664 = vmatpush.msra.mxu0 0.0
    %665 = vmatpush.msra.mxu0 0.0
    %666 = vmatpush.msra.mxu0 0.0
    %667 = vmatpush.msra.mxu0 0.0
    %668 = vmatpush.msra.mxu0 0.0
    %669 = vmatpush.msra.mxu0 0.0
    %670 = vmatpush.msra.mxu0 0.0
    %671 = vmatpush.msra.mxu0 0.0
    %672 = vmatpush.msra.mxu0 0.0
    %673 = vmatpush.msra.mxu0 %v591
    %674 = vmatmul.f32.gmra.mxu0 %v455
    %v675 = vpop.f32.mrf.mxu0
    %v676 = vadd.f32 0.0, %v675
    %677 = vdwg.mxu0
    %678 = vmatpush.msra.mxu0 0.0
    %679 = vmatpush.msra.mxu0 0.0
    %680 = vmatpush.msra.mxu0 0.0
    %681 = vmatpush.msra.mxu0 0.0
    %682 = vmatpush.msra.mxu0 0.0
    %683 = vmatpush.msra.mxu0 0.0
    %684 = vmatpush.msra.mxu0 0.0
    %685 = vmatpush.msra.mxu0 0.0
    %686 = vmatpush.msra.mxu0 0.0
    %687 = vmatpush.msra.mxu0 0.0
    %688 = vmatpush.msra.mxu0 0.0
    %689 = vmatpush.msra.mxu0 0.0
    %690 = vmatpush.msra.mxu0 0.0
    %691 = vmatpush.msra.mxu0 0.0
    %692 = vmatpush.msra.mxu0 0.0
    %693 = vmatpush.msra.mxu0 %v592
    %694 = vmatmul.f32.gmra.mxu0 %v455
    %v695 = vpop.f32.mrf.mxu0
    %v696 = vadd.f32 0.0, %v695
    %697 = vdwg.mxu0
    %v698 = vadd.f32 %v616, %v636
    %v699 = vadd.f32 %v698, %v656
    %v700 = vadd.f32 %v699, %v676
    %v701 = vadd.f32 %v700, %v696
    %702 = vadd.xlane.f32.xlu0 %v701
    %v703 = vpop.xlane.xlu0 %702
    %v704 = vmul.f32 %v703, 0.001953125
    %v705 = vmul.f32 %v563, %v563
    %v706 = vsub.f32 %v704, %v705
    %v707 = vmax.f32 %v706, 0.0
    %v708 = vadd.f32 %v707, 1e-05
    %v709 = vrsqrt.pop %v708
    %v710 = vmul.f32 %v709, %v708
    %v711 = vmul.f32 %v710, %v709
    %v712 = vmul.f32 0.5, %v711
    %v713 = vsub.f32 1.5, %v712
    %v714 = vmul.f32 %v709, %v713
    %vm715 = vweird.f32 %v708
    %vm716 = vweird.f32 %v709
    %vm717 = vmor %vm715, %vm716
    %v718 = vsel %vm717, %v709, %v714
    %v719 = vstv %s105
    %v720 = vmul.f32 %v718, %v719
    %v721 = vsub.f32 %v417, %v563
    %v722 = vsub.f32 %v418, %v563
    %v723 = vsub.f32 %v419, %v563
    %v724 = vsub.f32 %v420, %v563
    %v725 = vsub.f32 %v421, %v563
    %v726 = vsub.f32 %v422, %v563
    %v727 = vmul.f32 %v721, %v720
    %v728 = vmul.f32 %v722, %v720
    %v729 = vmul.f32 %v723, %v720
    %v730 = vmul.f32 %v724, %v720
    %v731 = vmul.f32 %v725, %v720
    %v732 = vmul.f32 %v726, %v720
    %739 = vrot.lane.b32.xlu0 %v727, 25
    %v740 = vpop.permute.xlu0 %739
    %741 = vrot.lane.b32.xlu0 %v728, 25
    %v742 = vpop.permute.xlu0 %741
    %743 = vrot.lane.b32.xlu0 %v729, 25
    %v744 = vpop.permute.xlu0 %743
    %745 = vrot.lane.b32.xlu0 %v730, 25
    %v746 = vpop.permute.xlu0 %745
    %747 = vrot.lane.b32.xlu0 %v731, 25
    %v748 = vpop.permute.xlu0 %747
    %749 = vrot.lane.b32.xlu0 %v732, 25
    %v750 = vpop.permute.xlu0 %749
    %v751 = vsel %vm442, %v740, %v742
    %v752 = vsel %vm442, %v742, %v744
    %v753 = vsel %vm442, %v744, %v746
    %v754 = vsel %vm442, %v746, %v748
    %v755 = vsel %vm442, %v748, %v750
    %v761 = vadd.f32 %v100, %v751
    %v762 = vadd.f32 %v101, %v752
    %v763 = vadd.f32 %v102, %v753
    %v764 = vadd.f32 %v103, %v754
    %v765 = vadd.f32 %v104, %v755
    %s766 = sld [smem:[#allocation4 + $0x2]]
    %767 = vst [vmem:[#allocation2 + $0x8] sm:$0xff] %v88
    %768 = vst [vmem:[#allocation2 + $0x10] sm:$0xff] %v89
    %769 = vst [vmem:[#allocation2 + $0x18] sm:$0xff] %v90
    %770 = vst [vmem:[#allocation2 + $0x20] sm:$0xff] %v91
    %771 = vst [vmem:[#allocation2 + $0x28] sm:$0xff] %v92
    %v772 = vld [vmem:[#allocation2] sm:$0xff]
    %v773 = vld [vmem:[#allocation2 + $0x8] sm:$0xff]
    %v774 = vld [vmem:[#allocation2 + $0x10] sm:$0xff]
    %v775 = vld [vmem:[#allocation2 + $0x18] sm:$0xff]
    %v776 = vld [vmem:[#allocation2 + $0x20] sm:$0xff]
    %v777 = vld [vmem:[#allocation2 + $0x28] sm:$0xff]
    %784 = vrot.lane.b32.xlu0 %v772, 127
    %v785 = vpop.permute.xlu0 %784
    %786 = vrot.lane.b32.xlu0 %v773, 127
    %v787 = vpop.permute.xlu0 %786
    %788 = vrot.lane.b32.xlu0 %v774, 127
    %v789 = vpop.permute.xlu0 %788
    %790 = vrot.lane.b32.xlu0 %v775, 127
    %v791 = vpop.permute.xlu0 %790
    %792 = vrot.lane.b32.xlu0 %v776, 127
    %v793 = vpop.permute.xlu0 %792
    %794 = vrot.lane.b32.xlu0 %v777, 127
    %v795 = vpop.permute.xlu0 %794
    %v796 = vsel %vm150, %v785, %v787
    %v797 = vsel %vm150, %v787, %v789
    %v798 = vsel %vm150, %v789, %v791
    %v799 = vsel %vm150, %v791, %v793
    %v800 = vsel %vm150, %v793, %v795
    %v807 = vadd.f32 %v772, %v796
    %v808 = vadd.f32 %v773, %v797
    %v809 = vadd.f32 %v774, %v798
    %v810 = vadd.f32 %v775, %v799
    %v811 = vadd.f32 %v776, %v800
    %v812 = vadd.f32 %v777, %v795
    %813 = vrot.lane.b32.xlu0 %v772, 126
    %v814 = vpop.permute.xlu0 %813
    %815 = vrot.lane.b32.xlu0 %v773, 126
    %v816 = vpop.permute.xlu0 %815
    %817 = vrot.lane.b32.xlu0 %v774, 126
    %v818 = vpop.permute.xlu0 %817
    %819 = vrot.lane.b32.xlu0 %v775, 126
    %v820 = vpop.permute.xlu0 %819
    %821 = vrot.lane.b32.xlu0 %v776, 126
    %v822 = vpop.permute.xlu0 %821
    %823 = vrot.lane.b32.xlu0 %v777, 126
    %v824 = vpop.permute.xlu0 %823
    %v825 = vsel %vm180, %v814, %v816
    %v826 = vsel %vm180, %v816, %v818
    %v827 = vsel %vm180, %v818, %v820
    %v828 = vsel %vm180, %v820, %v822
    %v829 = vsel %vm180, %v822, %v824
    %v836 = vadd.f32 %v807, %v825
    %v837 = vadd.f32 %v808, %v826
    %v838 = vadd.f32 %v809, %v827
    %v839 = vadd.f32 %v810, %v828
    %v840 = vadd.f32 %v811, %v829
    %v841 = vadd.f32 %v812, %v824
    %842 = vrot.lane.b32.xlu0 %v772, 104
    %v843 = vpop.permute.xlu0 %842
    %844 = vrot.lane.b32.xlu0 %v773, 104
    %v845 = vpop.permute.xlu0 %844
    %846 = vrot.lane.b32.xlu0 %v774, 104
    %v847 = vpop.permute.xlu0 %846
    %848 = vrot.lane.b32.xlu0 %v775, 104
    %v849 = vpop.permute.xlu0 %848
    %850 = vrot.lane.b32.xlu0 %v776, 104
    %v851 = vpop.permute.xlu0 %850
    %852 = vrot.lane.b32.xlu0 %v777, 104
    %v853 = vpop.permute.xlu0 %852
    %v854 = vsel %vm210, %v843, %v845
    %v855 = vsel %vm210, %v845, %v847
    %v856 = vsel %vm210, %v847, %v849
    %v857 = vsel %vm210, %v849, %v851
    %v858 = vsel %vm210, %v851, %v853
    %v865 = vadd.f32 %v836, %v854
    %v866 = vadd.f32 %v837, %v855
    %v867 = vadd.f32 %v838, %v856
    %v868 = vadd.f32 %v839, %v857
    %v869 = vadd.f32 %v840, %v858
    %v870 = vadd.f32 %v841, %v853
    %871 = vrot.lane.b32.xlu0 %v773, 103
    %v872 = vpop.permute.xlu0 %871
    %873 = vrot.lane.b32.xlu0 %v774, 103
    %v874 = vpop.permute.xlu0 %873
    %875 = vrot.lane.b32.xlu0 %v775, 103
    %v876 = vpop.permute.xlu0 %875
    %877 = vrot.lane.b32.xlu0 %v776, 103
    %v878 = vpop.permute.xlu0 %877
    %879 = vrot.lane.b32.xlu0 %v777, 103
    %v880 = vpop.permute.xlu0 %879
    %v881 = vsel %vm238, %v872, %v874
    %v882 = vsel %vm238, %v874, %v876
    %v883 = vsel %vm238, %v876, %v878
    %v884 = vsel %vm238, %v878, %v880
    %v891 = vadd.f32 %v865, %v872
    %v892 = vadd.f32 %v866, %v881
    %v893 = vadd.f32 %v867, %v882
    %v894 = vadd.f32 %v868, %v883
    %v895 = vadd.f32 %v869, %v884
    %v896 = vadd.f32 %v870, %v880
    %v897 = vld [vmem:[#allocation2 + $0x8] sm:$0xff]
    %v898 = vld [vmem:[#allocation2 + $0x10] sm:$0xff]
    %v899 = vld [vmem:[#allocation2 + $0x18] sm:$0xff]
    %v900 = vld [vmem:[#allocation2 + $0x20] sm:$0xff]
    %v901 = vld [vmem:[#allocation2 + $0x28] sm:$0xff]
    %v902 = vld [vmem:[#allocation2 + $0x30] sm:$0xff]
    %909 = vrot.lane.b32.xlu0 %v897, 102
    %v910 = vpop.permute.xlu0 %909
    %911 = vrot.lane.b32.xlu0 %v898, 102
    %v912 = vpop.permute.xlu0 %911
    %913 = vrot.lane.b32.xlu0 %v899, 102
    %v914 = vpop.permute.xlu0 %913
    %915 = vrot.lane.b32.xlu0 %v900, 102
    %v916 = vpop.permute.xlu0 %915
    %917 = vrot.lane.b32.xlu0 %v901, 102
    %v918 = vpop.permute.xlu0 %917
    %919 = vrot.lane.b32.xlu0 %v902, 102
    %v920 = vpop.permute.xlu0 %919
    %v921 = vsel %vm279, %v910, %v912
    %v922 = vsel %vm279, %v912, %v914
    %v923 = vsel %vm279, %v914, %v916
    %v924 = vsel %vm279, %v916, %v918
    %v925 = vsel %vm279, %v918, %v920
    %v932 = vadd.f32 %v891, %v910
    %v933 = vadd.f32 %v892, %v921
    %v934 = vadd.f32 %v893, %v922
    %v935 = vadd.f32 %v894, %v923
    %v936 = vadd.f32 %v895, %v924
    %v937 = vadd.f32 %v896, %v925
    %938 = vrot.lane.b32.xlu0 %v897, 80
    %v939 = vpop.permute.xlu0 %938
    %940 = vrot.lane.b32.xlu0 %v898, 80
    %v941 = vpop.permute.xlu0 %940
    %942 = vrot.lane.b32.xlu0 %v899, 80
    %v943 = vpop.permute.xlu0 %942
    %944 = vrot.lane.b32.xlu0 %v900, 80
    %v945 = vpop.permute.xlu0 %944
    %946 = vrot.lane.b32.xlu0 %v901, 80
    %v947 = vpop.permute.xlu0 %946
    %948 = vrot.lane.b32.xlu0 %v902, 80
    %v949 = vpop.permute.xlu0 %948
    %v950 = vsel %vm309, %v939, %v941
    %v951 = vsel %vm309, %v941, %v943
    %v952 = vsel %vm309, %v943, %v945
    %v953 = vsel %vm309, %v945, %v947
    %v954 = vsel %vm309, %v947, %v949
    %v961 = vadd.f32 %v932, %v939
    %v962 = vadd.f32 %v933, %v950
    %v963 = vadd.f32 %v934, %v951
    %v964 = vadd.f32 %v935, %v952
    %v965 = vadd.f32 %v936, %v953
    %v966 = vadd.f32 %v937, %v954
    %967 = vrot.lane.b32.xlu0 %v897, 79
    %v968 = vpop.permute.xlu0 %967
    %969 = vrot.lane.b32.xlu0 %v898, 79
    %v970 = vpop.permute.xlu0 %969
    %971 = vrot.lane.b32.xlu0 %v899, 79
    %v972 = vpop.permute.xlu0 %971
    %973 = vrot.lane.b32.xlu0 %v900, 79
    %v974 = vpop.permute.xlu0 %973
    %975 = vrot.lane.b32.xlu0 %v901, 79
    %v976 = vpop.permute.xlu0 %975
    %977 = vrot.lane.b32.xlu0 %v902, 79
    %v978 = vpop.permute.xlu0 %977
    %v979 = vsel %vm339, %v968, %v970
    %v980 = vsel %vm339, %v970, %v972
    %v981 = vsel %vm339, %v972, %v974
    %v982 = vsel %vm339, %v974, %v976
    %v983 = vsel %vm339, %v976, %v978
    %v990 = vadd.f32 %v961, %v968
    %v991 = vadd.f32 %v962, %v979
    %v992 = vadd.f32 %v963, %v980
    %v993 = vadd.f32 %v964, %v981
    %v994 = vadd.f32 %v965, %v982
    %v995 = vadd.f32 %v966, %v983
    %996 = vrot.lane.b32.xlu0 %v897, 78
    %v997 = vpop.permute.xlu0 %996
    %998 = vrot.lane.b32.xlu0 %v898, 78
    %v999 = vpop.permute.xlu0 %998
    %1000 = vrot.lane.b32.xlu0 %v899, 78
    %v1001 = vpop.permute.xlu0 %1000
    %1002 = vrot.lane.b32.xlu0 %v900, 78
    %v1003 = vpop.permute.xlu0 %1002
    %1004 = vrot.lane.b32.xlu0 %v901, 78
    %v1005 = vpop.permute.xlu0 %1004
    %1006 = vrot.lane.b32.xlu0 %v902, 78
    %v1007 = vpop.permute.xlu0 %1006
    %v1008 = vsel %vm369, %v997, %v999
    %v1009 = vsel %vm369, %v999, %v1001
    %v1010 = vsel %vm369, %v1001, %v1003
    %v1011 = vsel %vm369, %v1003, %v1005
    %v1012 = vsel %vm369, %v1005, %v1007
    %v1019 = vadd.f32 %v990, %v997
    %v1020 = vadd.f32 %v991, %v1008
    %v1021 = vadd.f32 %v992, %v1009
    %v1022 = vadd.f32 %v993, %v1010
    %v1023 = vadd.f32 %v994, %v1011
    %v1024 = vadd.f32 %v995, %v1012
    %v1025 = vld [vmem:[%s3] sm:$0x1f]
    %v1027 = vperm.slane %v1025, 0
    %v1028 = vperm.slane %v1025, 1
    %v1029 = vperm.slane %v1025, 2
    %v1030 = vperm.slane %v1025, 3
    %v1031 = vperm.slane %v1025, 4
    %1032 = vrot.lane.b32.xlu0 %v1027, 103
    %v1033 = vpop.permute.xlu0 %1032
    %1034 = vrot.lane.b32.xlu0 %v1028, 103
    %v1035 = vpop.permute.xlu0 %1034
    %1036 = vrot.lane.b32.xlu0 %v1029, 103
    %v1037 = vpop.permute.xlu0 %1036
    %1038 = vrot.lane.b32.xlu0 %v1030, 103
    %v1039 = vpop.permute.xlu0 %1038
    %1040 = vrot.lane.b32.xlu0 %v1031, 103
    %v1041 = vpop.permute.xlu0 %1040
    %v1042 = vsel %vm238, %v1033, %v1035
    %v1043 = vsel %vm238, %v1035, %v1037
    %v1044 = vsel %vm238, %v1037, %v1039
    %v1045 = vsel %vm238, %v1039, %v1041
    %v1052 = vmul.f32 %v1019, %v1033
    %v1053 = vmul.f32 %v1020, %v1042
    %v1054 = vmul.f32 %v1021, %v1043
    %v1055 = vmul.f32 %v1022, %v1044
    %v1056 = vmul.f32 %v1023, %v1045
    %v1057 = vmul.f32 %v1024, %v1041
    %v1058 = vld [vmem:[%s4] sm:$0xff]
    %1065 = vrot.lane.b32.xlu0 %v1052, 25
    %v1066 = vpop.permute.xlu0 %1065
    %1067 = vrot.lane.b32.xlu0 %v1053, 25
    %v1068 = vpop.permute.xlu0 %1067
    %1069 = vrot.lane.b32.xlu0 %v1054, 25
    %v1070 = vpop.permute.xlu0 %1069
    %1071 = vrot.lane.b32.xlu0 %v1055, 25
    %v1072 = vpop.permute.xlu0 %1071
    %1073 = vrot.lane.b32.xlu0 %v1056, 25
    %v1074 = vpop.permute.xlu0 %1073
    %1075 = vrot.lane.b32.xlu0 %v1057, 25
    %v1076 = vpop.permute.xlu0 %1075
    %v1077 = vsel %vm442, %v1066, %v1068
    %v1078 = vsel %vm442, %v1068, %v1070
    %v1079 = vsel %vm442, %v1070, %v1072
    %v1080 = vsel %vm442, %v1072, %v1074
    %v1081 = vsel %vm442, %v1074, %v1076
    %v1088 = vsel %vm453, %v1058, 0
    %1090 = vmatpush.msra.mxu0 0.0
    %1091 = vmatpush.msra.mxu0 0.0
    %1092 = vmatpush.msra.mxu0 0.0
    %1093 = vmatpush.msra.mxu0 0.0
    %1094 = vmatpush.msra.mxu0 0.0
    %1095 = vmatpush.msra.mxu0 0.0
    %1096 = vmatpush.msra.mxu0 0.0
    %1097 = vmatpush.msra.mxu0 0.0
    %1098 = vmatpush.msra.mxu0 0.0
    %1099 = vmatpush.msra.mxu0 0.0
    %1100 = vmatpush.msra.mxu0 0.0
    %1101 = vmatpush.msra.mxu0 0.0
    %1102 = vmatpush.msra.mxu0 0.0
    %1103 = vmatpush.msra.mxu0 0.0
    %1104 = vmatpush.msra.mxu0 0.0
    %1105 = vmatpush.msra.mxu0 %v1077
    %1106 = vmatmul.f32.gmra.mxu0 %v1088
    %v1107 = vpop.f32.mrf.mxu0
    %v1108 = vadd.f32 0.0, %v1107
    %1109 = vdwg.mxu0
    %1110 = vmatpush.msra.mxu0 0.0
    %1111 = vmatpush.msra.mxu0 0.0
    %1112 = vmatpush.msra.mxu0 0.0
    %1113 = vmatpush.msra.mxu0 0.0
    %1114 = vmatpush.msra.mxu0 0.0
    %1115 = vmatpush.msra.mxu0 0.0
    %1116 = vmatpush.msra.mxu0 0.0
    %1117 = vmatpush.msra.mxu0 0.0
    %1118 = vmatpush.msra.mxu0 0.0
    %1119 = vmatpush.msra.mxu0 0.0
    %1120 = vmatpush.msra.mxu0 0.0
    %1121 = vmatpush.msra.mxu0 0.0
    %1122 = vmatpush.msra.mxu0 0.0
    %1123 = vmatpush.msra.mxu0 0.0
    %1124 = vmatpush.msra.mxu0 0.0
    %1125 = vmatpush.msra.mxu0 %v1078
    %1126 = vmatmul.f32.gmra.mxu0 %v1088
    %v1127 = vpop.f32.mrf.mxu0
    %v1128 = vadd.f32 0.0, %v1127
    %1129 = vdwg.mxu0
    %1130 = vmatpush.msra.mxu0 0.0
    %1131 = vmatpush.msra.mxu0 0.0
    %1132 = vmatpush.msra.mxu0 0.0
    %1133 = vmatpush.msra.mxu0 0.0
    %1134 = vmatpush.msra.mxu0 0.0
    %1135 = vmatpush.msra.mxu0 0.0
    %1136 = vmatpush.msra.mxu0 0.0
    %1137 = vmatpush.msra.mxu0 0.0
    %1138 = vmatpush.msra.mxu0 0.0
    %1139 = vmatpush.msra.mxu0 0.0
    %1140 = vmatpush.msra.mxu0 0.0
    %1141 = vmatpush.msra.mxu0 0.0
    %1142 = vmatpush.msra.mxu0 0.0
    %1143 = vmatpush.msra.mxu0 0.0
    %1144 = vmatpush.msra.mxu0 0.0
    %1145 = vmatpush.msra.mxu0 %v1079
    %1146 = vmatmul.f32.gmra.mxu0 %v1088
    %v1147 = vpop.f32.mrf.mxu0
    %v1148 = vadd.f32 0.0, %v1147
    %1149 = vdwg.mxu0
    %1150 = vmatpush.msra.mxu0 0.0
    %1151 = vmatpush.msra.mxu0 0.0
    %1152 = vmatpush.msra.mxu0 0.0
    %1153 = vmatpush.msra.mxu0 0.0
    %1154 = vmatpush.msra.mxu0 0.0
    %1155 = vmatpush.msra.mxu0 0.0
    %1156 = vmatpush.msra.mxu0 0.0
    %1157 = vmatpush.msra.mxu0 0.0
    %1158 = vmatpush.msra.mxu0 0.0
    %1159 = vmatpush.msra.mxu0 0.0
    %1160 = vmatpush.msra.mxu0 0.0
    %1161 = vmatpush.msra.mxu0 0.0
    %1162 = vmatpush.msra.mxu0 0.0
    %1163 = vmatpush.msra.mxu0 0.0
    %1164 = vmatpush.msra.mxu0 0.0
    %1165 = vmatpush.msra.mxu0 %v1080
    %1166 = vmatmul.f32.gmra.mxu0 %v1088
    %v1167 = vpop.f32.mrf.mxu0
    %v1168 = vadd.f32 0.0, %v1167
    %1169 = vdwg.mxu0
    %1170 = vmatpush.msra.mxu0 0.0
    %1171 = vmatpush.msra.mxu0 0.0
    %1172 = vmatpush.msra.mxu0 0.0
    %1173 = vmatpush.msra.mxu0 0.0
    %1174 = vmatpush.msra.mxu0 0.0
    %1175 = vmatpush.msra.mxu0 0.0
    %1176 = vmatpush.msra.mxu0 0.0
    %1177 = vmatpush.msra.mxu0 0.0
    %1178 = vmatpush.msra.mxu0 0.0
    %1179 = vmatpush.msra.mxu0 0.0
    %1180 = vmatpush.msra.mxu0 0.0
    %1181 = vmatpush.msra.mxu0 0.0
    %1182 = vmatpush.msra.mxu0 0.0
    %1183 = vmatpush.msra.mxu0 0.0
    %1184 = vmatpush.msra.mxu0 0.0
    %1185 = vmatpush.msra.mxu0 %v1081
    %1186 = vmatmul.f32.gmra.mxu0 %v1088
    %v1187 = vpop.f32.mrf.mxu0
    %v1188 = vadd.f32 0.0, %v1187
    %1189 = vdwg.mxu0
    %v1190 = vadd.f32 %v1108, %v1128
    %v1191 = vadd.f32 %v1190, %v1148
    %v1192 = vadd.f32 %v1191, %v1168
    %v1193 = vadd.f32 %v1192, %v1188
    %1194 = vadd.xlane.f32.xlu0 %v1193
    %v1195 = vpop.xlane.xlu0 %1194
    %v1196 = vmul.f32 %v1195, 0.001953125
    %v1197 = vmul.f32 %v1052, %v1052
    %v1198 = vmul.f32 %v1053, %v1053
    %v1199 = vmul.f32 %v1054, %v1054
    %v1200 = vmul.f32 %v1055, %v1055
    %v1201 = vmul.f32 %v1056, %v1056
    %v1202 = vmul.f32 %v1057, %v1057
    %1209 = vrot.lane.b32.xlu0 %v1197, 25
    %v1210 = vpop.permute.xlu0 %1209
    %1211 = vrot.lane.b32.xlu0 %v1198, 25
    %v1212 = vpop.permute.xlu0 %1211
    %1213 = vrot.lane.b32.xlu0 %v1199, 25
    %v1214 = vpop.permute.xlu0 %1213
    %1215 = vrot.lane.b32.xlu0 %v1200, 25
    %v1216 = vpop.permute.xlu0 %1215
    %1217 = vrot.lane.b32.xlu0 %v1201, 25
    %v1218 = vpop.permute.xlu0 %1217
    %1219 = vrot.lane.b32.xlu0 %v1202, 25
    %v1220 = vpop.permute.xlu0 %1219
    %v1221 = vsel %vm442, %v1210, %v1212
    %v1222 = vsel %vm442, %v1212, %v1214
    %v1223 = vsel %vm442, %v1214, %v1216
    %v1224 = vsel %vm442, %v1216, %v1218
    %v1225 = vsel %vm442, %v1218, %v1220
    %1231 = vmatpush.msra.mxu0 0.0
    %1232 = vmatpush.msra.mxu0 0.0
    %1233 = vmatpush.msra.mxu0 0.0
    %1234 = vmatpush.msra.mxu0 0.0
    %1235 = vmatpush.msra.mxu0 0.0
    %1236 = vmatpush.msra.mxu0 0.0
    %1237 = vmatpush.msra.mxu0 0.0
    %1238 = vmatpush.msra.mxu0 0.0
    %1239 = vmatpush.msra.mxu0 0.0
    %1240 = vmatpush.msra.mxu0 0.0
    %1241 = vmatpush.msra.mxu0 0.0
    %1242 = vmatpush.msra.mxu0 0.0
    %1243 = vmatpush.msra.mxu0 0.0
    %1244 = vmatpush.msra.mxu0 0.0
    %1245 = vmatpush.msra.mxu0 0.0
    %1246 = vmatpush.msra.mxu0 %v1221
    %1247 = vmatmul.f32.gmra.mxu0 %v1088
    %v1248 = vpop.f32.mrf.mxu0
    %v1249 = vadd.f32 0.0, %v1248
    %1250 = vdwg.mxu0
    %1251 = vmatpush.msra.mxu0 0.0
    %1252 = vmatpush.msra.mxu0 0.0
    %1253 = vmatpush.msra.mxu0 0.0
    %1254 = vmatpush.msra.mxu0 0.0
    %1255 = vmatpush.msra.mxu0 0.0
    %1256 = vmatpush.msra.mxu0 0.0
    %1257 = vmatpush.msra.mxu0 0.0
    %1258 = vmatpush.msra.mxu0 0.0
    %1259 = vmatpush.msra.mxu0 0.0
    %1260 = vmatpush.msra.mxu0 0.0
    %1261 = vmatpush.msra.mxu0 0.0
    %1262 = vmatpush.msra.mxu0 0.0
    %1263 = vmatpush.msra.mxu0 0.0
    %1264 = vmatpush.msra.mxu0 0.0
    %1265 = vmatpush.msra.mxu0 0.0
    %1266 = vmatpush.msra.mxu0 %v1222
    %1267 = vmatmul.f32.gmra.mxu0 %v1088
    %v1268 = vpop.f32.mrf.mxu0
    %v1269 = vadd.f32 0.0, %v1268
    %1270 = vdwg.mxu0
    %1271 = vmatpush.msra.mxu0 0.0
    %1272 = vmatpush.msra.mxu0 0.0
    %1273 = vmatpush.msra.mxu0 0.0
    %1274 = vmatpush.msra.mxu0 0.0
    %1275 = vmatpush.msra.mxu0 0.0
    %1276 = vmatpush.msra.mxu0 0.0
    %1277 = vmatpush.msra.mxu0 0.0
    %1278 = vmatpush.msra.mxu0 0.0
    %1279 = vmatpush.msra.mxu0 0.0
    %1280 = vmatpush.msra.mxu0 0.0
    %1281 = vmatpush.msra.mxu0 0.0
    %1282 = vmatpush.msra.mxu0 0.0
    %1283 = vmatpush.msra.mxu0 0.0
    %1284 = vmatpush.msra.mxu0 0.0
    %1285 = vmatpush.msra.mxu0 0.0
    %1286 = vmatpush.msra.mxu0 %v1223
    %1287 = vmatmul.f32.gmra.mxu0 %v1088
    %v1288 = vpop.f32.mrf.mxu0
    %v1289 = vadd.f32 0.0, %v1288
    %1290 = vdwg.mxu0
    %1291 = vmatpush.msra.mxu0 0.0
    %1292 = vmatpush.msra.mxu0 0.0
    %1293 = vmatpush.msra.mxu0 0.0
    %1294 = vmatpush.msra.mxu0 0.0
    %1295 = vmatpush.msra.mxu0 0.0
    %1296 = vmatpush.msra.mxu0 0.0
    %1297 = vmatpush.msra.mxu0 0.0
    %1298 = vmatpush.msra.mxu0 0.0
    %1299 = vmatpush.msra.mxu0 0.0
    %1300 = vmatpush.msra.mxu0 0.0
    %1301 = vmatpush.msra.mxu0 0.0
    %1302 = vmatpush.msra.mxu0 0.0
    %1303 = vmatpush.msra.mxu0 0.0
    %1304 = vmatpush.msra.mxu0 0.0
    %1305 = vmatpush.msra.mxu0 0.0
    %1306 = vmatpush.msra.mxu0 %v1224
    %1307 = vmatmul.f32.gmra.mxu0 %v1088
    %v1308 = vpop.f32.mrf.mxu0
    %v1309 = vadd.f32 0.0, %v1308
    %1310 = vdwg.mxu0
    %1311 = vmatpush.msra.mxu0 0.0
    %1312 = vmatpush.msra.mxu0 0.0
    %1313 = vmatpush.msra.mxu0 0.0
    %1314 = vmatpush.msra.mxu0 0.0
    %1315 = vmatpush.msra.mxu0 0.0
    %1316 = vmatpush.msra.mxu0 0.0
    %1317 = vmatpush.msra.mxu0 0.0
    %1318 = vmatpush.msra.mxu0 0.0
    %1319 = vmatpush.msra.mxu0 0.0
    %1320 = vmatpush.msra.mxu0 0.0
    %1321 = vmatpush.msra.mxu0 0.0
    %1322 = vmatpush.msra.mxu0 0.0
    %1323 = vmatpush.msra.mxu0 0.0
    %1324 = vmatpush.msra.mxu0 0.0
    %1325 = vmatpush.msra.mxu0 0.0
    %1326 = vmatpush.msra.mxu0 %v1225
    %1327 = vmatmul.f32.gmra.mxu0 %v1088
    %v1328 = vpop.f32.mrf.mxu0
    %v1329 = vadd.f32 0.0, %v1328
    %1330 = vdwg.mxu0
    %v1331 = vadd.f32 %v1249, %v1269
    %v1332 = vadd.f32 %v1331, %v1289
    %v1333 = vadd.f32 %v1332, %v1309
    %v1334 = vadd.f32 %v1333, %v1329
    %1335 = vadd.xlane.f32.xlu0 %v1334
    %v1336 = vpop.xlane.xlu0 %1335
    %v1337 = vmul.f32 %v1336, 0.001953125
    %v1338 = vmul.f32 %v1196, %v1196
    %v1339 = vsub.f32 %v1337, %v1338
    %v1340 = vmax.f32 %v1339, 0.0
    %v1341 = vadd.f32 %v1340, 1e-05
    %v1342 = vrsqrt.pop %v1341
    %v1343 = vmul.f32 %v1342, %v1341
    %v1344 = vmul.f32 %v1343, %v1342
    %v1345 = vmul.f32 0.5, %v1344
    %v1346 = vsub.f32 1.5, %v1345
    %v1347 = vmul.f32 %v1342, %v1346
    %vm1348 = vweird.f32 %v1341
    %vm1349 = vweird.f32 %v1342
    %vm1350 = vmor %vm1348, %vm1349
    %v1351 = vsel %vm1350, %v1342, %v1347
    %v1352 = vstv %s766
    %v1353 = vmul.f32 %v1351, %v1352
    %v1354 = vsub.f32 %v1052, %v1196
    %v1355 = vsub.f32 %v1053, %v1196
    %v1356 = vsub.f32 %v1054, %v1196
    %v1357 = vsub.f32 %v1055, %v1196
    %v1358 = vsub.f32 %v1056, %v1196
    %v1359 = vsub.f32 %v1057, %v1196
    %v1360 = vmul.f32 %v1354, %v1353
    %v1361 = vmul.f32 %v1355, %v1353
    %v1362 = vmul.f32 %v1356, %v1353
    %v1363 = vmul.f32 %v1357, %v1353
    %v1364 = vmul.f32 %v1358, %v1353
    %v1365 = vmul.f32 %v1359, %v1353
    %1372 = vrot.lane.b32.xlu0 %v1360, 25
    %v1373 = vpop.permute.xlu0 %1372
    %1374 = vrot.lane.b32.xlu0 %v1361, 25
    %v1375 = vpop.permute.xlu0 %1374
    %1376 = vrot.lane.b32.xlu0 %v1362, 25
    %v1377 = vpop.permute.xlu0 %1376
    %1378 = vrot.lane.b32.xlu0 %v1363, 25
    %v1379 = vpop.permute.xlu0 %1378
    %1380 = vrot.lane.b32.xlu0 %v1364, 25
    %v1381 = vpop.permute.xlu0 %1380
    %1382 = vrot.lane.b32.xlu0 %v1365, 25
    %v1383 = vpop.permute.xlu0 %1382
    %v1384 = vsel %vm442, %v1373, %v1375
    %v1385 = vsel %vm442, %v1375, %v1377
    %v1386 = vsel %vm442, %v1377, %v1379
    %v1387 = vsel %vm442, %v1379, %v1381
    %v1388 = vsel %vm442, %v1381, %v1383
    %v1394 = vadd.f32 %v761, %v1384
    %v1395 = vadd.f32 %v762, %v1385
    %v1396 = vadd.f32 %v763, %v1386
    %v1397 = vadd.f32 %v764, %v1387
    %v1398 = vadd.f32 %v765, %v1388
    %s1399 = sld [smem:[#allocation4 + $0x4]]
    %1400 = vst [vmem:[#allocation2 + $0x8] sm:$0xff] %v93
    %1401 = vst [vmem:[#allocation2 + $0x10] sm:$0xff] %v94
    %1402 = vst [vmem:[#allocation2 + $0x18] sm:$0xff] %v95
    %1403 = vst [vmem:[#allocation2 + $0x20] sm:$0xff] %v96
    %1404 = vst [vmem:[#allocation2 + $0x28] sm:$0xff] %v97
    %v1405 = vld [vmem:[%s5] sm:$0xff]
    %v1406 = vld [vmem:[#allocation2] sm:$0xff]
    %v1407 = vld [vmem:[#allocation2 + $0x8] sm:$0xff]
    %v1408 = vld [vmem:[#allocation2 + $0x10] sm:$0xff]
    %v1409 = vld [vmem:[#allocation2 + $0x18] sm:$0xff]
    %v1410 = vld [vmem:[#allocation2 + $0x20] sm:$0xff]
    %v1411 = vld [vmem:[#allocation2 + $0x28] sm:$0xff]
    %1413 = vset.pattern.permute.xlu0 0
    %1414 = vperm.xlu0 %1413, %v1405
    %v1415 = vpop.permute.xlu0 %1414
    %v1417 = vmul.f32 %v1415, %v1406
    %v1418 = vmul.f32 %v1415, %v1407
    %v1419 = vmul.f32 %v1415, %v1408
    %v1420 = vmul.f32 %v1415, %v1409
    %v1421 = vmul.f32 %v1415, %v1410
    %v1422 = vmul.f32 %v1415, %v1411
    %1423 = vset.pattern.permute.xlu0 1
    %1424 = vperm.xlu0 %1423, %v1405
    %v1425 = vpop.permute.xlu0 %1424
    %v1427 = vmul.f32 %v1425, %v1406
    %v1428 = vmul.f32 %v1425, %v1407
    %v1429 = vmul.f32 %v1425, %v1408
    %v1430 = vmul.f32 %v1425, %v1409
    %v1431 = vmul.f32 %v1425, %v1410
    %v1432 = vmul.f32 %v1425, %v1411
    %1439 = vrot.lane.b32.xlu0 %v1427, 127
    %v1440 = vpop.permute.xlu0 %1439
    %1441 = vrot.lane.b32.xlu0 %v1428, 127
    %v1442 = vpop.permute.xlu0 %1441
    %1443 = vrot.lane.b32.xlu0 %v1429, 127
    %v1444 = vpop.permute.xlu0 %1443
    %1445 = vrot.lane.b32.xlu0 %v1430, 127
    %v1446 = vpop.permute.xlu0 %1445
    %1447 = vrot.lane.b32.xlu0 %v1431, 127
    %v1448 = vpop.permute.xlu0 %1447
    %1449 = vrot.lane.b32.xlu0 %v1432, 127
    %v1450 = vpop.permute.xlu0 %1449
    %v1451 = vsel %vm150, %v1440, %v1442
    %v1452 = vsel %vm150, %v1442, %v1444
    %v1453 = vsel %vm150, %v1444, %v1446
    %v1454 = vsel %vm150, %v1446, %v1448
    %v1455 = vsel %vm150, %v1448, %v1450
    %v1462 = vadd.f32 %v1417, %v1451
    %v1463 = vadd.f32 %v1418, %v1452
    %v1464 = vadd.f32 %v1419, %v1453
    %v1465 = vadd.f32 %v1420, %v1454
    %v1466 = vadd.f32 %v1421, %v1455
    %v1467 = vadd.f32 %v1422, %v1450
    %1468 = vset.pattern.permute.xlu0 2
    %1469 = vperm.xlu0 %1468, %v1405
    %v1470 = vpop.permute.xlu0 %1469
    %v1472 = vmul.f32 %v1470, %v1406
    %v1473 = vmul.f32 %v1470, %v1407
    %v1474 = vmul.f32 %v1470, %v1408
    %v1475 = vmul.f32 %v1470, %v1409
    %v1476 = vmul.f32 %v1470, %v1410
    %v1477 = vmul.f32 %v1470, %v1411
    %1484 = vrot.lane.b32.xlu0 %v1472, 126
    %v1485 = vpop.permute.xlu0 %1484
    %1486 = vrot.lane.b32.xlu0 %v1473, 126
    %v1487 = vpop.permute.xlu0 %1486
    %1488 = vrot.lane.b32.xlu0 %v1474, 126
    %v1489 = vpop.permute.xlu0 %1488
    %1490 = vrot.lane.b32.xlu0 %v1475, 126
    %v1491 = vpop.permute.xlu0 %1490
    %1492 = vrot.lane.b32.xlu0 %v1476, 126
    %v1493 = vpop.permute.xlu0 %1492
    %1494 = vrot.lane.b32.xlu0 %v1477, 126
    %v1495 = vpop.permute.xlu0 %1494
    %v1496 = vsel %vm180, %v1485, %v1487
    %v1497 = vsel %vm180, %v1487, %v1489
    %v1498 = vsel %vm180, %v1489, %v1491
    %v1499 = vsel %vm180, %v1491, %v1493
    %v1500 = vsel %vm180, %v1493, %v1495
    %v1507 = vadd.f32 %v1462, %v1496
    %v1508 = vadd.f32 %v1463, %v1497
    %v1509 = vadd.f32 %v1464, %v1498
    %v1510 = vadd.f32 %v1465, %v1499
    %v1511 = vadd.f32 %v1466, %v1500
    %v1512 = vadd.f32 %v1467, %v1495
    %1513 = vset.pattern.permute.xlu0 3
    %1514 = vperm.xlu0 %1513, %v1405
    %v1515 = vpop.permute.xlu0 %1514
    %v1517 = vmul.f32 %v1515, %v1406
    %v1518 = vmul.f32 %v1515, %v1407
    %v1519 = vmul.f32 %v1515, %v1408
    %v1520 = vmul.f32 %v1515, %v1409
    %v1521 = vmul.f32 %v1515, %v1410
    %v1522 = vmul.f32 %v1515, %v1411
    %1529 = vrot.lane.b32.xlu0 %v1517, 104
    %v1530 = vpop.permute.xlu0 %1529
    %1531 = vrot.lane.b32.xlu0 %v1518, 104
    %v1532 = vpop.permute.xlu0 %1531
    %1533 = vrot.lane.b32.xlu0 %v1519, 104
    %v1534 = vpop.permute.xlu0 %1533
    %1535 = vrot.lane.b32.xlu0 %v1520, 104
    %v1536 = vpop.permute.xlu0 %1535
    %1537 = vrot.lane.b32.xlu0 %v1521, 104
    %v1538 = vpop.permute.xlu0 %1537
    %1539 = vrot.lane.b32.xlu0 %v1522, 104
    %v1540 = vpop.permute.xlu0 %1539
    %v1541 = vsel %vm210, %v1530, %v1532
    %v1542 = vsel %vm210, %v1532, %v1534
    %v1543 = vsel %vm210, %v1534, %v1536
    %v1544 = vsel %vm210, %v1536, %v1538
    %v1545 = vsel %vm210, %v1538, %v1540
    %v1552 = vadd.f32 %v1507, %v1541
    %v1553 = vadd.f32 %v1508, %v1542
    %v1554 = vadd.f32 %v1509, %v1543
    %v1555 = vadd.f32 %v1510, %v1544
    %v1556 = vadd.f32 %v1511, %v1545
    %v1557 = vadd.f32 %v1512, %v1540
    %1558 = vset.pattern.permute.xlu0 4
    %1559 = vperm.xlu0 %1558, %v1405
    %v1560 = vpop.permute.xlu0 %1559
    %v1562 = vmul.f32 %v1560, %v1407
    %v1563 = vmul.f32 %v1560, %v1408
    %v1564 = vmul.f32 %v1560, %v1409
    %v1565 = vmul.f32 %v1560, %v1410
    %v1566 = vmul.f32 %v1560, %v1411
    %1572 = vrot.lane.b32.xlu0 %v1562, 103
    %v1573 = vpop.permute.xlu0 %1572
    %1574 = vrot.lane.b32.xlu0 %v1563, 103
    %v1575 = vpop.permute.xlu0 %1574
    %1576 = vrot.lane.b32.xlu0 %v1564, 103
    %v1577 = vpop.permute.xlu0 %1576
    %1578 = vrot.lane.b32.xlu0 %v1565, 103
    %v1579 = vpop.permute.xlu0 %1578
    %1580 = vrot.lane.b32.xlu0 %v1566, 103
    %v1581 = vpop.permute.xlu0 %1580
    %v1582 = vsel %vm238, %v1573, %v1575
    %v1583 = vsel %vm238, %v1575, %v1577
    %v1584 = vsel %vm238, %v1577, %v1579
    %v1585 = vsel %vm238, %v1579, %v1581
    %v1592 = vadd.f32 %v1552, %v1573
    %v1593 = vadd.f32 %v1553, %v1582
    %v1594 = vadd.f32 %v1554, %v1583
    %v1595 = vadd.f32 %v1555, %v1584
    %v1596 = vadd.f32 %v1556, %v1585
    %v1597 = vadd.f32 %v1557, %v1581
    %v1598 = vld [vmem:[#allocation2 + $0x8] sm:$0xff]
    %v1599 = vld [vmem:[#allocation2 + $0x10] sm:$0xff]
    %v1600 = vld [vmem:[#allocation2 + $0x18] sm:$0xff]
    %v1601 = vld [vmem:[#allocation2 + $0x20] sm:$0xff]
    %v1602 = vld [vmem:[#allocation2 + $0x28] sm:$0xff]
    %v1603 = vld [vmem:[#allocation2 + $0x30] sm:$0xff]
    %1604 = vset.pattern.permute.xlu0 5
    %1605 = vperm.xlu0 %1604, %v1405
    %v1606 = vpop.permute.xlu0 %1605
    %v1608 = vmul.f32 %v1606, %v1598
    %v1609 = vmul.f32 %v1606, %v1599
    %v1610 = vmul.f32 %v1606, %v1600
    %v1611 = vmul.f32 %v1606, %v1601
    %v1612 = vmul.f32 %v1606, %v1602
    %v1613 = vmul.f32 %v1606, %v1603
    %1620 = vrot.lane.b32.xlu0 %v1608, 102
    %v1621 = vpop.permute.xlu0 %1620
    %1622 = vrot.lane.b32.xlu0 %v1609, 102
    %v1623 = vpop.permute.xlu0 %1622
    %1624 = vrot.lane.b32.xlu0 %v1610, 102
    %v1625 = vpop.permute.xlu0 %1624
    %1626 = vrot.lane.b32.xlu0 %v1611, 102
    %v1627 = vpop.permute.xlu0 %1626
    %1628 = vrot.lane.b32.xlu0 %v1612, 102
    %v1629 = vpop.permute.xlu0 %1628
    %1630 = vrot.lane.b32.xlu0 %v1613, 102
    %v1631 = vpop.permute.xlu0 %1630
    %v1632 = vsel %vm279, %v1621, %v1623
    %v1633 = vsel %vm279, %v1623, %v1625
    %v1634 = vsel %vm279, %v1625, %v1627
    %v1635 = vsel %vm279, %v1627, %v1629
    %v1636 = vsel %vm279, %v1629, %v1631
    %v1643 = vadd.f32 %v1592, %v1621
    %v1644 = vadd.f32 %v1593, %v1632
    %v1645 = vadd.f32 %v1594, %v1633
    %v1646 = vadd.f32 %v1595, %v1634
    %v1647 = vadd.f32 %v1596, %v1635
    %v1648 = vadd.f32 %v1597, %v1636
    %1649 = vset.pattern.permute.xlu0 6
    %1650 = vperm.xlu0 %1649, %v1405
    %v1651 = vpop.permute.xlu0 %1650
    %v1653 = vmul.f32 %v1651, %v1598
    %v1654 = vmul.f32 %v1651, %v1599
    %v1655 = vmul.f32 %v1651, %v1600
    %v1656 = vmul.f32 %v1651, %v1601
    %v1657 = vmul.f32 %v1651, %v1602
    %v1658 = vmul.f32 %v1651, %v1603
    %1665 = vrot.lane.b32.xlu0 %v1653, 80
    %v1666 = vpop.permute.xlu0 %1665
    %1667 = vrot.lane.b32.xlu0 %v1654, 80
    %v1668 = vpop.permute.xlu0 %1667
    %1669 = vrot.lane.b32.xlu0 %v1655, 80
    %v1670 = vpop.permute.xlu0 %1669
    %1671 = vrot.lane.b32.xlu0 %v1656, 80
    %v1672 = vpop.permute.xlu0 %1671
    %1673 = vrot.lane.b32.xlu0 %v1657, 80
    %v1674 = vpop.permute.xlu0 %1673
    %1675 = vrot.lane.b32.xlu0 %v1658, 80
    %v1676 = vpop.permute.xlu0 %1675
    %v1677 = vsel %vm309, %v1666, %v1668
    %v1678 = vsel %vm309, %v1668, %v1670
    %v1679 = vsel %vm309, %v1670, %v1672
    %v1680 = vsel %vm309, %v1672, %v1674
    %v1681 = vsel %vm309, %v1674, %v1676
    %v1688 = vadd.f32 %v1643, %v1666
    %v1689 = vadd.f32 %v1644, %v1677
    %v1690 = vadd.f32 %v1645, %v1678
    %v1691 = vadd.f32 %v1646, %v1679
    %v1692 = vadd.f32 %v1647, %v1680
    %v1693 = vadd.f32 %v1648, %v1681
    %1694 = vset.pattern.permute.xlu0 7
    %1695 = vperm.xlu0 %1694, %v1405
    %v1696 = vpop.permute.xlu0 %1695
    %v1698 = vmul.f32 %v1696, %v1598
    %v1699 = vmul.f32 %v1696, %v1599
    %v1700 = vmul.f32 %v1696, %v1600
    %v1701 = vmul.f32 %v1696, %v1601
    %v1702 = vmul.f32 %v1696, %v1602
    %v1703 = vmul.f32 %v1696, %v1603
    %1710 = vrot.lane.b32.xlu0 %v1698, 79
    %v1711 = vpop.permute.xlu0 %1710
    %1712 = vrot.lane.b32.xlu0 %v1699, 79
    %v1713 = vpop.permute.xlu0 %1712
    %1714 = vrot.lane.b32.xlu0 %v1700, 79
    %v1715 = vpop.permute.xlu0 %1714
    %1716 = vrot.lane.b32.xlu0 %v1701, 79
    %v1717 = vpop.permute.xlu0 %1716
    %1718 = vrot.lane.b32.xlu0 %v1702, 79
    %v1719 = vpop.permute.xlu0 %1718
    %1720 = vrot.lane.b32.xlu0 %v1703, 79
    %v1721 = vpop.permute.xlu0 %1720
    %v1722 = vsel %vm339, %v1711, %v1713
    %v1723 = vsel %vm339, %v1713, %v1715
    %v1724 = vsel %vm339, %v1715, %v1717
    %v1725 = vsel %vm339, %v1717, %v1719
    %v1726 = vsel %vm339, %v1719, %v1721
    %v1733 = vadd.f32 %v1688, %v1711
    %v1734 = vadd.f32 %v1689, %v1722
    %v1735 = vadd.f32 %v1690, %v1723
    %v1736 = vadd.f32 %v1691, %v1724
    %v1737 = vadd.f32 %v1692, %v1725
    %v1738 = vadd.f32 %v1693, %v1726
    %1739 = vset.pattern.permute.xlu0 8
    %1740 = vperm.xlu0 %1739, %v1405
    %v1741 = vpop.permute.xlu0 %1740
    %v1743 = vmul.f32 %v1741, %v1598
    %v1744 = vmul.f32 %v1741, %v1599
    %v1745 = vmul.f32 %v1741, %v1600
    %v1746 = vmul.f32 %v1741, %v1601
    %v1747 = vmul.f32 %v1741, %v1602
    %v1748 = vmul.f32 %v1741, %v1603
    %1755 = vrot.lane.b32.xlu0 %v1743, 78
    %v1756 = vpop.permute.xlu0 %1755
    %1757 = vrot.lane.b32.xlu0 %v1744, 78
    %v1758 = vpop.permute.xlu0 %1757
    %1759 = vrot.lane.b32.xlu0 %v1745, 78
    %v1760 = vpop.permute.xlu0 %1759
    %1761 = vrot.lane.b32.xlu0 %v1746, 78
    %v1762 = vpop.permute.xlu0 %1761
    %1763 = vrot.lane.b32.xlu0 %v1747, 78
    %v1764 = vpop.permute.xlu0 %1763
    %1765 = vrot.lane.b32.xlu0 %v1748, 78
    %v1766 = vpop.permute.xlu0 %1765
    %v1767 = vsel %vm369, %v1756, %v1758
    %v1768 = vsel %vm369, %v1758, %v1760
    %v1769 = vsel %vm369, %v1760, %v1762
    %v1770 = vsel %vm369, %v1762, %v1764
    %v1771 = vsel %vm369, %v1764, %v1766
    %v1778 = vadd.f32 %v1733, %v1756
    %v1779 = vadd.f32 %v1734, %v1767
    %v1780 = vadd.f32 %v1735, %v1768
    %v1781 = vadd.f32 %v1736, %v1769
    %v1782 = vadd.f32 %v1737, %v1770
    %v1783 = vadd.f32 %v1738, %v1771
    %v1784 = vld [vmem:[#allocation3] sm:$0xff]
    %v1785 = vld [vmem:[#allocation3 + $0x8] sm:$0xff]
    %v1786 = vld [vmem:[#allocation3 + $0x10] sm:$0xff]
    %v1787 = vld [vmem:[#allocation3 + $0x18] sm:$0xff]
    %v1788 = vld [vmem:[#allocation3 + $0x20] sm:$0xff]
    %1794 = vrot.lane.b32.xlu0 %v1784, 103
    %v1795 = vpop.permute.xlu0 %1794
    %1796 = vrot.lane.b32.xlu0 %v1785, 103
    %v1797 = vpop.permute.xlu0 %1796
    %1798 = vrot.lane.b32.xlu0 %v1786, 103
    %v1799 = vpop.permute.xlu0 %1798
    %1800 = vrot.lane.b32.xlu0 %v1787, 103
    %v1801 = vpop.permute.xlu0 %1800
    %1802 = vrot.lane.b32.xlu0 %v1788, 103
    %v1803 = vpop.permute.xlu0 %1802
    %v1804 = vsel %vm238, %v1795, %v1797
    %v1805 = vsel %vm238, %v1797, %v1799
    %v1806 = vsel %vm238, %v1799, %v1801
    %v1807 = vsel %vm238, %v1801, %v1803
    %v1814 = vmul.f32 %v1778, %v1795
    %v1815 = vmul.f32 %v1779, %v1804
    %v1816 = vmul.f32 %v1780, %v1805
    %v1817 = vmul.f32 %v1781, %v1806
    %v1818 = vmul.f32 %v1782, %v1807
    %v1819 = vmul.f32 %v1783, %v1803
    %v1820 = vld [vmem:[%s6] sm:$0xff]
    %1827 = vrot.lane.b32.xlu0 %v1814, 25
    %v1828 = vpop.permute.xlu0 %1827
    %1829 = vrot.lane.b32.xlu0 %v1815, 25
    %v1830 = vpop.permute.xlu0 %1829
    %1831 = vrot.lane.b32.xlu0 %v1816, 25
    %v1832 = vpop.permute.xlu0 %1831
    %1833 = vrot.lane.b32.xlu0 %v1817, 25
    %v1834 = vpop.permute.xlu0 %1833
    %1835 = vrot.lane.b32.xlu0 %v1818, 25
    %v1836 = vpop.permute.xlu0 %1835
    %1837 = vrot.lane.b32.xlu0 %v1819, 25
    %v1838 = vpop.permute.xlu0 %1837
    %v1839 = vsel %vm442, %v1828, %v1830
    %v1840 = vsel %vm442, %v1830, %v1832
    %v1841 = vsel %vm442, %v1832, %v1834
    %v1842 = vsel %vm442, %v1834, %v1836
    %v1843 = vsel %vm442, %v1836, %v1838
    %v1850 = vsel %vm453, %v1820, 0
    %1852 = vmatpush.msra.mxu0 0.0
    %1853 = vmatpush.msra.mxu0 0.0
    %1854 = vmatpush.msra.mxu0 0.0
    %1855 = vmatpush.msra.mxu0 0.0
    %1856 = vmatpush.msra.mxu0 0.0
    %1857 = vmatpush.msra.mxu0 0.0
    %1858 = vmatpush.msra.mxu0 0.0
    %1859 = vmatpush.msra.mxu0 0.0
    %1860 = vmatpush.msra.mxu0 0.0
    %1861 = vmatpush.msra.mxu0 0.0
    %1862 = vmatpush.msra.mxu0 0.0
    %1863 = vmatpush.msra.mxu0 0.0
    %1864 = vmatpush.msra.mxu0 0.0
    %1865 = vmatpush.msra.mxu0 0.0
    %1866 = vmatpush.msra.mxu0 0.0
    %1867 = vmatpush.msra.mxu0 %v1839
    %1868 = vmatmul.f32.gmra.mxu0 %v1850
    %v1869 = vpop.f32.mrf.mxu0
    %v1870 = vadd.f32 0.0, %v1869
    %1871 = vdwg.mxu0
    %1872 = vmatpush.msra.mxu0 0.0
    %1873 = vmatpush.msra.mxu0 0.0
    %1874 = vmatpush.msra.mxu0 0.0
    %1875 = vmatpush.msra.mxu0 0.0
    %1876 = vmatpush.msra.mxu0 0.0
    %1877 = vmatpush.msra.mxu0 0.0
    %1878 = vmatpush.msra.mxu0 0.0
    %1879 = vmatpush.msra.mxu0 0.0
    %1880 = vmatpush.msra.mxu0 0.0
    %1881 = vmatpush.msra.mxu0 0.0
    %1882 = vmatpush.msra.mxu0 0.0
    %1883 = vmatpush.msra.mxu0 0.0
    %1884 = vmatpush.msra.mxu0 0.0
    %1885 = vmatpush.msra.mxu0 0.0
    %1886 = vmatpush.msra.mxu0 0.0
    %1887 = vmatpush.msra.mxu0 %v1840
    %1888 = vmatmul.f32.gmra.mxu0 %v1850
    %v1889 = vpop.f32.mrf.mxu0
    %v1890 = vadd.f32 0.0, %v1889
    %1891 = vdwg.mxu0
    %1892 = vmatpush.msra.mxu0 0.0
    %1893 = vmatpush.msra.mxu0 0.0
    %1894 = vmatpush.msra.mxu0 0.0
    %1895 = vmatpush.msra.mxu0 0.0
    %1896 = vmatpush.msra.mxu0 0.0
    %1897 = vmatpush.msra.mxu0 0.0
    %1898 = vmatpush.msra.mxu0 0.0
    %1899 = vmatpush.msra.mxu0 0.0
    %1900 = vmatpush.msra.mxu0 0.0
    %1901 = vmatpush.msra.mxu0 0.0
    %1902 = vmatpush.msra.mxu0 0.0
    %1903 = vmatpush.msra.mxu0 0.0
    %1904 = vmatpush.msra.mxu0 0.0
    %1905 = vmatpush.msra.mxu0 0.0
    %1906 = vmatpush.msra.mxu0 0.0
    %1907 = vmatpush.msra.mxu0 %v1841
    %1908 = vmatmul.f32.gmra.mxu0 %v1850
    %v1909 = vpop.f32.mrf.mxu0
    %v1910 = vadd.f32 0.0, %v1909
    %1911 = vdwg.mxu0
    %1912 = vmatpush.msra.mxu0 0.0
    %1913 = vmatpush.msra.mxu0 0.0
    %1914 = vmatpush.msra.mxu0 0.0
    %1915 = vmatpush.msra.mxu0 0.0
    %1916 = vmatpush.msra.mxu0 0.0
    %1917 = vmatpush.msra.mxu0 0.0
    %1918 = vmatpush.msra.mxu0 0.0
    %1919 = vmatpush.msra.mxu0 0.0
    %1920 = vmatpush.msra.mxu0 0.0
    %1921 = vmatpush.msra.mxu0 0.0
    %1922 = vmatpush.msra.mxu0 0.0
    %1923 = vmatpush.msra.mxu0 0.0
    %1924 = vmatpush.msra.mxu0 0.0
    %1925 = vmatpush.msra.mxu0 0.0
    %1926 = vmatpush.msra.mxu0 0.0
    %1927 = vmatpush.msra.mxu0 %v1842
    %1928 = vmatmul.f32.gmra.mxu0 %v1850
    %v1929 = vpop.f32.mrf.mxu0
    %v1930 = vadd.f32 0.0, %v1929
    %1931 = vdwg.mxu0
    %1932 = vmatpush.msra.mxu0 0.0
    %1933 = vmatpush.msra.mxu0 0.0
    %1934 = vmatpush.msra.mxu0 0.0
    %1935 = vmatpush.msra.mxu0 0.0
    %1936 = vmatpush.msra.mxu0 0.0
    %1937 = vmatpush.msra.mxu0 0.0
    %1938 = vmatpush.msra.mxu0 0.0
    %1939 = vmatpush.msra.mxu0 0.0
    %1940 = vmatpush.msra.mxu0 0.0
    %1941 = vmatpush.msra.mxu0 0.0
    %1942 = vmatpush.msra.mxu0 0.0
    %1943 = vmatpush.msra.mxu0 0.0
    %1944 = vmatpush.msra.mxu0 0.0
    %1945 = vmatpush.msra.mxu0 0.0
    %1946 = vmatpush.msra.mxu0 0.0
    %1947 = vmatpush.msra.mxu0 %v1843
    %1948 = vmatmul.f32.gmra.mxu0 %v1850
    %v1949 = vpop.f32.mrf.mxu0
    %v1950 = vadd.f32 0.0, %v1949
    %1951 = vdwg.mxu0
    %v1952 = vld [vmem:[%s4] sm:$0xff]
    %v1954 = vsel %vm453, %v1952, 0
    %1956 = vmatpush.msra.mxu0 0.0
    %1957 = vmatpush.msra.mxu0 0.0
    %1958 = vmatpush.msra.mxu0 0.0
    %1959 = vmatpush.msra.mxu0 0.0
    %1960 = vmatpush.msra.mxu0 0.0
    %1961 = vmatpush.msra.mxu0 0.0
    %1962 = vmatpush.msra.mxu0 0.0
    %1963 = vmatpush.msra.mxu0 0.0
    %1964 = vmatpush.msra.mxu0 0.0
    %1965 = vmatpush.msra.mxu0 0.0
    %1966 = vmatpush.msra.mxu0 0.0
    %1967 = vmatpush.msra.mxu0 0.0
    %1968 = vmatpush.msra.mxu0 0.0
    %1969 = vmatpush.msra.mxu0 0.0
    %1970 = vmatpush.msra.mxu0 0.0
    %1971 = vmatpush.msra.mxu0 %v1870
    %1972 = vmatmul.f32.gmra.mxu0 %v1954
    %v1973 = vpop.f32.mrf.mxu0
    %v1974 = vadd.f32 0.0, %v1973
    %1975 = vdwg.mxu0
    %1976 = vmatpush.msra.mxu0 0.0
    %1977 = vmatpush.msra.mxu0 0.0
    %1978 = vmatpush.msra.mxu0 0.0
    %1979 = vmatpush.msra.mxu0 0.0
    %1980 = vmatpush.msra.mxu0 0.0
    %1981 = vmatpush.msra.mxu0 0.0
    %1982 = vmatpush.msra.mxu0 0.0
    %1983 = vmatpush.msra.mxu0 0.0
    %1984 = vmatpush.msra.mxu0 0.0
    %1985 = vmatpush.msra.mxu0 0.0
    %1986 = vmatpush.msra.mxu0 0.0
    %1987 = vmatpush.msra.mxu0 0.0
    %1988 = vmatpush.msra.mxu0 0.0
    %1989 = vmatpush.msra.mxu0 0.0
    %1990 = vmatpush.msra.mxu0 0.0
    %1991 = vmatpush.msra.mxu0 %v1890
    %1992 = vmatmul.f32.gmra.mxu0 %v1954
    %v1993 = vpop.f32.mrf.mxu0
    %v1994 = vadd.f32 0.0, %v1993
    %1995 = vdwg.mxu0
    %1996 = vmatpush.msra.mxu0 0.0
    %1997 = vmatpush.msra.mxu0 0.0
    %1998 = vmatpush.msra.mxu0 0.0
    %1999 = vmatpush.msra.mxu0 0.0
    %2000 = vmatpush.msra.mxu0 0.0
    %2001 = vmatpush.msra.mxu0 0.0
    %2002 = vmatpush.msra.mxu0 0.0
    %2003 = vmatpush.msra.mxu0 0.0
    %2004 = vmatpush.msra.mxu0 0.0
    %2005 = vmatpush.msra.mxu0 0.0
    %2006 = vmatpush.msra.mxu0 0.0
    %2007 = vmatpush.msra.mxu0 0.0
    %2008 = vmatpush.msra.mxu0 0.0
    %2009 = vmatpush.msra.mxu0 0.0
    %2010 = vmatpush.msra.mxu0 0.0
    %2011 = vmatpush.msra.mxu0 %v1910
    %2012 = vmatmul.f32.gmra.mxu0 %v1954
    %v2013 = vpop.f32.mrf.mxu0
    %v2014 = vadd.f32 0.0, %v2013
    %2015 = vdwg.mxu0
    %2016 = vmatpush.msra.mxu0 0.0
    %2017 = vmatpush.msra.mxu0 0.0
    %2018 = vmatpush.msra.mxu0 0.0
    %2019 = vmatpush.msra.mxu0 0.0
    %2020 = vmatpush.msra.mxu0 0.0
    %2021 = vmatpush.msra.mxu0 0.0
    %2022 = vmatpush.msra.mxu0 0.0
    %2023 = vmatpush.msra.mxu0 0.0
    %2024 = vmatpush.msra.mxu0 0.0
    %2025 = vmatpush.msra.mxu0 0.0
    %2026 = vmatpush.msra.mxu0 0.0
    %2027 = vmatpush.msra.mxu0 0.0
    %2028 = vmatpush.msra.mxu0 0.0
    %2029 = vmatpush.msra.mxu0 0.0
    %2030 = vmatpush.msra.mxu0 0.0
    %2031 = vmatpush.msra.mxu0 %v1930
    %2032 = vmatmul.f32.gmra.mxu0 %v1954
    %v2033 = vpop.f32.mrf.mxu0
    %v2034 = vadd.f32 0.0, %v2033
    %2035 = vdwg.mxu0
    %2036 = vmatpush.msra.mxu0 0.0
    %2037 = vmatpush.msra.mxu0 0.0
    %2038 = vmatpush.msra.mxu0 0.0
    %2039 = vmatpush.msra.mxu0 0.0
    %2040 = vmatpush.msra.mxu0 0.0
    %2041 = vmatpush.msra.mxu0 0.0
    %2042 = vmatpush.msra.mxu0 0.0
    %2043 = vmatpush.msra.mxu0 0.0
    %2044 = vmatpush.msra.mxu0 0.0
    %2045 = vmatpush.msra.mxu0 0.0
    %2046 = vmatpush.msra.mxu0 0.0
    %2047 = vmatpush.msra.mxu0 0.0
    %2048 = vmatpush.msra.mxu0 0.0
    %2049 = vmatpush.msra.mxu0 0.0
    %2050 = vmatpush.msra.mxu0 0.0
    %2051 = vmatpush.msra.mxu0 %v1950
    %2052 = vmatmul.f32.gmra.mxu0 %v1954
    %v2053 = vpop.f32.mrf.mxu0
    %v2054 = vadd.f32 0.0, %v2053
    %2055 = vdwg.mxu0
    %v2056 = vadd.f32 %v1974, %v1994
    %v2057 = vadd.f32 %v2056, %v2014
    %v2058 = vadd.f32 %v2057, %v2034
    %v2059 = vadd.f32 %v2058, %v2054
    %2060 = vadd.xlane.f32.xlu0 %v2059
    %v2061 = vpop.xlane.xlu0 %2060
    %v2062 = vmul.f32 %v2061, 0.001953125
    %v2063 = vmul.f32 %v1870, %v1870
    %v2064 = vmul.f32 %v1890, %v1890
    %v2065 = vmul.f32 %v1910, %v1910
    %v2066 = vmul.f32 %v1930, %v1930
    %v2067 = vmul.f32 %v1950, %v1950
    %2068 = vmatpush.msra.mxu0 0.0
    %2069 = vmatpush.msra.mxu0 0.0
    %2070 = vmatpush.msra.mxu0 0.0
    %2071 = vmatpush.msra.mxu0 0.0
    %2072 = vmatpush.msra.mxu0 0.0
    %2073 = vmatpush.msra.mxu0 0.0
    %2074 = vmatpush.msra.mxu0 0.0
    %2075 = vmatpush.msra.mxu0 0.0
    %2076 = vmatpush.msra.mxu0 0.0
    %2077 = vmatpush.msra.mxu0 0.0
    %2078 = vmatpush.msra.mxu0 0.0
    %2079 = vmatpush.msra.mxu0 0.0
    %2080 = vmatpush.msra.mxu0 0.0
    %2081 = vmatpush.msra.mxu0 0.0
    %2082 = vmatpush.msra.mxu0 0.0
    %2083 = vmatpush.msra.mxu0 %v2063
    %2084 = vmatmul.f32.gmra.mxu0 %v1954
    %v2085 = vpop.f32.mrf.mxu0
    %v2086 = vadd.f32 0.0, %v2085
    %2087 = vdwg.mxu0
    %2088 = vmatpush.msra.mxu0 0.0
    %2089 = vmatpush.msra.mxu0 0.0
    %2090 = vmatpush.msra.mxu0 0.0
    %2091 = vmatpush.msra.mxu0 0.0
    %2092 = vmatpush.msra.mxu0 0.0
    %2093 = vmatpush.msra.mxu0 0.0
    %2094 = vmatpush.msra.mxu0 0.0
    %2095 = vmatpush.msra.mxu0 0.0
    %2096 = vmatpush.msra.mxu0 0.0
    %2097 = vmatpush.msra.mxu0 0.0
    %2098 = vmatpush.msra.mxu0 0.0
    %2099 = vmatpush.msra.mxu0 0.0
    %2100 = vmatpush.msra.mxu0 0.0
    %2101 = vmatpush.msra.mxu0 0.0
    %2102 = vmatpush.msra.mxu0 0.0
    %2103 = vmatpush.msra.mxu0 %v2064
    %2104 = vmatmul.f32.gmra.mxu0 %v1954
    %v2105 = vpop.f32.mrf.mxu0
    %v2106 = vadd.f32 0.0, %v2105
    %2107 = vdwg.mxu0
    %2108 = vmatpush.msra.mxu0 0.0
    %2109 = vmatpush.msra.mxu0 0.0
    %2110 = vmatpush.msra.mxu0 0.0
    %2111 = vmatpush.msra.mxu0 0.0
    %2112 = vmatpush.msra.mxu0 0.0
    %2113 = vmatpush.msra.mxu0 0.0
    %2114 = vmatpush.msra.mxu0 0.0
    %2115 = vmatpush.msra.mxu0 0.0
    %2116 = vmatpush.msra.mxu0 0.0
    %2117 = vmatpush.msra.mxu0 0.0
    %2118 = vmatpush.msra.mxu0 0.0
    %2119 = vmatpush.msra.mxu0 0.0
    %2120 = vmatpush.msra.mxu0 0.0
    %2121 = vmatpush.msra.mxu0 0.0
    %2122 = vmatpush.msra.mxu0 0.0
    %2123 = vmatpush.msra.mxu0 %v2065
    %2124 = vmatmul.f32.gmra.mxu0 %v1954
    %v2125 = vpop.f32.mrf.mxu0
    %v2126 = vadd.f32 0.0, %v2125
    %2127 = vdwg.mxu0
    %2128 = vmatpush.msra.mxu0 0.0
    %2129 = vmatpush.msra.mxu0 0.0
    %2130 = vmatpush.msra.mxu0 0.0
    %2131 = vmatpush.msra.mxu0 0.0
    %2132 = vmatpush.msra.mxu0 0.0
    %2133 = vmatpush.msra.mxu0 0.0
    %2134 = vmatpush.msra.mxu0 0.0
    %2135 = vmatpush.msra.mxu0 0.0
    %2136 = vmatpush.msra.mxu0 0.0
    %2137 = vmatpush.msra.mxu0 0.0
    %2138 = vmatpush.msra.mxu0 0.0
    %2139 = vmatpush.msra.mxu0 0.0
    %2140 = vmatpush.msra.mxu0 0.0
    %2141 = vmatpush.msra.mxu0 0.0
    %2142 = vmatpush.msra.mxu0 0.0
    %2143 = vmatpush.msra.mxu0 %v2066
    %2144 = vmatmul.f32.gmra.mxu0 %v1954
    %v2145 = vpop.f32.mrf.mxu0
    %v2146 = vadd.f32 0.0, %v2145
    %2147 = vdwg.mxu0
    %2148 = vmatpush.msra.mxu0 0.0
    %2149 = vmatpush.msra.mxu0 0.0
    %2150 = vmatpush.msra.mxu0 0.0
    %2151 = vmatpush.msra.mxu0 0.0
    %2152 = vmatpush.msra.mxu0 0.0
    %2153 = vmatpush.msra.mxu0 0.0
    %2154 = vmatpush.msra.mxu0 0.0
    %2155 = vmatpush.msra.mxu0 0.0
    %2156 = vmatpush.msra.mxu0 0.0
    %2157 = vmatpush.msra.mxu0 0.0
    %2158 = vmatpush.msra.mxu0 0.0
    %2159 = vmatpush.msra.mxu0 0.0
    %2160 = vmatpush.msra.mxu0 0.0
    %2161 = vmatpush.msra.mxu0 0.0
    %2162 = vmatpush.msra.mxu0 0.0
    %2163 = vmatpush.msra.mxu0 %v2067
    %2164 = vmatmul.f32.gmra.mxu0 %v1954
    %v2165 = vpop.f32.mrf.mxu0
    %v2166 = vadd.f32 0.0, %v2165
    %2167 = vdwg.mxu0
    %v2168 = vadd.f32 %v2086, %v2106
    %v2169 = vadd.f32 %v2168, %v2126
    %v2170 = vadd.f32 %v2169, %v2146
    %v2171 = vadd.f32 %v2170, %v2166
    %2172 = vadd.xlane.f32.xlu0 %v2171
    %v2173 = vpop.xlane.xlu0 %2172
    %v2174 = vmul.f32 %v2173, 0.001953125
    %v2175 = vmul.f32 %v2062, %v2062
    %v2176 = vsub.f32 %v2174, %v2175
    %v2177 = vmax.f32 %v2176, 0.0
    %v2178 = vadd.f32 %v2177, 1e-05
    %v2179 = vrsqrt.pop %v2178
    %v2180 = vmul.f32 %v2179, %v2178
    %v2181 = vmul.f32 %v2180, %v2179
    %v2182 = vmul.f32 0.5, %v2181
    %v2183 = vsub.f32 1.5, %v2182
    %v2184 = vmul.f32 %v2179, %v2183
    %vm2185 = vweird.f32 %v2178
    %vm2186 = vweird.f32 %v2179
    %vm2187 = vmor %vm2185, %vm2186
    %v2188 = vsel %vm2187, %v2179, %v2184
    %v2189 = vsub.f32 %v1870, %v2062
    %v2190 = vsub.f32 %v1890, %v2062
    %v2191 = vsub.f32 %v1910, %v2062
    %v2192 = vsub.f32 %v1930, %v2062
    %v2193 = vsub.f32 %v1950, %v2062
    %v2194 = vmul.f32 %v2189, %v2188
    %v2195 = vmul.f32 %v2190, %v2188
    %v2196 = vmul.f32 %v2191, %v2188
    %v2197 = vmul.f32 %v2192, %v2188
    %v2198 = vmul.f32 %v2193, %v2188
    %v2199 = vmax.f32 %v2194, 0.0
    %v2200 = vmax.f32 %v2195, 0.0
    %v2201 = vmax.f32 %v2196, 0.0
    %v2202 = vmax.f32 %v2197, 0.0
    %v2203 = vmax.f32 %v2198, 0.0
    %v2204 = vmul.f32 %v2199, %v1784
    %v2205 = vmul.f32 %v2200, %v1785
    %v2206 = vmul.f32 %v2201, %v1786
    %v2207 = vmul.f32 %v2202, %v1787
    %v2208 = vmul.f32 %v2203, %v1788
    %2209 = vst [vmem:[#allocation2 + $0x8] sm:$0xff] %v2204
    %2210 = vst [vmem:[#allocation2 + $0x10] sm:$0xff] %v2205
    %2211 = vst [vmem:[#allocation2 + $0x18] sm:$0xff] %v2206
    %2212 = vst [vmem:[#allocation2 + $0x20] sm:$0xff] %v2207
    %2213 = vst [vmem:[#allocation2 + $0x28] sm:$0xff] %v2208
    %v2214 = vld [vmem:[%s7] sm:$0xff]
    %v2215 = vld [vmem:[#allocation2] sm:$0xff]
    %v2216 = vld [vmem:[#allocation2 + $0x8] sm:$0xff]
    %v2217 = vld [vmem:[#allocation2 + $0x10] sm:$0xff]
    %v2218 = vld [vmem:[#allocation2 + $0x18] sm:$0xff]
    %v2219 = vld [vmem:[#allocation2 + $0x20] sm:$0xff]
    %v2220 = vld [vmem:[#allocation2 + $0x28] sm:$0xff]
    %2222 = vset.pattern.permute.xlu0 0
    %2223 = vperm.xlu0 %2222, %v2214
    %v2224 = vpop.permute.xlu0 %2223
    %v2226 = vmul.f32 %v2224, %v2215
    %v2227 = vmul.f32 %v2224, %v2216
    %v2228 = vmul.f32 %v2224, %v2217
    %v2229 = vmul.f32 %v2224, %v2218
    %v2230 = vmul.f32 %v2224, %v2219
    %v2231 = vmul.f32 %v2224, %v2220
    %2232 = vset.pattern.permute.xlu0 1
    %2233 = vperm.xlu0 %2232, %v2214
    %v2234 = vpop.permute.xlu0 %2233
    %v2236 = vmul.f32 %v2234, %v2215
    %v2237 = vmul.f32 %v2234, %v2216
    %v2238 = vmul.f32 %v2234, %v2217
    %v2239 = vmul.f32 %v2234, %v2218
    %v2240 = vmul.f32 %v2234, %v2219
    %v2241 = vmul.f32 %v2234, %v2220
    %2248 = vrot.lane.b32.xlu0 %v2236, 127
    %v2249 = vpop.permute.xlu0 %2248
    %2250 = vrot.lane.b32.xlu0 %v2237, 127
    %v2251 = vpop.permute.xlu0 %2250
    %2252 = vrot.lane.b32.xlu0 %v2238, 127
    %v2253 = vpop.permute.xlu0 %2252
    %2254 = vrot.lane.b32.xlu0 %v2239, 127
    %v2255 = vpop.permute.xlu0 %2254
    %2256 = vrot.lane.b32.xlu0 %v2240, 127
    %v2257 = vpop.permute.xlu0 %2256
    %2258 = vrot.lane.b32.xlu0 %v2241, 127
    %v2259 = vpop.permute.xlu0 %2258
    %v2260 = vsel %vm150, %v2249, %v2251
    %v2261 = vsel %vm150, %v2251, %v2253
    %v2262 = vsel %vm150, %v2253, %v2255
    %v2263 = vsel %vm150, %v2255, %v2257
    %v2264 = vsel %vm150, %v2257, %v2259
    %v2271 = vadd.f32 %v2226, %v2260
    %v2272 = vadd.f32 %v2227, %v2261
    %v2273 = vadd.f32 %v2228, %v2262
    %v2274 = vadd.f32 %v2229, %v2263
    %v2275 = vadd.f32 %v2230, %v2264
    %v2276 = vadd.f32 %v2231, %v2259
    %2277 = vset.pattern.permute.xlu0 2
    %2278 = vperm.xlu0 %2277, %v2214
    %v2279 = vpop.permute.xlu0 %2278
    %v2281 = vmul.f32 %v2279, %v2215
    %v2282 = vmul.f32 %v2279, %v2216
    %v2283 = vmul.f32 %v2279, %v2217
    %v2284 = vmul.f32 %v2279, %v2218
    %v2285 = vmul.f32 %v2279, %v2219
    %v2286 = vmul.f32 %v2279, %v2220
    %2293 = vrot.lane.b32.xlu0 %v2281, 126
    %v2294 = vpop.permute.xlu0 %2293
    %2295 = vrot.lane.b32.xlu0 %v2282, 126
    %v2296 = vpop.permute.xlu0 %2295
    %2297 = vrot.lane.b32.xlu0 %v2283, 126
    %v2298 = vpop.permute.xlu0 %2297
    %2299 = vrot.lane.b32.xlu0 %v2284, 126
    %v2300 = vpop.permute.xlu0 %2299
    %2301 = vrot.lane.b32.xlu0 %v2285, 126
    %v2302 = vpop.permute.xlu0 %2301
    %2303 = vrot.lane.b32.xlu0 %v2286, 126
    %v2304 = vpop.permute.xlu0 %2303
    %v2305 = vsel %vm180, %v2294, %v2296
    %v2306 = vsel %vm180, %v2296, %v2298
    %v2307 = vsel %vm180, %v2298, %v2300
    %v2308 = vsel %vm180, %v2300, %v2302
    %v2309 = vsel %vm180, %v2302, %v2304
    %v2316 = vadd.f32 %v2271, %v2305
    %v2317 = vadd.f32 %v2272, %v2306
    %v2318 = vadd.f32 %v2273, %v2307
    %v2319 = vadd.f32 %v2274, %v2308
    %v2320 = vadd.f32 %v2275, %v2309
    %v2321 = vadd.f32 %v2276, %v2304
    %2322 = vset.pattern.permute.xlu0 3
    %2323 = vperm.xlu0 %2322, %v2214
    %v2324 = vpop.permute.xlu0 %2323
    %v2326 = vmul.f32 %v2324, %v2215
    %v2327 = vmul.f32 %v2324, %v2216
    %v2328 = vmul.f32 %v2324, %v2217
    %v2329 = vmul.f32 %v2324, %v2218
    %v2330 = vmul.f32 %v2324, %v2219
    %v2331 = vmul.f32 %v2324, %v2220
    %2338 = vrot.lane.b32.xlu0 %v2326, 104
    %v2339 = vpop.permute.xlu0 %2338
    %2340 = vrot.lane.b32.xlu0 %v2327, 104
    %v2341 = vpop.permute.xlu0 %2340
    %2342 = vrot.lane.b32.xlu0 %v2328, 104
    %v2343 = vpop.permute.xlu0 %2342
    %2344 = vrot.lane.b32.xlu0 %v2329, 104
    %v2345 = vpop.permute.xlu0 %2344
    %2346 = vrot.lane.b32.xlu0 %v2330, 104
    %v2347 = vpop.permute.xlu0 %2346
    %2348 = vrot.lane.b32.xlu0 %v2331, 104
    %v2349 = vpop.permute.xlu0 %2348
    %v2350 = vsel %vm210, %v2339, %v2341
    %v2351 = vsel %vm210, %v2341, %v2343
    %v2352 = vsel %vm210, %v2343, %v2345
    %v2353 = vsel %vm210, %v2345, %v2347
    %v2354 = vsel %vm210, %v2347, %v2349
    %v2361 = vadd.f32 %v2316, %v2350
    %v2362 = vadd.f32 %v2317, %v2351
    %v2363 = vadd.f32 %v2318, %v2352
    %v2364 = vadd.f32 %v2319, %v2353
    %v2365 = vadd.f32 %v2320, %v2354
    %v2366 = vadd.f32 %v2321, %v2349
    %2367 = vset.pattern.permute.xlu0 4
    %2368 = vperm.xlu0 %2367, %v2214
    %v2369 = vpop.permute.xlu0 %2368
    %v2371 = vmul.f32 %v2369, %v2216
    %v2372 = vmul.f32 %v2369, %v2217
    %v2373 = vmul.f32 %v2369, %v2218
    %v2374 = vmul.f32 %v2369, %v2219
    %v2375 = vmul.f32 %v2369, %v2220
    %2381 = vrot.lane.b32.xlu0 %v2371, 103
    %v2382 = vpop.permute.xlu0 %2381
    %2383 = vrot.lane.b32.xlu0 %v2372, 103
    %v2384 = vpop.permute.xlu0 %2383
    %2385 = vrot.lane.b32.xlu0 %v2373, 103
    %v2386 = vpop.permute.xlu0 %2385
    %2387 = vrot.lane.b32.xlu0 %v2374, 103
    %v2388 = vpop.permute.xlu0 %2387
    %2389 = vrot.lane.b32.xlu0 %v2375, 103
    %v2390 = vpop.permute.xlu0 %2389
    %v2391 = vsel %vm238, %v2382, %v2384
    %v2392 = vsel %vm238, %v2384, %v2386
    %v2393 = vsel %vm238, %v2386, %v2388
    %v2394 = vsel %vm238, %v2388, %v2390
    %v2401 = vadd.f32 %v2361, %v2382
    %v2402 = vadd.f32 %v2362, %v2391
    %v2403 = vadd.f32 %v2363, %v2392
    %v2404 = vadd.f32 %v2364, %v2393
    %v2405 = vadd.f32 %v2365, %v2394
    %v2406 = vadd.f32 %v2366, %v2390
    %v2407 = vld [vmem:[#allocation2 + $0x8] sm:$0xff]
    %v2408 = vld [vmem:[#allocation2 + $0x10] sm:$0xff]
    %v2409 = vld [vmem:[#allocation2 + $0x18] sm:$0xff]
    %v2410 = vld [vmem:[#allocation2 + $0x20] sm:$0xff]
    %v2411 = vld [vmem:[#allocation2 + $0x28] sm:$0xff]
    %v2412 = vld [vmem:[#allocation2 + $0x30] sm:$0xff]
    %2413 = vset.pattern.permute.xlu0 5
    %2414 = vperm.xlu0 %2413, %v2214
    %v2415 = vpop.permute.xlu0 %2414
    %v2417 = vmul.f32 %v2415, %v2407
    %v2418 = vmul.f32 %v2415, %v2408
    %v2419 = vmul.f32 %v2415, %v2409
    %v2420 = vmul.f32 %v2415, %v2410
    %v2421 = vmul.f32 %v2415, %v2411
    %v2422 = vmul.f32 %v2415, %v2412
    %2429 = vrot.lane.b32.xlu0 %v2417, 102
    %v2430 = vpop.permute.xlu0 %2429
    %2431 = vrot.lane.b32.xlu0 %v2418, 102
    %v2432 = vpop.permute.xlu0 %2431
    %2433 = vrot.lane.b32.xlu0 %v2419, 102
    %v2434 = vpop.permute.xlu0 %2433
    %2435 = vrot.lane.b32.xlu0 %v2420, 102
    %v2436 = vpop.permute.xlu0 %2435
    %2437 = vrot.lane.b32.xlu0 %v2421, 102
    %v2438 = vpop.permute.xlu0 %2437
    %2439 = vrot.lane.b32.xlu0 %v2422, 102
    %v2440 = vpop.permute.xlu0 %2439
    %v2441 = vsel %vm279, %v2430, %v2432
    %v2442 = vsel %vm279, %v2432, %v2434
    %v2443 = vsel %vm279, %v2434, %v2436
    %v2444 = vsel %vm279, %v2436, %v2438
    %v2445 = vsel %vm279, %v2438, %v2440
    %v2452 = vadd.f32 %v2401, %v2430
    %v2453 = vadd.f32 %v2402, %v2441
    %v2454 = vadd.f32 %v2403, %v2442
    %v2455 = vadd.f32 %v2404, %v2443
    %v2456 = vadd.f32 %v2405, %v2444
    %v2457 = vadd.f32 %v2406, %v2445
    %2458 = vset.pattern.permute.xlu0 6
    %2459 = vperm.xlu0 %2458, %v2214
    %v2460 = vpop.permute.xlu0 %2459
    %v2462 = vmul.f32 %v2460, %v2407
    %v2463 = vmul.f32 %v2460, %v2408
    %v2464 = vmul.f32 %v2460, %v2409
    %v2465 = vmul.f32 %v2460, %v2410
    %v2466 = vmul.f32 %v2460, %v2411
    %v2467 = vmul.f32 %v2460, %v2412
    %2474 = vrot.lane.b32.xlu0 %v2462, 80
    %v2475 = vpop.permute.xlu0 %2474
    %2476 = vrot.lane.b32.xlu0 %v2463, 80
    %v2477 = vpop.permute.xlu0 %2476
    %2478 = vrot.lane.b32.xlu0 %v2464, 80
    %v2479 = vpop.permute.xlu0 %2478
    %2480 = vrot.lane.b32.xlu0 %v2465, 80
    %v2481 = vpop.permute.xlu0 %2480
    %2482 = vrot.lane.b32.xlu0 %v2466, 80
    %v2483 = vpop.permute.xlu0 %2482
    %2484 = vrot.lane.b32.xlu0 %v2467, 80
    %v2485 = vpop.permute.xlu0 %2484
    %v2486 = vsel %vm309, %v2475, %v2477
    %v2487 = vsel %vm309, %v2477, %v2479
    %v2488 = vsel %vm309, %v2479, %v2481
    %v2489 = vsel %vm309, %v2481, %v2483
    %v2490 = vsel %vm309, %v2483, %v2485
    %v2497 = vadd.f32 %v2452, %v2475
    %v2498 = vadd.f32 %v2453, %v2486
    %v2499 = vadd.f32 %v2454, %v2487
    %v2500 = vadd.f32 %v2455, %v2488
    %v2501 = vadd.f32 %v2456, %v2489
    %v2502 = vadd.f32 %v2457, %v2490
    %2503 = vset.pattern.permute.xlu0 7
    %2504 = vperm.xlu0 %2503, %v2214
    %v2505 = vpop.permute.xlu0 %2504
    %v2507 = vmul.f32 %v2505, %v2407
    %v2508 = vmul.f32 %v2505, %v2408
    %v2509 = vmul.f32 %v2505, %v2409
    %v2510 = vmul.f32 %v2505, %v2410
    %v2511 = vmul.f32 %v2505, %v2411
    %v2512 = vmul.f32 %v2505, %v2412
    %2519 = vrot.lane.b32.xlu0 %v2507, 79
    %v2520 = vpop.permute.xlu0 %2519
    %2521 = vrot.lane.b32.xlu0 %v2508, 79
    %v2522 = vpop.permute.xlu0 %2521
    %2523 = vrot.lane.b32.xlu0 %v2509, 79
    %v2524 = vpop.permute.xlu0 %2523
    %2525 = vrot.lane.b32.xlu0 %v2510, 79
    %v2526 = vpop.permute.xlu0 %2525
    %2527 = vrot.lane.b32.xlu0 %v2511, 79
    %v2528 = vpop.permute.xlu0 %2527
    %2529 = vrot.lane.b32.xlu0 %v2512, 79
    %v2530 = vpop.permute.xlu0 %2529
    %v2531 = vsel %vm339, %v2520, %v2522
    %v2532 = vsel %vm339, %v2522, %v2524
    %v2533 = vsel %vm339, %v2524, %v2526
    %v2534 = vsel %vm339, %v2526, %v2528
    %v2535 = vsel %vm339, %v2528, %v2530
    %v2542 = vadd.f32 %v2497, %v2520
    %v2543 = vadd.f32 %v2498, %v2531
    %v2544 = vadd.f32 %v2499, %v2532
    %v2545 = vadd.f32 %v2500, %v2533
    %v2546 = vadd.f32 %v2501, %v2534
    %v2547 = vadd.f32 %v2502, %v2535
    %2548 = vset.pattern.permute.xlu0 8
    %2549 = vperm.xlu0 %2548, %v2214
    %v2550 = vpop.permute.xlu0 %2549
    %v2552 = vmul.f32 %v2550, %v2407
    %v2553 = vmul.f32 %v2550, %v2408
    %v2554 = vmul.f32 %v2550, %v2409
    %v2555 = vmul.f32 %v2550, %v2410
    %v2556 = vmul.f32 %v2550, %v2411
    %v2557 = vmul.f32 %v2550, %v2412
    %2564 = vrot.lane.b32.xlu0 %v2552, 78
    %v2565 = vpop.permute.xlu0 %2564
    %2566 = vrot.lane.b32.xlu0 %v2553, 78
    %v2567 = vpop.permute.xlu0 %2566
    %2568 = vrot.lane.b32.xlu0 %v2554, 78
    %v2569 = vpop.permute.xlu0 %2568
    %2570 = vrot.lane.b32.xlu0 %v2555, 78
    %v2571 = vpop.permute.xlu0 %2570
    %2572 = vrot.lane.b32.xlu0 %v2556, 78
    %v2573 = vpop.permute.xlu0 %2572
    %2574 = vrot.lane.b32.xlu0 %v2557, 78
    %v2575 = vpop.permute.xlu0 %2574
    %v2576 = vsel %vm369, %v2565, %v2567
    %v2577 = vsel %vm369, %v2567, %v2569
    %v2578 = vsel %vm369, %v2569, %v2571
    %v2579 = vsel %vm369, %v2571, %v2573
    %v2580 = vsel %vm369, %v2573, %v2575
    %v2587 = vadd.f32 %v2542, %v2565
    %v2588 = vadd.f32 %v2543, %v2576
    %v2589 = vadd.f32 %v2544, %v2577
    %v2590 = vadd.f32 %v2545, %v2578
    %v2591 = vadd.f32 %v2546, %v2579
    %v2592 = vadd.f32 %v2547, %v2580
    %v2593 = vld [vmem:[#allocation3] sm:$0xff]
    %v2594 = vld [vmem:[#allocation3 + $0x8] sm:$0xff]
    %v2595 = vld [vmem:[#allocation3 + $0x10] sm:$0xff]
    %v2596 = vld [vmem:[#allocation3 + $0x18] sm:$0xff]
    %v2597 = vld [vmem:[#allocation3 + $0x20] sm:$0xff]
    %2603 = vrot.lane.b32.xlu0 %v2593, 103
    %v2604 = vpop.permute.xlu0 %2603
    %2605 = vrot.lane.b32.xlu0 %v2594, 103
    %v2606 = vpop.permute.xlu0 %2605
    %2607 = vrot.lane.b32.xlu0 %v2595, 103
    %v2608 = vpop.permute.xlu0 %2607
    %2609 = vrot.lane.b32.xlu0 %v2596, 103
    %v2610 = vpop.permute.xlu0 %2609
    %2611 = vrot.lane.b32.xlu0 %v2597, 103
    %v2612 = vpop.permute.xlu0 %2611
    %v2613 = vsel %vm238, %v2604, %v2606
    %v2614 = vsel %vm238, %v2606, %v2608
    %v2615 = vsel %vm238, %v2608, %v2610
    %v2616 = vsel %vm238, %v2610, %v2612
    %v2623 = vmul.f32 %v2587, %v2604
    %v2624 = vmul.f32 %v2588, %v2613
    %v2625 = vmul.f32 %v2589, %v2614
    %v2626 = vmul.f32 %v2590, %v2615
    %v2627 = vmul.f32 %v2591, %v2616
    %v2628 = vmul.f32 %v2592, %v2612
    %v2629 = vld [vmem:[%s8] sm:$0xff]
    %2636 = vrot.lane.b32.xlu0 %v2623, 25
    %v2637 = vpop.permute.xlu0 %2636
    %2638 = vrot.lane.b32.xlu0 %v2624, 25
    %v2639 = vpop.permute.xlu0 %2638
    %2640 = vrot.lane.b32.xlu0 %v2625, 25
    %v2641 = vpop.permute.xlu0 %2640
    %2642 = vrot.lane.b32.xlu0 %v2626, 25
    %v2643 = vpop.permute.xlu0 %2642
    %2644 = vrot.lane.b32.xlu0 %v2627, 25
    %v2645 = vpop.permute.xlu0 %2644
    %2646 = vrot.lane.b32.xlu0 %v2628, 25
    %v2647 = vpop.permute.xlu0 %2646
    %v2648 = vsel %vm442, %v2637, %v2639
    %v2649 = vsel %vm442, %v2639, %v2641
    %v2650 = vsel %vm442, %v2641, %v2643
    %v2651 = vsel %vm442, %v2643, %v2645
    %v2652 = vsel %vm442, %v2645, %v2647
    %v2659 = vsel %vm453, %v2629, 0
    %2661 = vmatpush.msra.mxu0 0.0
    %2662 = vmatpush.msra.mxu0 0.0
    %2663 = vmatpush.msra.mxu0 0.0
    %2664 = vmatpush.msra.mxu0 0.0
    %2665 = vmatpush.msra.mxu0 0.0
    %2666 = vmatpush.msra.mxu0 0.0
    %2667 = vmatpush.msra.mxu0 0.0
    %2668 = vmatpush.msra.mxu0 0.0
    %2669 = vmatpush.msra.mxu0 0.0
    %2670 = vmatpush.msra.mxu0 0.0
    %2671 = vmatpush.msra.mxu0 0.0
    %2672 = vmatpush.msra.mxu0 0.0
    %2673 = vmatpush.msra.mxu0 0.0
    %2674 = vmatpush.msra.mxu0 0.0
    %2675 = vmatpush.msra.mxu0 0.0
    %2676 = vmatpush.msra.mxu0 %v2648
    %2677 = vmatmul.f32.gmra.mxu0 %v2659
    %v2678 = vpop.f32.mrf.mxu0
    %v2679 = vadd.f32 0.0, %v2678
    %2680 = vdwg.mxu0
    %2681 = vmatpush.msra.mxu0 0.0
    %2682 = vmatpush.msra.mxu0 0.0
    %2683 = vmatpush.msra.mxu0 0.0
    %2684 = vmatpush.msra.mxu0 0.0
    %2685 = vmatpush.msra.mxu0 0.0
    %2686 = vmatpush.msra.mxu0 0.0
    %2687 = vmatpush.msra.mxu0 0.0
    %2688 = vmatpush.msra.mxu0 0.0
    %2689 = vmatpush.msra.mxu0 0.0
    %2690 = vmatpush.msra.mxu0 0.0
    %2691 = vmatpush.msra.mxu0 0.0
    %2692 = vmatpush.msra.mxu0 0.0
    %2693 = vmatpush.msra.mxu0 0.0
    %2694 = vmatpush.msra.mxu0 0.0
    %2695 = vmatpush.msra.mxu0 0.0
    %2696 = vmatpush.msra.mxu0 %v2649
    %2697 = vmatmul.f32.gmra.mxu0 %v2659
    %v2698 = vpop.f32.mrf.mxu0
    %v2699 = vadd.f32 0.0, %v2698
    %2700 = vdwg.mxu0
    %2701 = vmatpush.msra.mxu0 0.0
    %2702 = vmatpush.msra.mxu0 0.0
    %2703 = vmatpush.msra.mxu0 0.0
    %2704 = vmatpush.msra.mxu0 0.0
    %2705 = vmatpush.msra.mxu0 0.0
    %2706 = vmatpush.msra.mxu0 0.0
    %2707 = vmatpush.msra.mxu0 0.0
    %2708 = vmatpush.msra.mxu0 0.0
    %2709 = vmatpush.msra.mxu0 0.0
    %2710 = vmatpush.msra.mxu0 0.0
    %2711 = vmatpush.msra.mxu0 0.0
    %2712 = vmatpush.msra.mxu0 0.0
    %2713 = vmatpush.msra.mxu0 0.0
    %2714 = vmatpush.msra.mxu0 0.0
    %2715 = vmatpush.msra.mxu0 0.0
    %2716 = vmatpush.msra.mxu0 %v2650
    %2717 = vmatmul.f32.gmra.mxu0 %v2659
    %v2718 = vpop.f32.mrf.mxu0
    %v2719 = vadd.f32 0.0, %v2718
    %2720 = vdwg.mxu0
    %2721 = vmatpush.msra.mxu0 0.0
    %2722 = vmatpush.msra.mxu0 0.0
    %2723 = vmatpush.msra.mxu0 0.0
    %2724 = vmatpush.msra.mxu0 0.0
    %2725 = vmatpush.msra.mxu0 0.0
    %2726 = vmatpush.msra.mxu0 0.0
    %2727 = vmatpush.msra.mxu0 0.0
    %2728 = vmatpush.msra.mxu0 0.0
    %2729 = vmatpush.msra.mxu0 0.0
    %2730 = vmatpush.msra.mxu0 0.0
    %2731 = vmatpush.msra.mxu0 0.0
    %2732 = vmatpush.msra.mxu0 0.0
    %2733 = vmatpush.msra.mxu0 0.0
    %2734 = vmatpush.msra.mxu0 0.0
    %2735 = vmatpush.msra.mxu0 0.0
    %2736 = vmatpush.msra.mxu0 %v2651
    %2737 = vmatmul.f32.gmra.mxu0 %v2659
    %v2738 = vpop.f32.mrf.mxu0
    %v2739 = vadd.f32 0.0, %v2738
    %2740 = vdwg.mxu0
    %2741 = vmatpush.msra.mxu0 0.0
    %2742 = vmatpush.msra.mxu0 0.0
    %2743 = vmatpush.msra.mxu0 0.0
    %2744 = vmatpush.msra.mxu0 0.0
    %2745 = vmatpush.msra.mxu0 0.0
    %2746 = vmatpush.msra.mxu0 0.0
    %2747 = vmatpush.msra.mxu0 0.0
    %2748 = vmatpush.msra.mxu0 0.0
    %2749 = vmatpush.msra.mxu0 0.0
    %2750 = vmatpush.msra.mxu0 0.0
    %2751 = vmatpush.msra.mxu0 0.0
    %2752 = vmatpush.msra.mxu0 0.0
    %2753 = vmatpush.msra.mxu0 0.0
    %2754 = vmatpush.msra.mxu0 0.0
    %2755 = vmatpush.msra.mxu0 0.0
    %2756 = vmatpush.msra.mxu0 %v2652
    %2757 = vmatmul.f32.gmra.mxu0 %v2659
    %v2758 = vpop.f32.mrf.mxu0
    %v2759 = vadd.f32 0.0, %v2758
    %2760 = vdwg.mxu0
    %v2761 = vld [vmem:[%s4] sm:$0xff]
    %v2763 = vsel %vm453, %v2761, 0
    %2765 = vmatpush.msra.mxu0 0.0
    %2766 = vmatpush.msra.mxu0 0.0
    %2767 = vmatpush.msra.mxu0 0.0
    %2768 = vmatpush.msra.mxu0 0.0
    %2769 = vmatpush.msra.mxu0 0.0
    %2770 = vmatpush.msra.mxu0 0.0
    %2771 = vmatpush.msra.mxu0 0.0
    %2772 = vmatpush.msra.mxu0 0.0
    %2773 = vmatpush.msra.mxu0 0.0
    %2774 = vmatpush.msra.mxu0 0.0
    %2775 = vmatpush.msra.mxu0 0.0
    %2776 = vmatpush.msra.mxu0 0.0
    %2777 = vmatpush.msra.mxu0 0.0
    %2778 = vmatpush.msra.mxu0 0.0
    %2779 = vmatpush.msra.mxu0 0.0
    %2780 = vmatpush.msra.mxu0 %v2679
    %2781 = vmatmul.f32.gmra.mxu0 %v2763
    %v2782 = vpop.f32.mrf.mxu0
    %v2783 = vadd.f32 0.0, %v2782
    %2784 = vdwg.mxu0
    %2785 = vmatpush.msra.mxu0 0.0
    %2786 = vmatpush.msra.mxu0 0.0
    %2787 = vmatpush.msra.mxu0 0.0
    %2788 = vmatpush.msra.mxu0 0.0
    %2789 = vmatpush.msra.mxu0 0.0
    %2790 = vmatpush.msra.mxu0 0.0
    %2791 = vmatpush.msra.mxu0 0.0
    %2792 = vmatpush.msra.mxu0 0.0
    %2793 = vmatpush.msra.mxu0 0.0
    %2794 = vmatpush.msra.mxu0 0.0
    %2795 = vmatpush.msra.mxu0 0.0
    %2796 = vmatpush.msra.mxu0 0.0
    %2797 = vmatpush.msra.mxu0 0.0
    %2798 = vmatpush.msra.mxu0 0.0
    %2799 = vmatpush.msra.mxu0 0.0
    %2800 = vmatpush.msra.mxu0 %v2699
    %2801 = vmatmul.f32.gmra.mxu0 %v2763
    %v2802 = vpop.f32.mrf.mxu0
    %v2803 = vadd.f32 0.0, %v2802
    %2804 = vdwg.mxu0
    %2805 = vmatpush.msra.mxu0 0.0
    %2806 = vmatpush.msra.mxu0 0.0
    %2807 = vmatpush.msra.mxu0 0.0
    %2808 = vmatpush.msra.mxu0 0.0
    %2809 = vmatpush.msra.mxu0 0.0
    %2810 = vmatpush.msra.mxu0 0.0
    %2811 = vmatpush.msra.mxu0 0.0
    %2812 = vmatpush.msra.mxu0 0.0
    %2813 = vmatpush.msra.mxu0 0.0
    %2814 = vmatpush.msra.mxu0 0.0
    %2815 = vmatpush.msra.mxu0 0.0
    %2816 = vmatpush.msra.mxu0 0.0
    %2817 = vmatpush.msra.mxu0 0.0
    %2818 = vmatpush.msra.mxu0 0.0
    %2819 = vmatpush.msra.mxu0 0.0
    %2820 = vmatpush.msra.mxu0 %v2719
    %2821 = vmatmul.f32.gmra.mxu0 %v2763
    %v2822 = vpop.f32.mrf.mxu0
    %v2823 = vadd.f32 0.0, %v2822
    %2824 = vdwg.mxu0
    %2825 = vmatpush.msra.mxu0 0.0
    %2826 = vmatpush.msra.mxu0 0.0
    %2827 = vmatpush.msra.mxu0 0.0
    %2828 = vmatpush.msra.mxu0 0.0
    %2829 = vmatpush.msra.mxu0 0.0
    %2830 = vmatpush.msra.mxu0 0.0
    %2831 = vmatpush.msra.mxu0 0.0
    %2832 = vmatpush.msra.mxu0 0.0
    %2833 = vmatpush.msra.mxu0 0.0
    %2834 = vmatpush.msra.mxu0 0.0
    %2835 = vmatpush.msra.mxu0 0.0
    %2836 = vmatpush.msra.mxu0 0.0
    %2837 = vmatpush.msra.mxu0 0.0
    %2838 = vmatpush.msra.mxu0 0.0
    %2839 = vmatpush.msra.mxu0 0.0
    %2840 = vmatpush.msra.mxu0 %v2739
    %2841 = vmatmul.f32.gmra.mxu0 %v2763
    %v2842 = vpop.f32.mrf.mxu0
    %v2843 = vadd.f32 0.0, %v2842
    %2844 = vdwg.mxu0
    %2845 = vmatpush.msra.mxu0 0.0
    %2846 = vmatpush.msra.mxu0 0.0
    %2847 = vmatpush.msra.mxu0 0.0
    %2848 = vmatpush.msra.mxu0 0.0
    %2849 = vmatpush.msra.mxu0 0.0
    %2850 = vmatpush.msra.mxu0 0.0
    %2851 = vmatpush.msra.mxu0 0.0
    %2852 = vmatpush.msra.mxu0 0.0
    %2853 = vmatpush.msra.mxu0 0.0
    %2854 = vmatpush.msra.mxu0 0.0
    %2855 = vmatpush.msra.mxu0 0.0
    %2856 = vmatpush.msra.mxu0 0.0
    %2857 = vmatpush.msra.mxu0 0.0
    %2858 = vmatpush.msra.mxu0 0.0
    %2859 = vmatpush.msra.mxu0 0.0
    %2860 = vmatpush.msra.mxu0 %v2759
    %2861 = vmatmul.f32.gmra.mxu0 %v2763
    %v2862 = vpop.f32.mrf.mxu0
    %v2863 = vadd.f32 0.0, %v2862
    %2864 = vdwg.mxu0
    %v2865 = vadd.f32 %v2783, %v2803
    %v2866 = vadd.f32 %v2865, %v2823
    %v2867 = vadd.f32 %v2866, %v2843
    %v2868 = vadd.f32 %v2867, %v2863
    %2869 = vadd.xlane.f32.xlu0 %v2868
    %v2870 = vpop.xlane.xlu0 %2869
    %v2871 = vmul.f32 %v2870, 0.001953125
    %v2872 = vmul.f32 %v2679, %v2679
    %v2873 = vmul.f32 %v2699, %v2699
    %v2874 = vmul.f32 %v2719, %v2719
    %v2875 = vmul.f32 %v2739, %v2739
    %v2876 = vmul.f32 %v2759, %v2759
    %2877 = vmatpush.msra.mxu0 0.0
    %2878 = vmatpush.msra.mxu0 0.0
    %2879 = vmatpush.msra.mxu0 0.0
    %2880 = vmatpush.msra.mxu0 0.0
    %2881 = vmatpush.msra.mxu0 0.0
    %2882 = vmatpush.msra.mxu0 0.0
    %2883 = vmatpush.msra.mxu0 0.0
    %2884 = vmatpush.msra.mxu0 0.0
    %2885 = vmatpush.msra.mxu0 0.0
    %2886 = vmatpush.msra.mxu0 0.0
    %2887 = vmatpush.msra.mxu0 0.0
    %2888 = vmatpush.msra.mxu0 0.0
    %2889 = vmatpush.msra.mxu0 0.0
    %2890 = vmatpush.msra.mxu0 0.0
    %2891 = vmatpush.msra.mxu0 0.0
    %2892 = vmatpush.msra.mxu0 %v2872
    %2893 = vmatmul.f32.gmra.mxu0 %v2763
    %v2894 = vpop.f32.mrf.mxu0
    %v2895 = vadd.f32 0.0, %v2894
    %2896 = vdwg.mxu0
    %2897 = vmatpush.msra.mxu0 0.0
    %2898 = vmatpush.msra.mxu0 0.0
    %2899 = vmatpush.msra.mxu0 0.0
    %2900 = vmatpush.msra.mxu0 0.0
    %2901 = vmatpush.msra.mxu0 0.0
    %2902 = vmatpush.msra.mxu0 0.0
    %2903 = vmatpush.msra.mxu0 0.0
    %2904 = vmatpush.msra.mxu0 0.0
    %2905 = vmatpush.msra.mxu0 0.0
    %2906 = vmatpush.msra.mxu0 0.0
    %2907 = vmatpush.msra.mxu0 0.0
    %2908 = vmatpush.msra.mxu0 0.0
    %2909 = vmatpush.msra.mxu0 0.0
    %2910 = vmatpush.msra.mxu0 0.0
    %2911 = vmatpush.msra.mxu0 0.0
    %2912 = vmatpush.msra.mxu0 %v2873
    %2913 = vmatmul.f32.gmra.mxu0 %v2763
    %v2914 = vpop.f32.mrf.mxu0
    %v2915 = vadd.f32 0.0, %v2914
    %2916 = vdwg.mxu0
    %2917 = vmatpush.msra.mxu0 0.0
    %2918 = vmatpush.msra.mxu0 0.0
    %2919 = vmatpush.msra.mxu0 0.0
    %2920 = vmatpush.msra.mxu0 0.0
    %2921 = vmatpush.msra.mxu0 0.0
    %2922 = vmatpush.msra.mxu0 0.0
    %2923 = vmatpush.msra.mxu0 0.0
    %2924 = vmatpush.msra.mxu0 0.0
    %2925 = vmatpush.msra.mxu0 0.0
    %2926 = vmatpush.msra.mxu0 0.0
    %2927 = vmatpush.msra.mxu0 0.0
    %2928 = vmatpush.msra.mxu0 0.0
    %2929 = vmatpush.msra.mxu0 0.0
    %2930 = vmatpush.msra.mxu0 0.0
    %2931 = vmatpush.msra.mxu0 0.0
    %2932 = vmatpush.msra.mxu0 %v2874
    %2933 = vmatmul.f32.gmra.mxu0 %v2763
    %v2934 = vpop.f32.mrf.mxu0
    %v2935 = vadd.f32 0.0, %v2934
    %2936 = vdwg.mxu0
    %2937 = vmatpush.msra.mxu0 0.0
    %2938 = vmatpush.msra.mxu0 0.0
    %2939 = vmatpush.msra.mxu0 0.0
    %2940 = vmatpush.msra.mxu0 0.0
    %2941 = vmatpush.msra.mxu0 0.0
    %2942 = vmatpush.msra.mxu0 0.0
    %2943 = vmatpush.msra.mxu0 0.0
    %2944 = vmatpush.msra.mxu0 0.0
    %2945 = vmatpush.msra.mxu0 0.0
    %2946 = vmatpush.msra.mxu0 0.0
    %2947 = vmatpush.msra.mxu0 0.0
    %2948 = vmatpush.msra.mxu0 0.0
    %2949 = vmatpush.msra.mxu0 0.0
    %2950 = vmatpush.msra.mxu0 0.0
    %2951 = vmatpush.msra.mxu0 0.0
    %2952 = vmatpush.msra.mxu0 %v2875
    %2953 = vmatmul.f32.gmra.mxu0 %v2763
    %v2954 = vpop.f32.mrf.mxu0
    %v2955 = vadd.f32 0.0, %v2954
    %2956 = vdwg.mxu0
    %2957 = vmatpush.msra.mxu0 0.0
    %2958 = vmatpush.msra.mxu0 0.0
    %2959 = vmatpush.msra.mxu0 0.0
    %2960 = vmatpush.msra.mxu0 0.0
    %2961 = vmatpush.msra.mxu0 0.0
    %2962 = vmatpush.msra.mxu0 0.0
    %2963 = vmatpush.msra.mxu0 0.0
    %2964 = vmatpush.msra.mxu0 0.0
    %2965 = vmatpush.msra.mxu0 0.0
    %2966 = vmatpush.msra.mxu0 0.0
    %2967 = vmatpush.msra.mxu0 0.0
    %2968 = vmatpush.msra.mxu0 0.0
    %2969 = vmatpush.msra.mxu0 0.0
    %2970 = vmatpush.msra.mxu0 0.0
    %2971 = vmatpush.msra.mxu0 0.0
    %2972 = vmatpush.msra.mxu0 %v2876
    %2973 = vmatmul.f32.gmra.mxu0 %v2763
    %v2974 = vpop.f32.mrf.mxu0
    %v2975 = vadd.f32 0.0, %v2974
    %2976 = vdwg.mxu0
    %v2977 = vadd.f32 %v2895, %v2915
    %v2978 = vadd.f32 %v2977, %v2935
    %v2979 = vadd.f32 %v2978, %v2955
    %v2980 = vadd.f32 %v2979, %v2975
    %2981 = vadd.xlane.f32.xlu0 %v2980
    %v2982 = vpop.xlane.xlu0 %2981
    %v2983 = vmul.f32 %v2982, 0.001953125
    %v2984 = vmul.f32 %v2871, %v2871
    %v2985 = vsub.f32 %v2983, %v2984
    %v2986 = vmax.f32 %v2985, 0.0
    %v2987 = vadd.f32 %v2986, 1e-05
    %v2988 = vrsqrt.pop %v2987
    %v2989 = vmul.f32 %v2988, %v2987
    %v2990 = vmul.f32 %v2989, %v2988
    %v2991 = vmul.f32 0.5, %v2990
    %v2992 = vsub.f32 1.5, %v2991
    %v2993 = vmul.f32 %v2988, %v2992
    %vm2994 = vweird.f32 %v2987
    %vm2995 = vweird.f32 %v2988
    %vm2996 = vmor %vm2994, %vm2995
    %v2997 = vsel %vm2996, %v2988, %v2993
    %v2998 = vstv %s1399
    %v2999 = vmul.f32 %v2997, %v2998
    %v3000 = vsub.f32 %v2679, %v2871
    %v3001 = vsub.f32 %v2699, %v2871
    %v3002 = vsub.f32 %v2719, %v2871
    %v3003 = vsub.f32 %v2739, %v2871
    %v3004 = vsub.f32 %v2759, %v2871
    %v3005 = vmul.f32 %v3000, %v2999
    %v3006 = vmul.f32 %v3001, %v2999
    %v3007 = vmul.f32 %v3002, %v2999
    %v3008 = vmul.f32 %v3003, %v2999
    %v3009 = vmul.f32 %v3004, %v2999
    %v3010 = vadd.f32 %v1394, %v3005
    %v3011 = vadd.f32 %v1395, %v3006
    %v3012 = vadd.f32 %v1396, %v3007
    %v3013 = vadd.f32 %v1397, %v3008
    %v3014 = vadd.f32 %v1398, %v3009
    %s3015 = sld [smem:[#allocation4 + $0x5]]
    %3016 = vst [vmem:[#allocation2 + $0x8] sm:$0xff] %v93
    %3017 = vst [vmem:[#allocation2 + $0x10] sm:$0xff] %v94
    %3018 = vst [vmem:[#allocation2 + $0x18] sm:$0xff] %v95
    %3019 = vst [vmem:[#allocation2 + $0x20] sm:$0xff] %v96
    %3020 = vst [vmem:[#allocation2 + $0x28] sm:$0xff] %v97
    %v3021 = vld [vmem:[%s9] sm:$0xff]
    %v3022 = vld [vmem:[#allocation2] sm:$0xff]
    %v3023 = vld [vmem:[#allocation2 + $0x8] sm:$0xff]
    %v3024 = vld [vmem:[#allocation2 + $0x10] sm:$0xff]
    %v3025 = vld [vmem:[#allocation2 + $0x18] sm:$0xff]
    %v3026 = vld [vmem:[#allocation2 + $0x20] sm:$0xff]
    %v3027 = vld [vmem:[#allocation2 + $0x28] sm:$0xff]
    %3029 = vset.pattern.permute.xlu0 0
    %3030 = vperm.xlu0 %3029, %v3021
    %v3031 = vpop.permute.xlu0 %3030
    %v3033 = vmul.f32 %v3031, %v3022
    %v3034 = vmul.f32 %v3031, %v3023
    %v3035 = vmul.f32 %v3031, %v3024
    %v3036 = vmul.f32 %v3031, %v3025
    %v3037 = vmul.f32 %v3031, %v3026
    %v3038 = vmul.f32 %v3031, %v3027
    %3039 = vset.pattern.permute.xlu0 1
    %3040 = vperm.xlu0 %3039, %v3021
    %v3041 = vpop.permute.xlu0 %3040
    %v3043 = vmul.f32 %v3041, %v3022
    %v3044 = vmul.f32 %v3041, %v3023
    %v3045 = vmul.f32 %v3041, %v3024
    %v3046 = vmul.f32 %v3041, %v3025
    %v3047 = vmul.f32 %v3041, %v3026
    %v3048 = vmul.f32 %v3041, %v3027
    %3055 = vrot.lane.b32.xlu0 %v3043, 127
    %v3056 = vpop.permute.xlu0 %3055
    %3057 = vrot.lane.b32.xlu0 %v3044, 127
    %v3058 = vpop.permute.xlu0 %3057
    %3059 = vrot.lane.b32.xlu0 %v3045, 127
    %v3060 = vpop.permute.xlu0 %3059
    %3061 = vrot.lane.b32.xlu0 %v3046, 127
    %v3062 = vpop.permute.xlu0 %3061
    %3063 = vrot.lane.b32.xlu0 %v3047, 127
    %v3064 = vpop.permute.xlu0 %3063
    %3065 = vrot.lane.b32.xlu0 %v3048, 127
    %v3066 = vpop.permute.xlu0 %3065
    %v3067 = vsel %vm150, %v3056, %v3058
    %v3068 = vsel %vm150, %v3058, %v3060
    %v3069 = vsel %vm150, %v3060, %v3062
    %v3070 = vsel %vm150, %v3062, %v3064
    %v3071 = vsel %vm150, %v3064, %v3066
    %v3078 = vadd.f32 %v3033, %v3067
    %v3079 = vadd.f32 %v3034, %v3068
    %v3080 = vadd.f32 %v3035, %v3069
    %v3081 = vadd.f32 %v3036, %v3070
    %v3082 = vadd.f32 %v3037, %v3071
    %v3083 = vadd.f32 %v3038, %v3066
    %3084 = vset.pattern.permute.xlu0 2
    %3085 = vperm.xlu0 %3084, %v3021
    %v3086 = vpop.permute.xlu0 %3085
    %v3088 = vmul.f32 %v3086, %v3022
    %v3089 = vmul.f32 %v3086, %v3023
    %v3090 = vmul.f32 %v3086, %v3024
    %v3091 = vmul.f32 %v3086, %v3025
    %v3092 = vmul.f32 %v3086, %v3026
    %v3093 = vmul.f32 %v3086, %v3027
    %3100 = vrot.lane.b32.xlu0 %v3088, 126
    %v3101 = vpop.permute.xlu0 %3100
    %3102 = vrot.lane.b32.xlu0 %v3089, 126
    %v3103 = vpop.permute.xlu0 %3102
    %3104 = vrot.lane.b32.xlu0 %v3090, 126
    %v3105 = vpop.permute.xlu0 %3104
    %3106 = vrot.lane.b32.xlu0 %v3091, 126
    %v3107 = vpop.permute.xlu0 %3106
    %3108 = vrot.lane.b32.xlu0 %v3092, 126
    %v3109 = vpop.permute.xlu0 %3108
    %3110 = vrot.lane.b32.xlu0 %v3093, 126
    %v3111 = vpop.permute.xlu0 %3110
    %v3112 = vsel %vm180, %v3101, %v3103
    %v3113 = vsel %vm180, %v3103, %v3105
    %v3114 = vsel %vm180, %v3105, %v3107
    %v3115 = vsel %vm180, %v3107, %v3109
    %v3116 = vsel %vm180, %v3109, %v3111
    %v3123 = vadd.f32 %v3078, %v3112
    %v3124 = vadd.f32 %v3079, %v3113
    %v3125 = vadd.f32 %v3080, %v3114
    %v3126 = vadd.f32 %v3081, %v3115
    %v3127 = vadd.f32 %v3082, %v3116
    %v3128 = vadd.f32 %v3083, %v3111
    %3129 = vset.pattern.permute.xlu0 3
    %3130 = vperm.xlu0 %3129, %v3021
    %v3131 = vpop.permute.xlu0 %3130
    %v3133 = vmul.f32 %v3131, %v3022
    %v3134 = vmul.f32 %v3131, %v3023
    %v3135 = vmul.f32 %v3131, %v3024
    %v3136 = vmul.f32 %v3131, %v3025
    %v3137 = vmul.f32 %v3131, %v3026
    %v3138 = vmul.f32 %v3131, %v3027
    %3145 = vrot.lane.b32.xlu0 %v3133, 125
    %v3146 = vpop.permute.xlu0 %3145
    %3147 = vrot.lane.b32.xlu0 %v3134, 125
    %v3148 = vpop.permute.xlu0 %3147
    %3149 = vrot.lane.b32.xlu0 %v3135, 125
    %v3150 = vpop.permute.xlu0 %3149
    %3151 = vrot.lane.b32.xlu0 %v3136, 125
    %v3152 = vpop.permute.xlu0 %3151
    %3153 = vrot.lane.b32.xlu0 %v3137, 125
    %v3154 = vpop.permute.xlu0 %3153
    %3155 = vrot.lane.b32.xlu0 %v3138, 125
    %v3156 = vpop.permute.xlu0 %3155
    %vm3157 = vcmask 1022976
    %v3158 = vsel %vm3157, %v3146, %v3148
    %v3159 = vsel %vm3157, %v3148, %v3150
    %v3160 = vsel %vm3157, %v3150, %v3152
    %v3161 = vsel %vm3157, %v3152, %v3154
    %v3162 = vsel %vm3157, %v3154, %v3156
    %v3169 = vadd.f32 %v3123, %v3158
    %v3170 = vadd.f32 %v3124, %v3159
    %v3171 = vadd.f32 %v3125, %v3160
    %v3172 = vadd.f32 %v3126, %v3161
    %v3173 = vadd.f32 %v3127, %v3162
    %v3174 = vadd.f32 %v3128, %v3156
    %3175 = vset.pattern.permute.xlu0 4
    %3176 = vperm.xlu0 %3175, %v3021
    %v3177 = vpop.permute.xlu0 %3176
    %v3179 = vmul.f32 %v3177, %v3022
    %v3180 = vmul.f32 %v3177, %v3023
    %v3181 = vmul.f32 %v3177, %v3024
    %v3182 = vmul.f32 %v3177, %v3025
    %v3183 = vmul.f32 %v3177, %v3026
    %v3184 = vmul.f32 %v3177, %v3027
    %3191 = vrot.lane.b32.xlu0 %v3179, 124
    %v3192 = vpop.permute.xlu0 %3191
    %3193 = vrot.lane.b32.xlu0 %v3180, 124
    %v3194 = vpop.permute.xlu0 %3193
    %3195 = vrot.lane.b32.xlu0 %v3181, 124
    %v3196 = vpop.permute.xlu0 %3195
    %3197 = vrot.lane.b32.xlu0 %v3182, 124
    %v3198 = vpop.permute.xlu0 %3197
    %3199 = vrot.lane.b32.xlu0 %v3183, 124
    %v3200 = vpop.permute.xlu0 %3199
    %3201 = vrot.lane.b32.xlu0 %v3184, 124
    %v3202 = vpop.permute.xlu0 %3201
    %vm3203 = vcmask 1014784
    %v3204 = vsel %vm3203, %v3192, %v3194
    %v3205 = vsel %vm3203, %v3194, %v3196
    %v3206 = vsel %vm3203, %v3196, %v3198
    %v3207 = vsel %vm3203, %v3198, %v3200
    %v3208 = vsel %vm3203, %v3200, %v3202
    %v3215 = vadd.f32 %v3169, %v3204
    %v3216 = vadd.f32 %v3170, %v3205
    %v3217 = vadd.f32 %v3171, %v3206
    %v3218 = vadd.f32 %v3172, %v3207
    %v3219 = vadd.f32 %v3173, %v3208
    %v3220 = vadd.f32 %v3174, %v3202
    %3221 = vset.pattern.permute.xlu0 5
    %3222 = vperm.xlu0 %3221, %v3021
    %v3223 = vpop.permute.xlu0 %3222
    %v3225 = vmul.f32 %v3223, %v3022
    %v3226 = vmul.f32 %v3223, %v3023
    %v3227 = vmul.f32 %v3223, %v3024
    %v3228 = vmul.f32 %v3223, %v3025
    %v3229 = vmul.f32 %v3223, %v3026
    %v3230 = vmul.f32 %v3223, %v3027
    %3237 = vrot.lane.b32.xlu0 %v3225, 104
    %v3238 = vpop.permute.xlu0 %3237
    %3239 = vrot.lane.b32.xlu0 %v3226, 104
    %v3240 = vpop.permute.xlu0 %3239
    %3241 = vrot.lane.b32.xlu0 %v3227, 104
    %v3242 = vpop.permute.xlu0 %3241
    %3243 = vrot.lane.b32.xlu0 %v3228, 104
    %v3244 = vpop.permute.xlu0 %3243
    %3245 = vrot.lane.b32.xlu0 %v3229, 104
    %v3246 = vpop.permute.xlu0 %3245
    %3247 = vrot.lane.b32.xlu0 %v3230, 104
    %v3248 = vpop.permute.xlu0 %3247
    %v3249 = vsel %vm210, %v3238, %v3240
    %v3250 = vsel %vm210, %v3240, %v3242
    %v3251 = vsel %vm210, %v3242, %v3244
    %v3252 = vsel %vm210, %v3244, %v3246
    %v3253 = vsel %vm210, %v3246, %v3248
    %v3260 = vadd.f32 %v3215, %v3249
    %v3261 = vadd.f32 %v3216, %v3250
    %v3262 = vadd.f32 %v3217, %v3251
    %v3263 = vadd.f32 %v3218, %v3252
    %v3264 = vadd.f32 %v3219, %v3253
    %v3265 = vadd.f32 %v3220, %v3248
    %3266 = vset.pattern.permute.xlu0 6
    %3267 = vperm.xlu0 %3266, %v3021
    %v3268 = vpop.permute.xlu0 %3267
    %v3270 = vmul.f32 %v3268, %v3022
    %v3271 = vmul.f32 %v3268, %v3023
    %v3272 = vmul.f32 %v3268, %v3024
    %v3273 = vmul.f32 %v3268, %v3025
    %v3274 = vmul.f32 %v3268, %v3026
    %v3275 = vmul.f32 %v3268, %v3027
    %3282 = vrot.lane.b32.xlu0 %v3270, 103
    %v3283 = vpop.permute.xlu0 %3282
    %3284 = vrot.lane.b32.xlu0 %v3271, 103
    %v3285 = vpop.permute.xlu0 %3284
    %3286 = vrot.lane.b32.xlu0 %v3272, 103
    %v3287 = vpop.permute.xlu0 %3286
    %3288 = vrot.lane.b32.xlu0 %v3273, 103
    %v3289 = vpop.permute.xlu0 %3288
    %3290 = vrot.lane.b32.xlu0 %v3274, 103
    %v3291 = vpop.permute.xlu0 %3290
    %3292 = vrot.lane.b32.xlu0 %v3275, 103
    %v3293 = vpop.permute.xlu0 %3292
    %v3294 = vsel %vm238, %v3283, %v3285
    %v3295 = vsel %vm238, %v3285, %v3287
    %v3296 = vsel %vm238, %v3287, %v3289
    %v3297 = vsel %vm238, %v3289, %v3291
    %v3298 = vsel %vm238, %v3291, %v3293
    %v3305 = vadd.f32 %v3260, %v3294
    %v3306 = vadd.f32 %v3261, %v3295
    %v3307 = vadd.f32 %v3262, %v3296
    %v3308 = vadd.f32 %v3263, %v3297
    %v3309 = vadd.f32 %v3264, %v3298
    %v3310 = vadd.f32 %v3265, %v3293
    %3311 = vset.pattern.permute.xlu0 7
    %3312 = vperm.xlu0 %3311, %v3021
    %v3313 = vpop.permute.xlu0 %3312
    %v3315 = vmul.f32 %v3313, %v3022
    %v3316 = vmul.f32 %v3313, %v3023
    %v3317 = vmul.f32 %v3313, %v3024
    %v3318 = vmul.f32 %v3313, %v3025
    %v3319 = vmul.f32 %v3313, %v3026
    %v3320 = vmul.f32 %v3313, %v3027
    %3327 = vrot.lane.b32.xlu0 %v3315, 102
    %v3328 = vpop.permute.xlu0 %3327
    %3329 = vrot.lane.b32.xlu0 %v3316, 102
    %v3330 = vpop.permute.xlu0 %3329
    %3331 = vrot.lane.b32.xlu0 %v3317, 102
    %v3332 = vpop.permute.xlu0 %3331
    %3333 = vrot.lane.b32.xlu0 %v3318, 102
    %v3334 = vpop.permute.xlu0 %3333
    %3335 = vrot.lane.b32.xlu0 %v3319, 102
    %v3336 = vpop.permute.xlu0 %3335
    %3337 = vrot.lane.b32.xlu0 %v3320, 102
    %v3338 = vpop.permute.xlu0 %3337
    %v3339 = vsel %vm279, %v3328, %v3330
    %v3340 = vsel %vm279, %v3330, %v3332
    %v3341 = vsel %vm279, %v3332, %v3334
    %v3342 = vsel %vm279, %v3334, %v3336
    %v3343 = vsel %vm279, %v3336, %v3338
    %v3350 = vadd.f32 %v3305, %v3339
    %v3351 = vadd.f32 %v3306, %v3340
    %v3352 = vadd.f32 %v3307, %v3341
    %v3353 = vadd.f32 %v3308, %v3342
    %v3354 = vadd.f32 %v3309, %v3343
    %v3355 = vadd.f32 %v3310, %v3338
    %3356 = vset.pattern.permute.xlu0 8
    %3357 = vperm.xlu0 %3356, %v3021
    %v3358 = vpop.permute.xlu0 %3357
    %v3360 = vmul.f32 %v3358, %v3022
    %v3361 = vmul.f32 %v3358, %v3023
    %v3362 = vmul.f32 %v3358, %v3024
    %v3363 = vmul.f32 %v3358, %v3025
    %v3364 = vmul.f32 %v3358, %v3026
    %v3365 = vmul.f32 %v3358, %v3027
    %3372 = vrot.lane.b32.xlu0 %v3360, 101
    %v3373 = vpop.permute.xlu0 %3372
    %3374 = vrot.lane.b32.xlu0 %v3361, 101
    %v3375 = vpop.permute.xlu0 %3374
    %3376 = vrot.lane.b32.xlu0 %v3362, 101
    %v3377 = vpop.permute.xlu0 %3376
    %3378 = vrot.lane.b32.xlu0 %v3363, 101
    %v3379 = vpop.permute.xlu0 %3378
    %3380 = vrot.lane.b32.xlu0 %v3364, 101
    %v3381 = vpop.permute.xlu0 %3380
    %3382 = vrot.lane.b32.xlu0 %v3365, 101
    %v3383 = vpop.permute.xlu0 %3382
    %vm3384 = vcmask 826368
    %v3385 = vsel %vm3384, %v3373, %v3375
    %v3386 = vsel %vm3384, %v3375, %v3377
    %v3387 = vsel %vm3384, %v3377, %v3379
    %v3388 = vsel %vm3384, %v3379, %v3381
    %v3389 = vsel %vm3384, %v3381, %v3383
    %v3396 = vadd.f32 %v3350, %v3385
    %v3397 = vadd.f32 %v3351, %v3386
    %v3398 = vadd.f32 %v3352, %v3387
    %v3399 = vadd.f32 %v3353, %v3388
    %v3400 = vadd.f32 %v3354, %v3389
    %v3401 = vadd.f32 %v3355, %v3383
    %3402 = vset.pattern.permute.xlu0 9
    %3403 = vperm.xlu0 %3402, %v3021
    %v3404 = vpop.permute.xlu0 %3403
    %v3406 = vmul.f32 %v3404, %v3022
    %v3407 = vmul.f32 %v3404, %v3023
    %v3408 = vmul.f32 %v3404, %v3024
    %v3409 = vmul.f32 %v3404, %v3025
    %v3410 = vmul.f32 %v3404, %v3026
    %v3411 = vmul.f32 %v3404, %v3027
    %3418 = vrot.lane.b32.xlu0 %v3406, 100
    %v3419 = vpop.permute.xlu0 %3418
    %3420 = vrot.lane.b32.xlu0 %v3407, 100
    %v3421 = vpop.permute.xlu0 %3420
    %3422 = vrot.lane.b32.xlu0 %v3408, 100
    %v3423 = vpop.permute.xlu0 %3422
    %3424 = vrot.lane.b32.xlu0 %v3409, 100
    %v3425 = vpop.permute.xlu0 %3424
    %3426 = vrot.lane.b32.xlu0 %v3410, 100
    %v3427 = vpop.permute.xlu0 %3426
    %3428 = vrot.lane.b32.xlu0 %v3411, 100
    %v3429 = vpop.permute.xlu0 %3428
    %vm3430 = vcmask 818176
    %v3431 = vsel %vm3430, %v3419, %v3421
    %v3432 = vsel %vm3430, %v3421, %v3423
    %v3433 = vsel %vm3430, %v3423, %v3425
    %v3434 = vsel %vm3430, %v3425, %v3427
    %v3435 = vsel %vm3430, %v3427, %v3429
    %v3442 = vadd.f32 %v3396, %v3431
    %v3443 = vadd.f32 %v3397, %v3432
    %v3444 = vadd.f32 %v3398, %v3433
    %v3445 = vadd.f32 %v3399, %v3434
    %v3446 = vadd.f32 %v3400, %v3435
    %v3447 = vadd.f32 %v3401, %v3429
    %3448 = vset.pattern.permute.xlu0 10
    %3449 = vperm.xlu0 %3448, %v3021
    %v3450 = vpop.permute.xlu0 %3449
    %v3452 = vmul.f32 %v3450, %v3022
    %v3453 = vmul.f32 %v3450, %v3023
    %v3454 = vmul.f32 %v3450, %v3024
    %v3455 = vmul.f32 %v3450, %v3025
    %v3456 = vmul.f32 %v3450, %v3026
    %v3457 = vmul.f32 %v3450, %v3027
    %3464 = vrot.lane.b32.xlu0 %v3452, 80
    %v3465 = vpop.permute.xlu0 %3464
    %3466 = vrot.lane.b32.xlu0 %v3453, 80
    %v3467 = vpop.permute.xlu0 %3466
    %3468 = vrot.lane.b32.xlu0 %v3454, 80
    %v3469 = vpop.permute.xlu0 %3468
    %3470 = vrot.lane.b32.xlu0 %v3455, 80
    %v3471 = vpop.permute.xlu0 %3470
    %3472 = vrot.lane.b32.xlu0 %v3456, 80
    %v3473 = vpop.permute.xlu0 %3472
    %3474 = vrot.lane.b32.xlu0 %v3457, 80
    %v3475 = vpop.permute.xlu0 %3474
    %v3476 = vsel %vm309, %v3465, %v3467
    %v3477 = vsel %vm309, %v3467, %v3469
    %v3478 = vsel %vm309, %v3469, %v3471
    %v3479 = vsel %vm309, %v3471, %v3473
    %v3480 = vsel %vm309, %v3473, %v3475
    %v3487 = vadd.f32 %v3442, %v3476
    %v3488 = vadd.f32 %v3443, %v3477
    %v3489 = vadd.f32 %v3444, %v3478
    %v3490 = vadd.f32 %v3445, %v3479
    %v3491 = vadd.f32 %v3446, %v3480
    %v3492 = vadd.f32 %v3447, %v3475
    %3493 = vset.pattern.permute.xlu0 11
    %3494 = vperm.xlu0 %3493, %v3021
    %v3495 = vpop.permute.xlu0 %3494
    %v3497 = vmul.f32 %v3495, %v3022
    %v3498 = vmul.f32 %v3495, %v3023
    %v3499 = vmul.f32 %v3495, %v3024
    %v3500 = vmul.f32 %v3495, %v3025
    %v3501 = vmul.f32 %v3495, %v3026
    %v3502 = vmul.f32 %v3495, %v3027
    %3509 = vrot.lane.b32.xlu0 %v3497, 79
    %v3510 = vpop.permute.xlu0 %3509
    %3511 = vrot.lane.b32.xlu0 %v3498, 79
    %v3512 = vpop.permute.xlu0 %3511
    %3513 = vrot.lane.b32.xlu0 %v3499, 79
    %v3514 = vpop.permute.xlu0 %3513
    %3515 = vrot.lane.b32.xlu0 %v3500, 79
    %v3516 = vpop.permute.xlu0 %3515
    %3517 = vrot.lane.b32.xlu0 %v3501, 79
    %v3518 = vpop.permute.xlu0 %3517
    %3519 = vrot.lane.b32.xlu0 %v3502, 79
    %v3520 = vpop.permute.xlu0 %3519
    %v3521 = vsel %vm339, %v3510, %v3512
    %v3522 = vsel %vm339, %v3512, %v3514
    %v3523 = vsel %vm339, %v3514, %v3516
    %v3524 = vsel %vm339, %v3516, %v3518
    %v3525 = vsel %vm339, %v3518, %v3520
    %v3532 = vadd.f32 %v3487, %v3521
    %v3533 = vadd.f32 %v3488, %v3522
    %v3534 = vadd.f32 %v3489, %v3523
    %v3535 = vadd.f32 %v3490, %v3524
    %v3536 = vadd.f32 %v3491, %v3525
    %v3537 = vadd.f32 %v3492, %v3520
    %3538 = vset.pattern.permute.xlu0 12
    %3539 = vperm.xlu0 %3538, %v3021
    %v3540 = vpop.permute.xlu0 %3539
    %v3542 = vmul.f32 %v3540, %v3023
    %v3543 = vmul.f32 %v3540, %v3024
    %v3544 = vmul.f32 %v3540, %v3025
    %v3545 = vmul.f32 %v3540, %v3026
    %v3546 = vmul.f32 %v3540, %v3027
    %3552 = vrot.lane.b32.xlu0 %v3542, 78
    %v3553 = vpop.permute.xlu0 %3552
    %3554 = vrot.lane.b32.xlu0 %v3543, 78
    %v3555 = vpop.permute.xlu0 %3554
    %3556 = vrot.lane.b32.xlu0 %v3544, 78
    %v3557 = vpop.permute.xlu0 %3556
    %3558 = vrot.lane.b32.xlu0 %v3545, 78
    %v3559 = vpop.permute.xlu0 %3558
    %3560 = vrot.lane.b32.xlu0 %v3546, 78
    %v3561 = vpop.permute.xlu0 %3560
    %v3562 = vsel %vm369, %v3553, %v3555
    %v3563 = vsel %vm369, %v3555, %v3557
    %v3564 = vsel %vm369, %v3557, %v3559
    %v3565 = vsel %vm369, %v3559, %v3561
    %v3572 = vadd.f32 %v3532, %v3553
    %v3573 = vadd.f32 %v3533, %v3562
    %v3574 = vadd.f32 %v3534, %v3563
    %v3575 = vadd.f32 %v3535, %v3564
    %v3576 = vadd.f32 %v3536, %v3565
    %v3577 = vadd.f32 %v3537, %v3561
    %v3578 = vld [vmem:[#allocation2 + $0x8] sm:$0xff]
    %v3579 = vld [vmem:[#allocation2 + $0x10] sm:$0xff]
    %v3580 = vld [vmem:[#allocation2 + $0x18] sm:$0xff]
    %v3581 = vld [vmem:[#allocation2 + $0x20] sm:$0xff]
    %v3582 = vld [vmem:[#allocation2 + $0x28] sm:$0xff]
    %v3583 = vld [vmem:[#allocation2 + $0x30] sm:$0xff]
    %3584 = vset.pattern.permute.xlu0 13
    %3585 = vperm.xlu0 %3584, %v3021
    %v3586 = vpop.permute.xlu0 %3585
    %v3588 = vmul.f32 %v3586, %v3578
    %v3589 = vmul.f32 %v3586, %v3579
    %v3590 = vmul.f32 %v3586, %v3580
    %v3591 = vmul.f32 %v3586, %v3581
    %v3592 = vmul.f32 %v3586, %v3582
    %v3593 = vmul.f32 %v3586, %v3583
    %3600 = vrot.lane.b32.xlu0 %v3588, 77
    %v3601 = vpop.permute.xlu0 %3600
    %3602 = vrot.lane.b32.xlu0 %v3589, 77
    %v3603 = vpop.permute.xlu0 %3602
    %3604 = vrot.lane.b32.xlu0 %v3590, 77
    %v3605 = vpop.permute.xlu0 %3604
    %3606 = vrot.lane.b32.xlu0 %v3591, 77
    %v3607 = vpop.permute.xlu0 %3606
    %3608 = vrot.lane.b32.xlu0 %v3592, 77
    %v3609 = vpop.permute.xlu0 %3608
    %3610 = vrot.lane.b32.xlu0 %v3593, 77
    %v3611 = vpop.permute.xlu0 %3610
    %vm3612 = vcmask 629760
    %v3613 = vsel %vm3612, %v3601, %v3603
    %v3614 = vsel %vm3612, %v3603, %v3605
    %v3615 = vsel %vm3612, %v3605, %v3607
    %v3616 = vsel %vm3612, %v3607, %v3609
    %v3617 = vsel %vm3612, %v3609, %v3611
    %v3624 = vadd.f32 %v3572, %v3601
    %v3625 = vadd.f32 %v3573, %v3613
    %v3626 = vadd.f32 %v3574, %v3614
    %v3627 = vadd.f32 %v3575, %v3615
    %v3628 = vadd.f32 %v3576, %v3616
    %v3629 = vadd.f32 %v3577, %v3617
    %3630 = vset.pattern.permute.xlu0 14
    %3631 = vperm.xlu0 %3630, %v3021
    %v3632 = vpop.permute.xlu0 %3631
    %v3634 = vmul.f32 %v3632, %v3578
    %v3635 = vmul.f32 %v3632, %v3579
    %v3636 = vmul.f32 %v3632, %v3580
    %v3637 = vmul.f32 %v3632, %v3581
    %v3638 = vmul.f32 %v3632, %v3582
    %v3639 = vmul.f32 %v3632, %v3583
    %3646 = vrot.lane.b32.xlu0 %v3634, 76
    %v3647 = vpop.permute.xlu0 %3646
    %3648 = vrot.lane.b32.xlu0 %v3635, 76
    %v3649 = vpop.permute.xlu0 %3648
    %3650 = vrot.lane.b32.xlu0 %v3636, 76
    %v3651 = vpop.permute.xlu0 %3650
    %3652 = vrot.lane.b32.xlu0 %v3637, 76
    %v3653 = vpop.permute.xlu0 %3652
    %3654 = vrot.lane.b32.xlu0 %v3638, 76
    %v3655 = vpop.permute.xlu0 %3654
    %3656 = vrot.lane.b32.xlu0 %v3639, 76
    %v3657 = vpop.permute.xlu0 %3656
    %vm3658 = vcmask 621568
    %v3659 = vsel %vm3658, %v3647, %v3649
    %v3660 = vsel %vm3658, %v3649, %v3651
    %v3661 = vsel %vm3658, %v3651, %v3653
    %v3662 = vsel %vm3658, %v3653, %v3655
    %v3663 = vsel %vm3658, %v3655, %v3657
    %v3670 = vadd.f32 %v3624, %v3647
    %v3671 = vadd.f32 %v3625, %v3659
    %v3672 = vadd.f32 %v3626, %v3660
    %v3673 = vadd.f32 %v3627, %v3661
    %v3674 = vadd.f32 %v3628, %v3662
    %v3675 = vadd.f32 %v3629, %v3663
    %3676 = vset.pattern.permute.xlu0 15
    %3677 = vperm.xlu0 %3676, %v3021
    %v3678 = vpop.permute.xlu0 %3677
    %v3680 = vmul.f32 %v3678, %v3578
    %v3681 = vmul.f32 %v3678, %v3579
    %v3682 = vmul.f32 %v3678, %v3580
    %v3683 = vmul.f32 %v3678, %v3581
    %v3684 = vmul.f32 %v3678, %v3582
    %v3685 = vmul.f32 %v3678, %v3583
    %3692 = vrot.lane.b32.xlu0 %v3680, 56
    %v3693 = vpop.permute.xlu0 %3692
    %3694 = vrot.lane.b32.xlu0 %v3681, 56
    %v3695 = vpop.permute.xlu0 %3694
    %3696 = vrot.lane.b32.xlu0 %v3682, 56
    %v3697 = vpop.permute.xlu0 %3696
    %3698 = vrot.lane.b32.xlu0 %v3683, 56
    %v3699 = vpop.permute.xlu0 %3698
    %3700 = vrot.lane.b32.xlu0 %v3684, 56
    %v3701 = vpop.permute.xlu0 %3700
    %3702 = vrot.lane.b32.xlu0 %v3685, 56
    %v3703 = vpop.permute.xlu0 %3702
    %vm3704 = vcmask 457728
    %v3705 = vsel %vm3704, %v3693, %v3695
    %v3706 = vsel %vm3704, %v3695, %v3697
    %v3707 = vsel %vm3704, %v3697, %v3699
    %v3708 = vsel %vm3704, %v3699, %v3701
    %v3709 = vsel %vm3704, %v3701, %v3703
    %v3716 = vadd.f32 %v3670, %v3693
    %v3717 = vadd.f32 %v3671, %v3705
    %v3718 = vadd.f32 %v3672, %v3706
    %v3719 = vadd.f32 %v3673, %v3707
    %v3720 = vadd.f32 %v3674, %v3708
    %v3721 = vadd.f32 %v3675, %v3709
    %3722 = vset.pattern.permute.xlu0 16
    %3723 = vperm.xlu0 %3722, %v3021
    %v3724 = vpop.permute.xlu0 %3723
    %v3726 = vmul.f32 %v3724, %v3578
    %v3727 = vmul.f32 %v3724, %v3579
    %v3728 = vmul.f32 %v3724, %v3580
    %v3729 = vmul.f32 %v3724, %v3581
    %v3730 = vmul.f32 %v3724, %v3582
    %v3731 = vmul.f32 %v3724, %v3583
    %3738 = vrot.lane.b32.xlu0 %v3726, 55
    %v3739 = vpop.permute.xlu0 %3738
    %3740 = vrot.lane.b32.xlu0 %v3727, 55
    %v3741 = vpop.permute.xlu0 %3740
    %3742 = vrot.lane.b32.xlu0 %v3728, 55
    %v3743 = vpop.permute.xlu0 %3742
    %3744 = vrot.lane.b32.xlu0 %v3729, 55
    %v3745 = vpop.permute.xlu0 %3744
    %3746 = vrot.lane.b32.xlu0 %v3730, 55
    %v3747 = vpop.permute.xlu0 %3746
    %3748 = vrot.lane.b32.xlu0 %v3731, 55
    %v3749 = vpop.permute.xlu0 %3748
    %vm3750 = vcmask 449536
    %v3751 = vsel %vm3750, %v3739, %v3741
    %v3752 = vsel %vm3750, %v3741, %v3743
    %v3753 = vsel %vm3750, %v3743, %v3745
    %v3754 = vsel %vm3750, %v3745, %v3747
    %v3755 = vsel %vm3750, %v3747, %v3749
    %v3762 = vadd.f32 %v3716, %v3739
    %v3763 = vadd.f32 %v3717, %v3751
    %v3764 = vadd.f32 %v3718, %v3752
    %v3765 = vadd.f32 %v3719, %v3753
    %v3766 = vadd.f32 %v3720, %v3754
    %v3767 = vadd.f32 %v3721, %v3755
    %3768 = vset.pattern.permute.xlu0 17
    %3769 = vperm.xlu0 %3768, %v3021
    %v3770 = vpop.permute.xlu0 %3769
    %v3772 = vmul.f32 %v3770, %v3578
    %v3773 = vmul.f32 %v3770, %v3579
    %v3774 = vmul.f32 %v3770, %v3580
    %v3775 = vmul.f32 %v3770, %v3581
    %v3776 = vmul.f32 %v3770, %v3582
    %v3777 = vmul.f32 %v3770, %v3583
    %3784 = vrot.lane.b32.xlu0 %v3772, 54
    %v3785 = vpop.permute.xlu0 %3784
    %3786 = vrot.lane.b32.xlu0 %v3773, 54
    %v3787 = vpop.permute.xlu0 %3786
    %3788 = vrot.lane.b32.xlu0 %v3774, 54
    %v3789 = vpop.permute.xlu0 %3788
    %3790 = vrot.lane.b32.xlu0 %v3775, 54
    %v3791 = vpop.permute.xlu0 %3790
    %3792 = vrot.lane.b32.xlu0 %v3776, 54
    %v3793 = vpop.permute.xlu0 %3792
    %3794 = vrot.lane.b32.xlu0 %v3777, 54
    %v3795 = vpop.permute.xlu0 %3794
    %vm3796 = vcmask 441344
    %v3797 = vsel %vm3796, %v3785, %v3787
    %v3798 = vsel %vm3796, %v3787, %v3789
    %v3799 = vsel %vm3796, %v3789, %v3791
    %v3800 = vsel %vm3796, %v3791, %v3793
    %v3801 = vsel %vm3796, %v3793, %v3795
    %v3808 = vadd.f32 %v3762, %v3785
    %v3809 = vadd.f32 %v3763, %v3797
    %v3810 = vadd.f32 %v3764, %v3798
    %v3811 = vadd.f32 %v3765, %v3799
    %v3812 = vadd.f32 %v3766, %v3800
    %v3813 = vadd.f32 %v3767, %v3801
    %3814 = vset.pattern.permute.xlu0 18
    %3815 = vperm.xlu0 %3814, %v3021
    %v3816 = vpop.permute.xlu0 %3815
    %v3818 = vmul.f32 %v3816, %v3578
    %v3819 = vmul.f32 %v3816, %v3579
    %v3820 = vmul.f32 %v3816, %v3580
    %v3821 = vmul.f32 %v3816, %v3581
    %v3822 = vmul.f32 %v3816, %v3582
    %v3823 = vmul.f32 %v3816, %v3583
    %3830 = vrot.lane.b32.xlu0 %v3818, 53
    %v3831 = vpop.permute.xlu0 %3830
    %3832 = vrot.lane.b32.xlu0 %v3819, 53
    %v3833 = vpop.permute.xlu0 %3832
    %3834 = vrot.lane.b32.xlu0 %v3820, 53
    %v3835 = vpop.permute.xlu0 %3834
    %3836 = vrot.lane.b32.xlu0 %v3821, 53
    %v3837 = vpop.permute.xlu0 %3836
    %3838 = vrot.lane.b32.xlu0 %v3822, 53
    %v3839 = vpop.permute.xlu0 %3838
    %3840 = vrot.lane.b32.xlu0 %v3823, 53
    %v3841 = vpop.permute.xlu0 %3840
    %vm3842 = vcmask 433152
    %v3843 = vsel %vm3842, %v3831, %v3833
    %v3844 = vsel %vm3842, %v3833, %v3835
    %v3845 = vsel %vm3842, %v3835, %v3837
    %v3846 = vsel %vm3842, %v3837, %v3839
    %v3847 = vsel %vm3842, %v3839, %v3841
    %v3854 = vadd.f32 %v3808, %v3831
    %v3855 = vadd.f32 %v3809, %v3843
    %v3856 = vadd.f32 %v3810, %v3844
    %v3857 = vadd.f32 %v3811, %v3845
    %v3858 = vadd.f32 %v3812, %v3846
    %v3859 = vadd.f32 %v3813, %v3847
    %3860 = vset.pattern.permute.xlu0 19
    %3861 = vperm.xlu0 %3860, %v3021
    %v3862 = vpop.permute.xlu0 %3861
    %v3864 = vmul.f32 %v3862, %v3578
    %v3865 = vmul.f32 %v3862, %v3579
    %v3866 = vmul.f32 %v3862, %v3580
    %v3867 = vmul.f32 %v3862, %v3581
    %v3868 = vmul.f32 %v3862, %v3582
    %v3869 = vmul.f32 %v3862, %v3583
    %3876 = vrot.lane.b32.xlu0 %v3864, 52
    %v3877 = vpop.permute.xlu0 %3876
    %3878 = vrot.lane.b32.xlu0 %v3865, 52
    %v3879 = vpop.permute.xlu0 %3878
    %3880 = vrot.lane.b32.xlu0 %v3866, 52
    %v3881 = vpop.permute.xlu0 %3880
    %3882 = vrot.lane.b32.xlu0 %v3867, 52
    %v3883 = vpop.permute.xlu0 %3882
    %3884 = vrot.lane.b32.xlu0 %v3868, 52
    %v3885 = vpop.permute.xlu0 %3884
    %3886 = vrot.lane.b32.xlu0 %v3869, 52
    %v3887 = vpop.permute.xlu0 %3886
    %vm3888 = vcmask 424960
    %v3889 = vsel %vm3888, %v3877, %v3879
    %v3890 = vsel %vm3888, %v3879, %v3881
    %v3891 = vsel %vm3888, %v3881, %v3883
    %v3892 = vsel %vm3888, %v3883, %v3885
    %v3893 = vsel %vm3888, %v3885, %v3887
    %v3900 = vadd.f32 %v3854, %v3877
    %v3901 = vadd.f32 %v3855, %v3889
    %v3902 = vadd.f32 %v3856, %v3890
    %v3903 = vadd.f32 %v3857, %v3891
    %v3904 = vadd.f32 %v3858, %v3892
    %v3905 = vadd.f32 %v3859, %v3893
    %3906 = vset.pattern.permute.xlu0 20
    %3907 = vperm.xlu0 %3906, %v3021
    %v3908 = vpop.permute.xlu0 %3907
    %v3910 = vmul.f32 %v3908, %v3578
    %v3911 = vmul.f32 %v3908, %v3579
    %v3912 = vmul.f32 %v3908, %v3580
    %v3913 = vmul.f32 %v3908, %v3581
    %v3914 = vmul.f32 %v3908, %v3582
    %v3915 = vmul.f32 %v3908, %v3583
    %3922 = vrot.lane.b32.xlu0 %v3910, 32
    %v3923 = vpop.permute.xlu0 %3922
    %3924 = vrot.lane.b32.xlu0 %v3911, 32
    %v3925 = vpop.permute.xlu0 %3924
    %3926 = vrot.lane.b32.xlu0 %v3912, 32
    %v3927 = vpop.permute.xlu0 %3926
    %3928 = vrot.lane.b32.xlu0 %v3913, 32
    %v3929 = vpop.permute.xlu0 %3928
    %3930 = vrot.lane.b32.xlu0 %v3914, 32
    %v3931 = vpop.permute.xlu0 %3930
    %3932 = vrot.lane.b32.xlu0 %v3915, 32
    %v3933 = vpop.permute.xlu0 %3932
    %vm3934 = vcmask 261120
    %v3935 = vsel %vm3934, %v3923, %v3925
    %v3936 = vsel %vm3934, %v3925, %v3927
    %v3937 = vsel %vm3934, %v3927, %v3929
    %v3938 = vsel %vm3934, %v3929, %v3931
    %v3939 = vsel %vm3934, %v3931, %v3933
    %v3946 = vadd.f32 %v3900, %v3923
    %v3947 = vadd.f32 %v3901, %v3935
    %v3948 = vadd.f32 %v3902, %v3936
    %v3949 = vadd.f32 %v3903, %v3937
    %v3950 = vadd.f32 %v3904, %v3938
    %v3951 = vadd.f32 %v3905, %v3939
    %3952 = vset.pattern.permute.xlu0 21
    %3953 = vperm.xlu0 %3952, %v3021
    %v3954 = vpop.permute.xlu0 %3953
    %v3956 = vmul.f32 %v3954, %v3578
    %v3957 = vmul.f32 %v3954, %v3579
    %v3958 = vmul.f32 %v3954, %v3580
    %v3959 = vmul.f32 %v3954, %v3581
    %v3960 = vmul.f32 %v3954, %v3582
    %v3961 = vmul.f32 %v3954, %v3583
    %3968 = vrot.lane.b32.xlu0 %v3956, 31
    %v3969 = vpop.permute.xlu0 %3968
    %3970 = vrot.lane.b32.xlu0 %v3957, 31
    %v3971 = vpop.permute.xlu0 %3970
    %3972 = vrot.lane.b32.xlu0 %v3958, 31
    %v3973 = vpop.permute.xlu0 %3972
    %3974 = vrot.lane.b32.xlu0 %v3959, 31
    %v3975 = vpop.permute.xlu0 %3974
    %3976 = vrot.lane.b32.xlu0 %v3960, 31
    %v3977 = vpop.permute.xlu0 %3976
    %3978 = vrot.lane.b32.xlu0 %v3961, 31
    %v3979 = vpop.permute.xlu0 %3978
    %vm3980 = vcmask 252928
    %v3981 = vsel %vm3980, %v3969, %v3971
    %v3982 = vsel %vm3980, %v3971, %v3973
    %v3983 = vsel %vm3980, %v3973, %v3975
    %v3984 = vsel %vm3980, %v3975, %v3977
    %v3985 = vsel %vm3980, %v3977, %v3979
    %v3992 = vadd.f32 %v3946, %v3969
    %v3993 = vadd.f32 %v3947, %v3981
    %v3994 = vadd.f32 %v3948, %v3982
    %v3995 = vadd.f32 %v3949, %v3983
    %v3996 = vadd.f32 %v3950, %v3984
    %v3997 = vadd.f32 %v3951, %v3985
    %3998 = vset.pattern.permute.xlu0 22
    %3999 = vperm.xlu0 %3998, %v3021
    %v4000 = vpop.permute.xlu0 %3999
    %v4002 = vmul.f32 %v4000, %v3578
    %v4003 = vmul.f32 %v4000, %v3579
    %v4004 = vmul.f32 %v4000, %v3580
    %v4005 = vmul.f32 %v4000, %v3581
    %v4006 = vmul.f32 %v4000, %v3582
    %v4007 = vmul.f32 %v4000, %v3583
    %4014 = vrot.lane.b32.xlu0 %v4002, 30
    %v4015 = vpop.permute.xlu0 %4014
    %4016 = vrot.lane.b32.xlu0 %v4003, 30
    %v4017 = vpop.permute.xlu0 %4016
    %4018 = vrot.lane.b32.xlu0 %v4004, 30
    %v4019 = vpop.permute.xlu0 %4018
    %4020 = vrot.lane.b32.xlu0 %v4005, 30
    %v4021 = vpop.permute.xlu0 %4020
    %4022 = vrot.lane.b32.xlu0 %v4006, 30
    %v4023 = vpop.permute.xlu0 %4022
    %4024 = vrot.lane.b32.xlu0 %v4007, 30
    %v4025 = vpop.permute.xlu0 %4024
    %vm4026 = vcmask 244736
    %v4027 = vsel %vm4026, %v4015, %v4017
    %v4028 = vsel %vm4026, %v4017, %v4019
    %v4029 = vsel %vm4026, %v4019, %v4021
    %v4030 = vsel %vm4026, %v4021, %v4023
    %v4031 = vsel %vm4026, %v4023, %v4025
    %v4038 = vadd.f32 %v3992, %v4015
    %v4039 = vadd.f32 %v3993, %v4027
    %v4040 = vadd.f32 %v3994, %v4028
    %v4041 = vadd.f32 %v3995, %v4029
    %v4042 = vadd.f32 %v3996, %v4030
    %v4043 = vadd.f32 %v3997, %v4031
    %4044 = vset.pattern.permute.xlu0 23
    %4045 = vperm.xlu0 %4044, %v3021
    %v4046 = vpop.permute.xlu0 %4045
    %v4048 = vmul.f32 %v4046, %v3578
    %v4049 = vmul.f32 %v4046, %v3579
    %v4050 = vmul.f32 %v4046, %v3580
    %v4051 = vmul.f32 %v4046, %v3581
    %v4052 = vmul.f32 %v4046, %v3582
    %v4053 = vmul.f32 %v4046, %v3583
    %4060 = vrot.lane.b32.xlu0 %v4048, 29
    %v4061 = vpop.permute.xlu0 %4060
    %4062 = vrot.lane.b32.xlu0 %v4049, 29
    %v4063 = vpop.permute.xlu0 %4062
    %4064 = vrot.lane.b32.xlu0 %v4050, 29
    %v4065 = vpop.permute.xlu0 %4064
    %4066 = vrot.lane.b32.xlu0 %v4051, 29
    %v4067 = vpop.permute.xlu0 %4066
    %4068 = vrot.lane.b32.xlu0 %v4052, 29
    %v4069 = vpop.permute.xlu0 %4068
    %4070 = vrot.lane.b32.xlu0 %v4053, 29
    %v4071 = vpop.permute.xlu0 %4070
    %vm4072 = vcmask 236544
    %v4073 = vsel %vm4072, %v4061, %v4063
    %v4074 = vsel %vm4072, %v4063, %v4065
    %v4075 = vsel %vm4072, %v4065, %v4067
    %v4076 = vsel %vm4072, %v4067, %v4069
    %v4077 = vsel %vm4072, %v4069, %v4071
    %v4084 = vadd.f32 %v4038, %v4061
    %v4085 = vadd.f32 %v4039, %v4073
    %v4086 = vadd.f32 %v4040, %v4074
    %v4087 = vadd.f32 %v4041, %v4075
    %v4088 = vadd.f32 %v4042, %v4076
    %v4089 = vadd.f32 %v4043, %v4077
    %4090 = vset.pattern.permute.xlu0 24
    %4091 = vperm.xlu0 %4090, %v3021
    %v4092 = vpop.permute.xlu0 %4091
    %v4094 = vmul.f32 %v4092, %v3578
    %v4095 = vmul.f32 %v4092, %v3579
    %v4096 = vmul.f32 %v4092, %v3580
    %v4097 = vmul.f32 %v4092, %v3581
    %v4098 = vmul.f32 %v4092, %v3582
    %v4099 = vmul.f32 %v4092, %v3583
    %4106 = vrot.lane.b32.xlu0 %v4094, 28
    %v4107 = vpop.permute.xlu0 %4106
    %4108 = vrot.lane.b32.xlu0 %v4095, 28
    %v4109 = vpop.permute.xlu0 %4108
    %4110 = vrot.lane.b32.xlu0 %v4096, 28
    %v4111 = vpop.permute.xlu0 %4110
    %4112 = vrot.lane.b32.xlu0 %v4097, 28
    %v4113 = vpop.permute.xlu0 %4112
    %4114 = vrot.lane.b32.xlu0 %v4098, 28
    %v4115 = vpop.permute.xlu0 %4114
    %4116 = vrot.lane.b32.xlu0 %v4099, 28
    %v4117 = vpop.permute.xlu0 %4116
    %vm4118 = vcmask 228352
    %v4119 = vsel %vm4118, %v4107, %v4109
    %v4120 = vsel %vm4118, %v4109, %v4111
    %v4121 = vsel %vm4118, %v4111, %v4113
    %v4122 = vsel %vm4118, %v4113, %v4115
    %v4123 = vsel %vm4118, %v4115, %v4117
    %v4130 = vadd.f32 %v4084, %v4107
    %v4131 = vadd.f32 %v4085, %v4119
    %v4132 = vadd.f32 %v4086, %v4120
    %v4133 = vadd.f32 %v4087, %v4121
    %v4134 = vadd.f32 %v4088, %v4122
    %v4135 = vadd.f32 %v4089, %v4123
    %v4136 = vld [vmem:[#allocation3] sm:$0xff]
    %v4137 = vld [vmem:[#allocation3 + $0x8] sm:$0xff]
    %v4138 = vld [vmem:[#allocation3 + $0x10] sm:$0xff]
    %v4139 = vld [vmem:[#allocation3 + $0x18] sm:$0xff]
    %v4140 = vld [vmem:[#allocation3 + $0x20] sm:$0xff]
    %4146 = vrot.lane.b32.xlu0 %v4136, 78
    %v4147 = vpop.permute.xlu0 %4146
    %4148 = vrot.lane.b32.xlu0 %v4137, 78
    %v4149 = vpop.permute.xlu0 %4148
    %4150 = vrot.lane.b32.xlu0 %v4138, 78
    %v4151 = vpop.permute.xlu0 %4150
    %4152 = vrot.lane.b32.xlu0 %v4139, 78
    %v4153 = vpop.permute.xlu0 %4152
    %4154 = vrot.lane.b32.xlu0 %v4140, 78
    %v4155 = vpop.permute.xlu0 %4154
    %v4156 = vsel %vm369, %v4147, %v4149
    %v4157 = vsel %vm369, %v4149, %v4151
    %v4158 = vsel %vm369, %v4151, %v4153
    %v4159 = vsel %vm369, %v4153, %v4155
    %v4166 = vmul.f32 %v4130, %v4147
    %v4167 = vmul.f32 %v4131, %v4156
    %v4168 = vmul.f32 %v4132, %v4157
    %v4169 = vmul.f32 %v4133, %v4158
    %v4170 = vmul.f32 %v4134, %v4159
    %v4171 = vmul.f32 %v4135, %v4155
    %v4172 = vld [vmem:[%s10] sm:$0xff]
    %4179 = vrot.lane.b32.xlu0 %v4166, 50
    %v4180 = vpop.permute.xlu0 %4179
    %4181 = vrot.lane.b32.xlu0 %v4167, 50
    %v4182 = vpop.permute.xlu0 %4181
    %4183 = vrot.lane.b32.xlu0 %v4168, 50
    %v4184 = vpop.permute.xlu0 %4183
    %4185 = vrot.lane.b32.xlu0 %v4169, 50
    %v4186 = vpop.permute.xlu0 %4185
    %4187 = vrot.lane.b32.xlu0 %v4170, 50
    %v4188 = vpop.permute.xlu0 %4187
    %4189 = vrot.lane.b32.xlu0 %v4171, 50
    %v4190 = vpop.permute.xlu0 %4189
    %vm4191 = vcmask 408576
    %v4192 = vsel %vm4191, %v4180, %v4182
    %v4193 = vsel %vm4191, %v4182, %v4184
    %v4194 = vsel %vm4191, %v4184, %v4186
    %v4195 = vsel %vm4191, %v4186, %v4188
    %v4196 = vsel %vm4191, %v4188, %v4190
    %v4203 = vsel %vm453, %v4172, 0
    %4205 = vmatpush.msra.mxu0 0.0
    %4206 = vmatpush.msra.mxu0 0.0
    %4207 = vmatpush.msra.mxu0 0.0
    %4208 = vmatpush.msra.mxu0 0.0
    %4209 = vmatpush.msra.mxu0 0.0
    %4210 = vmatpush.msra.mxu0 0.0
    %4211 = vmatpush.msra.mxu0 0.0
    %4212 = vmatpush.msra.mxu0 0.0
    %4213 = vmatpush.msra.mxu0 0.0
    %4214 = vmatpush.msra.mxu0 0.0
    %4215 = vmatpush.msra.mxu0 0.0
    %4216 = vmatpush.msra.mxu0 0.0
    %4217 = vmatpush.msra.mxu0 0.0
    %4218 = vmatpush.msra.mxu0 0.0
    %4219 = vmatpush.msra.mxu0 0.0
    %4220 = vmatpush.msra.mxu0 %v4192
    %4221 = vmatmul.f32.gmra.mxu0 %v4203
    %v4222 = vpop.f32.mrf.mxu0
    %v4223 = vadd.f32 0.0, %v4222
    %4224 = vdwg.mxu0
    %4225 = vmatpush.msra.mxu0 0.0
    %4226 = vmatpush.msra.mxu0 0.0
    %4227 = vmatpush.msra.mxu0 0.0
    %4228 = vmatpush.msra.mxu0 0.0
    %4229 = vmatpush.msra.mxu0 0.0
    %4230 = vmatpush.msra.mxu0 0.0
    %4231 = vmatpush.msra.mxu0 0.0
    %4232 = vmatpush.msra.mxu0 0.0
    %4233 = vmatpush.msra.mxu0 0.0
    %4234 = vmatpush.msra.mxu0 0.0
    %4235 = vmatpush.msra.mxu0 0.0
    %4236 = vmatpush.msra.mxu0 0.0
    %4237 = vmatpush.msra.mxu0 0.0
    %4238 = vmatpush.msra.mxu0 0.0
    %4239 = vmatpush.msra.mxu0 0.0
    %4240 = vmatpush.msra.mxu0 %v4193
    %4241 = vmatmul.f32.gmra.mxu0 %v4203
    %v4242 = vpop.f32.mrf.mxu0
    %v4243 = vadd.f32 0.0, %v4242
    %4244 = vdwg.mxu0
    %4245 = vmatpush.msra.mxu0 0.0
    %4246 = vmatpush.msra.mxu0 0.0
    %4247 = vmatpush.msra.mxu0 0.0
    %4248 = vmatpush.msra.mxu0 0.0
    %4249 = vmatpush.msra.mxu0 0.0
    %4250 = vmatpush.msra.mxu0 0.0
    %4251 = vmatpush.msra.mxu0 0.0
    %4252 = vmatpush.msra.mxu0 0.0
    %4253 = vmatpush.msra.mxu0 0.0
    %4254 = vmatpush.msra.mxu0 0.0
    %4255 = vmatpush.msra.mxu0 0.0
    %4256 = vmatpush.msra.mxu0 0.0
    %4257 = vmatpush.msra.mxu0 0.0
    %4258 = vmatpush.msra.mxu0 0.0
    %4259 = vmatpush.msra.mxu0 0.0
    %4260 = vmatpush.msra.mxu0 %v4194
    %4261 = vmatmul.f32.gmra.mxu0 %v4203
    %v4262 = vpop.f32.mrf.mxu0
    %v4263 = vadd.f32 0.0, %v4262
    %4264 = vdwg.mxu0
    %4265 = vmatpush.msra.mxu0 0.0
    %4266 = vmatpush.msra.mxu0 0.0
    %4267 = vmatpush.msra.mxu0 0.0
    %4268 = vmatpush.msra.mxu0 0.0
    %4269 = vmatpush.msra.mxu0 0.0
    %4270 = vmatpush.msra.mxu0 0.0
    %4271 = vmatpush.msra.mxu0 0.0
    %4272 = vmatpush.msra.mxu0 0.0
    %4273 = vmatpush.msra.mxu0 0.0
    %4274 = vmatpush.msra.mxu0 0.0
    %4275 = vmatpush.msra.mxu0 0.0
    %4276 = vmatpush.msra.mxu0 0.0
    %4277 = vmatpush.msra.mxu0 0.0
    %4278 = vmatpush.msra.mxu0 0.0
    %4279 = vmatpush.msra.mxu0 0.0
    %4280 = vmatpush.msra.mxu0 %v4195
    %4281 = vmatmul.f32.gmra.mxu0 %v4203
    %v4282 = vpop.f32.mrf.mxu0
    %v4283 = vadd.f32 0.0, %v4282
    %4284 = vdwg.mxu0
    %4285 = vmatpush.msra.mxu0 0.0
    %4286 = vmatpush.msra.mxu0 0.0
    %4287 = vmatpush.msra.mxu0 0.0
    %4288 = vmatpush.msra.mxu0 0.0
    %4289 = vmatpush.msra.mxu0 0.0
    %4290 = vmatpush.msra.mxu0 0.0
    %4291 = vmatpush.msra.mxu0 0.0
    %4292 = vmatpush.msra.mxu0 0.0
    %4293 = vmatpush.msra.mxu0 0.0
    %4294 = vmatpush.msra.mxu0 0.0
    %4295 = vmatpush.msra.mxu0 0.0
    %4296 = vmatpush.msra.mxu0 0.0
    %4297 = vmatpush.msra.mxu0 0.0
    %4298 = vmatpush.msra.mxu0 0.0
    %4299 = vmatpush.msra.mxu0 0.0
    %4300 = vmatpush.msra.mxu0 %v4196
    %4301 = vmatmul.f32.gmra.mxu0 %v4203
    %v4302 = vpop.f32.mrf.mxu0
    %v4303 = vadd.f32 0.0, %v4302
    %4304 = vdwg.mxu0
    %v4305 = vld [vmem:[%s4] sm:$0xff]
    %v4307 = vsel %vm453, %v4305, 0
    %4309 = vmatpush.msra.mxu0 0.0
    %4310 = vmatpush.msra.mxu0 0.0
    %4311 = vmatpush.msra.mxu0 0.0
    %4312 = vmatpush.msra.mxu0 0.0
    %4313 = vmatpush.msra.mxu0 0.0
    %4314 = vmatpush.msra.mxu0 0.0
    %4315 = vmatpush.msra.mxu0 0.0
    %4316 = vmatpush.msra.mxu0 0.0
    %4317 = vmatpush.msra.mxu0 0.0
    %4318 = vmatpush.msra.mxu0 0.0
    %4319 = vmatpush.msra.mxu0 0.0
    %4320 = vmatpush.msra.mxu0 0.0
    %4321 = vmatpush.msra.mxu0 0.0
    %4322 = vmatpush.msra.mxu0 0.0
    %4323 = vmatpush.msra.mxu0 0.0
    %4324 = vmatpush.msra.mxu0 %v4223
    %4325 = vmatmul.f32.gmra.mxu0 %v4307
    %v4326 = vpop.f32.mrf.mxu0
    %v4327 = vadd.f32 0.0, %v4326
    %4328 = vdwg.mxu0
    %4329 = vmatpush.msra.mxu0 0.0
    %4330 = vmatpush.msra.mxu0 0.0
    %4331 = vmatpush.msra.mxu0 0.0
    %4332 = vmatpush.msra.mxu0 0.0
    %4333 = vmatpush.msra.mxu0 0.0
    %4334 = vmatpush.msra.mxu0 0.0
    %4335 = vmatpush.msra.mxu0 0.0
    %4336 = vmatpush.msra.mxu0 0.0
    %4337 = vmatpush.msra.mxu0 0.0
    %4338 = vmatpush.msra.mxu0 0.0
    %4339 = vmatpush.msra.mxu0 0.0
    %4340 = vmatpush.msra.mxu0 0.0
    %4341 = vmatpush.msra.mxu0 0.0
    %4342 = vmatpush.msra.mxu0 0.0
    %4343 = vmatpush.msra.mxu0 0.0
    %4344 = vmatpush.msra.mxu0 %v4243
    %4345 = vmatmul.f32.gmra.mxu0 %v4307
    %v4346 = vpop.f32.mrf.mxu0
    %v4347 = vadd.f32 0.0, %v4346
    %4348 = vdwg.mxu0
    %4349 = vmatpush.msra.mxu0 0.0
    %4350 = vmatpush.msra.mxu0 0.0
    %4351 = vmatpush.msra.mxu0 0.0
    %4352 = vmatpush.msra.mxu0 0.0
    %4353 = vmatpush.msra.mxu0 0.0
    %4354 = vmatpush.msra.mxu0 0.0
    %4355 = vmatpush.msra.mxu0 0.0
    %4356 = vmatpush.msra.mxu0 0.0
    %4357 = vmatpush.msra.mxu0 0.0
    %4358 = vmatpush.msra.mxu0 0.0
    %4359 = vmatpush.msra.mxu0 0.0
    %4360 = vmatpush.msra.mxu0 0.0
    %4361 = vmatpush.msra.mxu0 0.0
    %4362 = vmatpush.msra.mxu0 0.0
    %4363 = vmatpush.msra.mxu0 0.0
    %4364 = vmatpush.msra.mxu0 %v4263
    %4365 = vmatmul.f32.gmra.mxu0 %v4307
    %v4366 = vpop.f32.mrf.mxu0
    %v4367 = vadd.f32 0.0, %v4366
    %4368 = vdwg.mxu0
    %4369 = vmatpush.msra.mxu0 0.0
    %4370 = vmatpush.msra.mxu0 0.0
    %4371 = vmatpush.msra.mxu0 0.0
    %4372 = vmatpush.msra.mxu0 0.0
    %4373 = vmatpush.msra.mxu0 0.0
    %4374 = vmatpush.msra.mxu0 0.0
    %4375 = vmatpush.msra.mxu0 0.0
    %4376 = vmatpush.msra.mxu0 0.0
    %4377 = vmatpush.msra.mxu0 0.0
    %4378 = vmatpush.msra.mxu0 0.0
    %4379 = vmatpush.msra.mxu0 0.0
    %4380 = vmatpush.msra.mxu0 0.0
    %4381 = vmatpush.msra.mxu0 0.0
    %4382 = vmatpush.msra.mxu0 0.0
    %4383 = vmatpush.msra.mxu0 0.0
    %4384 = vmatpush.msra.mxu0 %v4283
    %4385 = vmatmul.f32.gmra.mxu0 %v4307
    %v4386 = vpop.f32.mrf.mxu0
    %v4387 = vadd.f32 0.0, %v4386
    %4388 = vdwg.mxu0
    %4389 = vmatpush.msra.mxu0 0.0
    %4390 = vmatpush.msra.mxu0 0.0
    %4391 = vmatpush.msra.mxu0 0.0
    %4392 = vmatpush.msra.mxu0 0.0
    %4393 = vmatpush.msra.mxu0 0.0
    %4394 = vmatpush.msra.mxu0 0.0
    %4395 = vmatpush.msra.mxu0 0.0
    %4396 = vmatpush.msra.mxu0 0.0
    %4397 = vmatpush.msra.mxu0 0.0
    %4398 = vmatpush.msra.mxu0 0.0
    %4399 = vmatpush.msra.mxu0 0.0
    %4400 = vmatpush.msra.mxu0 0.0
    %4401 = vmatpush.msra.mxu0 0.0
    %4402 = vmatpush.msra.mxu0 0.0
    %4403 = vmatpush.msra.mxu0 0.0
    %4404 = vmatpush.msra.mxu0 %v4303
    %4405 = vmatmul.f32.gmra.mxu0 %v4307
    %v4406 = vpop.f32.mrf.mxu0
    %v4407 = vadd.f32 0.0, %v4406
    %4408 = vdwg.mxu0
    %v4409 = vadd.f32 %v4327, %v4347
    %v4410 = vadd.f32 %v4409, %v4367
    %v4411 = vadd.f32 %v4410, %v4387
    %v4412 = vadd.f32 %v4411, %v4407
    %4413 = vadd.xlane.f32.xlu0 %v4412
    %v4414 = vpop.xlane.xlu0 %4413
    %v4415 = vmul.f32 %v4414, 0.001953125
    %v4416 = vmul.f32 %v4223, %v4223
    %v4417 = vmul.f32 %v4243, %v4243
    %v4418 = vmul.f32 %v4263, %v4263
    %v4419 = vmul.f32 %v4283, %v4283
    %v4420 = vmul.f32 %v4303, %v4303
    %4421 = vmatpush.msra.mxu0 0.0
    %4422 = vmatpush.msra.mxu0 0.0
    %4423 = vmatpush.msra.mxu0 0.0
    %4424 = vmatpush.msra.mxu0 0.0
    %4425 = vmatpush.msra.mxu0 0.0
    %4426 = vmatpush.msra.mxu0 0.0
    %4427 = vmatpush.msra.mxu0 0.0
    %4428 = vmatpush.msra.mxu0 0.0
    %4429 = vmatpush.msra.mxu0 0.0
    %4430 = vmatpush.msra.mxu0 0.0
    %4431 = vmatpush.msra.mxu0 0.0
    %4432 = vmatpush.msra.mxu0 0.0
    %4433 = vmatpush.msra.mxu0 0.0
    %4434 = vmatpush.msra.mxu0 0.0
    %4435 = vmatpush.msra.mxu0 0.0
    %4436 = vmatpush.msra.mxu0 %v4416
    %4437 = vmatmul.f32.gmra.mxu0 %v4307
    %v4438 = vpop.f32.mrf.mxu0
    %v4439 = vadd.f32 0.0, %v4438
    %4440 = vdwg.mxu0
    %4441 = vmatpush.msra.mxu0 0.0
    %4442 = vmatpush.msra.mxu0 0.0
    %4443 = vmatpush.msra.mxu0 0.0
    %4444 = vmatpush.msra.mxu0 0.0
    %4445 = vmatpush.msra.mxu0 0.0
    %4446 = vmatpush.msra.mxu0 0.0
    %4447 = vmatpush.msra.mxu0 0.0
    %4448 = vmatpush.msra.mxu0 0.0
    %4449 = vmatpush.msra.mxu0 0.0
    %4450 = vmatpush.msra.mxu0 0.0
    %4451 = vmatpush.msra.mxu0 0.0
    %4452 = vmatpush.msra.mxu0 0.0
    %4453 = vmatpush.msra.mxu0 0.0
    %4454 = vmatpush.msra.mxu0 0.0
    %4455 = vmatpush.msra.mxu0 0.0
    %4456 = vmatpush.msra.mxu0 %v4417
    %4457 = vmatmul.f32.gmra.mxu0 %v4307
    %v4458 = vpop.f32.mrf.mxu0
    %v4459 = vadd.f32 0.0, %v4458
    %4460 = vdwg.mxu0
    %4461 = vmatpush.msra.mxu0 0.0
    %4462 = vmatpush.msra.mxu0 0.0
    %4463 = vmatpush.msra.mxu0 0.0
    %4464 = vmatpush.msra.mxu0 0.0
    %4465 = vmatpush.msra.mxu0 0.0
    %4466 = vmatpush.msra.mxu0 0.0
    %4467 = vmatpush.msra.mxu0 0.0
    %4468 = vmatpush.msra.mxu0 0.0
    %4469 = vmatpush.msra.mxu0 0.0
    %4470 = vmatpush.msra.mxu0 0.0
    %4471 = vmatpush.msra.mxu0 0.0
    %4472 = vmatpush.msra.mxu0 0.0
    %4473 = vmatpush.msra.mxu0 0.0
    %4474 = vmatpush.msra.mxu0 0.0
    %4475 = vmatpush.msra.mxu0 0.0
    %4476 = vmatpush.msra.mxu0 %v4418
    %4477 = vmatmul.f32.gmra.mxu0 %v4307
    %v4478 = vpop.f32.mrf.mxu0
    %v4479 = vadd.f32 0.0, %v4478
    %4480 = vdwg.mxu0
    %4481 = vmatpush.msra.mxu0 0.0
    %4482 = vmatpush.msra.mxu0 0.0
    %4483 = vmatpush.msra.mxu0 0.0
    %4484 = vmatpush.msra.mxu0 0.0
    %4485 = vmatpush.msra.mxu0 0.0
    %4486 = vmatpush.msra.mxu0 0.0
    %4487 = vmatpush.msra.mxu0 0.0
    %4488 = vmatpush.msra.mxu0 0.0
    %4489 = vmatpush.msra.mxu0 0.0
    %4490 = vmatpush.msra.mxu0 0.0
    %4491 = vmatpush.msra.mxu0 0.0
    %4492 = vmatpush.msra.mxu0 0.0
    %4493 = vmatpush.msra.mxu0 0.0
    %4494 = vmatpush.msra.mxu0 0.0
    %4495 = vmatpush.msra.mxu0 0.0
    %4496 = vmatpush.msra.mxu0 %v4419
    %4497 = vmatmul.f32.gmra.mxu0 %v4307
    %v4498 = vpop.f32.mrf.mxu0
    %v4499 = vadd.f32 0.0, %v4498
    %4500 = vdwg.mxu0
    %4501 = vmatpush.msra.mxu0 0.0
    %4502 = vmatpush.msra.mxu0 0.0
    %4503 = vmatpush.msra.mxu0 0.0
    %4504 = vmatpush.msra.mxu0 0.0
    %4505 = vmatpush.msra.mxu0 0.0
    %4506 = vmatpush.msra.mxu0 0.0
    %4507 = vmatpush.msra.mxu0 0.0
    %4508 = vmatpush.msra.mxu0 0.0
    %4509 = vmatpush.msra.mxu0 0.0
    %4510 = vmatpush.msra.mxu0 0.0
    %4511 = vmatpush.msra.mxu0 0.0
    %4512 = vmatpush.msra.mxu0 0.0
    %4513 = vmatpush.msra.mxu0 0.0
    %4514 = vmatpush.msra.mxu0 0.0
    %4515 = vmatpush.msra.mxu0 0.0
    %4516 = vmatpush.msra.mxu0 %v4420
    %4517 = vmatmul.f32.gmra.mxu0 %v4307
    %v4518 = vpop.f32.mrf.mxu0
    %v4519 = vadd.f32 0.0, %v4518
    %4520 = vdwg.mxu0
    %v4521 = vadd.f32 %v4439, %v4459
    %v4522 = vadd.f32 %v4521, %v4479
    %v4523 = vadd.f32 %v4522, %v4499
    %v4524 = vadd.f32 %v4523, %v4519
    %4525 = vadd.xlane.f32.xlu0 %v4524
    %v4526 = vpop.xlane.xlu0 %4525
    %v4527 = vmul.f32 %v4526, 0.001953125
    %v4528 = vmul.f32 %v4415, %v4415
    %v4529 = vsub.f32 %v4527, %v4528
    %v4530 = vmax.f32 %v4529, 0.0
    %v4531 = vadd.f32 %v4530, 1e-05
    %v4532 = vrsqrt.pop %v4531
    %v4533 = vmul.f32 %v4532, %v4531
    %v4534 = vmul.f32 %v4533, %v4532
    %v4535 = vmul.f32 0.5, %v4534
    %v4536 = vsub.f32 1.5, %v4535
    %v4537 = vmul.f32 %v4532, %v4536
    %vm4538 = vweird.f32 %v4531
    %vm4539 = vweird.f32 %v4532
    %vm4540 = vmor %vm4538, %vm4539
    %v4541 = vsel %vm4540, %v4532, %v4537
    %v4542 = vsub.f32 %v4223, %v4415
    %v4543 = vsub.f32 %v4243, %v4415
    %v4544 = vsub.f32 %v4263, %v4415
    %v4545 = vsub.f32 %v4283, %v4415
    %v4546 = vsub.f32 %v4303, %v4415
    %v4547 = vmul.f32 %v4542, %v4541
    %v4548 = vmul.f32 %v4543, %v4541
    %v4549 = vmul.f32 %v4544, %v4541
    %v4550 = vmul.f32 %v4545, %v4541
    %v4551 = vmul.f32 %v4546, %v4541
    %v4552 = vmax.f32 %v4547, 0.0
    %v4553 = vmax.f32 %v4548, 0.0
    %v4554 = vmax.f32 %v4549, 0.0
    %v4555 = vmax.f32 %v4550, 0.0
    %v4556 = vmax.f32 %v4551, 0.0
    %v4557 = vmul.f32 %v4552, %v4136
    %v4558 = vmul.f32 %v4553, %v4137
    %v4559 = vmul.f32 %v4554, %v4138
    %v4560 = vmul.f32 %v4555, %v4139
    %v4561 = vmul.f32 %v4556, %v4140
    %4562 = vst [vmem:[#allocation2 + $0x8] sm:$0xff] %v4557
    %4563 = vst [vmem:[#allocation2 + $0x10] sm:$0xff] %v4558
    %4564 = vst [vmem:[#allocation2 + $0x18] sm:$0xff] %v4559
    %4565 = vst [vmem:[#allocation2 + $0x20] sm:$0xff] %v4560
    %4566 = vst [vmem:[#allocation2 + $0x28] sm:$0xff] %v4561
    %v4567 = vld [vmem:[%s11] sm:$0xff]
    %v4568 = vld [vmem:[#allocation2] sm:$0xff]
    %v4569 = vld [vmem:[#allocation2 + $0x8] sm:$0xff]
    %v4570 = vld [vmem:[#allocation2 + $0x10] sm:$0xff]
    %v4571 = vld [vmem:[#allocation2 + $0x18] sm:$0xff]
    %v4572 = vld [vmem:[#allocation2 + $0x20] sm:$0xff]
    %v4573 = vld [vmem:[#allocation2 + $0x28] sm:$0xff]
    %4575 = vset.pattern.permute.xlu0 0
    %4576 = vperm.xlu0 %4575, %v4567
    %v4577 = vpop.permute.xlu0 %4576
    %v4579 = vmul.f32 %v4577, %v4568
    %v4580 = vmul.f32 %v4577, %v4569
    %v4581 = vmul.f32 %v4577, %v4570
    %v4582 = vmul.f32 %v4577, %v4571
    %v4583 = vmul.f32 %v4577, %v4572
    %v4584 = vmul.f32 %v4577, %v4573
    %4585 = vset.pattern.permute.xlu0 1
    %4586 = vperm.xlu0 %4585, %v4567
    %v4587 = vpop.permute.xlu0 %4586
    %v4589 = vmul.f32 %v4587, %v4568
    %v4590 = vmul.f32 %v4587, %v4569
    %v4591 = vmul.f32 %v4587, %v4570
    %v4592 = vmul.f32 %v4587, %v4571
    %v4593 = vmul.f32 %v4587, %v4572
    %v4594 = vmul.f32 %v4587, %v4573
    %4601 = vrot.lane.b32.xlu0 %v4589, 127
    %v4602 = vpop.permute.xlu0 %4601
    %4603 = vrot.lane.b32.xlu0 %v4590, 127
    %v4604 = vpop.permute.xlu0 %4603
    %4605 = vrot.lane.b32.xlu0 %v4591, 127
    %v4606 = vpop.permute.xlu0 %4605
    %4607 = vrot.lane.b32.xlu0 %v4592, 127
    %v4608 = vpop.permute.xlu0 %4607
    %4609 = vrot.lane.b32.xlu0 %v4593, 127
    %v4610 = vpop.permute.xlu0 %4609
    %4611 = vrot.lane.b32.xlu0 %v4594, 127
    %v4612 = vpop.permute.xlu0 %4611
    %v4613 = vsel %vm150, %v4602, %v4604
    %v4614 = vsel %vm150, %v4604, %v4606
    %v4615 = vsel %vm150, %v4606, %v4608
    %v4616 = vsel %vm150, %v4608, %v4610
    %v4617 = vsel %vm150, %v4610, %v4612
    %v4624 = vadd.f32 %v4579, %v4613
    %v4625 = vadd.f32 %v4580, %v4614
    %v4626 = vadd.f32 %v4581, %v4615
    %v4627 = vadd.f32 %v4582, %v4616
    %v4628 = vadd.f32 %v4583, %v4617
    %v4629 = vadd.f32 %v4584, %v4612
    %4630 = vset.pattern.permute.xlu0 2
    %4631 = vperm.xlu0 %4630, %v4567
    %v4632 = vpop.permute.xlu0 %4631
    %v4634 = vmul.f32 %v4632, %v4568
    %v4635 = vmul.f32 %v4632, %v4569
    %v4636 = vmul.f32 %v4632, %v4570
    %v4637 = vmul.f32 %v4632, %v4571
    %v4638 = vmul.f32 %v4632, %v4572
    %v4639 = vmul.f32 %v4632, %v4573
    %4646 = vrot.lane.b32.xlu0 %v4634, 126
    %v4647 = vpop.permute.xlu0 %4646
    %4648 = vrot.lane.b32.xlu0 %v4635, 126
    %v4649 = vpop.permute.xlu0 %4648
    %4650 = vrot.lane.b32.xlu0 %v4636, 126
    %v4651 = vpop.permute.xlu0 %4650
    %4652 = vrot.lane.b32.xlu0 %v4637, 126
    %v4653 = vpop.permute.xlu0 %4652
    %4654 = vrot.lane.b32.xlu0 %v4638, 126
    %v4655 = vpop.permute.xlu0 %4654
    %4656 = vrot.lane.b32.xlu0 %v4639, 126
    %v4657 = vpop.permute.xlu0 %4656
    %v4658 = vsel %vm180, %v4647, %v4649
    %v4659 = vsel %vm180, %v4649, %v4651
    %v4660 = vsel %vm180, %v4651, %v4653
    %v4661 = vsel %vm180, %v4653, %v4655
    %v4662 = vsel %vm180, %v4655, %v4657
    %v4669 = vadd.f32 %v4624, %v4658
    %v4670 = vadd.f32 %v4625, %v4659
    %v4671 = vadd.f32 %v4626, %v4660
    %v4672 = vadd.f32 %v4627, %v4661
    %v4673 = vadd.f32 %v4628, %v4662
    %v4674 = vadd.f32 %v4629, %v4657
    %4675 = vset.pattern.permute.xlu0 3
    %4676 = vperm.xlu0 %4675, %v4567
    %v4677 = vpop.permute.xlu0 %4676
    %v4679 = vmul.f32 %v4677, %v4568
    %v4680 = vmul.f32 %v4677, %v4569
    %v4681 = vmul.f32 %v4677, %v4570
    %v4682 = vmul.f32 %v4677, %v4571
    %v4683 = vmul.f32 %v4677, %v4572
    %v4684 = vmul.f32 %v4677, %v4573
    %4691 = vrot.lane.b32.xlu0 %v4679, 125
    %v4692 = vpop.permute.xlu0 %4691
    %4693 = vrot.lane.b32.xlu0 %v4680, 125
    %v4694 = vpop.permute.xlu0 %4693
    %4695 = vrot.lane.b32.xlu0 %v4681, 125
    %v4696 = vpop.permute.xlu0 %4695
    %4697 = vrot.lane.b32.xlu0 %v4682, 125
    %v4698 = vpop.permute.xlu0 %4697
    %4699 = vrot.lane.b32.xlu0 %v4683, 125
    %v4700 = vpop.permute.xlu0 %4699
    %4701 = vrot.lane.b32.xlu0 %v4684, 125
    %v4702 = vpop.permute.xlu0 %4701
    %v4703 = vsel %vm3157, %v4692, %v4694
    %v4704 = vsel %vm3157, %v4694, %v4696
    %v4705 = vsel %vm3157, %v4696, %v4698
    %v4706 = vsel %vm3157, %v4698, %v4700
    %v4707 = vsel %vm3157, %v4700, %v4702
    %v4714 = vadd.f32 %v4669, %v4703
    %v4715 = vadd.f32 %v4670, %v4704
    %v4716 = vadd.f32 %v4671, %v4705
    %v4717 = vadd.f32 %v4672, %v4706
    %v4718 = vadd.f32 %v4673, %v4707
    %v4719 = vadd.f32 %v4674, %v4702
    %4720 = vset.pattern.permute.xlu0 4
    %4721 = vperm.xlu0 %4720, %v4567
    %v4722 = vpop.permute.xlu0 %4721
    %v4724 = vmul.f32 %v4722, %v4568
    %v4725 = vmul.f32 %v4722, %v4569
    %v4726 = vmul.f32 %v4722, %v4570
    %v4727 = vmul.f32 %v4722, %v4571
    %v4728 = vmul.f32 %v4722, %v4572
    %v4729 = vmul.f32 %v4722, %v4573
    %4736 = vrot.lane.b32.xlu0 %v4724, 124
    %v4737 = vpop.permute.xlu0 %4736
    %4738 = vrot.lane.b32.xlu0 %v4725, 124
    %v4739 = vpop.permute.xlu0 %4738
    %4740 = vrot.lane.b32.xlu0 %v4726, 124
    %v4741 = vpop.permute.xlu0 %4740
    %4742 = vrot.lane.b32.xlu0 %v4727, 124
    %v4743 = vpop.permute.xlu0 %4742
    %4744 = vrot.lane.b32.xlu0 %v4728, 124
    %v4745 = vpop.permute.xlu0 %4744
    %4746 = vrot.lane.b32.xlu0 %v4729, 124
    %v4747 = vpop.permute.xlu0 %4746
    %v4748 = vsel %vm3203, %v4737, %v4739
    %v4749 = vsel %vm3203, %v4739, %v4741
    %v4750 = vsel %vm3203, %v4741, %v4743
    %v4751 = vsel %vm3203, %v4743, %v4745
    %v4752 = vsel %vm3203, %v4745, %v4747
    %v4759 = vadd.f32 %v4714, %v4748
    %v4760 = vadd.f32 %v4715, %v4749
    %v4761 = vadd.f32 %v4716, %v4750
    %v4762 = vadd.f32 %v4717, %v4751
    %v4763 = vadd.f32 %v4718, %v4752
    %v4764 = vadd.f32 %v4719, %v4747
    %4765 = vset.pattern.permute.xlu0 5
    %4766 = vperm.xlu0 %4765, %v4567
    %v4767 = vpop.permute.xlu0 %4766
    %v4769 = vmul.f32 %v4767, %v4568
    %v4770 = vmul.f32 %v4767, %v4569
    %v4771 = vmul.f32 %v4767, %v4570
    %v4772 = vmul.f32 %v4767, %v4571
    %v4773 = vmul.f32 %v4767, %v4572
    %v4774 = vmul.f32 %v4767, %v4573
    %4781 = vrot.lane.b32.xlu0 %v4769, 104
    %v4782 = vpop.permute.xlu0 %4781
    %4783 = vrot.lane.b32.xlu0 %v4770, 104
    %v4784 = vpop.permute.xlu0 %4783
    %4785 = vrot.lane.b32.xlu0 %v4771, 104
    %v4786 = vpop.permute.xlu0 %4785
    %4787 = vrot.lane.b32.xlu0 %v4772, 104
    %v4788 = vpop.permute.xlu0 %4787
    %4789 = vrot.lane.b32.xlu0 %v4773, 104
    %v4790 = vpop.permute.xlu0 %4789
    %4791 = vrot.lane.b32.xlu0 %v4774, 104
    %v4792 = vpop.permute.xlu0 %4791
    %v4793 = vsel %vm210, %v4782, %v4784
    %v4794 = vsel %vm210, %v4784, %v4786
    %v4795 = vsel %vm210, %v4786, %v4788
    %v4796 = vsel %vm210, %v4788, %v4790
    %v4797 = vsel %vm210, %v4790, %v4792
    %v4804 = vadd.f32 %v4759, %v4793
    %v4805 = vadd.f32 %v4760, %v4794
    %v4806 = vadd.f32 %v4761, %v4795
    %v4807 = vadd.f32 %v4762, %v4796
    %v4808 = vadd.f32 %v4763, %v4797
    %v4809 = vadd.f32 %v4764, %v4792
    %4810 = vset.pattern.permute.xlu0 6
    %4811 = vperm.xlu0 %4810, %v4567
    %v4812 = vpop.permute.xlu0 %4811
    %v4814 = vmul.f32 %v4812, %v4568
    %v4815 = vmul.f32 %v4812, %v4569
    %v4816 = vmul.f32 %v4812, %v4570
    %v4817 = vmul.f32 %v4812, %v4571
    %v4818 = vmul.f32 %v4812, %v4572
    %v4819 = vmul.f32 %v4812, %v4573
    %4826 = vrot.lane.b32.xlu0 %v4814, 103
    %v4827 = vpop.permute.xlu0 %4826
    %4828 = vrot.lane.b32.xlu0 %v4815, 103
    %v4829 = vpop.permute.xlu0 %4828
    %4830 = vrot.lane.b32.xlu0 %v4816, 103
    %v4831 = vpop.permute.xlu0 %4830
    %4832 = vrot.lane.b32.xlu0 %v4817, 103
    %v4833 = vpop.permute.xlu0 %4832
    %4834 = vrot.lane.b32.xlu0 %v4818, 103
    %v4835 = vpop.permute.xlu0 %4834
    %4836 = vrot.lane.b32.xlu0 %v4819, 103
    %v4837 = vpop.permute.xlu0 %4836
    %v4838 = vsel %vm238, %v4827, %v4829
    %v4839 = vsel %vm238, %v4829, %v4831
    %v4840 = vsel %vm238, %v4831, %v4833
    %v4841 = vsel %vm238, %v4833, %v4835
    %v4842 = vsel %vm238, %v4835, %v4837
    %v4849 = vadd.f32 %v4804, %v4838
    %v4850 = vadd.f32 %v4805, %v4839
    %v4851 = vadd.f32 %v4806, %v4840
    %v4852 = vadd.f32 %v4807, %v4841
    %v4853 = vadd.f32 %v4808, %v4842
    %v4854 = vadd.f32 %v4809, %v4837
    %4855 = vset.pattern.permute.xlu0 7
    %4856 = vperm.xlu0 %4855, %v4567
    %v4857 = vpop.permute.xlu0 %4856
    %v4859 = vmul.f32 %v4857, %v4568
    %v4860 = vmul.f32 %v4857, %v4569
    %v4861 = vmul.f32 %v4857, %v4570
    %v4862 = vmul.f32 %v4857, %v4571
    %v4863 = vmul.f32 %v4857, %v4572
    %v4864 = vmul.f32 %v4857, %v4573
    %4871 = vrot.lane.b32.xlu0 %v4859, 102
    %v4872 = vpop.permute.xlu0 %4871
    %4873 = vrot.lane.b32.xlu0 %v4860, 102
    %v4874 = vpop.permute.xlu0 %4873
    %4875 = vrot.lane.b32.xlu0 %v4861, 102
    %v4876 = vpop.permute.xlu0 %4875
    %4877 = vrot.lane.b32.xlu0 %v4862, 102
    %v4878 = vpop.permute.xlu0 %4877
    %4879 = vrot.lane.b32.xlu0 %v4863, 102
    %v4880 = vpop.permute.xlu0 %4879
    %4881 = vrot.lane.b32.xlu0 %v4864, 102
    %v4882 = vpop.permute.xlu0 %4881
    %v4883 = vsel %vm279, %v4872, %v4874
    %v4884 = vsel %vm279, %v4874, %v4876
    %v4885 = vsel %vm279, %v4876, %v4878
    %v4886 = vsel %vm279, %v4878, %v4880
    %v4887 = vsel %vm279, %v4880, %v4882
    %v4894 = vadd.f32 %v4849, %v4883
    %v4895 = vadd.f32 %v4850, %v4884
    %v4896 = vadd.f32 %v4851, %v4885
    %v4897 = vadd.f32 %v4852, %v4886
    %v4898 = vadd.f32 %v4853, %v4887
    %v4899 = vadd.f32 %v4854, %v4882
    %4900 = vset.pattern.permute.xlu0 8
    %4901 = vperm.xlu0 %4900, %v4567
    %v4902 = vpop.permute.xlu0 %4901
    %v4904 = vmul.f32 %v4902, %v4568
    %v4905 = vmul.f32 %v4902, %v4569
    %v4906 = vmul.f32 %v4902, %v4570
    %v4907 = vmul.f32 %v4902, %v4571
    %v4908 = vmul.f32 %v4902, %v4572
    %v4909 = vmul.f32 %v4902, %v4573
    %4916 = vrot.lane.b32.xlu0 %v4904, 101
    %v4917 = vpop.permute.xlu0 %4916
    %4918 = vrot.lane.b32.xlu0 %v4905, 101
    %v4919 = vpop.permute.xlu0 %4918
    %4920 = vrot.lane.b32.xlu0 %v4906, 101
    %v4921 = vpop.permute.xlu0 %4920
    %4922 = vrot.lane.b32.xlu0 %v4907, 101
    %v4923 = vpop.permute.xlu0 %4922
    %4924 = vrot.lane.b32.xlu0 %v4908, 101
    %v4925 = vpop.permute.xlu0 %4924
    %4926 = vrot.lane.b32.xlu0 %v4909, 101
    %v4927 = vpop.permute.xlu0 %4926
    %v4928 = vsel %vm3384, %v4917, %v4919
    %v4929 = vsel %vm3384, %v4919, %v4921
    %v4930 = vsel %vm3384, %v4921, %v4923
    %v4931 = vsel %vm3384, %v4923, %v4925
    %v4932 = vsel %vm3384, %v4925, %v4927
    %v4939 = vadd.f32 %v4894, %v4928
    %v4940 = vadd.f32 %v4895, %v4929
    %v4941 = vadd.f32 %v4896, %v4930
    %v4942 = vadd.f32 %v4897, %v4931
    %v4943 = vadd.f32 %v4898, %v4932
    %v4944 = vadd.f32 %v4899, %v4927
    %4945 = vset.pattern.permute.xlu0 9
    %4946 = vperm.xlu0 %4945, %v4567
    %v4947 = vpop.permute.xlu0 %4946
    %v4949 = vmul.f32 %v4947, %v4568
    %v4950 = vmul.f32 %v4947, %v4569
    %v4951 = vmul.f32 %v4947, %v4570
    %v4952 = vmul.f32 %v4947, %v4571
    %v4953 = vmul.f32 %v4947, %v4572
    %v4954 = vmul.f32 %v4947, %v4573
    %4961 = vrot.lane.b32.xlu0 %v4949, 100
    %v4962 = vpop.permute.xlu0 %4961
    %4963 = vrot.lane.b32.xlu0 %v4950, 100
    %v4964 = vpop.permute.xlu0 %4963
    %4965 = vrot.lane.b32.xlu0 %v4951, 100
    %v4966 = vpop.permute.xlu0 %4965
    %4967 = vrot.lane.b32.xlu0 %v4952, 100
    %v4968 = vpop.permute.xlu0 %4967
    %4969 = vrot.lane.b32.xlu0 %v4953, 100
    %v4970 = vpop.permute.xlu0 %4969
    %4971 = vrot.lane.b32.xlu0 %v4954, 100
    %v4972 = vpop.permute.xlu0 %4971
    %v4973 = vsel %vm3430, %v4962, %v4964
    %v4974 = vsel %vm3430, %v4964, %v4966
    %v4975 = vsel %vm3430, %v4966, %v4968
    %v4976 = vsel %vm3430, %v4968, %v4970
    %v4977 = vsel %vm3430, %v4970, %v4972
    %v4984 = vadd.f32 %v4939, %v4973
    %v4985 = vadd.f32 %v4940, %v4974
    %v4986 = vadd.f32 %v4941, %v4975
    %v4987 = vadd.f32 %v4942, %v4976
    %v4988 = vadd.f32 %v4943, %v4977
    %v4989 = vadd.f32 %v4944, %v4972
    %4990 = vset.pattern.permute.xlu0 10
    %4991 = vperm.xlu0 %4990, %v4567
    %v4992 = vpop.permute.xlu0 %4991
    %v4994 = vmul.f32 %v4992, %v4568
    %v4995 = vmul.f32 %v4992, %v4569
    %v4996 = vmul.f32 %v4992, %v4570
    %v4997 = vmul.f32 %v4992, %v4571
    %v4998 = vmul.f32 %v4992, %v4572
    %v4999 = vmul.f32 %v4992, %v4573
    %5006 = vrot.lane.b32.xlu0 %v4994, 80
    %v5007 = vpop.permute.xlu0 %5006
    %5008 = vrot.lane.b32.xlu0 %v4995, 80
    %v5009 = vpop.permute.xlu0 %5008
    %5010 = vrot.lane.b32.xlu0 %v4996, 80
    %v5011 = vpop.permute.xlu0 %5010
    %5012 = vrot.lane.b32.xlu0 %v4997, 80
    %v5013 = vpop.permute.xlu0 %5012
    %5014 = vrot.lane.b32.xlu0 %v4998, 80
    %v5015 = vpop.permute.xlu0 %5014
    %5016 = vrot.lane.b32.xlu0 %v4999, 80
    %v5017 = vpop.permute.xlu0 %5016
    %v5018 = vsel %vm309, %v5007, %v5009
    %v5019 = vsel %vm309, %v5009, %v5011
    %v5020 = vsel %vm309, %v5011, %v5013
    %v5021 = vsel %vm309, %v5013, %v5015
    %v5022 = vsel %vm309, %v5015, %v5017
    %v5029 = vadd.f32 %v4984, %v5018
    %v5030 = vadd.f32 %v4985, %v5019
    %v5031 = vadd.f32 %v4986, %v5020
    %v5032 = vadd.f32 %v4987, %v5021
    %v5033 = vadd.f32 %v4988, %v5022
    %v5034 = vadd.f32 %v4989, %v5017
    %5035 = vset.pattern.permute.xlu0 11
    %5036 = vperm.xlu0 %5035, %v4567
    %v5037 = vpop.permute.xlu0 %5036
    %v5039 = vmul.f32 %v5037, %v4568
    %v5040 = vmul.f32 %v5037, %v4569
    %v5041 = vmul.f32 %v5037, %v4570
    %v5042 = vmul.f32 %v5037, %v4571
    %v5043 = vmul.f32 %v5037, %v4572
    %v5044 = vmul.f32 %v5037, %v4573
    %5051 = vrot.lane.b32.xlu0 %v5039, 79
    %v5052 = vpop.permute.xlu0 %5051
    %5053 = vrot.lane.b32.xlu0 %v5040, 79
    %v5054 = vpop.permute.xlu0 %5053
    %5055 = vrot.lane.b32.xlu0 %v5041, 79
    %v5056 = vpop.permute.xlu0 %5055
    %5057 = vrot.lane.b32.xlu0 %v5042, 79
    %v5058 = vpop.permute.xlu0 %5057
    %5059 = vrot.lane.b32.xlu0 %v5043, 79
    %v5060 = vpop.permute.xlu0 %5059
    %5061 = vrot.lane.b32.xlu0 %v5044, 79
    %v5062 = vpop.permute.xlu0 %5061
    %v5063 = vsel %vm339, %v5052, %v5054
    %v5064 = vsel %vm339, %v5054, %v5056
    %v5065 = vsel %vm339, %v5056, %v5058
    %v5066 = vsel %vm339, %v5058, %v5060
    %v5067 = vsel %vm339, %v5060, %v5062
    %v5074 = vadd.f32 %v5029, %v5063
    %v5075 = vadd.f32 %v5030, %v5064
    %v5076 = vadd.f32 %v5031, %v5065
    %v5077 = vadd.f32 %v5032, %v5066
    %v5078 = vadd.f32 %v5033, %v5067
    %v5079 = vadd.f32 %v5034, %v5062
    %5080 = vset.pattern.permute.xlu0 12
    %5081 = vperm.xlu0 %5080, %v4567
    %v5082 = vpop.permute.xlu0 %5081
    %v5084 = vmul.f32 %v5082, %v4569
    %v5085 = vmul.f32 %v5082, %v4570
    %v5086 = vmul.f32 %v5082, %v4571
    %v5087 = vmul.f32 %v5082, %v4572
    %v5088 = vmul.f32 %v5082, %v4573
    %5094 = vrot.lane.b32.xlu0 %v5084, 78
    %v5095 = vpop.permute.xlu0 %5094
    %5096 = vrot.lane.b32.xlu0 %v5085, 78
    %v5097 = vpop.permute.xlu0 %5096
    %5098 = vrot.lane.b32.xlu0 %v5086, 78
    %v5099 = vpop.permute.xlu0 %5098
    %5100 = vrot.lane.b32.xlu0 %v5087, 78
    %v5101 = vpop.permute.xlu0 %5100
    %5102 = vrot.lane.b32.xlu0 %v5088, 78
    %v5103 = vpop.permute.xlu0 %5102
    %v5104 = vsel %vm369, %v5095, %v5097
    %v5105 = vsel %vm369, %v5097, %v5099
    %v5106 = vsel %vm369, %v5099, %v5101
    %v5107 = vsel %vm369, %v5101, %v5103
    %v5114 = vadd.f32 %v5074, %v5095
    %v5115 = vadd.f32 %v5075, %v5104
    %v5116 = vadd.f32 %v5076, %v5105
    %v5117 = vadd.f32 %v5077, %v5106
    %v5118 = vadd.f32 %v5078, %v5107
    %v5119 = vadd.f32 %v5079, %v5103
    %v5120 = vld [vmem:[#allocation2 + $0x8] sm:$0xff]
    %v5121 = vld [vmem:[#allocation2 + $0x10] sm:$0xff]
    %v5122 = vld [vmem:[#allocation2 + $0x18] sm:$0xff]
    %v5123 = vld [vmem:[#allocation2 + $0x20] sm:$0xff]
    %v5124 = vld [vmem:[#allocation2 + $0x28] sm:$0xff]
    %v5125 = vld [vmem:[#allocation2 + $0x30] sm:$0xff]
    %5126 = vset.pattern.permute.xlu0 13
    %5127 = vperm.xlu0 %5126, %v4567
    %v5128 = vpop.permute.xlu0 %5127
    %v5130 = vmul.f32 %v5128, %v5120
    %v5131 = vmul.f32 %v5128, %v5121
    %v5132 = vmul.f32 %v5128, %v5122
    %v5133 = vmul.f32 %v5128, %v5123
    %v5134 = vmul.f32 %v5128, %v5124
    %v5135 = vmul.f32 %v5128, %v5125
    %5142 = vrot.lane.b32.xlu0 %v5130, 77
    %v5143 = vpop.permute.xlu0 %5142
    %5144 = vrot.lane.b32.xlu0 %v5131, 77
    %v5145 = vpop.permute.xlu0 %5144
    %5146 = vrot.lane.b32.xlu0 %v5132, 77
    %v5147 = vpop.permute.xlu0 %5146
    %5148 = vrot.lane.b32.xlu0 %v5133, 77
    %v5149 = vpop.permute.xlu0 %5148
    %5150 = vrot.lane.b32.xlu0 %v5134, 77
    %v5151 = vpop.permute.xlu0 %5150
    %5152 = vrot.lane.b32.xlu0 %v5135, 77
    %v5153 = vpop.permute.xlu0 %5152
    %v5154 = vsel %vm3612, %v5143, %v5145
    %v5155 = vsel %vm3612, %v5145, %v5147
    %v5156 = vsel %vm3612, %v5147, %v5149
    %v5157 = vsel %vm3612, %v5149, %v5151
    %v5158 = vsel %vm3612, %v5151, %v5153
    %v5165 = vadd.f32 %v5114, %v5143
    %v5166 = vadd.f32 %v5115, %v5154
    %v5167 = vadd.f32 %v5116, %v5155
    %v5168 = vadd.f32 %v5117, %v5156
    %v5169 = vadd.f32 %v5118, %v5157
    %v5170 = vadd.f32 %v5119, %v5158
    %5171 = vset.pattern.permute.xlu0 14
    %5172 = vperm.xlu0 %5171, %v4567
    %v5173 = vpop.permute.xlu0 %5172
    %v5175 = vmul.f32 %v5173, %v5120
    %v5176 = vmul.f32 %v5173, %v5121
    %v5177 = vmul.f32 %v5173, %v5122
    %v5178 = vmul.f32 %v5173, %v5123
    %v5179 = vmul.f32 %v5173, %v5124
    %v5180 = vmul.f32 %v5173, %v5125
    %5187 = vrot.lane.b32.xlu0 %v5175, 76
    %v5188 = vpop.permute.xlu0 %5187
    %5189 = vrot.lane.b32.xlu0 %v5176, 76
    %v5190 = vpop.permute.xlu0 %5189
    %5191 = vrot.lane.b32.xlu0 %v5177, 76
    %v5192 = vpop.permute.xlu0 %5191
    %5193 = vrot.lane.b32.xlu0 %v5178, 76
    %v5194 = vpop.permute.xlu0 %5193
    %5195 = vrot.lane.b32.xlu0 %v5179, 76
    %v5196 = vpop.permute.xlu0 %5195
    %5197 = vrot.lane.b32.xlu0 %v5180, 76
    %v5198 = vpop.permute.xlu0 %5197
    %v5199 = vsel %vm3658, %v5188, %v5190
    %v5200 = vsel %vm3658, %v5190, %v5192
    %v5201 = vsel %vm3658, %v5192, %v5194
    %v5202 = vsel %vm3658, %v5194, %v5196
    %v5203 = vsel %vm3658, %v5196, %v5198
    %v5210 = vadd.f32 %v5165, %v5188
    %v5211 = vadd.f32 %v5166, %v5199
    %v5212 = vadd.f32 %v5167, %v5200
    %v5213 = vadd.f32 %v5168, %v5201
    %v5214 = vadd.f32 %v5169, %v5202
    %v5215 = vadd.f32 %v5170, %v5203
    %5216 = vset.pattern.permute.xlu0 15
    %5217 = vperm.xlu0 %5216, %v4567
    %v5218 = vpop.permute.xlu0 %5217
    %v5220 = vmul.f32 %v5218, %v5120
    %v5221 = vmul.f32 %v5218, %v5121
    %v5222 = vmul.f32 %v5218, %v5122
    %v5223 = vmul.f32 %v5218, %v5123
    %v5224 = vmul.f32 %v5218, %v5124
    %v5225 = vmul.f32 %v5218, %v5125
    %5232 = vrot.lane.b32.xlu0 %v5220, 56
    %v5233 = vpop.permute.xlu0 %5232
    %5234 = vrot.lane.b32.xlu0 %v5221, 56
    %v5235 = vpop.permute.xlu0 %5234
    %5236 = vrot.lane.b32.xlu0 %v5222, 56
    %v5237 = vpop.permute.xlu0 %5236
    %5238 = vrot.lane.b32.xlu0 %v5223, 56
    %v5239 = vpop.permute.xlu0 %5238
    %5240 = vrot.lane.b32.xlu0 %v5224, 56
    %v5241 = vpop.permute.xlu0 %5240
    %5242 = vrot.lane.b32.xlu0 %v5225, 56
    %v5243 = vpop.permute.xlu0 %5242
    %v5244 = vsel %vm3704, %v5233, %v5235
    %v5245 = vsel %vm3704, %v5235, %v5237
    %v5246 = vsel %vm3704, %v5237, %v5239
    %v5247 = vsel %vm3704, %v5239, %v5241
    %v5248 = vsel %vm3704, %v5241, %v5243
    %v5255 = vadd.f32 %v5210, %v5233
    %v5256 = vadd.f32 %v5211, %v5244
    %v5257 = vadd.f32 %v5212, %v5245
    %v5258 = vadd.f32 %v5213, %v5246
    %v5259 = vadd.f32 %v5214, %v5247
    %v5260 = vadd.f32 %v5215, %v5248
    %5261 = vset.pattern.permute.xlu0 16
    %5262 = vperm.xlu0 %5261, %v4567
    %v5263 = vpop.permute.xlu0 %5262
    %v5265 = vmul.f32 %v5263, %v5120
    %v5266 = vmul.f32 %v5263, %v5121
    %v5267 = vmul.f32 %v5263, %v5122
    %v5268 = vmul.f32 %v5263, %v5123
    %v5269 = vmul.f32 %v5263, %v5124
    %v5270 = vmul.f32 %v5263, %v5125
    %5277 = vrot.lane.b32.xlu0 %v5265, 55
    %v5278 = vpop.permute.xlu0 %5277
    %5279 = vrot.lane.b32.xlu0 %v5266, 55
    %v5280 = vpop.permute.xlu0 %5279
    %5281 = vrot.lane.b32.xlu0 %v5267, 55
    %v5282 = vpop.permute.xlu0 %5281
    %5283 = vrot.lane.b32.xlu0 %v5268, 55
    %v5284 = vpop.permute.xlu0 %5283
    %5285 = vrot.lane.b32.xlu0 %v5269, 55
    %v5286 = vpop.permute.xlu0 %5285
    %5287 = vrot.lane.b32.xlu0 %v5270, 55
    %v5288 = vpop.permute.xlu0 %5287
    %v5289 = vsel %vm3750, %v5278, %v5280
    %v5290 = vsel %vm3750, %v5280, %v5282
    %v5291 = vsel %vm3750, %v5282, %v5284
    %v5292 = vsel %vm3750, %v5284, %v5286
    %v5293 = vsel %vm3750, %v5286, %v5288
    %v5300 = vadd.f32 %v5255, %v5278
    %v5301 = vadd.f32 %v5256, %v5289
    %v5302 = vadd.f32 %v5257, %v5290
    %v5303 = vadd.f32 %v5258, %v5291
    %v5304 = vadd.f32 %v5259, %v5292
    %v5305 = vadd.f32 %v5260, %v5293
    %5306 = vset.pattern.permute.xlu0 17
    %5307 = vperm.xlu0 %5306, %v4567
    %v5308 = vpop.permute.xlu0 %5307
    %v5310 = vmul.f32 %v5308, %v5120
    %v5311 = vmul.f32 %v5308, %v5121
    %v5312 = vmul.f32 %v5308, %v5122
    %v5313 = vmul.f32 %v5308, %v5123
    %v5314 = vmul.f32 %v5308, %v5124
    %v5315 = vmul.f32 %v5308, %v5125
    %5322 = vrot.lane.b32.xlu0 %v5310, 54
    %v5323 = vpop.permute.xlu0 %5322
    %5324 = vrot.lane.b32.xlu0 %v5311, 54
    %v5325 = vpop.permute.xlu0 %5324
    %5326 = vrot.lane.b32.xlu0 %v5312, 54
    %v5327 = vpop.permute.xlu0 %5326
    %5328 = vrot.lane.b32.xlu0 %v5313, 54
    %v5329 = vpop.permute.xlu0 %5328
    %5330 = vrot.lane.b32.xlu0 %v5314, 54
    %v5331 = vpop.permute.xlu0 %5330
    %5332 = vrot.lane.b32.xlu0 %v5315, 54
    %v5333 = vpop.permute.xlu0 %5332
    %v5334 = vsel %vm3796, %v5323, %v5325
    %v5335 = vsel %vm3796, %v5325, %v5327
    %v5336 = vsel %vm3796, %v5327, %v5329
    %v5337 = vsel %vm3796, %v5329, %v5331
    %v5338 = vsel %vm3796, %v5331, %v5333
    %v5345 = vadd.f32 %v5300, %v5323
    %v5346 = vadd.f32 %v5301, %v5334
    %v5347 = vadd.f32 %v5302, %v5335
    %v5348 = vadd.f32 %v5303, %v5336
    %v5349 = vadd.f32 %v5304, %v5337
    %v5350 = vadd.f32 %v5305, %v5338
    %5351 = vset.pattern.permute.xlu0 18
    %5352 = vperm.xlu0 %5351, %v4567
    %v5353 = vpop.permute.xlu0 %5352
    %v5355 = vmul.f32 %v5353, %v5120
    %v5356 = vmul.f32 %v5353, %v5121
    %v5357 = vmul.f32 %v5353, %v5122
    %v5358 = vmul.f32 %v5353, %v5123
    %v5359 = vmul.f32 %v5353, %v5124
    %v5360 = vmul.f32 %v5353, %v5125
    %5367 = vrot.lane.b32.xlu0 %v5355, 53
    %v5368 = vpop.permute.xlu0 %5367
    %5369 = vrot.lane.b32.xlu0 %v5356, 53
    %v5370 = vpop.permute.xlu0 %5369
    %5371 = vrot.lane.b32.xlu0 %v5357, 53
    %v5372 = vpop.permute.xlu0 %5371
    %5373 = vrot.lane.b32.xlu0 %v5358, 53
    %v5374 = vpop.permute.xlu0 %5373
    %5375 = vrot.lane.b32.xlu0 %v5359, 53
    %v5376 = vpop.permute.xlu0 %5375
    %5377 = vrot.lane.b32.xlu0 %v5360, 53
    %v5378 = vpop.permute.xlu0 %5377
    %v5379 = vsel %vm3842, %v5368, %v5370
    %v5380 = vsel %vm3842, %v5370, %v5372
    %v5381 = vsel %vm3842, %v5372, %v5374
    %v5382 = vsel %vm3842, %v5374, %v5376
    %v5383 = vsel %vm3842, %v5376, %v5378
    %v5390 = vadd.f32 %v5345, %v5368
    %v5391 = vadd.f32 %v5346, %v5379
    %v5392 = vadd.f32 %v5347, %v5380
    %v5393 = vadd.f32 %v5348, %v5381
    %v5394 = vadd.f32 %v5349, %v5382
    %v5395 = vadd.f32 %v5350, %v5383
    %5396 = vset.pattern.permute.xlu0 19
    %5397 = vperm.xlu0 %5396, %v4567
    %v5398 = vpop.permute.xlu0 %5397
    %v5400 = vmul.f32 %v5398, %v5120
    %v5401 = vmul.f32 %v5398, %v5121
    %v5402 = vmul.f32 %v5398, %v5122
    %v5403 = vmul.f32 %v5398, %v5123
    %v5404 = vmul.f32 %v5398, %v5124
    %v5405 = vmul.f32 %v5398, %v5125
    %5412 = vrot.lane.b32.xlu0 %v5400, 52
    %v5413 = vpop.permute.xlu0 %5412
    %5414 = vrot.lane.b32.xlu0 %v5401, 52
    %v5415 = vpop.permute.xlu0 %5414
    %5416 = vrot.lane.b32.xlu0 %v5402, 52
    %v5417 = vpop.permute.xlu0 %5416
    %5418 = vrot.lane.b32.xlu0 %v5403, 52
    %v5419 = vpop.permute.xlu0 %5418
    %5420 = vrot.lane.b32.xlu0 %v5404, 52
    %v5421 = vpop.permute.xlu0 %5420
    %5422 = vrot.lane.b32.xlu0 %v5405, 52
    %v5423 = vpop.permute.xlu0 %5422
    %v5424 = vsel %vm3888, %v5413, %v5415
    %v5425 = vsel %vm3888, %v5415, %v5417
    %v5426 = vsel %vm3888, %v5417, %v5419
    %v5427 = vsel %vm3888, %v5419, %v5421
    %v5428 = vsel %vm3888, %v5421, %v5423
    %v5435 = vadd.f32 %v5390, %v5413
    %v5436 = vadd.f32 %v5391, %v5424
    %v5437 = vadd.f32 %v5392, %v5425
    %v5438 = vadd.f32 %v5393, %v5426
    %v5439 = vadd.f32 %v5394, %v5427
    %v5440 = vadd.f32 %v5395, %v5428
    %5441 = vset.pattern.permute.xlu0 20
    %5442 = vperm.xlu0 %5441, %v4567
    %v5443 = vpop.permute.xlu0 %5442
    %v5445 = vmul.f32 %v5443, %v5120
    %v5446 = vmul.f32 %v5443, %v5121
    %v5447 = vmul.f32 %v5443, %v5122
    %v5448 = vmul.f32 %v5443, %v5123
    %v5449 = vmul.f32 %v5443, %v5124
    %v5450 = vmul.f32 %v5443, %v5125
    %5457 = vrot.lane.b32.xlu0 %v5445, 32
    %v5458 = vpop.permute.xlu0 %5457
    %5459 = vrot.lane.b32.xlu0 %v5446, 32
    %v5460 = vpop.permute.xlu0 %5459
    %5461 = vrot.lane.b32.xlu0 %v5447, 32
    %v5462 = vpop.permute.xlu0 %5461
    %5463 = vrot.lane.b32.xlu0 %v5448, 32
    %v5464 = vpop.permute.xlu0 %5463
    %5465 = vrot.lane.b32.xlu0 %v5449, 32
    %v5466 = vpop.permute.xlu0 %5465
    %5467 = vrot.lane.b32.xlu0 %v5450, 32
    %v5468 = vpop.permute.xlu0 %5467
    %v5469 = vsel %vm3934, %v5458, %v5460
    %v5470 = vsel %vm3934, %v5460, %v5462
    %v5471 = vsel %vm3934, %v5462, %v5464
    %v5472 = vsel %vm3934, %v5464, %v5466
    %v5473 = vsel %vm3934, %v5466, %v5468
    %v5480 = vadd.f32 %v5435, %v5458
    %v5481 = vadd.f32 %v5436, %v5469
    %v5482 = vadd.f32 %v5437, %v5470
    %v5483 = vadd.f32 %v5438, %v5471
    %v5484 = vadd.f32 %v5439, %v5472
    %v5485 = vadd.f32 %v5440, %v5473
    %5486 = vset.pattern.permute.xlu0 21
    %5487 = vperm.xlu0 %5486, %v4567
    %v5488 = vpop.permute.xlu0 %5487
    %v5490 = vmul.f32 %v5488, %v5120
    %v5491 = vmul.f32 %v5488, %v5121
    %v5492 = vmul.f32 %v5488, %v5122
    %v5493 = vmul.f32 %v5488, %v5123
    %v5494 = vmul.f32 %v5488, %v5124
    %v5495 = vmul.f32 %v5488, %v5125
    %5502 = vrot.lane.b32.xlu0 %v5490, 31
    %v5503 = vpop.permute.xlu0 %5502
    %5504 = vrot.lane.b32.xlu0 %v5491, 31
    %v5505 = vpop.permute.xlu0 %5504
    %5506 = vrot.lane.b32.xlu0 %v5492, 31
    %v5507 = vpop.permute.xlu0 %5506
    %5508 = vrot.lane.b32.xlu0 %v5493, 31
    %v5509 = vpop.permute.xlu0 %5508
    %5510 = vrot.lane.b32.xlu0 %v5494, 31
    %v5511 = vpop.permute.xlu0 %5510
    %5512 = vrot.lane.b32.xlu0 %v5495, 31
    %v5513 = vpop.permute.xlu0 %5512
    %v5514 = vsel %vm3980, %v5503, %v5505
    %v5515 = vsel %vm3980, %v5505, %v5507
    %v5516 = vsel %vm3980, %v5507, %v5509
    %v5517 = vsel %vm3980, %v5509, %v5511
    %v5518 = vsel %vm3980, %v5511, %v5513
    %v5525 = vadd.f32 %v5480, %v5503
    %v5526 = vadd.f32 %v5481, %v5514
    %v5527 = vadd.f32 %v5482, %v5515
    %v5528 = vadd.f32 %v5483, %v5516
    %v5529 = vadd.f32 %v5484, %v5517
    %v5530 = vadd.f32 %v5485, %v5518
    %5531 = vset.pattern.permute.xlu0 22
    %5532 = vperm.xlu0 %5531, %v4567
    %v5533 = vpop.permute.xlu0 %5532
    %v5535 = vmul.f32 %v5533, %v5120
    %v5536 = vmul.f32 %v5533, %v5121
    %v5537 = vmul.f32 %v5533, %v5122
    %v5538 = vmul.f32 %v5533, %v5123
    %v5539 = vmul.f32 %v5533, %v5124
    %v5540 = vmul.f32 %v5533, %v5125
    %5547 = vrot.lane.b32.xlu0 %v5535, 30
    %v5548 = vpop.permute.xlu0 %5547
    %5549 = vrot.lane.b32.xlu0 %v5536, 30
    %v5550 = vpop.permute.xlu0 %5549
    %5551 = vrot.lane.b32.xlu0 %v5537, 30
    %v5552 = vpop.permute.xlu0 %5551
    %5553 = vrot.lane.b32.xlu0 %v5538, 30
    %v5554 = vpop.permute.xlu0 %5553
    %5555 = vrot.lane.b32.xlu0 %v5539, 30
    %v5556 = vpop.permute.xlu0 %5555
    %5557 = vrot.lane.b32.xlu0 %v5540, 30
    %v5558 = vpop.permute.xlu0 %5557
    %v5559 = vsel %vm4026, %v5548, %v5550
    %v5560 = vsel %vm4026, %v5550, %v5552
    %v5561 = vsel %vm4026, %v5552, %v5554
    %v5562 = vsel %vm4026, %v5554, %v5556
    %v5563 = vsel %vm4026, %v5556, %v5558
    %v5570 = vadd.f32 %v5525, %v5548
    %v5571 = vadd.f32 %v5526, %v5559
    %v5572 = vadd.f32 %v5527, %v5560
    %v5573 = vadd.f32 %v5528, %v5561
    %v5574 = vadd.f32 %v5529, %v5562
    %v5575 = vadd.f32 %v5530, %v5563
    %5576 = vset.pattern.permute.xlu0 23
    %5577 = vperm.xlu0 %5576, %v4567
    %v5578 = vpop.permute.xlu0 %5577
    %v5580 = vmul.f32 %v5578, %v5120
    %v5581 = vmul.f32 %v5578, %v5121
    %v5582 = vmul.f32 %v5578, %v5122
    %v5583 = vmul.f32 %v5578, %v5123
    %v5584 = vmul.f32 %v5578, %v5124
    %v5585 = vmul.f32 %v5578, %v5125
    %5592 = vrot.lane.b32.xlu0 %v5580, 29
    %v5593 = vpop.permute.xlu0 %5592
    %5594 = vrot.lane.b32.xlu0 %v5581, 29
    %v5595 = vpop.permute.xlu0 %5594
    %5596 = vrot.lane.b32.xlu0 %v5582, 29
    %v5597 = vpop.permute.xlu0 %5596
    %5598 = vrot.lane.b32.xlu0 %v5583, 29
    %v5599 = vpop.permute.xlu0 %5598
    %5600 = vrot.lane.b32.xlu0 %v5584, 29
    %v5601 = vpop.permute.xlu0 %5600
    %5602 = vrot.lane.b32.xlu0 %v5585, 29
    %v5603 = vpop.permute.xlu0 %5602
    %v5604 = vsel %vm4072, %v5593, %v5595
    %v5605 = vsel %vm4072, %v5595, %v5597
    %v5606 = vsel %vm4072, %v5597, %v5599
    %v5607 = vsel %vm4072, %v5599, %v5601
    %v5608 = vsel %vm4072, %v5601, %v5603
    %v5615 = vadd.f32 %v5570, %v5593
    %v5616 = vadd.f32 %v5571, %v5604
    %v5617 = vadd.f32 %v5572, %v5605
    %v5618 = vadd.f32 %v5573, %v5606
    %v5619 = vadd.f32 %v5574, %v5607
    %v5620 = vadd.f32 %v5575, %v5608
    %5621 = vset.pattern.permute.xlu0 24
    %5622 = vperm.xlu0 %5621, %v4567
    %v5623 = vpop.permute.xlu0 %5622
    %v5625 = vmul.f32 %v5623, %v5120
    %v5626 = vmul.f32 %v5623, %v5121
    %v5627 = vmul.f32 %v5623, %v5122
    %v5628 = vmul.f32 %v5623, %v5123
    %v5629 = vmul.f32 %v5623, %v5124
    %v5630 = vmul.f32 %v5623, %v5125
    %5637 = vrot.lane.b32.xlu0 %v5625, 28
    %v5638 = vpop.permute.xlu0 %5637
    %5639 = vrot.lane.b32.xlu0 %v5626, 28
    %v5640 = vpop.permute.xlu0 %5639
    %5641 = vrot.lane.b32.xlu0 %v5627, 28
    %v5642 = vpop.permute.xlu0 %5641
    %5643 = vrot.lane.b32.xlu0 %v5628, 28
    %v5644 = vpop.permute.xlu0 %5643
    %5645 = vrot.lane.b32.xlu0 %v5629, 28
    %v5646 = vpop.permute.xlu0 %5645
    %5647 = vrot.lane.b32.xlu0 %v5630, 28
    %v5648 = vpop.permute.xlu0 %5647
    %v5649 = vsel %vm4118, %v5638, %v5640
    %v5650 = vsel %vm4118, %v5640, %v5642
    %v5651 = vsel %vm4118, %v5642, %v5644
    %v5652 = vsel %vm4118, %v5644, %v5646
    %v5653 = vsel %vm4118, %v5646, %v5648
    %v5660 = vadd.f32 %v5615, %v5638
    %v5661 = vadd.f32 %v5616, %v5649
    %v5662 = vadd.f32 %v5617, %v5650
    %v5663 = vadd.f32 %v5618, %v5651
    %v5664 = vadd.f32 %v5619, %v5652
    %v5665 = vadd.f32 %v5620, %v5653
    %v5666 = vld [vmem:[#allocation3] sm:$0xff]
    %v5667 = vld [vmem:[#allocation3 + $0x8] sm:$0xff]
    %v5668 = vld [vmem:[#allocation3 + $0x10] sm:$0xff]
    %v5669 = vld [vmem:[#allocation3 + $0x18] sm:$0xff]
    %v5670 = vld [vmem:[#allocation3 + $0x20] sm:$0xff]
    %5676 = vrot.lane.b32.xlu0 %v5666, 78
    %v5677 = vpop.permute.xlu0 %5676
    %5678 = vrot.lane.b32.xlu0 %v5667, 78
    %v5679 = vpop.permute.xlu0 %5678
    %5680 = vrot.lane.b32.xlu0 %v5668, 78
    %v5681 = vpop.permute.xlu0 %5680
    %5682 = vrot.lane.b32.xlu0 %v5669, 78
    %v5683 = vpop.permute.xlu0 %5682
    %5684 = vrot.lane.b32.xlu0 %v5670, 78
    %v5685 = vpop.permute.xlu0 %5684
    %v5686 = vsel %vm369, %v5677, %v5679
    %v5687 = vsel %vm369, %v5679, %v5681
    %v5688 = vsel %vm369, %v5681, %v5683
    %v5689 = vsel %vm369, %v5683, %v5685
    %v5696 = vmul.f32 %v5660, %v5677
    %v5697 = vmul.f32 %v5661, %v5686
    %v5698 = vmul.f32 %v5662, %v5687
    %v5699 = vmul.f32 %v5663, %v5688
    %v5700 = vmul.f32 %v5664, %v5689
    %v5701 = vmul.f32 %v5665, %v5685
    %v5702 = vld [vmem:[%s12] sm:$0xff]
    %5709 = vrot.lane.b32.xlu0 %v5696, 50
    %v5710 = vpop.permute.xlu0 %5709
    %5711 = vrot.lane.b32.xlu0 %v5697, 50
    %v5712 = vpop.permute.xlu0 %5711
    %5713 = vrot.lane.b32.xlu0 %v5698, 50
    %v5714 = vpop.permute.xlu0 %5713
    %5715 = vrot.lane.b32.xlu0 %v5699, 50
    %v5716 = vpop.permute.xlu0 %5715
    %5717 = vrot.lane.b32.xlu0 %v5700, 50
    %v5718 = vpop.permute.xlu0 %5717
    %5719 = vrot.lane.b32.xlu0 %v5701, 50
    %v5720 = vpop.permute.xlu0 %5719
    %v5721 = vsel %vm4191, %v5710, %v5712
    %v5722 = vsel %vm4191, %v5712, %v5714
    %v5723 = vsel %vm4191, %v5714, %v5716
    %v5724 = vsel %vm4191, %v5716, %v5718
    %v5725 = vsel %vm4191, %v5718, %v5720
    %v5732 = vsel %vm453, %v5702, 0
    %5734 = vmatpush.msra.mxu0 0.0
    %5735 = vmatpush.msra.mxu0 0.0
    %5736 = vmatpush.msra.mxu0 0.0
    %5737 = vmatpush.msra.mxu0 0.0
    %5738 = vmatpush.msra.mxu0 0.0
    %5739 = vmatpush.msra.mxu0 0.0
    %5740 = vmatpush.msra.mxu0 0.0
    %5741 = vmatpush.msra.mxu0 0.0
    %5742 = vmatpush.msra.mxu0 0.0
    %5743 = vmatpush.msra.mxu0 0.0
    %5744 = vmatpush.msra.mxu0 0.0
    %5745 = vmatpush.msra.mxu0 0.0
    %5746 = vmatpush.msra.mxu0 0.0
    %5747 = vmatpush.msra.mxu0 0.0
    %5748 = vmatpush.msra.mxu0 0.0
    %5749 = vmatpush.msra.mxu0 %v5721
    %5750 = vmatmul.f32.gmra.mxu0 %v5732
    %v5751 = vpop.f32.mrf.mxu0
    %v5752 = vadd.f32 0.0, %v5751
    %5753 = vdwg.mxu0
    %5754 = vmatpush.msra.mxu0 0.0
    %5755 = vmatpush.msra.mxu0 0.0
    %5756 = vmatpush.msra.mxu0 0.0
    %5757 = vmatpush.msra.mxu0 0.0
    %5758 = vmatpush.msra.mxu0 0.0
    %5759 = vmatpush.msra.mxu0 0.0
    %5760 = vmatpush.msra.mxu0 0.0
    %5761 = vmatpush.msra.mxu0 0.0
    %5762 = vmatpush.msra.mxu0 0.0
    %5763 = vmatpush.msra.mxu0 0.0
    %5764 = vmatpush.msra.mxu0 0.0
    %5765 = vmatpush.msra.mxu0 0.0
    %5766 = vmatpush.msra.mxu0 0.0
    %5767 = vmatpush.msra.mxu0 0.0
    %5768 = vmatpush.msra.mxu0 0.0
    %5769 = vmatpush.msra.mxu0 %v5722
    %5770 = vmatmul.f32.gmra.mxu0 %v5732
    %v5771 = vpop.f32.mrf.mxu0
    %v5772 = vadd.f32 0.0, %v5771
    %5773 = vdwg.mxu0
    %5774 = vmatpush.msra.mxu0 0.0
    %5775 = vmatpush.msra.mxu0 0.0
    %5776 = vmatpush.msra.mxu0 0.0
    %5777 = vmatpush.msra.mxu0 0.0
    %5778 = vmatpush.msra.mxu0 0.0
    %5779 = vmatpush.msra.mxu0 0.0
    %5780 = vmatpush.msra.mxu0 0.0
    %5781 = vmatpush.msra.mxu0 0.0
    %5782 = vmatpush.msra.mxu0 0.0
    %5783 = vmatpush.msra.mxu0 0.0
    %5784 = vmatpush.msra.mxu0 0.0
    %5785 = vmatpush.msra.mxu0 0.0
    %5786 = vmatpush.msra.mxu0 0.0
    %5787 = vmatpush.msra.mxu0 0.0
    %5788 = vmatpush.msra.mxu0 0.0
    %5789 = vmatpush.msra.mxu0 %v5723
    %5790 = vmatmul.f32.gmra.mxu0 %v5732
    %v5791 = vpop.f32.mrf.mxu0
    %v5792 = vadd.f32 0.0, %v5791
    %5793 = vdwg.mxu0
    %5794 = vmatpush.msra.mxu0 0.0
    %5795 = vmatpush.msra.mxu0 0.0
    %5796 = vmatpush.msra.mxu0 0.0
    %5797 = vmatpush.msra.mxu0 0.0
    %5798 = vmatpush.msra.mxu0 0.0
    %5799 = vmatpush.msra.mxu0 0.0
    %5800 = vmatpush.msra.mxu0 0.0
    %5801 = vmatpush.msra.mxu0 0.0
    %5802 = vmatpush.msra.mxu0 0.0
    %5803 = vmatpush.msra.mxu0 0.0
    %5804 = vmatpush.msra.mxu0 0.0
    %5805 = vmatpush.msra.mxu0 0.0
    %5806 = vmatpush.msra.mxu0 0.0
    %5807 = vmatpush.msra.mxu0 0.0
    %5808 = vmatpush.msra.mxu0 0.0
    %5809 = vmatpush.msra.mxu0 %v5724
    %5810 = vmatmul.f32.gmra.mxu0 %v5732
    %v5811 = vpop.f32.mrf.mxu0
    %v5812 = vadd.f32 0.0, %v5811
    %5813 = vdwg.mxu0
    %5814 = vmatpush.msra.mxu0 0.0
    %5815 = vmatpush.msra.mxu0 0.0
    %5816 = vmatpush.msra.mxu0 0.0
    %5817 = vmatpush.msra.mxu0 0.0
    %5818 = vmatpush.msra.mxu0 0.0
    %5819 = vmatpush.msra.mxu0 0.0
    %5820 = vmatpush.msra.mxu0 0.0
    %5821 = vmatpush.msra.mxu0 0.0
    %5822 = vmatpush.msra.mxu0 0.0
    %5823 = vmatpush.msra.mxu0 0.0
    %5824 = vmatpush.msra.mxu0 0.0
    %5825 = vmatpush.msra.mxu0 0.0
    %5826 = vmatpush.msra.mxu0 0.0
    %5827 = vmatpush.msra.mxu0 0.0
    %5828 = vmatpush.msra.mxu0 0.0
    %5829 = vmatpush.msra.mxu0 %v5725
    %5830 = vmatmul.f32.gmra.mxu0 %v5732
    %v5831 = vpop.f32.mrf.mxu0
    %v5832 = vadd.f32 0.0, %v5831
    %5833 = vdwg.mxu0
    %v5834 = vld [vmem:[%s4] sm:$0xff]
    %v5836 = vsel %vm453, %v5834, 0
    %5838 = vmatpush.msra.mxu0 0.0
    %5839 = vmatpush.msra.mxu0 0.0
    %5840 = vmatpush.msra.mxu0 0.0
    %5841 = vmatpush.msra.mxu0 0.0
    %5842 = vmatpush.msra.mxu0 0.0
    %5843 = vmatpush.msra.mxu0 0.0
    %5844 = vmatpush.msra.mxu0 0.0
    %5845 = vmatpush.msra.mxu0 0.0
    %5846 = vmatpush.msra.mxu0 0.0
    %5847 = vmatpush.msra.mxu0 0.0
    %5848 = vmatpush.msra.mxu0 0.0
    %5849 = vmatpush.msra.mxu0 0.0
    %5850 = vmatpush.msra.mxu0 0.0
    %5851 = vmatpush.msra.mxu0 0.0
    %5852 = vmatpush.msra.mxu0 0.0
    %5853 = vmatpush.msra.mxu0 %v5752
    %5854 = vmatmul.f32.gmra.mxu0 %v5836
    %v5855 = vpop.f32.mrf.mxu0
    %v5856 = vadd.f32 0.0, %v5855
    %5857 = vdwg.mxu0
    %5858 = vmatpush.msra.mxu0 0.0
    %5859 = vmatpush.msra.mxu0 0.0
    %5860 = vmatpush.msra.mxu0 0.0
    %5861 = vmatpush.msra.mxu0 0.0
    %5862 = vmatpush.msra.mxu0 0.0
    %5863 = vmatpush.msra.mxu0 0.0
    %5864 = vmatpush.msra.mxu0 0.0
    %5865 = vmatpush.msra.mxu0 0.0
    %5866 = vmatpush.msra.mxu0 0.0
    %5867 = vmatpush.msra.mxu0 0.0
    %5868 = vmatpush.msra.mxu0 0.0
    %5869 = vmatpush.msra.mxu0 0.0
    %5870 = vmatpush.msra.mxu0 0.0
    %5871 = vmatpush.msra.mxu0 0.0
    %5872 = vmatpush.msra.mxu0 0.0
    %5873 = vmatpush.msra.mxu0 %v5772
    %5874 = vmatmul.f32.gmra.mxu0 %v5836
    %v5875 = vpop.f32.mrf.mxu0
    %v5876 = vadd.f32 0.0, %v5875
    %5877 = vdwg.mxu0
    %5878 = vmatpush.msra.mxu0 0.0
    %5879 = vmatpush.msra.mxu0 0.0
    %5880 = vmatpush.msra.mxu0 0.0
    %5881 = vmatpush.msra.mxu0 0.0
    %5882 = vmatpush.msra.mxu0 0.0
    %5883 = vmatpush.msra.mxu0 0.0
    %5884 = vmatpush.msra.mxu0 0.0
    %5885 = vmatpush.msra.mxu0 0.0
    %5886 = vmatpush.msra.mxu0 0.0
    %5887 = vmatpush.msra.mxu0 0.0
    %5888 = vmatpush.msra.mxu0 0.0
    %5889 = vmatpush.msra.mxu0 0.0
    %5890 = vmatpush.msra.mxu0 0.0
    %5891 = vmatpush.msra.mxu0 0.0
    %5892 = vmatpush.msra.mxu0 0.0
    %5893 = vmatpush.msra.mxu0 %v5792
    %5894 = vmatmul.f32.gmra.mxu0 %v5836
    %v5895 = vpop.f32.mrf.mxu0
    %v5896 = vadd.f32 0.0, %v5895
    %5897 = vdwg.mxu0
    %5898 = vmatpush.msra.mxu0 0.0
    %5899 = vmatpush.msra.mxu0 0.0
    %5900 = vmatpush.msra.mxu0 0.0
    %5901 = vmatpush.msra.mxu0 0.0
    %5902 = vmatpush.msra.mxu0 0.0
    %5903 = vmatpush.msra.mxu0 0.0
    %5904 = vmatpush.msra.mxu0 0.0
    %5905 = vmatpush.msra.mxu0 0.0
    %5906 = vmatpush.msra.mxu0 0.0
    %5907 = vmatpush.msra.mxu0 0.0
    %5908 = vmatpush.msra.mxu0 0.0
    %5909 = vmatpush.msra.mxu0 0.0
    %5910 = vmatpush.msra.mxu0 0.0
    %5911 = vmatpush.msra.mxu0 0.0
    %5912 = vmatpush.msra.mxu0 0.0
    %5913 = vmatpush.msra.mxu0 %v5812
    %5914 = vmatmul.f32.gmra.mxu0 %v5836
    %v5915 = vpop.f32.mrf.mxu0
    %v5916 = vadd.f32 0.0, %v5915
    %5917 = vdwg.mxu0
    %5918 = vmatpush.msra.mxu0 0.0
    %5919 = vmatpush.msra.mxu0 0.0
    %5920 = vmatpush.msra.mxu0 0.0
    %5921 = vmatpush.msra.mxu0 0.0
    %5922 = vmatpush.msra.mxu0 0.0
    %5923 = vmatpush.msra.mxu0 0.0
    %5924 = vmatpush.msra.mxu0 0.0
    %5925 = vmatpush.msra.mxu0 0.0
    %5926 = vmatpush.msra.mxu0 0.0
    %5927 = vmatpush.msra.mxu0 0.0
    %5928 = vmatpush.msra.mxu0 0.0
    %5929 = vmatpush.msra.mxu0 0.0
    %5930 = vmatpush.msra.mxu0 0.0
    %5931 = vmatpush.msra.mxu0 0.0
    %5932 = vmatpush.msra.mxu0 0.0
    %5933 = vmatpush.msra.mxu0 %v5832
    %5934 = vmatmul.f32.gmra.mxu0 %v5836
    %v5935 = vpop.f32.mrf.mxu0
    %v5936 = vadd.f32 0.0, %v5935
    %5937 = vdwg.mxu0
    %v5938 = vadd.f32 %v5856, %v5876
    %v5939 = vadd.f32 %v5938, %v5896
    %v5940 = vadd.f32 %v5939, %v5916
    %v5941 = vadd.f32 %v5940, %v5936
    %5942 = vadd.xlane.f32.xlu0 %v5941
    %v5943 = vpop.xlane.xlu0 %5942
    %v5944 = vmul.f32 %v5943, 0.001953125
    %v5945 = vmul.f32 %v5752, %v5752
    %v5946 = vmul.f32 %v5772, %v5772
    %v5947 = vmul.f32 %v5792, %v5792
    %v5948 = vmul.f32 %v5812, %v5812
    %v5949 = vmul.f32 %v5832, %v5832
    %5950 = vmatpush.msra.mxu0 0.0
    %5951 = vmatpush.msra.mxu0 0.0
    %5952 = vmatpush.msra.mxu0 0.0
    %5953 = vmatpush.msra.mxu0 0.0
    %5954 = vmatpush.msra.mxu0 0.0
    %5955 = vmatpush.msra.mxu0 0.0
    %5956 = vmatpush.msra.mxu0 0.0
    %5957 = vmatpush.msra.mxu0 0.0
    %5958 = vmatpush.msra.mxu0 0.0
    %5959 = vmatpush.msra.mxu0 0.0
    %5960 = vmatpush.msra.mxu0 0.0
    %5961 = vmatpush.msra.mxu0 0.0
    %5962 = vmatpush.msra.mxu0 0.0
    %5963 = vmatpush.msra.mxu0 0.0
    %5964 = vmatpush.msra.mxu0 0.0
    %5965 = vmatpush.msra.mxu0 %v5945
    %5966 = vmatmul.f32.gmra.mxu0 %v5836
    %v5967 = vpop.f32.mrf.mxu0
    %v5968 = vadd.f32 0.0, %v5967
    %5969 = vdwg.mxu0
    %5970 = vmatpush.msra.mxu0 0.0
    %5971 = vmatpush.msra.mxu0 0.0
    %5972 = vmatpush.msra.mxu0 0.0
    %5973 = vmatpush.msra.mxu0 0.0
    %5974 = vmatpush.msra.mxu0 0.0
    %5975 = vmatpush.msra.mxu0 0.0
    %5976 = vmatpush.msra.mxu0 0.0
    %5977 = vmatpush.msra.mxu0 0.0
    %5978 = vmatpush.msra.mxu0 0.0
    %5979 = vmatpush.msra.mxu0 0.0
    %5980 = vmatpush.msra.mxu0 0.0
    %5981 = vmatpush.msra.mxu0 0.0
    %5982 = vmatpush.msra.mxu0 0.0
    %5983 = vmatpush.msra.mxu0 0.0
    %5984 = vmatpush.msra.mxu0 0.0
    %5985 = vmatpush.msra.mxu0 %v5946
    %5986 = vmatmul.f32.gmra.mxu0 %v5836
    %v5987 = vpop.f32.mrf.mxu0
    %v5988 = vadd.f32 0.0, %v5987
    %5989 = vdwg.mxu0
    %5990 = vmatpush.msra.mxu0 0.0
    %5991 = vmatpush.msra.mxu0 0.0
    %5992 = vmatpush.msra.mxu0 0.0
    %5993 = vmatpush.msra.mxu0 0.0
    %5994 = vmatpush.msra.mxu0 0.0
    %5995 = vmatpush.msra.mxu0 0.0
    %5996 = vmatpush.msra.mxu0 0.0
    %5997 = vmatpush.msra.mxu0 0.0
    %5998 = vmatpush.msra.mxu0 0.0
    %5999 = vmatpush.msra.mxu0 0.0
    %6000 = vmatpush.msra.mxu0 0.0
    %6001 = vmatpush.msra.mxu0 0.0
    %6002 = vmatpush.msra.mxu0 0.0
    %6003 = vmatpush.msra.mxu0 0.0
    %6004 = vmatpush.msra.mxu0 0.0
    %6005 = vmatpush.msra.mxu0 %v5947
    %6006 = vmatmul.f32.gmra.mxu0 %v5836
    %v6007 = vpop.f32.mrf.mxu0
    %v6008 = vadd.f32 0.0, %v6007
    %6009 = vdwg.mxu0
    %6010 = vmatpush.msra.mxu0 0.0
    %6011 = vmatpush.msra.mxu0 0.0
    %6012 = vmatpush.msra.mxu0 0.0
    %6013 = vmatpush.msra.mxu0 0.0
    %6014 = vmatpush.msra.mxu0 0.0
    %6015 = vmatpush.msra.mxu0 0.0
    %6016 = vmatpush.msra.mxu0 0.0
    %6017 = vmatpush.msra.mxu0 0.0
    %6018 = vmatpush.msra.mxu0 0.0
    %6019 = vmatpush.msra.mxu0 0.0
    %6020 = vmatpush.msra.mxu0 0.0
    %6021 = vmatpush.msra.mxu0 0.0
    %6022 = vmatpush.msra.mxu0 0.0
    %6023 = vmatpush.msra.mxu0 0.0
    %6024 = vmatpush.msra.mxu0 0.0
    %6025 = vmatpush.msra.mxu0 %v5948
    %6026 = vmatmul.f32.gmra.mxu0 %v5836
    %v6027 = vpop.f32.mrf.mxu0
    %v6028 = vadd.f32 0.0, %v6027
    %6029 = vdwg.mxu0
    %6030 = vmatpush.msra.mxu0 0.0
    %6031 = vmatpush.msra.mxu0 0.0
    %6032 = vmatpush.msra.mxu0 0.0
    %6033 = vmatpush.msra.mxu0 0.0
    %6034 = vmatpush.msra.mxu0 0.0
    %6035 = vmatpush.msra.mxu0 0.0
    %6036 = vmatpush.msra.mxu0 0.0
    %6037 = vmatpush.msra.mxu0 0.0
    %6038 = vmatpush.msra.mxu0 0.0
    %6039 = vmatpush.msra.mxu0 0.0
    %6040 = vmatpush.msra.mxu0 0.0
    %6041 = vmatpush.msra.mxu0 0.0
    %6042 = vmatpush.msra.mxu0 0.0
    %6043 = vmatpush.msra.mxu0 0.0
    %6044 = vmatpush.msra.mxu0 0.0
    %6045 = vmatpush.msra.mxu0 %v5949
    %6046 = vmatmul.f32.gmra.mxu0 %v5836
    %v6047 = vpop.f32.mrf.mxu0
    %v6048 = vadd.f32 0.0, %v6047
    %6049 = vdwg.mxu0
    %v6050 = vadd.f32 %v5968, %v5988
    %v6051 = vadd.f32 %v6050, %v6008
    %v6052 = vadd.f32 %v6051, %v6028
    %v6053 = vadd.f32 %v6052, %v6048
    %6054 = vadd.xlane.f32.xlu0 %v6053
    %v6055 = vpop.xlane.xlu0 %6054
    %v6056 = vmul.f32 %v6055, 0.001953125
    %v6057 = vmul.f32 %v5944, %v5944
    %v6058 = vsub.f32 %v6056, %v6057
    %v6059 = vmax.f32 %v6058, 0.0
    %v6060 = vadd.f32 %v6059, 1e-05
    %v6061 = vrsqrt.pop %v6060
    %v6062 = vmul.f32 %v6061, %v6060
    %v6063 = vmul.f32 %v6062, %v6061
    %v6064 = vmul.f32 0.5, %v6063
    %v6065 = vsub.f32 1.5, %v6064
    %v6066 = vmul.f32 %v6061, %v6065
    %vm6067 = vweird.f32 %v6060
    %vm6068 = vweird.f32 %v6061
    %vm6069 = vmor %vm6067, %vm6068
    %v6070 = vsel %vm6069, %v6061, %v6066
    %v6071 = vstv %s3015
    %v6072 = vmul.f32 %v6070, %v6071
    %v6073 = vsub.f32 %v5752, %v5944
    %v6074 = vsub.f32 %v5772, %v5944
    %v6075 = vsub.f32 %v5792, %v5944
    %v6076 = vsub.f32 %v5812, %v5944
    %v6077 = vsub.f32 %v5832, %v5944
    %v6078 = vmul.f32 %v6073, %v6072
    %v6079 = vmul.f32 %v6074, %v6072
    %v6080 = vmul.f32 %v6075, %v6072
    %v6081 = vmul.f32 %v6076, %v6072
    %v6082 = vmul.f32 %v6077, %v6072
    %v6083 = vadd.f32 %v3010, %v6078
    %v6084 = vadd.f32 %v3011, %v6079
    %v6085 = vadd.f32 %v3012, %v6080
    %v6086 = vadd.f32 %v3013, %v6081
    %v6087 = vadd.f32 %v3014, %v6082
    %s6088 = sld [smem:[#allocation4 + $0x6]]
    %6089 = vst [vmem:[#allocation2 + $0x8] sm:$0xff] %v93
    %6090 = vst [vmem:[#allocation2 + $0x10] sm:$0xff] %v94
    %6091 = vst [vmem:[#allocation2 + $0x18] sm:$0xff] %v95
    %6092 = vst [vmem:[#allocation2 + $0x20] sm:$0xff] %v96
    %6093 = vst [vmem:[#allocation2 + $0x28] sm:$0xff] %v97
    %v6094 = vld [vmem:[%s13] sm:$0xff]
    %v6095 = vld [vmem:[#allocation2] sm:$0xff]
    %v6096 = vld [vmem:[#allocation2 + $0x8] sm:$0xff]
    %v6097 = vld [vmem:[#allocation2 + $0x10] sm:$0xff]
    %v6098 = vld [vmem:[#allocation2 + $0x18] sm:$0xff]
    %v6099 = vld [vmem:[#allocation2 + $0x20] sm:$0xff]
    %v6100 = vld [vmem:[#allocation2 + $0x28] sm:$0xff]
    %6102 = vset.pattern.permute.xlu0 0
    %6103 = vperm.xlu0 %6102, %v6094
    %v6104 = vpop.permute.xlu0 %6103
    %v6106 = vmul.f32 %v6104, %v6095
    %v6107 = vmul.f32 %v6104, %v6096
    %v6108 = vmul.f32 %v6104, %v6097
    %v6109 = vmul.f32 %v6104, %v6098
    %v6110 = vmul.f32 %v6104, %v6099
    %v6111 = vmul.f32 %v6104, %v6100
    %6112 = vset.pattern.permute.xlu0 1
    %6113 = vperm.xlu0 %6112, %v6094
    %v6114 = vpop.permute.xlu0 %6113
    %v6116 = vmul.f32 %v6114, %v6095
    %v6117 = vmul.f32 %v6114, %v6096
    %v6118 = vmul.f32 %v6114, %v6097
    %v6119 = vmul.f32 %v6114, %v6098
    %v6120 = vmul.f32 %v6114, %v6099
    %v6121 = vmul.f32 %v6114, %v6100
    %6128 = vrot.lane.b32.xlu0 %v6116, 126
    %v6129 = vpop.permute.xlu0 %6128
    %6130 = vrot.lane.b32.xlu0 %v6117, 126
    %v6131 = vpop.permute.xlu0 %6130
    %6132 = vrot.lane.b32.xlu0 %v6118, 126
    %v6133 = vpop.permute.xlu0 %6132
    %6134 = vrot.lane.b32.xlu0 %v6119, 126
    %v6135 = vpop.permute.xlu0 %6134
    %6136 = vrot.lane.b32.xlu0 %v6120, 126
    %v6137 = vpop.permute.xlu0 %6136
    %6138 = vrot.lane.b32.xlu0 %v6121, 126
    %v6139 = vpop.permute.xlu0 %6138
    %v6140 = vsel %vm180, %v6129, %v6131
    %v6141 = vsel %vm180, %v6131, %v6133
    %v6142 = vsel %vm180, %v6133, %v6135
    %v6143 = vsel %vm180, %v6135, %v6137
    %v6144 = vsel %vm180, %v6137, %v6139
    %v6151 = vadd.f32 %v6106, %v6140
    %v6152 = vadd.f32 %v6107, %v6141
    %v6153 = vadd.f32 %v6108, %v6142
    %v6154 = vadd.f32 %v6109, %v6143
    %v6155 = vadd.f32 %v6110, %v6144
    %v6156 = vadd.f32 %v6111, %v6139
    %6157 = vset.pattern.permute.xlu0 2
    %6158 = vperm.xlu0 %6157, %v6094
    %v6159 = vpop.permute.xlu0 %6158
    %v6161 = vmul.f32 %v6159, %v6095
    %v6162 = vmul.f32 %v6159, %v6096
    %v6163 = vmul.f32 %v6159, %v6097
    %v6164 = vmul.f32 %v6159, %v6098
    %v6165 = vmul.f32 %v6159, %v6099
    %v6166 = vmul.f32 %v6159, %v6100
    %6173 = vrot.lane.b32.xlu0 %v6161, 124
    %v6174 = vpop.permute.xlu0 %6173
    %6175 = vrot.lane.b32.xlu0 %v6162, 124
    %v6176 = vpop.permute.xlu0 %6175
    %6177 = vrot.lane.b32.xlu0 %v6163, 124
    %v6178 = vpop.permute.xlu0 %6177
    %6179 = vrot.lane.b32.xlu0 %v6164, 124
    %v6180 = vpop.permute.xlu0 %6179
    %6181 = vrot.lane.b32.xlu0 %v6165, 124
    %v6182 = vpop.permute.xlu0 %6181
    %6183 = vrot.lane.b32.xlu0 %v6166, 124
    %v6184 = vpop.permute.xlu0 %6183
    %v6185 = vsel %vm3203, %v6174, %v6176
    %v6186 = vsel %vm3203, %v6176, %v6178
    %v6187 = vsel %vm3203, %v6178, %v6180
    %v6188 = vsel %vm3203, %v6180, %v6182
    %v6189 = vsel %vm3203, %v6182, %v6184
    %v6196 = vadd.f32 %v6151, %v6185
    %v6197 = vadd.f32 %v6152, %v6186
    %v6198 = vadd.f32 %v6153, %v6187
    %v6199 = vadd.f32 %v6154, %v6188
    %v6200 = vadd.f32 %v6155, %v6189
    %v6201 = vadd.f32 %v6156, %v6184
    %6202 = vset.pattern.permute.xlu0 3
    %6203 = vperm.xlu0 %6202, %v6094
    %v6204 = vpop.permute.xlu0 %6203
    %v6206 = vmul.f32 %v6204, %v6095
    %v6207 = vmul.f32 %v6204, %v6096
    %v6208 = vmul.f32 %v6204, %v6097
    %v6209 = vmul.f32 %v6204, %v6098
    %v6210 = vmul.f32 %v6204, %v6099
    %v6211 = vmul.f32 %v6204, %v6100
    %6218 = vrot.lane.b32.xlu0 %v6206, 80
    %v6219 = vpop.permute.xlu0 %6218
    %6220 = vrot.lane.b32.xlu0 %v6207, 80
    %v6221 = vpop.permute.xlu0 %6220
    %6222 = vrot.lane.b32.xlu0 %v6208, 80
    %v6223 = vpop.permute.xlu0 %6222
    %6224 = vrot.lane.b32.xlu0 %v6209, 80
    %v6225 = vpop.permute.xlu0 %6224
    %6226 = vrot.lane.b32.xlu0 %v6210, 80
    %v6227 = vpop.permute.xlu0 %6226
    %6228 = vrot.lane.b32.xlu0 %v6211, 80
    %v6229 = vpop.permute.xlu0 %6228
    %v6230 = vsel %vm309, %v6219, %v6221
    %v6231 = vsel %vm309, %v6221, %v6223
    %v6232 = vsel %vm309, %v6223, %v6225
    %v6233 = vsel %vm309, %v6225, %v6227
    %v6234 = vsel %vm309, %v6227, %v6229
    %v6241 = vadd.f32 %v6196, %v6230
    %v6242 = vadd.f32 %v6197, %v6231
    %v6243 = vadd.f32 %v6198, %v6232
    %v6244 = vadd.f32 %v6199, %v6233
    %v6245 = vadd.f32 %v6200, %v6234
    %v6246 = vadd.f32 %v6201, %v6229
    %6247 = vset.pattern.permute.xlu0 4
    %6248 = vperm.xlu0 %6247, %v6094
    %v6249 = vpop.permute.xlu0 %6248
    %v6251 = vmul.f32 %v6249, %v6096
    %v6252 = vmul.f32 %v6249, %v6097
    %v6253 = vmul.f32 %v6249, %v6098
    %v6254 = vmul.f32 %v6249, %v6099
    %v6255 = vmul.f32 %v6249, %v6100
    %6261 = vrot.lane.b32.xlu0 %v6251, 78
    %v6262 = vpop.permute.xlu0 %6261
    %6263 = vrot.lane.b32.xlu0 %v6252, 78
    %v6264 = vpop.permute.xlu0 %6263
    %6265 = vrot.lane.b32.xlu0 %v6253, 78
    %v6266 = vpop.permute.xlu0 %6265
    %6267 = vrot.lane.b32.xlu0 %v6254, 78
    %v6268 = vpop.permute.xlu0 %6267
    %6269 = vrot.lane.b32.xlu0 %v6255, 78
    %v6270 = vpop.permute.xlu0 %6269
    %v6271 = vsel %vm369, %v6262, %v6264
    %v6272 = vsel %vm369, %v6264, %v6266
    %v6273 = vsel %vm369, %v6266, %v6268
    %v6274 = vsel %vm369, %v6268, %v6270
    %v6281 = vadd.f32 %v6241, %v6262
    %v6282 = vadd.f32 %v6242, %v6271
    %v6283 = vadd.f32 %v6243, %v6272
    %v6284 = vadd.f32 %v6244, %v6273
    %v6285 = vadd.f32 %v6245, %v6274
    %v6286 = vadd.f32 %v6246, %v6270
    %v6287 = vld [vmem:[#allocation2 + $0x8] sm:$0xff]
    %v6288 = vld [vmem:[#allocation2 + $0x10] sm:$0xff]
    %v6289 = vld [vmem:[#allocation2 + $0x18] sm:$0xff]
    %v6290 = vld [vmem:[#allocation2 + $0x20] sm:$0xff]
    %v6291 = vld [vmem:[#allocation2 + $0x28] sm:$0xff]
    %v6292 = vld [vmem:[#allocation2 + $0x30] sm:$0xff]
    %6293 = vset.pattern.permute.xlu0 5
    %6294 = vperm.xlu0 %6293, %v6094
    %v6295 = vpop.permute.xlu0 %6294
    %v6297 = vmul.f32 %v6295, %v6287
    %v6298 = vmul.f32 %v6295, %v6288
    %v6299 = vmul.f32 %v6295, %v6289
    %v6300 = vmul.f32 %v6295, %v6290
    %v6301 = vmul.f32 %v6295, %v6291
    %v6302 = vmul.f32 %v6295, %v6292
    %6309 = vrot.lane.b32.xlu0 %v6297, 76
    %v6310 = vpop.permute.xlu0 %6309
    %6311 = vrot.lane.b32.xlu0 %v6298, 76
    %v6312 = vpop.permute.xlu0 %6311
    %6313 = vrot.lane.b32.xlu0 %v6299, 76
    %v6314 = vpop.permute.xlu0 %6313
    %6315 = vrot.lane.b32.xlu0 %v6300, 76
    %v6316 = vpop.permute.xlu0 %6315
    %6317 = vrot.lane.b32.xlu0 %v6301, 76
    %v6318 = vpop.permute.xlu0 %6317
    %6319 = vrot.lane.b32.xlu0 %v6302, 76
    %v6320 = vpop.permute.xlu0 %6319
    %v6321 = vsel %vm3658, %v6310, %v6312
    %v6322 = vsel %vm3658, %v6312, %v6314
    %v6323 = vsel %vm3658, %v6314, %v6316
    %v6324 = vsel %vm3658, %v6316, %v6318
    %v6325 = vsel %vm3658, %v6318, %v6320
    %v6332 = vadd.f32 %v6281, %v6310
    %v6333 = vadd.f32 %v6282, %v6321
    %v6334 = vadd.f32 %v6283, %v6322
    %v6335 = vadd.f32 %v6284, %v6323
    %v6336 = vadd.f32 %v6285, %v6324
    %v6337 = vadd.f32 %v6286, %v6325
    %6338 = vset.pattern.permute.xlu0 6
    %6339 = vperm.xlu0 %6338, %v6094
    %v6340 = vpop.permute.xlu0 %6339
    %v6342 = vmul.f32 %v6340, %v6287
    %v6343 = vmul.f32 %v6340, %v6288
    %v6344 = vmul.f32 %v6340, %v6289
    %v6345 = vmul.f32 %v6340, %v6290
    %v6346 = vmul.f32 %v6340, %v6291
    %v6347 = vmul.f32 %v6340, %v6292
    %6354 = vrot.lane.b32.xlu0 %v6342, 32
    %v6355 = vpop.permute.xlu0 %6354
    %6356 = vrot.lane.b32.xlu0 %v6343, 32
    %v6357 = vpop.permute.xlu0 %6356
    %6358 = vrot.lane.b32.xlu0 %v6344, 32
    %v6359 = vpop.permute.xlu0 %6358
    %6360 = vrot.lane.b32.xlu0 %v6345, 32
    %v6361 = vpop.permute.xlu0 %6360
    %6362 = vrot.lane.b32.xlu0 %v6346, 32
    %v6363 = vpop.permute.xlu0 %6362
    %6364 = vrot.lane.b32.xlu0 %v6347, 32
    %v6365 = vpop.permute.xlu0 %6364
    %v6366 = vsel %vm3934, %v6355, %v6357
    %v6367 = vsel %vm3934, %v6357, %v6359
    %v6368 = vsel %vm3934, %v6359, %v6361
    %v6369 = vsel %vm3934, %v6361, %v6363
    %v6370 = vsel %vm3934, %v6363, %v6365
    %v6377 = vadd.f32 %v6332, %v6355
    %v6378 = vadd.f32 %v6333, %v6366
    %v6379 = vadd.f32 %v6334, %v6367
    %v6380 = vadd.f32 %v6335, %v6368
    %v6381 = vadd.f32 %v6336, %v6369
    %v6382 = vadd.f32 %v6337, %v6370
    %6383 = vset.pattern.permute.xlu0 7
    %6384 = vperm.xlu0 %6383, %v6094
    %v6385 = vpop.permute.xlu0 %6384
    %v6387 = vmul.f32 %v6385, %v6287
    %v6388 = vmul.f32 %v6385, %v6288
    %v6389 = vmul.f32 %v6385, %v6289
    %v6390 = vmul.f32 %v6385, %v6290
    %v6391 = vmul.f32 %v6385, %v6291
    %v6392 = vmul.f32 %v6385, %v6292
    %6399 = vrot.lane.b32.xlu0 %v6387, 30
    %v6400 = vpop.permute.xlu0 %6399
    %6401 = vrot.lane.b32.xlu0 %v6388, 30
    %v6402 = vpop.permute.xlu0 %6401
    %6403 = vrot.lane.b32.xlu0 %v6389, 30
    %v6404 = vpop.permute.xlu0 %6403
    %6405 = vrot.lane.b32.xlu0 %v6390, 30
    %v6406 = vpop.permute.xlu0 %6405
    %6407 = vrot.lane.b32.xlu0 %v6391, 30
    %v6408 = vpop.permute.xlu0 %6407
    %6409 = vrot.lane.b32.xlu0 %v6392, 30
    %v6410 = vpop.permute.xlu0 %6409
    %v6411 = vsel %vm4026, %v6400, %v6402
    %v6412 = vsel %vm4026, %v6402, %v6404
    %v6413 = vsel %vm4026, %v6404, %v6406
    %v6414 = vsel %vm4026, %v6406, %v6408
    %v6415 = vsel %vm4026, %v6408, %v6410
    %v6422 = vadd.f32 %v6377, %v6400
    %v6423 = vadd.f32 %v6378, %v6411
    %v6424 = vadd.f32 %v6379, %v6412
    %v6425 = vadd.f32 %v6380, %v6413
    %v6426 = vadd.f32 %v6381, %v6414
    %v6427 = vadd.f32 %v6382, %v6415
    %6428 = vset.pattern.permute.xlu0 8
    %6429 = vperm.xlu0 %6428, %v6094
    %v6430 = vpop.permute.xlu0 %6429
    %v6432 = vmul.f32 %v6430, %v6287
    %v6433 = vmul.f32 %v6430, %v6288
    %v6434 = vmul.f32 %v6430, %v6289
    %v6435 = vmul.f32 %v6430, %v6290
    %v6436 = vmul.f32 %v6430, %v6291
    %v6437 = vmul.f32 %v6430, %v6292
    %6444 = vrot.lane.b32.xlu0 %v6432, 28
    %v6445 = vpop.permute.xlu0 %6444
    %6446 = vrot.lane.b32.xlu0 %v6433, 28
    %v6447 = vpop.permute.xlu0 %6446
    %6448 = vrot.lane.b32.xlu0 %v6434, 28
    %v6449 = vpop.permute.xlu0 %6448
    %6450 = vrot.lane.b32.xlu0 %v6435, 28
    %v6451 = vpop.permute.xlu0 %6450
    %6452 = vrot.lane.b32.xlu0 %v6436, 28
    %v6453 = vpop.permute.xlu0 %6452
    %6454 = vrot.lane.b32.xlu0 %v6437, 28
    %v6455 = vpop.permute.xlu0 %6454
    %v6456 = vsel %vm4118, %v6445, %v6447
    %v6457 = vsel %vm4118, %v6447, %v6449
    %v6458 = vsel %vm4118, %v6449, %v6451
    %v6459 = vsel %vm4118, %v6451, %v6453
    %v6460 = vsel %vm4118, %v6453, %v6455
    %v6467 = vadd.f32 %v6422, %v6445
    %v6468 = vadd.f32 %v6423, %v6456
    %v6469 = vadd.f32 %v6424, %v6457
    %v6470 = vadd.f32 %v6425, %v6458
    %v6471 = vadd.f32 %v6426, %v6459
    %v6472 = vadd.f32 %v6427, %v6460
    %v6473 = vld [vmem:[#allocation3] sm:$0xff]
    %v6474 = vld [vmem:[#allocation3 + $0x8] sm:$0xff]
    %v6475 = vld [vmem:[#allocation3 + $0x10] sm:$0xff]
    %v6476 = vld [vmem:[#allocation3 + $0x18] sm:$0xff]
    %v6477 = vld [vmem:[#allocation3 + $0x20] sm:$0xff]
    %6483 = vrot.lane.b32.xlu0 %v6473, 78
    %v6484 = vpop.permute.xlu0 %6483
    %6485 = vrot.lane.b32.xlu0 %v6474, 78
    %v6486 = vpop.permute.xlu0 %6485
    %6487 = vrot.lane.b32.xlu0 %v6475, 78
    %v6488 = vpop.permute.xlu0 %6487
    %6489 = vrot.lane.b32.xlu0 %v6476, 78
    %v6490 = vpop.permute.xlu0 %6489
    %6491 = vrot.lane.b32.xlu0 %v6477, 78
    %v6492 = vpop.permute.xlu0 %6491
    %v6493 = vsel %vm369, %v6484, %v6486
    %v6494 = vsel %vm369, %v6486, %v6488
    %v6495 = vsel %vm369, %v6488, %v6490
    %v6496 = vsel %vm369, %v6490, %v6492
    %v6503 = vmul.f32 %v6467, %v6484
    %v6504 = vmul.f32 %v6468, %v6493
    %v6505 = vmul.f32 %v6469, %v6494
    %v6506 = vmul.f32 %v6470, %v6495
    %v6507 = vmul.f32 %v6471, %v6496
    %v6508 = vmul.f32 %v6472, %v6492
    %v6509 = vld [vmem:[%s14] sm:$0xff]
    %6516 = vrot.lane.b32.xlu0 %v6503, 50
    %v6517 = vpop.permute.xlu0 %6516
    %6518 = vrot.lane.b32.xlu0 %v6504, 50
    %v6519 = vpop.permute.xlu0 %6518
    %6520 = vrot.lane.b32.xlu0 %v6505, 50
    %v6521 = vpop.permute.xlu0 %6520
    %6522 = vrot.lane.b32.xlu0 %v6506, 50
    %v6523 = vpop.permute.xlu0 %6522
    %6524 = vrot.lane.b32.xlu0 %v6507, 50
    %v6525 = vpop.permute.xlu0 %6524
    %6526 = vrot.lane.b32.xlu0 %v6508, 50
    %v6527 = vpop.permute.xlu0 %6526
    %v6528 = vsel %vm4191, %v6517, %v6519
    %v6529 = vsel %vm4191, %v6519, %v6521
    %v6530 = vsel %vm4191, %v6521, %v6523
    %v6531 = vsel %vm4191, %v6523, %v6525
    %v6532 = vsel %vm4191, %v6525, %v6527
    %v6539 = vsel %vm453, %v6509, 0
    %6541 = vmatpush.msra.mxu0 0.0
    %6542 = vmatpush.msra.mxu0 0.0
    %6543 = vmatpush.msra.mxu0 0.0
    %6544 = vmatpush.msra.mxu0 0.0
    %6545 = vmatpush.msra.mxu0 0.0
    %6546 = vmatpush.msra.mxu0 0.0
    %6547 = vmatpush.msra.mxu0 0.0
    %6548 = vmatpush.msra.mxu0 0.0
    %6549 = vmatpush.msra.mxu0 0.0
    %6550 = vmatpush.msra.mxu0 0.0
    %6551 = vmatpush.msra.mxu0 0.0
    %6552 = vmatpush.msra.mxu0 0.0
    %6553 = vmatpush.msra.mxu0 0.0
    %6554 = vmatpush.msra.mxu0 0.0
    %6555 = vmatpush.msra.mxu0 0.0
    %6556 = vmatpush.msra.mxu0 %v6528
    %6557 = vmatmul.f32.gmra.mxu0 %v6539
    %v6558 = vpop.f32.mrf.mxu0
    %v6559 = vadd.f32 0.0, %v6558
    %6560 = vdwg.mxu0
    %6561 = vmatpush.msra.mxu0 0.0
    %6562 = vmatpush.msra.mxu0 0.0
    %6563 = vmatpush.msra.mxu0 0.0
    %6564 = vmatpush.msra.mxu0 0.0
    %6565 = vmatpush.msra.mxu0 0.0
    %6566 = vmatpush.msra.mxu0 0.0
    %6567 = vmatpush.msra.mxu0 0.0
    %6568 = vmatpush.msra.mxu0 0.0
    %6569 = vmatpush.msra.mxu0 0.0
    %6570 = vmatpush.msra.mxu0 0.0
    %6571 = vmatpush.msra.mxu0 0.0
    %6572 = vmatpush.msra.mxu0 0.0
    %6573 = vmatpush.msra.mxu0 0.0
    %6574 = vmatpush.msra.mxu0 0.0
    %6575 = vmatpush.msra.mxu0 0.0
    %6576 = vmatpush.msra.mxu0 %v6529
    %6577 = vmatmul.f32.gmra.mxu0 %v6539
    %v6578 = vpop.f32.mrf.mxu0
    %v6579 = vadd.f32 0.0, %v6578
    %6580 = vdwg.mxu0
    %6581 = vmatpush.msra.mxu0 0.0
    %6582 = vmatpush.msra.mxu0 0.0
    %6583 = vmatpush.msra.mxu0 0.0
    %6584 = vmatpush.msra.mxu0 0.0
    %6585 = vmatpush.msra.mxu0 0.0
    %6586 = vmatpush.msra.mxu0 0.0
    %6587 = vmatpush.msra.mxu0 0.0
    %6588 = vmatpush.msra.mxu0 0.0
    %6589 = vmatpush.msra.mxu0 0.0
    %6590 = vmatpush.msra.mxu0 0.0
    %6591 = vmatpush.msra.mxu0 0.0
    %6592 = vmatpush.msra.mxu0 0.0
    %6593 = vmatpush.msra.mxu0 0.0
    %6594 = vmatpush.msra.mxu0 0.0
    %6595 = vmatpush.msra.mxu0 0.0
    %6596 = vmatpush.msra.mxu0 %v6530
    %6597 = vmatmul.f32.gmra.mxu0 %v6539
    %v6598 = vpop.f32.mrf.mxu0
    %v6599 = vadd.f32 0.0, %v6598
    %6600 = vdwg.mxu0
    %6601 = vmatpush.msra.mxu0 0.0
    %6602 = vmatpush.msra.mxu0 0.0
    %6603 = vmatpush.msra.mxu0 0.0
    %6604 = vmatpush.msra.mxu0 0.0
    %6605 = vmatpush.msra.mxu0 0.0
    %6606 = vmatpush.msra.mxu0 0.0
    %6607 = vmatpush.msra.mxu0 0.0
    %6608 = vmatpush.msra.mxu0 0.0
    %6609 = vmatpush.msra.mxu0 0.0
    %6610 = vmatpush.msra.mxu0 0.0
    %6611 = vmatpush.msra.mxu0 0.0
    %6612 = vmatpush.msra.mxu0 0.0
    %6613 = vmatpush.msra.mxu0 0.0
    %6614 = vmatpush.msra.mxu0 0.0
    %6615 = vmatpush.msra.mxu0 0.0
    %6616 = vmatpush.msra.mxu0 %v6531
    %6617 = vmatmul.f32.gmra.mxu0 %v6539
    %v6618 = vpop.f32.mrf.mxu0
    %v6619 = vadd.f32 0.0, %v6618
    %6620 = vdwg.mxu0
    %6621 = vmatpush.msra.mxu0 0.0
    %6622 = vmatpush.msra.mxu0 0.0
    %6623 = vmatpush.msra.mxu0 0.0
    %6624 = vmatpush.msra.mxu0 0.0
    %6625 = vmatpush.msra.mxu0 0.0
    %6626 = vmatpush.msra.mxu0 0.0
    %6627 = vmatpush.msra.mxu0 0.0
    %6628 = vmatpush.msra.mxu0 0.0
    %6629 = vmatpush.msra.mxu0 0.0
    %6630 = vmatpush.msra.mxu0 0.0
    %6631 = vmatpush.msra.mxu0 0.0
    %6632 = vmatpush.msra.mxu0 0.0
    %6633 = vmatpush.msra.mxu0 0.0
    %6634 = vmatpush.msra.mxu0 0.0
    %6635 = vmatpush.msra.mxu0 0.0
    %6636 = vmatpush.msra.mxu0 %v6532
    %6637 = vmatmul.f32.gmra.mxu0 %v6539
    %v6638 = vpop.f32.mrf.mxu0
    %v6639 = vadd.f32 0.0, %v6638
    %6640 = vdwg.mxu0
    %v6641 = vld [vmem:[%s4] sm:$0xff]
    %v6643 = vsel %vm453, %v6641, 0
    %6645 = vmatpush.msra.mxu0 0.0
    %6646 = vmatpush.msra.mxu0 0.0
    %6647 = vmatpush.msra.mxu0 0.0
    %6648 = vmatpush.msra.mxu0 0.0
    %6649 = vmatpush.msra.mxu0 0.0
    %6650 = vmatpush.msra.mxu0 0.0
    %6651 = vmatpush.msra.mxu0 0.0
    %6652 = vmatpush.msra.mxu0 0.0
    %6653 = vmatpush.msra.mxu0 0.0
    %6654 = vmatpush.msra.mxu0 0.0
    %6655 = vmatpush.msra.mxu0 0.0
    %6656 = vmatpush.msra.mxu0 0.0
    %6657 = vmatpush.msra.mxu0 0.0
    %6658 = vmatpush.msra.mxu0 0.0
    %6659 = vmatpush.msra.mxu0 0.0
    %6660 = vmatpush.msra.mxu0 %v6559
    %6661 = vmatmul.f32.gmra.mxu0 %v6643
    %v6662 = vpop.f32.mrf.mxu0
    %v6663 = vadd.f32 0.0, %v6662
    %6664 = vdwg.mxu0
    %6665 = vmatpush.msra.mxu0 0.0
    %6666 = vmatpush.msra.mxu0 0.0
    %6667 = vmatpush.msra.mxu0 0.0
    %6668 = vmatpush.msra.mxu0 0.0
    %6669 = vmatpush.msra.mxu0 0.0
    %6670 = vmatpush.msra.mxu0 0.0
    %6671 = vmatpush.msra.mxu0 0.0
    %6672 = vmatpush.msra.mxu0 0.0
    %6673 = vmatpush.msra.mxu0 0.0
    %6674 = vmatpush.msra.mxu0 0.0
    %6675 = vmatpush.msra.mxu0 0.0
    %6676 = vmatpush.msra.mxu0 0.0
    %6677 = vmatpush.msra.mxu0 0.0
    %6678 = vmatpush.msra.mxu0 0.0
    %6679 = vmatpush.msra.mxu0 0.0
    %6680 = vmatpush.msra.mxu0 %v6579
    %6681 = vmatmul.f32.gmra.mxu0 %v6643
    %v6682 = vpop.f32.mrf.mxu0
    %v6683 = vadd.f32 0.0, %v6682
    %6684 = vdwg.mxu0
    %6685 = vmatpush.msra.mxu0 0.0
    %6686 = vmatpush.msra.mxu0 0.0
    %6687 = vmatpush.msra.mxu0 0.0
    %6688 = vmatpush.msra.mxu0 0.0
    %6689 = vmatpush.msra.mxu0 0.0
    %6690 = vmatpush.msra.mxu0 0.0
    %6691 = vmatpush.msra.mxu0 0.0
    %6692 = vmatpush.msra.mxu0 0.0
    %6693 = vmatpush.msra.mxu0 0.0
    %6694 = vmatpush.msra.mxu0 0.0
    %6695 = vmatpush.msra.mxu0 0.0
    %6696 = vmatpush.msra.mxu0 0.0
    %6697 = vmatpush.msra.mxu0 0.0
    %6698 = vmatpush.msra.mxu0 0.0
    %6699 = vmatpush.msra.mxu0 0.0
    %6700 = vmatpush.msra.mxu0 %v6599
    %6701 = vmatmul.f32.gmra.mxu0 %v6643
    %v6702 = vpop.f32.mrf.mxu0
    %v6703 = vadd.f32 0.0, %v6702
    %6704 = vdwg.mxu0
    %6705 = vmatpush.msra.mxu0 0.0
    %6706 = vmatpush.msra.mxu0 0.0
    %6707 = vmatpush.msra.mxu0 0.0
    %6708 = vmatpush.msra.mxu0 0.0
    %6709 = vmatpush.msra.mxu0 0.0
    %6710 = vmatpush.msra.mxu0 0.0
    %6711 = vmatpush.msra.mxu0 0.0
    %6712 = vmatpush.msra.mxu0 0.0
    %6713 = vmatpush.msra.mxu0 0.0
    %6714 = vmatpush.msra.mxu0 0.0
    %6715 = vmatpush.msra.mxu0 0.0
    %6716 = vmatpush.msra.mxu0 0.0
    %6717 = vmatpush.msra.mxu0 0.0
    %6718 = vmatpush.msra.mxu0 0.0
    %6719 = vmatpush.msra.mxu0 0.0
    %6720 = vmatpush.msra.mxu0 %v6619
    %6721 = vmatmul.f32.gmra.mxu0 %v6643
    %v6722 = vpop.f32.mrf.mxu0
    %v6723 = vadd.f32 0.0, %v6722
    %6724 = vdwg.mxu0
    %6725 = vmatpush.msra.mxu0 0.0
    %6726 = vmatpush.msra.mxu0 0.0
    %6727 = vmatpush.msra.mxu0 0.0
    %6728 = vmatpush.msra.mxu0 0.0
    %6729 = vmatpush.msra.mxu0 0.0
    %6730 = vmatpush.msra.mxu0 0.0
    %6731 = vmatpush.msra.mxu0 0.0
    %6732 = vmatpush.msra.mxu0 0.0
    %6733 = vmatpush.msra.mxu0 0.0
    %6734 = vmatpush.msra.mxu0 0.0
    %6735 = vmatpush.msra.mxu0 0.0
    %6736 = vmatpush.msra.mxu0 0.0
    %6737 = vmatpush.msra.mxu0 0.0
    %6738 = vmatpush.msra.mxu0 0.0
    %6739 = vmatpush.msra.mxu0 0.0
    %6740 = vmatpush.msra.mxu0 %v6639
    %6741 = vmatmul.f32.gmra.mxu0 %v6643
    %v6742 = vpop.f32.mrf.mxu0
    %v6743 = vadd.f32 0.0, %v6742
    %6744 = vdwg.mxu0
    %v6745 = vadd.f32 %v6663, %v6683
    %v6746 = vadd.f32 %v6745, %v6703
    %v6747 = vadd.f32 %v6746, %v6723
    %v6748 = vadd.f32 %v6747, %v6743
    %6749 = vadd.xlane.f32.xlu0 %v6748
    %v6750 = vpop.xlane.xlu0 %6749
    %v6751 = vmul.f32 %v6750, 0.001953125
    %v6752 = vmul.f32 %v6559, %v6559
    %v6753 = vmul.f32 %v6579, %v6579
    %v6754 = vmul.f32 %v6599, %v6599
    %v6755 = vmul.f32 %v6619, %v6619
    %v6756 = vmul.f32 %v6639, %v6639
    %6757 = vmatpush.msra.mxu0 0.0
    %6758 = vmatpush.msra.mxu0 0.0
    %6759 = vmatpush.msra.mxu0 0.0
    %6760 = vmatpush.msra.mxu0 0.0
    %6761 = vmatpush.msra.mxu0 0.0
    %6762 = vmatpush.msra.mxu0 0.0
    %6763 = vmatpush.msra.mxu0 0.0
    %6764 = vmatpush.msra.mxu0 0.0
    %6765 = vmatpush.msra.mxu0 0.0
    %6766 = vmatpush.msra.mxu0 0.0
    %6767 = vmatpush.msra.mxu0 0.0
    %6768 = vmatpush.msra.mxu0 0.0
    %6769 = vmatpush.msra.mxu0 0.0
    %6770 = vmatpush.msra.mxu0 0.0
    %6771 = vmatpush.msra.mxu0 0.0
    %6772 = vmatpush.msra.mxu0 %v6752
    %6773 = vmatmul.f32.gmra.mxu0 %v6643
    %v6774 = vpop.f32.mrf.mxu0
    %v6775 = vadd.f32 0.0, %v6774
    %6776 = vdwg.mxu0
    %6777 = vmatpush.msra.mxu0 0.0
    %6778 = vmatpush.msra.mxu0 0.0
    %6779 = vmatpush.msra.mxu0 0.0
    %6780 = vmatpush.msra.mxu0 0.0
    %6781 = vmatpush.msra.mxu0 0.0
    %6782 = vmatpush.msra.mxu0 0.0
    %6783 = vmatpush.msra.mxu0 0.0
    %6784 = vmatpush.msra.mxu0 0.0
    %6785 = vmatpush.msra.mxu0 0.0
    %6786 = vmatpush.msra.mxu0 0.0
    %6787 = vmatpush.msra.mxu0 0.0
    %6788 = vmatpush.msra.mxu0 0.0
    %6789 = vmatpush.msra.mxu0 0.0
    %6790 = vmatpush.msra.mxu0 0.0
    %6791 = vmatpush.msra.mxu0 0.0
    %6792 = vmatpush.msra.mxu0 %v6753
    %6793 = vmatmul.f32.gmra.mxu0 %v6643
    %v6794 = vpop.f32.mrf.mxu0
    %v6795 = vadd.f32 0.0, %v6794
    %6796 = vdwg.mxu0
    %6797 = vmatpush.msra.mxu0 0.0
    %6798 = vmatpush.msra.mxu0 0.0
    %6799 = vmatpush.msra.mxu0 0.0
    %6800 = vmatpush.msra.mxu0 0.0
    %6801 = vmatpush.msra.mxu0 0.0
    %6802 = vmatpush.msra.mxu0 0.0
    %6803 = vmatpush.msra.mxu0 0.0
    %6804 = vmatpush.msra.mxu0 0.0
    %6805 = vmatpush.msra.mxu0 0.0
    %6806 = vmatpush.msra.mxu0 0.0
    %6807 = vmatpush.msra.mxu0 0.0
    %6808 = vmatpush.msra.mxu0 0.0
    %6809 = vmatpush.msra.mxu0 0.0
    %6810 = vmatpush.msra.mxu0 0.0
    %6811 = vmatpush.msra.mxu0 0.0
    %6812 = vmatpush.msra.mxu0 %v6754
    %6813 = vmatmul.f32.gmra.mxu0 %v6643
    %v6814 = vpop.f32.mrf.mxu0
    %v6815 = vadd.f32 0.0, %v6814
    %6816 = vdwg.mxu0
    %6817 = vmatpush.msra.mxu0 0.0
    %6818 = vmatpush.msra.mxu0 0.0
    %6819 = vmatpush.msra.mxu0 0.0
    %6820 = vmatpush.msra.mxu0 0.0
    %6821 = vmatpush.msra.mxu0 0.0
    %6822 = vmatpush.msra.mxu0 0.0
    %6823 = vmatpush.msra.mxu0 0.0
    %6824 = vmatpush.msra.mxu0 0.0
    %6825 = vmatpush.msra.mxu0 0.0
    %6826 = vmatpush.msra.mxu0 0.0
    %6827 = vmatpush.msra.mxu0 0.0
    %6828 = vmatpush.msra.mxu0 0.0
    %6829 = vmatpush.msra.mxu0 0.0
    %6830 = vmatpush.msra.mxu0 0.0
    %6831 = vmatpush.msra.mxu0 0.0
    %6832 = vmatpush.msra.mxu0 %v6755
    %6833 = vmatmul.f32.gmra.mxu0 %v6643
    %v6834 = vpop.f32.mrf.mxu0
    %v6835 = vadd.f32 0.0, %v6834
    %6836 = vdwg.mxu0
    %6837 = vmatpush.msra.mxu0 0.0
    %6838 = vmatpush.msra.mxu0 0.0
    %6839 = vmatpush.msra.mxu0 0.0
    %6840 = vmatpush.msra.mxu0 0.0
    %6841 = vmatpush.msra.mxu0 0.0
    %6842 = vmatpush.msra.mxu0 0.0
    %6843 = vmatpush.msra.mxu0 0.0
    %6844 = vmatpush.msra.mxu0 0.0
    %6845 = vmatpush.msra.mxu0 0.0
    %6846 = vmatpush.msra.mxu0 0.0
    %6847 = vmatpush.msra.mxu0 0.0
    %6848 = vmatpush.msra.mxu0 0.0
    %6849 = vmatpush.msra.mxu0 0.0
    %6850 = vmatpush.msra.mxu0 0.0
    %6851 = vmatpush.msra.mxu0 0.0
    %6852 = vmatpush.msra.mxu0 %v6756
    %6853 = vmatmul.f32.gmra.mxu0 %v6643
    %v6854 = vpop.f32.mrf.mxu0
    %v6855 = vadd.f32 0.0, %v6854
    %6856 = vdwg.mxu0
    %v6857 = vadd.f32 %v6775, %v6795
    %v6858 = vadd.f32 %v6857, %v6815
    %v6859 = vadd.f32 %v6858, %v6835
    %v6860 = vadd.f32 %v6859, %v6855
    %6861 = vadd.xlane.f32.xlu0 %v6860
    %v6862 = vpop.xlane.xlu0 %6861
    %v6863 = vmul.f32 %v6862, 0.001953125
    %v6864 = vmul.f32 %v6751, %v6751
    %v6865 = vsub.f32 %v6863, %v6864
    %v6866 = vmax.f32 %v6865, 0.0
    %v6867 = vadd.f32 %v6866, 1e-05
    %v6868 = vrsqrt.pop %v6867
    %v6869 = vmul.f32 %v6868, %v6867
    %v6870 = vmul.f32 %v6869, %v6868
    %v6871 = vmul.f32 0.5, %v6870
    %v6872 = vsub.f32 1.5, %v6871
    %v6873 = vmul.f32 %v6868, %v6872
    %vm6874 = vweird.f32 %v6867
    %vm6875 = vweird.f32 %v6868
    %vm6876 = vmor %vm6874, %vm6875
    %v6877 = vsel %vm6876, %v6868, %v6873
    %v6878 = vstv %s6088
    %v6879 = vmul.f32 %v6877, %v6878
    %v6880 = vsub.f32 %v6559, %v6751
    %v6881 = vsub.f32 %v6579, %v6751
    %v6882 = vsub.f32 %v6599, %v6751
    %v6883 = vsub.f32 %v6619, %v6751
    %v6884 = vsub.f32 %v6639, %v6751
    %v6885 = vmul.f32 %v6880, %v6879
    %v6886 = vmul.f32 %v6881, %v6879
    %v6887 = vmul.f32 %v6882, %v6879
    %v6888 = vmul.f32 %v6883, %v6879
    %v6889 = vmul.f32 %v6884, %v6879
    %v6890 = vadd.f32 %v6083, %v6885
    %v6891 = vadd.f32 %v6084, %v6886
    %v6892 = vadd.f32 %v6085, %v6887
    %v6893 = vadd.f32 %v6086, %v6888
    %v6894 = vadd.f32 %v6087, %v6889
    %s6895 = sld [smem:[#allocation4 + $0x7]]
    %6896 = vst [vmem:[#allocation2 + $0x8] sm:$0xff] %v93
    %6897 = vst [vmem:[#allocation2 + $0x10] sm:$0xff] %v94
    %6898 = vst [vmem:[#allocation2 + $0x18] sm:$0xff] %v95
    %6899 = vst [vmem:[#allocation2 + $0x20] sm:$0xff] %v96
    %6900 = vst [vmem:[#allocation2 + $0x28] sm:$0xff] %v97
    %v6901 = vld [vmem:[%s15] sm:$0xff]
    %v6902 = vld [vmem:[#allocation2] sm:$0xff]
    %v6903 = vld [vmem:[#allocation2 + $0x8] sm:$0xff]
    %v6904 = vld [vmem:[#allocation2 + $0x10] sm:$0xff]
    %v6905 = vld [vmem:[#allocation2 + $0x18] sm:$0xff]
    %v6906 = vld [vmem:[#allocation2 + $0x20] sm:$0xff]
    %v6907 = vld [vmem:[#allocation2 + $0x28] sm:$0xff]
    %6909 = vset.pattern.permute.xlu0 0
    %6910 = vperm.xlu0 %6909, %v6901
    %v6911 = vpop.permute.xlu0 %6910
    %v6913 = vmul.f32 %v6911, %v6902
    %v6914 = vmul.f32 %v6911, %v6903
    %v6915 = vmul.f32 %v6911, %v6904
    %v6916 = vmul.f32 %v6911, %v6905
    %v6917 = vmul.f32 %v6911, %v6906
    %v6918 = vmul.f32 %v6911, %v6907
    %6919 = vset.pattern.permute.xlu0 1
    %6920 = vperm.xlu0 %6919, %v6901
    %v6921 = vpop.permute.xlu0 %6920
    %v6923 = vmul.f32 %v6921, %v6902
    %v6924 = vmul.f32 %v6921, %v6903
    %v6925 = vmul.f32 %v6921, %v6904
    %v6926 = vmul.f32 %v6921, %v6905
    %v6927 = vmul.f32 %v6921, %v6906
    %v6928 = vmul.f32 %v6921, %v6907
    %6935 = vrot.lane.b32.xlu0 %v6923, 126
    %v6936 = vpop.permute.xlu0 %6935
    %6937 = vrot.lane.b32.xlu0 %v6924, 126
    %v6938 = vpop.permute.xlu0 %6937
    %6939 = vrot.lane.b32.xlu0 %v6925, 126
    %v6940 = vpop.permute.xlu0 %6939
    %6941 = vrot.lane.b32.xlu0 %v6926, 126
    %v6942 = vpop.permute.xlu0 %6941
    %6943 = vrot.lane.b32.xlu0 %v6927, 126
    %v6944 = vpop.permute.xlu0 %6943
    %6945 = vrot.lane.b32.xlu0 %v6928, 126
    %v6946 = vpop.permute.xlu0 %6945
    %v6947 = vsel %vm180, %v6936, %v6938
    %v6948 = vsel %vm180, %v6938, %v6940
    %v6949 = vsel %vm180, %v6940, %v6942
    %v6950 = vsel %vm180, %v6942, %v6944
    %v6951 = vsel %vm180, %v6944, %v6946
    %v6958 = vadd.f32 %v6913, %v6947
    %v6959 = vadd.f32 %v6914, %v6948
    %v6960 = vadd.f32 %v6915, %v6949
    %v6961 = vadd.f32 %v6916, %v6950
    %v6962 = vadd.f32 %v6917, %v6951
    %v6963 = vadd.f32 %v6918, %v6946
    %6964 = vset.pattern.permute.xlu0 2
    %6965 = vperm.xlu0 %6964, %v6901
    %v6966 = vpop.permute.xlu0 %6965
    %v6968 = vmul.f32 %v6966, %v6902
    %v6969 = vmul.f32 %v6966, %v6903
    %v6970 = vmul.f32 %v6966, %v6904
    %v6971 = vmul.f32 %v6966, %v6905
    %v6972 = vmul.f32 %v6966, %v6906
    %v6973 = vmul.f32 %v6966, %v6907
    %6980 = vrot.lane.b32.xlu0 %v6968, 124
    %v6981 = vpop.permute.xlu0 %6980
    %6982 = vrot.lane.b32.xlu0 %v6969, 124
    %v6983 = vpop.permute.xlu0 %6982
    %6984 = vrot.lane.b32.xlu0 %v6970, 124
    %v6985 = vpop.permute.xlu0 %6984
    %6986 = vrot.lane.b32.xlu0 %v6971, 124
    %v6987 = vpop.permute.xlu0 %6986
    %6988 = vrot.lane.b32.xlu0 %v6972, 124
    %v6989 = vpop.permute.xlu0 %6988
    %6990 = vrot.lane.b32.xlu0 %v6973, 124
    %v6991 = vpop.permute.xlu0 %6990
    %v6992 = vsel %vm3203, %v6981, %v6983
    %v6993 = vsel %vm3203, %v6983, %v6985
    %v6994 = vsel %vm3203, %v6985, %v6987
    %v6995 = vsel %vm3203, %v6987, %v6989
    %v6996 = vsel %vm3203, %v6989, %v6991
    %v7003 = vadd.f32 %v6958, %v6992
    %v7004 = vadd.f32 %v6959, %v6993
    %v7005 = vadd.f32 %v6960, %v6994
    %v7006 = vadd.f32 %v6961, %v6995
    %v7007 = vadd.f32 %v6962, %v6996
    %v7008 = vadd.f32 %v6963, %v6991
    %7009 = vset.pattern.permute.xlu0 3
    %7010 = vperm.xlu0 %7009, %v6901
    %v7011 = vpop.permute.xlu0 %7010
    %v7013 = vmul.f32 %v7011, %v6902
    %v7014 = vmul.f32 %v7011, %v6903
    %v7015 = vmul.f32 %v7011, %v6904
    %v7016 = vmul.f32 %v7011, %v6905
    %v7017 = vmul.f32 %v7011, %v6906
    %v7018 = vmul.f32 %v7011, %v6907
    %7025 = vrot.lane.b32.xlu0 %v7013, 122
    %v7026 = vpop.permute.xlu0 %7025
    %7027 = vrot.lane.b32.xlu0 %v7014, 122
    %v7028 = vpop.permute.xlu0 %7027
    %7029 = vrot.lane.b32.xlu0 %v7015, 122
    %v7030 = vpop.permute.xlu0 %7029
    %7031 = vrot.lane.b32.xlu0 %v7016, 122
    %v7032 = vpop.permute.xlu0 %7031
    %7033 = vrot.lane.b32.xlu0 %v7017, 122
    %v7034 = vpop.permute.xlu0 %7033
    %7035 = vrot.lane.b32.xlu0 %v7018, 122
    %v7036 = vpop.permute.xlu0 %7035
    %vm7037 = vcmask 998400
    %v7038 = vsel %vm7037, %v7026, %v7028
    %v7039 = vsel %vm7037, %v7028, %v7030
    %v7040 = vsel %vm7037, %v7030, %v7032
    %v7041 = vsel %vm7037, %v7032, %v7034
    %v7042 = vsel %vm7037, %v7034, %v7036
    %v7049 = vadd.f32 %v7003, %v7038
    %v7050 = vadd.f32 %v7004, %v7039
    %v7051 = vadd.f32 %v7005, %v7040
    %v7052 = vadd.f32 %v7006, %v7041
    %v7053 = vadd.f32 %v7007, %v7042
    %v7054 = vadd.f32 %v7008, %v7036
    %7055 = vset.pattern.permute.xlu0 4
    %7056 = vperm.xlu0 %7055, %v6901
    %v7057 = vpop.permute.xlu0 %7056
    %v7059 = vmul.f32 %v7057, %v6902
    %v7060 = vmul.f32 %v7057, %v6903
    %v7061 = vmul.f32 %v7057, %v6904
    %v7062 = vmul.f32 %v7057, %v6905
    %v7063 = vmul.f32 %v7057, %v6906
    %v7064 = vmul.f32 %v7057, %v6907
    %7071 = vrot.lane.b32.xlu0 %v7059, 120
    %v7072 = vpop.permute.xlu0 %7071
    %7073 = vrot.lane.b32.xlu0 %v7060, 120
    %v7074 = vpop.permute.xlu0 %7073
    %7075 = vrot.lane.b32.xlu0 %v7061, 120
    %v7076 = vpop.permute.xlu0 %7075
    %7077 = vrot.lane.b32.xlu0 %v7062, 120
    %v7078 = vpop.permute.xlu0 %7077
    %7079 = vrot.lane.b32.xlu0 %v7063, 120
    %v7080 = vpop.permute.xlu0 %7079
    %7081 = vrot.lane.b32.xlu0 %v7064, 120
    %v7082 = vpop.permute.xlu0 %7081
    %vm7083 = vcmask 982016
    %v7084 = vsel %vm7083, %v7072, %v7074
    %v7085 = vsel %vm7083, %v7074, %v7076
    %v7086 = vsel %vm7083, %v7076, %v7078
    %v7087 = vsel %vm7083, %v7078, %v7080
    %v7088 = vsel %vm7083, %v7080, %v7082
    %v7095 = vadd.f32 %v7049, %v7084
    %v7096 = vadd.f32 %v7050, %v7085
    %v7097 = vadd.f32 %v7051, %v7086
    %v7098 = vadd.f32 %v7052, %v7087
    %v7099 = vadd.f32 %v7053, %v7088
    %v7100 = vadd.f32 %v7054, %v7082
    %7101 = vset.pattern.permute.xlu0 5
    %7102 = vperm.xlu0 %7101, %v6901
    %v7103 = vpop.permute.xlu0 %7102
    %v7105 = vmul.f32 %v7103, %v6902
    %v7106 = vmul.f32 %v7103, %v6903
    %v7107 = vmul.f32 %v7103, %v6904
    %v7108 = vmul.f32 %v7103, %v6905
    %v7109 = vmul.f32 %v7103, %v6906
    %v7110 = vmul.f32 %v7103, %v6907
    %7117 = vrot.lane.b32.xlu0 %v7105, 80
    %v7118 = vpop.permute.xlu0 %7117
    %7119 = vrot.lane.b32.xlu0 %v7106, 80
    %v7120 = vpop.permute.xlu0 %7119
    %7121 = vrot.lane.b32.xlu0 %v7107, 80
    %v7122 = vpop.permute.xlu0 %7121
    %7123 = vrot.lane.b32.xlu0 %v7108, 80
    %v7124 = vpop.permute.xlu0 %7123
    %7125 = vrot.lane.b32.xlu0 %v7109, 80
    %v7126 = vpop.permute.xlu0 %7125
    %7127 = vrot.lane.b32.xlu0 %v7110, 80
    %v7128 = vpop.permute.xlu0 %7127
    %v7129 = vsel %vm309, %v7118, %v7120
    %v7130 = vsel %vm309, %v7120, %v7122
    %v7131 = vsel %vm309, %v7122, %v7124
    %v7132 = vsel %vm309, %v7124, %v7126
    %v7133 = vsel %vm309, %v7126, %v7128
    %v7140 = vadd.f32 %v7095, %v7129
    %v7141 = vadd.f32 %v7096, %v7130
    %v7142 = vadd.f32 %v7097, %v7131
    %v7143 = vadd.f32 %v7098, %v7132
    %v7144 = vadd.f32 %v7099, %v7133
    %v7145 = vadd.f32 %v7100, %v7128
    %7146 = vset.pattern.permute.xlu0 6
    %7147 = vperm.xlu0 %7146, %v6901
    %v7148 = vpop.permute.xlu0 %7147
    %v7150 = vmul.f32 %v7148, %v6902
    %v7151 = vmul.f32 %v7148, %v6903
    %v7152 = vmul.f32 %v7148, %v6904
    %v7153 = vmul.f32 %v7148, %v6905
    %v7154 = vmul.f32 %v7148, %v6906
    %v7155 = vmul.f32 %v7148, %v6907
    %7162 = vrot.lane.b32.xlu0 %v7150, 78
    %v7163 = vpop.permute.xlu0 %7162
    %7164 = vrot.lane.b32.xlu0 %v7151, 78
    %v7165 = vpop.permute.xlu0 %7164
    %7166 = vrot.lane.b32.xlu0 %v7152, 78
    %v7167 = vpop.permute.xlu0 %7166
    %7168 = vrot.lane.b32.xlu0 %v7153, 78
    %v7169 = vpop.permute.xlu0 %7168
    %7170 = vrot.lane.b32.xlu0 %v7154, 78
    %v7171 = vpop.permute.xlu0 %7170
    %7172 = vrot.lane.b32.xlu0 %v7155, 78
    %v7173 = vpop.permute.xlu0 %7172
    %v7174 = vsel %vm369, %v7163, %v7165
    %v7175 = vsel %vm369, %v7165, %v7167
    %v7176 = vsel %vm369, %v7167, %v7169
    %v7177 = vsel %vm369, %v7169, %v7171
    %v7178 = vsel %vm369, %v7171, %v7173
    %v7185 = vadd.f32 %v7140, %v7174
    %v7186 = vadd.f32 %v7141, %v7175
    %v7187 = vadd.f32 %v7142, %v7176
    %v7188 = vadd.f32 %v7143, %v7177
    %v7189 = vadd.f32 %v7144, %v7178
    %v7190 = vadd.f32 %v7145, %v7173
    %7191 = vset.pattern.permute.xlu0 7
    %7192 = vperm.xlu0 %7191, %v6901
    %v7193 = vpop.permute.xlu0 %7192
    %v7195 = vmul.f32 %v7193, %v6902
    %v7196 = vmul.f32 %v7193, %v6903
    %v7197 = vmul.f32 %v7193, %v6904
    %v7198 = vmul.f32 %v7193, %v6905
    %v7199 = vmul.f32 %v7193, %v6906
    %v7200 = vmul.f32 %v7193, %v6907
    %7207 = vrot.lane.b32.xlu0 %v7195, 76
    %v7208 = vpop.permute.xlu0 %7207
    %7209 = vrot.lane.b32.xlu0 %v7196, 76
    %v7210 = vpop.permute.xlu0 %7209
    %7211 = vrot.lane.b32.xlu0 %v7197, 76
    %v7212 = vpop.permute.xlu0 %7211
    %7213 = vrot.lane.b32.xlu0 %v7198, 76
    %v7214 = vpop.permute.xlu0 %7213
    %7215 = vrot.lane.b32.xlu0 %v7199, 76
    %v7216 = vpop.permute.xlu0 %7215
    %7217 = vrot.lane.b32.xlu0 %v7200, 76
    %v7218 = vpop.permute.xlu0 %7217
    %v7219 = vsel %vm3658, %v7208, %v7210
    %v7220 = vsel %vm3658, %v7210, %v7212
    %v7221 = vsel %vm3658, %v7212, %v7214
    %v7222 = vsel %vm3658, %v7214, %v7216
    %v7223 = vsel %vm3658, %v7216, %v7218
    %v7230 = vadd.f32 %v7185, %v7219
    %v7231 = vadd.f32 %v7186, %v7220
    %v7232 = vadd.f32 %v7187, %v7221
    %v7233 = vadd.f32 %v7188, %v7222
    %v7234 = vadd.f32 %v7189, %v7223
    %v7235 = vadd.f32 %v7190, %v7218
    %7236 = vset.pattern.permute.xlu0 8
    %7237 = vperm.xlu0 %7236, %v6901
    %v7238 = vpop.permute.xlu0 %7237
    %v7240 = vmul.f32 %v7238, %v6902
    %v7241 = vmul.f32 %v7238, %v6903
    %v7242 = vmul.f32 %v7238, %v6904
    %v7243 = vmul.f32 %v7238, %v6905
    %v7244 = vmul.f32 %v7238, %v6906
    %v7245 = vmul.f32 %v7238, %v6907
    %7252 = vrot.lane.b32.xlu0 %v7240, 74
    %v7253 = vpop.permute.xlu0 %7252
    %7254 = vrot.lane.b32.xlu0 %v7241, 74
    %v7255 = vpop.permute.xlu0 %7254
    %7256 = vrot.lane.b32.xlu0 %v7242, 74
    %v7257 = vpop.permute.xlu0 %7256
    %7258 = vrot.lane.b32.xlu0 %v7243, 74
    %v7259 = vpop.permute.xlu0 %7258
    %7260 = vrot.lane.b32.xlu0 %v7244, 74
    %v7261 = vpop.permute.xlu0 %7260
    %7262 = vrot.lane.b32.xlu0 %v7245, 74
    %v7263 = vpop.permute.xlu0 %7262
    %vm7264 = vcmask 605184
    %v7265 = vsel %vm7264, %v7253, %v7255
    %v7266 = vsel %vm7264, %v7255, %v7257
    %v7267 = vsel %vm7264, %v7257, %v7259
    %v7268 = vsel %vm7264, %v7259, %v7261
    %v7269 = vsel %vm7264, %v7261, %v7263
    %v7276 = vadd.f32 %v7230, %v7265
    %v7277 = vadd.f32 %v7231, %v7266
    %v7278 = vadd.f32 %v7232, %v7267
    %v7279 = vadd.f32 %v7233, %v7268
    %v7280 = vadd.f32 %v7234, %v7269
    %v7281 = vadd.f32 %v7235, %v7263
    %7282 = vset.pattern.permute.xlu0 9
    %7283 = vperm.xlu0 %7282, %v6901
    %v7284 = vpop.permute.xlu0 %7283
    %v7286 = vmul.f32 %v7284, %v6902
    %v7287 = vmul.f32 %v7284, %v6903
    %v7288 = vmul.f32 %v7284, %v6904
    %v7289 = vmul.f32 %v7284, %v6905
    %v7290 = vmul.f32 %v7284, %v6906
    %v7291 = vmul.f32 %v7284, %v6907
    %7298 = vrot.lane.b32.xlu0 %v7286, 72
    %v7299 = vpop.permute.xlu0 %7298
    %7300 = vrot.lane.b32.xlu0 %v7287, 72
    %v7301 = vpop.permute.xlu0 %7300
    %7302 = vrot.lane.b32.xlu0 %v7288, 72
    %v7303 = vpop.permute.xlu0 %7302
    %7304 = vrot.lane.b32.xlu0 %v7289, 72
    %v7305 = vpop.permute.xlu0 %7304
    %7306 = vrot.lane.b32.xlu0 %v7290, 72
    %v7307 = vpop.permute.xlu0 %7306
    %7308 = vrot.lane.b32.xlu0 %v7291, 72
    %v7309 = vpop.permute.xlu0 %7308
    %vm7310 = vcmask 588800
    %v7311 = vsel %vm7310, %v7299, %v7301
    %v7312 = vsel %vm7310, %v7301, %v7303
    %v7313 = vsel %vm7310, %v7303, %v7305
    %v7314 = vsel %vm7310, %v7305, %v7307
    %v7315 = vsel %vm7310, %v7307, %v7309
    %v7322 = vadd.f32 %v7276, %v7311
    %v7323 = vadd.f32 %v7277, %v7312
    %v7324 = vadd.f32 %v7278, %v7313
    %v7325 = vadd.f32 %v7279, %v7314
    %v7326 = vadd.f32 %v7280, %v7315
    %v7327 = vadd.f32 %v7281, %v7309
    %7328 = vset.pattern.permute.xlu0 10
    %7329 = vperm.xlu0 %7328, %v6901
    %v7330 = vpop.permute.xlu0 %7329
    %v7332 = vmul.f32 %v7330, %v6902
    %v7333 = vmul.f32 %v7330, %v6903
    %v7334 = vmul.f32 %v7330, %v6904
    %v7335 = vmul.f32 %v7330, %v6905
    %v7336 = vmul.f32 %v7330, %v6906
    %v7337 = vmul.f32 %v7330, %v6907
    %7344 = vrot.lane.b32.xlu0 %v7332, 32
    %v7345 = vpop.permute.xlu0 %7344
    %7346 = vrot.lane.b32.xlu0 %v7333, 32
    %v7347 = vpop.permute.xlu0 %7346
    %7348 = vrot.lane.b32.xlu0 %v7334, 32
    %v7349 = vpop.permute.xlu0 %7348
    %7350 = vrot.lane.b32.xlu0 %v7335, 32
    %v7351 = vpop.permute.xlu0 %7350
    %7352 = vrot.lane.b32.xlu0 %v7336, 32
    %v7353 = vpop.permute.xlu0 %7352
    %7354 = vrot.lane.b32.xlu0 %v7337, 32
    %v7355 = vpop.permute.xlu0 %7354
    %v7356 = vsel %vm3934, %v7345, %v7347
    %v7357 = vsel %vm3934, %v7347, %v7349
    %v7358 = vsel %vm3934, %v7349, %v7351
    %v7359 = vsel %vm3934, %v7351, %v7353
    %v7360 = vsel %vm3934, %v7353, %v7355
    %v7367 = vadd.f32 %v7322, %v7356
    %v7368 = vadd.f32 %v7323, %v7357
    %v7369 = vadd.f32 %v7324, %v7358
    %v7370 = vadd.f32 %v7325, %v7359
    %v7371 = vadd.f32 %v7326, %v7360
    %v7372 = vadd.f32 %v7327, %v7355
    %7373 = vset.pattern.permute.xlu0 11
    %7374 = vperm.xlu0 %7373, %v6901
    %v7375 = vpop.permute.xlu0 %7374
    %v7377 = vmul.f32 %v7375, %v6902
    %v7378 = vmul.f32 %v7375, %v6903
    %v7379 = vmul.f32 %v7375, %v6904
    %v7380 = vmul.f32 %v7375, %v6905
    %v7381 = vmul.f32 %v7375, %v6906
    %v7382 = vmul.f32 %v7375, %v6907
    %7389 = vrot.lane.b32.xlu0 %v7377, 30
    %v7390 = vpop.permute.xlu0 %7389
    %7391 = vrot.lane.b32.xlu0 %v7378, 30
    %v7392 = vpop.permute.xlu0 %7391
    %7393 = vrot.lane.b32.xlu0 %v7379, 30
    %v7394 = vpop.permute.xlu0 %7393
    %7395 = vrot.lane.b32.xlu0 %v7380, 30
    %v7396 = vpop.permute.xlu0 %7395
    %7397 = vrot.lane.b32.xlu0 %v7381, 30
    %v7398 = vpop.permute.xlu0 %7397
    %7399 = vrot.lane.b32.xlu0 %v7382, 30
    %v7400 = vpop.permute.xlu0 %7399
    %v7401 = vsel %vm4026, %v7390, %v7392
    %v7402 = vsel %vm4026, %v7392, %v7394
    %v7403 = vsel %vm4026, %v7394, %v7396
    %v7404 = vsel %vm4026, %v7396, %v7398
    %v7405 = vsel %vm4026, %v7398, %v7400
    %v7412 = vadd.f32 %v7367, %v7401
    %v7413 = vadd.f32 %v7368, %v7402
    %v7414 = vadd.f32 %v7369, %v7403
    %v7415 = vadd.f32 %v7370, %v7404
    %v7416 = vadd.f32 %v7371, %v7405
    %v7417 = vadd.f32 %v7372, %v7400
    %7418 = vset.pattern.permute.xlu0 12
    %7419 = vperm.xlu0 %7418, %v6901
    %v7420 = vpop.permute.xlu0 %7419
    %v7422 = vmul.f32 %v7420, %v6903
    %v7423 = vmul.f32 %v7420, %v6904
    %v7424 = vmul.f32 %v7420, %v6905
    %v7425 = vmul.f32 %v7420, %v6906
    %v7426 = vmul.f32 %v7420, %v6907
    %7432 = vrot.lane.b32.xlu0 %v7422, 28
    %v7433 = vpop.permute.xlu0 %7432
    %7434 = vrot.lane.b32.xlu0 %v7423, 28
    %v7435 = vpop.permute.xlu0 %7434
    %7436 = vrot.lane.b32.xlu0 %v7424, 28
    %v7437 = vpop.permute.xlu0 %7436
    %7438 = vrot.lane.b32.xlu0 %v7425, 28
    %v7439 = vpop.permute.xlu0 %7438
    %7440 = vrot.lane.b32.xlu0 %v7426, 28
    %v7441 = vpop.permute.xlu0 %7440
    %v7442 = vsel %vm4118, %v7433, %v7435
    %v7443 = vsel %vm4118, %v7435, %v7437
    %v7444 = vsel %vm4118, %v7437, %v7439
    %v7445 = vsel %vm4118, %v7439, %v7441
    %v7452 = vadd.f32 %v7412, %v7433
    %v7453 = vadd.f32 %v7413, %v7442
    %v7454 = vadd.f32 %v7414, %v7443
    %v7455 = vadd.f32 %v7415, %v7444
    %v7456 = vadd.f32 %v7416, %v7445
    %v7457 = vadd.f32 %v7417, %v7441
    %v7458 = vld [vmem:[#allocation2 + $0x8] sm:$0xff]
    %v7459 = vld [vmem:[#allocation2 + $0x10] sm:$0xff]
    %v7460 = vld [vmem:[#allocation2 + $0x18] sm:$0xff]
    %v7461 = vld [vmem:[#allocation2 + $0x20] sm:$0xff]
    %v7462 = vld [vmem:[#allocation2 + $0x28] sm:$0xff]
    %v7463 = vld [vmem:[#allocation2 + $0x30] sm:$0xff]
    %7464 = vset.pattern.permute.xlu0 13
    %7465 = vperm.xlu0 %7464, %v6901
    %v7466 = vpop.permute.xlu0 %7465
    %v7468 = vmul.f32 %v7466, %v7458
    %v7469 = vmul.f32 %v7466, %v7459
    %v7470 = vmul.f32 %v7466, %v7460
    %v7471 = vmul.f32 %v7466, %v7461
    %v7472 = vmul.f32 %v7466, %v7462
    %v7473 = vmul.f32 %v7466, %v7463
    %7480 = vrot.lane.b32.xlu0 %v7468, 26
    %v7481 = vpop.permute.xlu0 %7480
    %7482 = vrot.lane.b32.xlu0 %v7469, 26
    %v7483 = vpop.permute.xlu0 %7482
    %7484 = vrot.lane.b32.xlu0 %v7470, 26
    %v7485 = vpop.permute.xlu0 %7484
    %7486 = vrot.lane.b32.xlu0 %v7471, 26
    %v7487 = vpop.permute.xlu0 %7486
    %7488 = vrot.lane.b32.xlu0 %v7472, 26
    %v7489 = vpop.permute.xlu0 %7488
    %7490 = vrot.lane.b32.xlu0 %v7473, 26
    %v7491 = vpop.permute.xlu0 %7490
    %vm7492 = vcmask 211968
    %v7493 = vsel %vm7492, %v7481, %v7483
    %v7494 = vsel %vm7492, %v7483, %v7485
    %v7495 = vsel %vm7492, %v7485, %v7487
    %v7496 = vsel %vm7492, %v7487, %v7489
    %v7497 = vsel %vm7492, %v7489, %v7491
    %v7504 = vadd.f32 %v7452, %v7481
    %v7505 = vadd.f32 %v7453, %v7493
    %v7506 = vadd.f32 %v7454, %v7494
    %v7507 = vadd.f32 %v7455, %v7495
    %v7508 = vadd.f32 %v7456, %v7496
    %v7509 = vadd.f32 %v7457, %v7497
    %7510 = vset.pattern.permute.xlu0 14
    %7511 = vperm.xlu0 %7510, %v6901
    %v7512 = vpop.permute.xlu0 %7511
    %v7514 = vmul.f32 %v7512, %v7458
    %v7515 = vmul.f32 %v7512, %v7459
    %v7516 = vmul.f32 %v7512, %v7460
    %v7517 = vmul.f32 %v7512, %v7461
    %v7518 = vmul.f32 %v7512, %v7462
    %v7519 = vmul.f32 %v7512, %v7463
    %7526 = vrot.lane.b32.xlu0 %v7514, 24
    %v7527 = vpop.permute.xlu0 %7526
    %7528 = vrot.lane.b32.xlu0 %v7515, 24
    %v7529 = vpop.permute.xlu0 %7528
    %7530 = vrot.lane.b32.xlu0 %v7516, 24
    %v7531 = vpop.permute.xlu0 %7530
    %7532 = vrot.lane.b32.xlu0 %v7517, 24
    %v7533 = vpop.permute.xlu0 %7532
    %7534 = vrot.lane.b32.xlu0 %v7518, 24
    %v7535 = vpop.permute.xlu0 %7534
    %7536 = vrot.lane.b32.xlu0 %v7519, 24
    %v7537 = vpop.permute.xlu0 %7536
    %vm7538 = vcmask 195584
    %v7539 = vsel %vm7538, %v7527, %v7529
    %v7540 = vsel %vm7538, %v7529, %v7531
    %v7541 = vsel %vm7538, %v7531, %v7533
    %v7542 = vsel %vm7538, %v7533, %v7535
    %v7543 = vsel %vm7538, %v7535, %v7537
    %v7550 = vadd.f32 %v7504, %v7527
    %v7551 = vadd.f32 %v7505, %v7539
    %v7552 = vadd.f32 %v7506, %v7540
    %v7553 = vadd.f32 %v7507, %v7541
    %v7554 = vadd.f32 %v7508, %v7542
    %v7555 = vadd.f32 %v7509, %v7543
    %7556 = vset.pattern.permute.xlu0 15
    %7557 = vperm.xlu0 %7556, %v6901
    %v7558 = vpop.permute.xlu0 %7557
    %v7560 = vmul.f32 %v7558, %v7458
    %v7561 = vmul.f32 %v7558, %v7459
    %v7562 = vmul.f32 %v7558, %v7460
    %v7563 = vmul.f32 %v7558, %v7461
    %v7564 = vmul.f32 %v7558, %v7462
    %v7565 = vmul.f32 %v7558, %v7463
    %7572 = vrot.lane.b32.xlu0 %v7560, 112
    %v7573 = vpop.permute.xlu0 %7572
    %7574 = vrot.lane.b32.xlu0 %v7561, 112
    %v7575 = vpop.permute.xlu0 %7574
    %7576 = vrot.lane.b32.xlu0 %v7562, 112
    %v7577 = vpop.permute.xlu0 %7576
    %7578 = vrot.lane.b32.xlu0 %v7563, 112
    %v7579 = vpop.permute.xlu0 %7578
    %7580 = vrot.lane.b32.xlu0 %v7564, 112
    %v7581 = vpop.permute.xlu0 %7580
    %7582 = vrot.lane.b32.xlu0 %v7565, 112
    %v7583 = vpop.permute.xlu0 %7582
    %vm7584 = vcmask 916480
    %v7585 = vsel %vm7584, %v7573, %v7575
    %v7586 = vsel %vm7584, %v7575, %v7577
    %v7587 = vsel %vm7584, %v7577, %v7579
    %v7588 = vsel %vm7584, %v7579, %v7581
    %v7589 = vsel %vm7584, %v7581, %v7583
    %v7596 = vadd.f32 %v7550, %v7585
    %v7597 = vadd.f32 %v7551, %v7586
    %v7598 = vadd.f32 %v7552, %v7587
    %v7599 = vadd.f32 %v7553, %v7588
    %v7600 = vadd.f32 %v7554, %v7589
    %v7601 = vadd.f32 %v7555, %v7583
    %7602 = vset.pattern.permute.xlu0 16
    %7603 = vperm.xlu0 %7602, %v6901
    %v7604 = vpop.permute.xlu0 %7603
    %v7606 = vmul.f32 %v7604, %v7458
    %v7607 = vmul.f32 %v7604, %v7459
    %v7608 = vmul.f32 %v7604, %v7460
    %v7609 = vmul.f32 %v7604, %v7461
    %v7610 = vmul.f32 %v7604, %v7462
    %v7611 = vmul.f32 %v7604, %v7463
    %7618 = vrot.lane.b32.xlu0 %v7606, 110
    %v7619 = vpop.permute.xlu0 %7618
    %7620 = vrot.lane.b32.xlu0 %v7607, 110
    %v7621 = vpop.permute.xlu0 %7620
    %7622 = vrot.lane.b32.xlu0 %v7608, 110
    %v7623 = vpop.permute.xlu0 %7622
    %7624 = vrot.lane.b32.xlu0 %v7609, 110
    %v7625 = vpop.permute.xlu0 %7624
    %7626 = vrot.lane.b32.xlu0 %v7610, 110
    %v7627 = vpop.permute.xlu0 %7626
    %7628 = vrot.lane.b32.xlu0 %v7611, 110
    %v7629 = vpop.permute.xlu0 %7628
    %vm7630 = vcmask 900096
    %v7631 = vsel %vm7630, %v7619, %v7621
    %v7632 = vsel %vm7630, %v7621, %v7623
    %v7633 = vsel %vm7630, %v7623, %v7625
    %v7634 = vsel %vm7630, %v7625, %v7627
    %v7635 = vsel %vm7630, %v7627, %v7629
    %v7642 = vadd.f32 %v7596, %v7631
    %v7643 = vadd.f32 %v7597, %v7632
    %v7644 = vadd.f32 %v7598, %v7633
    %v7645 = vadd.f32 %v7599, %v7634
    %v7646 = vadd.f32 %v7600, %v7635
    %v7647 = vadd.f32 %v7601, %v7629
    %7648 = vset.pattern.permute.xlu0 17
    %7649 = vperm.xlu0 %7648, %v6901
    %v7650 = vpop.permute.xlu0 %7649
    %v7652 = vmul.f32 %v7650, %v7458
    %v7653 = vmul.f32 %v7650, %v7459
    %v7654 = vmul.f32 %v7650, %v7460
    %v7655 = vmul.f32 %v7650, %v7461
    %v7656 = vmul.f32 %v7650, %v7462
    %v7657 = vmul.f32 %v7650, %v7463
    %7664 = vrot.lane.b32.xlu0 %v7652, 108
    %v7665 = vpop.permute.xlu0 %7664
    %7666 = vrot.lane.b32.xlu0 %v7653, 108
    %v7667 = vpop.permute.xlu0 %7666
    %7668 = vrot.lane.b32.xlu0 %v7654, 108
    %v7669 = vpop.permute.xlu0 %7668
    %7670 = vrot.lane.b32.xlu0 %v7655, 108
    %v7671 = vpop.permute.xlu0 %7670
    %7672 = vrot.lane.b32.xlu0 %v7656, 108
    %v7673 = vpop.permute.xlu0 %7672
    %7674 = vrot.lane.b32.xlu0 %v7657, 108
    %v7675 = vpop.permute.xlu0 %7674
    %vm7676 = vcmask 883712
    %v7677 = vsel %vm7676, %v7665, %v7667
    %v7678 = vsel %vm7676, %v7667, %v7669
    %v7679 = vsel %vm7676, %v7669, %v7671
    %v7680 = vsel %vm7676, %v7671, %v7673
    %v7681 = vsel %vm7676, %v7673, %v7675
    %v7688 = vadd.f32 %v7642, %v7677
    %v7689 = vadd.f32 %v7643, %v7678
    %v7690 = vadd.f32 %v7644, %v7679
    %v7691 = vadd.f32 %v7645, %v7680
    %v7692 = vadd.f32 %v7646, %v7681
    %v7693 = vadd.f32 %v7647, %v7675
    %7694 = vset.pattern.permute.xlu0 18
    %7695 = vperm.xlu0 %7694, %v6901
    %v7696 = vpop.permute.xlu0 %7695
    %v7698 = vmul.f32 %v7696, %v7458
    %v7699 = vmul.f32 %v7696, %v7459
    %v7700 = vmul.f32 %v7696, %v7460
    %v7701 = vmul.f32 %v7696, %v7461
    %v7702 = vmul.f32 %v7696, %v7462
    %v7703 = vmul.f32 %v7696, %v7463
    %7710 = vrot.lane.b32.xlu0 %v7698, 106
    %v7711 = vpop.permute.xlu0 %7710
    %7712 = vrot.lane.b32.xlu0 %v7699, 106
    %v7713 = vpop.permute.xlu0 %7712
    %7714 = vrot.lane.b32.xlu0 %v7700, 106
    %v7715 = vpop.permute.xlu0 %7714
    %7716 = vrot.lane.b32.xlu0 %v7701, 106
    %v7717 = vpop.permute.xlu0 %7716
    %7718 = vrot.lane.b32.xlu0 %v7702, 106
    %v7719 = vpop.permute.xlu0 %7718
    %7720 = vrot.lane.b32.xlu0 %v7703, 106
    %v7721 = vpop.permute.xlu0 %7720
    %vm7722 = vcmask 867328
    %v7723 = vsel %vm7722, %v7711, %v7713
    %v7724 = vsel %vm7722, %v7713, %v7715
    %v7725 = vsel %vm7722, %v7715, %v7717
    %v7726 = vsel %vm7722, %v7717, %v7719
    %v7727 = vsel %vm7722, %v7719, %v7721
    %v7734 = vadd.f32 %v7688, %v7723
    %v7735 = vadd.f32 %v7689, %v7724
    %v7736 = vadd.f32 %v7690, %v7725
    %v7737 = vadd.f32 %v7691, %v7726
    %v7738 = vadd.f32 %v7692, %v7727
    %v7739 = vadd.f32 %v7693, %v7721
    %7740 = vset.pattern.permute.xlu0 19
    %7741 = vperm.xlu0 %7740, %v6901
    %v7742 = vpop.permute.xlu0 %7741
    %v7744 = vmul.f32 %v7742, %v7458
    %v7745 = vmul.f32 %v7742, %v7459
    %v7746 = vmul.f32 %v7742, %v7460
    %v7747 = vmul.f32 %v7742, %v7461
    %v7748 = vmul.f32 %v7742, %v7462
    %v7749 = vmul.f32 %v7742, %v7463
    %7756 = vrot.lane.b32.xlu0 %v7744, 104
    %v7757 = vpop.permute.xlu0 %7756
    %7758 = vrot.lane.b32.xlu0 %v7745, 104
    %v7759 = vpop.permute.xlu0 %7758
    %7760 = vrot.lane.b32.xlu0 %v7746, 104
    %v7761 = vpop.permute.xlu0 %7760
    %7762 = vrot.lane.b32.xlu0 %v7747, 104
    %v7763 = vpop.permute.xlu0 %7762
    %7764 = vrot.lane.b32.xlu0 %v7748, 104
    %v7765 = vpop.permute.xlu0 %7764
    %7766 = vrot.lane.b32.xlu0 %v7749, 104
    %v7767 = vpop.permute.xlu0 %7766
    %v7768 = vsel %vm210, %v7757, %v7759
    %v7769 = vsel %vm210, %v7759, %v7761
    %v7770 = vsel %vm210, %v7761, %v7763
    %v7771 = vsel %vm210, %v7763, %v7765
    %v7772 = vsel %vm210, %v7765, %v7767
    %v7779 = vadd.f32 %v7734, %v7768
    %v7780 = vadd.f32 %v7735, %v7769
    %v7781 = vadd.f32 %v7736, %v7770
    %v7782 = vadd.f32 %v7737, %v7771
    %v7783 = vadd.f32 %v7738, %v7772
    %v7784 = vadd.f32 %v7739, %v7767
    %7785 = vset.pattern.permute.xlu0 20
    %7786 = vperm.xlu0 %7785, %v6901
    %v7787 = vpop.permute.xlu0 %7786
    %v7789 = vmul.f32 %v7787, %v7458
    %v7790 = vmul.f32 %v7787, %v7459
    %v7791 = vmul.f32 %v7787, %v7460
    %v7792 = vmul.f32 %v7787, %v7461
    %v7793 = vmul.f32 %v7787, %v7462
    %v7794 = vmul.f32 %v7787, %v7463
    %7801 = vrot.lane.b32.xlu0 %v7789, 64
    %v7802 = vpop.permute.xlu0 %7801
    %7803 = vrot.lane.b32.xlu0 %v7790, 64
    %v7804 = vpop.permute.xlu0 %7803
    %7805 = vrot.lane.b32.xlu0 %v7791, 64
    %v7806 = vpop.permute.xlu0 %7805
    %7807 = vrot.lane.b32.xlu0 %v7792, 64
    %v7808 = vpop.permute.xlu0 %7807
    %7809 = vrot.lane.b32.xlu0 %v7793, 64
    %v7810 = vpop.permute.xlu0 %7809
    %7811 = vrot.lane.b32.xlu0 %v7794, 64
    %v7812 = vpop.permute.xlu0 %7811
    %vm7813 = vcmask 523264
    %v7814 = vsel %vm7813, %v7802, %v7804
    %v7815 = vsel %vm7813, %v7804, %v7806
    %v7816 = vsel %vm7813, %v7806, %v7808
    %v7817 = vsel %vm7813, %v7808, %v7810
    %v7818 = vsel %vm7813, %v7810, %v7812
    %v7825 = vadd.f32 %v7779, %v7814
    %v7826 = vadd.f32 %v7780, %v7815
    %v7827 = vadd.f32 %v7781, %v7816
    %v7828 = vadd.f32 %v7782, %v7817
    %v7829 = vadd.f32 %v7783, %v7818
    %v7830 = vadd.f32 %v7784, %v7812
    %7831 = vset.pattern.permute.xlu0 21
    %7832 = vperm.xlu0 %7831, %v6901
    %v7833 = vpop.permute.xlu0 %7832
    %v7835 = vmul.f32 %v7833, %v7458
    %v7836 = vmul.f32 %v7833, %v7459
    %v7837 = vmul.f32 %v7833, %v7460
    %v7838 = vmul.f32 %v7833, %v7461
    %v7839 = vmul.f32 %v7833, %v7462
    %v7840 = vmul.f32 %v7833, %v7463
    %7847 = vrot.lane.b32.xlu0 %v7835, 62
    %v7848 = vpop.permute.xlu0 %7847
    %7849 = vrot.lane.b32.xlu0 %v7836, 62
    %v7850 = vpop.permute.xlu0 %7849
    %7851 = vrot.lane.b32.xlu0 %v7837, 62
    %v7852 = vpop.permute.xlu0 %7851
    %7853 = vrot.lane.b32.xlu0 %v7838, 62
    %v7854 = vpop.permute.xlu0 %7853
    %7855 = vrot.lane.b32.xlu0 %v7839, 62
    %v7856 = vpop.permute.xlu0 %7855
    %7857 = vrot.lane.b32.xlu0 %v7840, 62
    %v7858 = vpop.permute.xlu0 %7857
    %vm7859 = vcmask 506880
    %v7860 = vsel %vm7859, %v7848, %v7850
    %v7861 = vsel %vm7859, %v7850, %v7852
    %v7862 = vsel %vm7859, %v7852, %v7854
    %v7863 = vsel %vm7859, %v7854, %v7856
    %v7864 = vsel %vm7859, %v7856, %v7858
    %v7871 = vadd.f32 %v7825, %v7860
    %v7872 = vadd.f32 %v7826, %v7861
    %v7873 = vadd.f32 %v7827, %v7862
    %v7874 = vadd.f32 %v7828, %v7863
    %v7875 = vadd.f32 %v7829, %v7864
    %v7876 = vadd.f32 %v7830, %v7858
    %7877 = vset.pattern.permute.xlu0 22
    %7878 = vperm.xlu0 %7877, %v6901
    %v7879 = vpop.permute.xlu0 %7878
    %v7881 = vmul.f32 %v7879, %v7458
    %v7882 = vmul.f32 %v7879, %v7459
    %v7883 = vmul.f32 %v7879, %v7460
    %v7884 = vmul.f32 %v7879, %v7461
    %v7885 = vmul.f32 %v7879, %v7462
    %v7886 = vmul.f32 %v7879, %v7463
    %7893 = vrot.lane.b32.xlu0 %v7881, 60
    %v7894 = vpop.permute.xlu0 %7893
    %7895 = vrot.lane.b32.xlu0 %v7882, 60
    %v7896 = vpop.permute.xlu0 %7895
    %7897 = vrot.lane.b32.xlu0 %v7883, 60
    %v7898 = vpop.permute.xlu0 %7897
    %7899 = vrot.lane.b32.xlu0 %v7884, 60
    %v7900 = vpop.permute.xlu0 %7899
    %7901 = vrot.lane.b32.xlu0 %v7885, 60
    %v7902 = vpop.permute.xlu0 %7901
    %7903 = vrot.lane.b32.xlu0 %v7886, 60
    %v7904 = vpop.permute.xlu0 %7903
    %vm7905 = vcmask 490496
    %v7906 = vsel %vm7905, %v7894, %v7896
    %v7907 = vsel %vm7905, %v7896, %v7898
    %v7908 = vsel %vm7905, %v7898, %v7900
    %v7909 = vsel %vm7905, %v7900, %v7902
    %v7910 = vsel %vm7905, %v7902, %v7904
    %v7917 = vadd.f32 %v7871, %v7906
    %v7918 = vadd.f32 %v7872, %v7907
    %v7919 = vadd.f32 %v7873, %v7908
    %v7920 = vadd.f32 %v7874, %v7909
    %v7921 = vadd.f32 %v7875, %v7910
    %v7922 = vadd.f32 %v7876, %v7904
    %7923 = vset.pattern.permute.xlu0 23
    %7924 = vperm.xlu0 %7923, %v6901
    %v7925 = vpop.permute.xlu0 %7924
    %v7927 = vmul.f32 %v7925, %v7458
    %v7928 = vmul.f32 %v7925, %v7459
    %v7929 = vmul.f32 %v7925, %v7460
    %v7930 = vmul.f32 %v7925, %v7461
    %v7931 = vmul.f32 %v7925, %v7462
    %v7932 = vmul.f32 %v7925, %v7463
    %7939 = vrot.lane.b32.xlu0 %v7927, 58
    %v7940 = vpop.permute.xlu0 %7939
    %7941 = vrot.lane.b32.xlu0 %v7928, 58
    %v7942 = vpop.permute.xlu0 %7941
    %7943 = vrot.lane.b32.xlu0 %v7929, 58
    %v7944 = vpop.permute.xlu0 %7943
    %7945 = vrot.lane.b32.xlu0 %v7930, 58
    %v7946 = vpop.permute.xlu0 %7945
    %7947 = vrot.lane.b32.xlu0 %v7931, 58
    %v7948 = vpop.permute.xlu0 %7947
    %7949 = vrot.lane.b32.xlu0 %v7932, 58
    %v7950 = vpop.permute.xlu0 %7949
    %vm7951 = vcmask 474112
    %v7952 = vsel %vm7951, %v7940, %v7942
    %v7953 = vsel %vm7951, %v7942, %v7944
    %v7954 = vsel %vm7951, %v7944, %v7946
    %v7955 = vsel %vm7951, %v7946, %v7948
    %v7956 = vsel %vm7951, %v7948, %v7950
    %v7963 = vadd.f32 %v7917, %v7952
    %v7964 = vadd.f32 %v7918, %v7953
    %v7965 = vadd.f32 %v7919, %v7954
    %v7966 = vadd.f32 %v7920, %v7955
    %v7967 = vadd.f32 %v7921, %v7956
    %v7968 = vadd.f32 %v7922, %v7950
    %7969 = vset.pattern.permute.xlu0 24
    %7970 = vperm.xlu0 %7969, %v6901
    %v7971 = vpop.permute.xlu0 %7970
    %v7973 = vmul.f32 %v7971, %v7458
    %v7974 = vmul.f32 %v7971, %v7459
    %v7975 = vmul.f32 %v7971, %v7460
    %v7976 = vmul.f32 %v7971, %v7461
    %v7977 = vmul.f32 %v7971, %v7462
    %v7978 = vmul.f32 %v7971, %v7463
    %7985 = vrot.lane.b32.xlu0 %v7973, 56
    %v7986 = vpop.permute.xlu0 %7985
    %7987 = vrot.lane.b32.xlu0 %v7974, 56
    %v7988 = vpop.permute.xlu0 %7987
    %7989 = vrot.lane.b32.xlu0 %v7975, 56
    %v7990 = vpop.permute.xlu0 %7989
    %7991 = vrot.lane.b32.xlu0 %v7976, 56
    %v7992 = vpop.permute.xlu0 %7991
    %7993 = vrot.lane.b32.xlu0 %v7977, 56
    %v7994 = vpop.permute.xlu0 %7993
    %7995 = vrot.lane.b32.xlu0 %v7978, 56
    %v7996 = vpop.permute.xlu0 %7995
    %v7997 = vsel %vm3704, %v7986, %v7988
    %v7998 = vsel %vm3704, %v7988, %v7990
    %v7999 = vsel %vm3704, %v7990, %v7992
    %v8000 = vsel %vm3704, %v7992, %v7994
    %v8001 = vsel %vm3704, %v7994, %v7996
    %v8008 = vadd.f32 %v7963, %v7997
    %v8009 = vadd.f32 %v7964, %v7998
    %v8010 = vadd.f32 %v7965, %v7999
    %v8011 = vadd.f32 %v7966, %v8000
    %v8012 = vadd.f32 %v7967, %v8001
    %v8013 = vadd.f32 %v7968, %v7996
    %v8014 = vld [vmem:[#allocation3] sm:$0xff]
    %v8015 = vld [vmem:[#allocation3 + $0x8] sm:$0xff]
    %v8016 = vld [vmem:[#allocation3 + $0x10] sm:$0xff]
    %v8017 = vld [vmem:[#allocation3 + $0x18] sm:$0xff]
    %v8018 = vld [vmem:[#allocation3 + $0x20] sm:$0xff]
    %8024 = vrot.lane.b32.xlu0 %v8014, 28
    %v8025 = vpop.permute.xlu0 %8024
    %8026 = vrot.lane.b32.xlu0 %v8015, 28
    %v8027 = vpop.permute.xlu0 %8026
    %8028 = vrot.lane.b32.xlu0 %v8016, 28
    %v8029 = vpop.permute.xlu0 %8028
    %8030 = vrot.lane.b32.xlu0 %v8017, 28
    %v8031 = vpop.permute.xlu0 %8030
    %8032 = vrot.lane.b32.xlu0 %v8018, 28
    %v8033 = vpop.permute.xlu0 %8032
    %v8034 = vsel %vm4118, %v8025, %v8027
    %v8035 = vsel %vm4118, %v8027, %v8029
    %v8036 = vsel %vm4118, %v8029, %v8031
    %v8037 = vsel %vm4118, %v8031, %v8033
    %v8044 = vmul.f32 %v8008, %v8025
    %v8045 = vmul.f32 %v8009, %v8034
    %v8046 = vmul.f32 %v8010, %v8035
    %v8047 = vmul.f32 %v8011, %v8036
    %v8048 = vmul.f32 %v8012, %v8037
    %v8049 = vmul.f32 %v8013, %v8033
    %v8050 = vld [vmem:[%s16] sm:$0xff]
    %8057 = vrot.lane.b32.xlu0 %v8044, 100
    %v8058 = vpop.permute.xlu0 %8057
    %8059 = vrot.lane.b32.xlu0 %v8045, 100
    %v8060 = vpop.permute.xlu0 %8059
    %8061 = vrot.lane.b32.xlu0 %v8046, 100
    %v8062 = vpop.permute.xlu0 %8061
    %8063 = vrot.lane.b32.xlu0 %v8047, 100
    %v8064 = vpop.permute.xlu0 %8063
    %8065 = vrot.lane.b32.xlu0 %v8048, 100
    %v8066 = vpop.permute.xlu0 %8065
    %8067 = vrot.lane.b32.xlu0 %v8049, 100
    %v8068 = vpop.permute.xlu0 %8067
    %v8069 = vsel %vm3430, %v8058, %v8060
    %v8070 = vsel %vm3430, %v8060, %v8062
    %v8071 = vsel %vm3430, %v8062, %v8064
    %v8072 = vsel %vm3430, %v8064, %v8066
    %v8073 = vsel %vm3430, %v8066, %v8068
    %v8080 = vsel %vm453, %v8050, 0
    %8082 = vmatpush.msra.mxu0 0.0
    %8083 = vmatpush.msra.mxu0 0.0
    %8084 = vmatpush.msra.mxu0 0.0
    %8085 = vmatpush.msra.mxu0 0.0
    %8086 = vmatpush.msra.mxu0 0.0
    %8087 = vmatpush.msra.mxu0 0.0
    %8088 = vmatpush.msra.mxu0 0.0
    %8089 = vmatpush.msra.mxu0 0.0
    %8090 = vmatpush.msra.mxu0 0.0
    %8091 = vmatpush.msra.mxu0 0.0
    %8092 = vmatpush.msra.mxu0 0.0
    %8093 = vmatpush.msra.mxu0 0.0
    %8094 = vmatpush.msra.mxu0 0.0
    %8095 = vmatpush.msra.mxu0 0.0
    %8096 = vmatpush.msra.mxu0 0.0
    %8097 = vmatpush.msra.mxu0 %v8069
    %8098 = vmatmul.f32.gmra.mxu0 %v8080
    %v8099 = vpop.f32.mrf.mxu0
    %v8100 = vadd.f32 0.0, %v8099
    %8101 = vdwg.mxu0
    %8102 = vmatpush.msra.mxu0 0.0
    %8103 = vmatpush.msra.mxu0 0.0
    %8104 = vmatpush.msra.mxu0 0.0
    %8105 = vmatpush.msra.mxu0 0.0
    %8106 = vmatpush.msra.mxu0 0.0
    %8107 = vmatpush.msra.mxu0 0.0
    %8108 = vmatpush.msra.mxu0 0.0
    %8109 = vmatpush.msra.mxu0 0.0
    %8110 = vmatpush.msra.mxu0 0.0
    %8111 = vmatpush.msra.mxu0 0.0
    %8112 = vmatpush.msra.mxu0 0.0
    %8113 = vmatpush.msra.mxu0 0.0
    %8114 = vmatpush.msra.mxu0 0.0
    %8115 = vmatpush.msra.mxu0 0.0
    %8116 = vmatpush.msra.mxu0 0.0
    %8117 = vmatpush.msra.mxu0 %v8070
    %8118 = vmatmul.f32.gmra.mxu0 %v8080
    %v8119 = vpop.f32.mrf.mxu0
    %v8120 = vadd.f32 0.0, %v8119
    %8121 = vdwg.mxu0
    %8122 = vmatpush.msra.mxu0 0.0
    %8123 = vmatpush.msra.mxu0 0.0
    %8124 = vmatpush.msra.mxu0 0.0
    %8125 = vmatpush.msra.mxu0 0.0
    %8126 = vmatpush.msra.mxu0 0.0
    %8127 = vmatpush.msra.mxu0 0.0
    %8128 = vmatpush.msra.mxu0 0.0
    %8129 = vmatpush.msra.mxu0 0.0
    %8130 = vmatpush.msra.mxu0 0.0
    %8131 = vmatpush.msra.mxu0 0.0
    %8132 = vmatpush.msra.mxu0 0.0
    %8133 = vmatpush.msra.mxu0 0.0
    %8134 = vmatpush.msra.mxu0 0.0
    %8135 = vmatpush.msra.mxu0 0.0
    %8136 = vmatpush.msra.mxu0 0.0
    %8137 = vmatpush.msra.mxu0 %v8071
    %8138 = vmatmul.f32.gmra.mxu0 %v8080
    %v8139 = vpop.f32.mrf.mxu0
    %v8140 = vadd.f32 0.0, %v8139
    %8141 = vdwg.mxu0
    %8142 = vmatpush.msra.mxu0 0.0
    %8143 = vmatpush.msra.mxu0 0.0
    %8144 = vmatpush.msra.mxu0 0.0
    %8145 = vmatpush.msra.mxu0 0.0
    %8146 = vmatpush.msra.mxu0 0.0
    %8147 = vmatpush.msra.mxu0 0.0
    %8148 = vmatpush.msra.mxu0 0.0
    %8149 = vmatpush.msra.mxu0 0.0
    %8150 = vmatpush.msra.mxu0 0.0
    %8151 = vmatpush.msra.mxu0 0.0
    %8152 = vmatpush.msra.mxu0 0.0
    %8153 = vmatpush.msra.mxu0 0.0
    %8154 = vmatpush.msra.mxu0 0.0
    %8155 = vmatpush.msra.mxu0 0.0
    %8156 = vmatpush.msra.mxu0 0.0
    %8157 = vmatpush.msra.mxu0 %v8072
    %8158 = vmatmul.f32.gmra.mxu0 %v8080
    %v8159 = vpop.f32.mrf.mxu0
    %v8160 = vadd.f32 0.0, %v8159
    %8161 = vdwg.mxu0
    %8162 = vmatpush.msra.mxu0 0.0
    %8163 = vmatpush.msra.mxu0 0.0
    %8164 = vmatpush.msra.mxu0 0.0
    %8165 = vmatpush.msra.mxu0 0.0
    %8166 = vmatpush.msra.mxu0 0.0
    %8167 = vmatpush.msra.mxu0 0.0
    %8168 = vmatpush.msra.mxu0 0.0
    %8169 = vmatpush.msra.mxu0 0.0
    %8170 = vmatpush.msra.mxu0 0.0
    %8171 = vmatpush.msra.mxu0 0.0
    %8172 = vmatpush.msra.mxu0 0.0
    %8173 = vmatpush.msra.mxu0 0.0
    %8174 = vmatpush.msra.mxu0 0.0
    %8175 = vmatpush.msra.mxu0 0.0
    %8176 = vmatpush.msra.mxu0 0.0
    %8177 = vmatpush.msra.mxu0 %v8073
    %8178 = vmatmul.f32.gmra.mxu0 %v8080
    %v8179 = vpop.f32.mrf.mxu0
    %v8180 = vadd.f32 0.0, %v8179
    %8181 = vdwg.mxu0
    %v8182 = vld [vmem:[%s4] sm:$0xff]
    %v8184 = vsel %vm453, %v8182, 0
    %8186 = vmatpush.msra.mxu0 0.0
    %8187 = vmatpush.msra.mxu0 0.0
    %8188 = vmatpush.msra.mxu0 0.0
    %8189 = vmatpush.msra.mxu0 0.0
    %8190 = vmatpush.msra.mxu0 0.0
    %8191 = vmatpush.msra.mxu0 0.0
    %8192 = vmatpush.msra.mxu0 0.0
    %8193 = vmatpush.msra.mxu0 0.0
    %8194 = vmatpush.msra.mxu0 0.0
    %8195 = vmatpush.msra.mxu0 0.0
    %8196 = vmatpush.msra.mxu0 0.0
    %8197 = vmatpush.msra.mxu0 0.0
    %8198 = vmatpush.msra.mxu0 0.0
    %8199 = vmatpush.msra.mxu0 0.0
    %8200 = vmatpush.msra.mxu0 0.0
    %8201 = vmatpush.msra.mxu0 %v8100
    %8202 = vmatmul.f32.gmra.mxu0 %v8184
    %v8203 = vpop.f32.mrf.mxu0
    %v8204 = vadd.f32 0.0, %v8203
    %8205 = vdwg.mxu0
    %8206 = vmatpush.msra.mxu0 0.0
    %8207 = vmatpush.msra.mxu0 0.0
    %8208 = vmatpush.msra.mxu0 0.0
    %8209 = vmatpush.msra.mxu0 0.0
    %8210 = vmatpush.msra.mxu0 0.0
    %8211 = vmatpush.msra.mxu0 0.0
    %8212 = vmatpush.msra.mxu0 0.0
    %8213 = vmatpush.msra.mxu0 0.0
    %8214 = vmatpush.msra.mxu0 0.0
    %8215 = vmatpush.msra.mxu0 0.0
    %8216 = vmatpush.msra.mxu0 0.0
    %8217 = vmatpush.msra.mxu0 0.0
    %8218 = vmatpush.msra.mxu0 0.0
    %8219 = vmatpush.msra.mxu0 0.0
    %8220 = vmatpush.msra.mxu0 0.0
    %8221 = vmatpush.msra.mxu0 %v8120
    %8222 = vmatmul.f32.gmra.mxu0 %v8184
    %v8223 = vpop.f32.mrf.mxu0
    %v8224 = vadd.f32 0.0, %v8223
    %8225 = vdwg.mxu0
    %8226 = vmatpush.msra.mxu0 0.0
    %8227 = vmatpush.msra.mxu0 0.0
    %8228 = vmatpush.msra.mxu0 0.0
    %8229 = vmatpush.msra.mxu0 0.0
    %8230 = vmatpush.msra.mxu0 0.0
    %8231 = vmatpush.msra.mxu0 0.0
    %8232 = vmatpush.msra.mxu0 0.0
    %8233 = vmatpush.msra.mxu0 0.0
    %8234 = vmatpush.msra.mxu0 0.0
    %8235 = vmatpush.msra.mxu0 0.0
    %8236 = vmatpush.msra.mxu0 0.0
    %8237 = vmatpush.msra.mxu0 0.0
    %8238 = vmatpush.msra.mxu0 0.0
    %8239 = vmatpush.msra.mxu0 0.0
    %8240 = vmatpush.msra.mxu0 0.0
    %8241 = vmatpush.msra.mxu0 %v8140
    %8242 = vmatmul.f32.gmra.mxu0 %v8184
    %v8243 = vpop.f32.mrf.mxu0
    %v8244 = vadd.f32 0.0, %v8243
    %8245 = vdwg.mxu0
    %8246 = vmatpush.msra.mxu0 0.0
    %8247 = vmatpush.msra.mxu0 0.0
    %8248 = vmatpush.msra.mxu0 0.0
    %8249 = vmatpush.msra.mxu0 0.0
    %8250 = vmatpush.msra.mxu0 0.0
    %8251 = vmatpush.msra.mxu0 0.0
    %8252 = vmatpush.msra.mxu0 0.0
    %8253 = vmatpush.msra.mxu0 0.0
    %8254 = vmatpush.msra.mxu0 0.0
    %8255 = vmatpush.msra.mxu0 0.0
    %8256 = vmatpush.msra.mxu0 0.0
    %8257 = vmatpush.msra.mxu0 0.0
    %8258 = vmatpush.msra.mxu0 0.0
    %8259 = vmatpush.msra.mxu0 0.0
    %8260 = vmatpush.msra.mxu0 0.0
    %8261 = vmatpush.msra.mxu0 %v8160
    %8262 = vmatmul.f32.gmra.mxu0 %v8184
    %v8263 = vpop.f32.mrf.mxu0
    %v8264 = vadd.f32 0.0, %v8263
    %8265 = vdwg.mxu0
    %8266 = vmatpush.msra.mxu0 0.0
    %8267 = vmatpush.msra.mxu0 0.0
    %8268 = vmatpush.msra.mxu0 0.0
    %8269 = vmatpush.msra.mxu0 0.0
    %8270 = vmatpush.msra.mxu0 0.0
    %8271 = vmatpush.msra.mxu0 0.0
    %8272 = vmatpush.msra.mxu0 0.0
    %8273 = vmatpush.msra.mxu0 0.0
    %8274 = vmatpush.msra.mxu0 0.0
    %8275 = vmatpush.msra.mxu0 0.0
    %8276 = vmatpush.msra.mxu0 0.0
    %8277 = vmatpush.msra.mxu0 0.0
    %8278 = vmatpush.msra.mxu0 0.0
    %8279 = vmatpush.msra.mxu0 0.0
    %8280 = vmatpush.msra.mxu0 0.0
    %8281 = vmatpush.msra.mxu0 %v8180
    %8282 = vmatmul.f32.gmra.mxu0 %v8184
    %v8283 = vpop.f32.mrf.mxu0
    %v8284 = vadd.f32 0.0, %v8283
    %8285 = vdwg.mxu0
    %v8286 = vadd.f32 %v8204, %v8224
    %v8287 = vadd.f32 %v8286, %v8244
    %v8288 = vadd.f32 %v8287, %v8264
    %v8289 = vadd.f32 %v8288, %v8284
    %8290 = vadd.xlane.f32.xlu0 %v8289
    %v8291 = vpop.xlane.xlu0 %8290
    %v8292 = vmul.f32 %v8291, 0.001953125
    %v8293 = vmul.f32 %v8100, %v8100
    %v8294 = vmul.f32 %v8120, %v8120
    %v8295 = vmul.f32 %v8140, %v8140
    %v8296 = vmul.f32 %v8160, %v8160
    %v8297 = vmul.f32 %v8180, %v8180
    %8298 = vmatpush.msra.mxu0 0.0
    %8299 = vmatpush.msra.mxu0 0.0
    %8300 = vmatpush.msra.mxu0 0.0
    %8301 = vmatpush.msra.mxu0 0.0
    %8302 = vmatpush.msra.mxu0 0.0
    %8303 = vmatpush.msra.mxu0 0.0
    %8304 = vmatpush.msra.mxu0 0.0
    %8305 = vmatpush.msra.mxu0 0.0
    %8306 = vmatpush.msra.mxu0 0.0
    %8307 = vmatpush.msra.mxu0 0.0
    %8308 = vmatpush.msra.mxu0 0.0
    %8309 = vmatpush.msra.mxu0 0.0
    %8310 = vmatpush.msra.mxu0 0.0
    %8311 = vmatpush.msra.mxu0 0.0
    %8312 = vmatpush.msra.mxu0 0.0
    %8313 = vmatpush.msra.mxu0 %v8293
    %8314 = vmatmul.f32.gmra.mxu0 %v8184
    %v8315 = vpop.f32.mrf.mxu0
    %v8316 = vadd.f32 0.0, %v8315
    %8317 = vdwg.mxu0
    %8318 = vmatpush.msra.mxu0 0.0
    %8319 = vmatpush.msra.mxu0 0.0
    %8320 = vmatpush.msra.mxu0 0.0
    %8321 = vmatpush.msra.mxu0 0.0
    %8322 = vmatpush.msra.mxu0 0.0
    %8323 = vmatpush.msra.mxu0 0.0
    %8324 = vmatpush.msra.mxu0 0.0
    %8325 = vmatpush.msra.mxu0 0.0
    %8326 = vmatpush.msra.mxu0 0.0
    %8327 = vmatpush.msra.mxu0 0.0
    %8328 = vmatpush.msra.mxu0 0.0
    %8329 = vmatpush.msra.mxu0 0.0
    %8330 = vmatpush.msra.mxu0 0.0
    %8331 = vmatpush.msra.mxu0 0.0
    %8332 = vmatpush.msra.mxu0 0.0
    %8333 = vmatpush.msra.mxu0 %v8294
    %8334 = vmatmul.f32.gmra.mxu0 %v8184
    %v8335 = vpop.f32.mrf.mxu0
    %v8336 = vadd.f32 0.0, %v8335
    %8337 = vdwg.mxu0
    %8338 = vmatpush.msra.mxu0 0.0
    %8339 = vmatpush.msra.mxu0 0.0
    %8340 = vmatpush.msra.mxu0 0.0
    %8341 = vmatpush.msra.mxu0 0.0
    %8342 = vmatpush.msra.mxu0 0.0
    %8343 = vmatpush.msra.mxu0 0.0
    %8344 = vmatpush.msra.mxu0 0.0
    %8345 = vmatpush.msra.mxu0 0.0
    %8346 = vmatpush.msra.mxu0 0.0
    %8347 = vmatpush.msra.mxu0 0.0
    %8348 = vmatpush.msra.mxu0 0.0
    %8349 = vmatpush.msra.mxu0 0.0
    %8350 = vmatpush.msra.mxu0 0.0
    %8351 = vmatpush.msra.mxu0 0.0
    %8352 = vmatpush.msra.mxu0 0.0
    %8353 = vmatpush.msra.mxu0 %v8295
    %8354 = vmatmul.f32.gmra.mxu0 %v8184
    %v8355 = vpop.f32.mrf.mxu0
    %v8356 = vadd.f32 0.0, %v8355
    %8357 = vdwg.mxu0
    %8358 = vmatpush.msra.mxu0 0.0
    %8359 = vmatpush.msra.mxu0 0.0
    %8360 = vmatpush.msra.mxu0 0.0
    %8361 = vmatpush.msra.mxu0 0.0
    %8362 = vmatpush.msra.mxu0 0.0
    %8363 = vmatpush.msra.mxu0 0.0
    %8364 = vmatpush.msra.mxu0 0.0
    %8365 = vmatpush.msra.mxu0 0.0
    %8366 = vmatpush.msra.mxu0 0.0
    %8367 = vmatpush.msra.mxu0 0.0
    %8368 = vmatpush.msra.mxu0 0.0
    %8369 = vmatpush.msra.mxu0 0.0
    %8370 = vmatpush.msra.mxu0 0.0
    %8371 = vmatpush.msra.mxu0 0.0
    %8372 = vmatpush.msra.mxu0 0.0
    %8373 = vmatpush.msra.mxu0 %v8296
    %8374 = vmatmul.f32.gmra.mxu0 %v8184
    %v8375 = vpop.f32.mrf.mxu0
    %v8376 = vadd.f32 0.0, %v8375
    %8377 = vdwg.mxu0
    %8378 = vmatpush.msra.mxu0 0.0
    %8379 = vmatpush.msra.mxu0 0.0
    %8380 = vmatpush.msra.mxu0 0.0
    %8381 = vmatpush.msra.mxu0 0.0
    %8382 = vmatpush.msra.mxu0 0.0
    %8383 = vmatpush.msra.mxu0 0.0
    %8384 = vmatpush.msra.mxu0 0.0
    %8385 = vmatpush.msra.mxu0 0.0
    %8386 = vmatpush.msra.mxu0 0.0
    %8387 = vmatpush.msra.mxu0 0.0
    %8388 = vmatpush.msra.mxu0 0.0
    %8389 = vmatpush.msra.mxu0 0.0
    %8390 = vmatpush.msra.mxu0 0.0
    %8391 = vmatpush.msra.mxu0 0.0
    %8392 = vmatpush.msra.mxu0 0.0
    %8393 = vmatpush.msra.mxu0 %v8297
    %8394 = vmatmul.f32.gmra.mxu0 %v8184
    %v8395 = vpop.f32.mrf.mxu0
    %v8396 = vadd.f32 0.0, %v8395
    %8397 = vdwg.mxu0
    %v8398 = vadd.f32 %v8316, %v8336
    %v8399 = vadd.f32 %v8398, %v8356
    %v8400 = vadd.f32 %v8399, %v8376
    %v8401 = vadd.f32 %v8400, %v8396
    %8402 = vadd.xlane.f32.xlu0 %v8401
    %v8403 = vpop.xlane.xlu0 %8402
    %v8404 = vmul.f32 %v8403, 0.001953125
    %v8405 = vmul.f32 %v8292, %v8292
    %v8406 = vsub.f32 %v8404, %v8405
    %v8407 = vmax.f32 %v8406, 0.0
    %v8408 = vadd.f32 %v8407, 1e-05
    %v8409 = vrsqrt.pop %v8408
    %v8410 = vmul.f32 %v8409, %v8408
    %v8411 = vmul.f32 %v8410, %v8409
    %v8412 = vmul.f32 0.5, %v8411
    %v8413 = vsub.f32 1.5, %v8412
    %v8414 = vmul.f32 %v8409, %v8413
    %vm8415 = vweird.f32 %v8408
    %vm8416 = vweird.f32 %v8409
    %vm8417 = vmor %vm8415, %vm8416
    %v8418 = vsel %vm8417, %v8409, %v8414
    %v8419 = vstv %s6895
    %v8420 = vmul.f32 %v8418, %v8419
    %v8421 = vsub.f32 %v8100, %v8292
    %v8422 = vsub.f32 %v8120, %v8292
    %v8423 = vsub.f32 %v8140, %v8292
    %v8424 = vsub.f32 %v8160, %v8292
    %v8425 = vsub.f32 %v8180, %v8292
    %v8426 = vmul.f32 %v8421, %v8420
    %v8427 = vmul.f32 %v8422, %v8420
    %v8428 = vmul.f32 %v8423, %v8420
    %v8429 = vmul.f32 %v8424, %v8420
    %v8430 = vmul.f32 %v8425, %v8420
    %v8431 = vadd.f32 %v6890, %v8426
    %v8432 = vadd.f32 %v6891, %v8427
    %v8433 = vadd.f32 %v6892, %v8428
    %v8434 = vadd.f32 %v6893, %v8429
    %v8435 = vadd.f32 %v6894, %v8430
    %8436 = vst [vmem:[%s17] sm:$0xff] %v8431
    %8437 = vst [vmem:[%s17 + $0x8] sm:$0xff] %v8432
    %8438 = vst [vmem:[%s17 + $0x10] sm:$0xff] %v8433
    %8439 = vst [vmem:[%s17 + $0x18] sm:$0xff] %v8434
    %8440 = vst [vmem:[%s17 + $0x20] sm:$0xff] %v8435
    // Predicated region
    $region74: #{mixed_op_forward.1} parent=1 // pred_check
      _
    $region75: #{mixed_op_forward.1} parent=1 // pred_check_branch
      %8442 = sbr.rel (0) target = $region77
    $region76: #{mixed_op_forward.1} parent=1 // pred_region
      _
    $region77: #{mixed_op_forward.1} parent=1 // pred_fallthru
      _
    // Predicated region
    $region78: #{mixed_op_forward.1} parent=1 // pred_check
      _
    $region79: #{mixed_op_forward.1} parent=1 // pred_check_branch
      %8444 = sbr.rel (0) target = $region81
    $region80: #{mixed_op_forward.1} parent=1 // pred_region
      _
    $region81: #{mixed_op_forward.1} parent=1 // pred_fallthru
      _
    %8445 = vsyncpa [#allocation5], 1

</llo_original>
